<compile_context>
chip_gen: v7x
topology: tpu7x:2x2x1
jax: 0.10.0
libtpu: 0.0.40
codegen_flags: <defaults>
</compile_context>

<pallas_src>
import functools

import jax
import jax.numpy as jnp
from jax import lax
from jax.experimental import pallas as pl
from jax.experimental.pallas import tpu as pltpu


def _pick_chunk_rows(n_rows):
    """Largest multiple of 8 that divides n_rows and is <= 128 (fallback n_rows)."""
    for r in range(min(n_rows, 128), 7, -1):
        if r % 8 == 0 and n_rows % r == 0:
            return r
    return n_rows


# ----------------------------------------------------------------------------
# Fused Pallas kernel: conv3x3 -> ReLU -> conv3x3 -> tanh for one image.
# ----------------------------------------------------------------------------
def _offset_head_kernel(x_ref, w1_ref, b1_ref, w2_ref, b2_ref, o_ref, h_ref,
                        *, H, W, Cin, Chid, Cout, R):
    # x_ref : (1, (H+3)*(W+2), Cin)  f32  flattened zero-padded image
    # w1_ref: (3, 3*Cin, Chid)       bf16 (kw taps fused along K)
    # b1_ref: (1, Chid)              f32
    # w2_ref: (9, Chid) f32 if Cout == 1 else (9, Chid, Cout) bf16
    # b2_ref: (1, Cout)              f32
    # o_ref : (1, H*(W+2), Cout)     f32  padded-column output frame
    # h_ref : ((H+3)*(W+2), Chid)    f32  VMEM scratch: hidden + zero halo
    W2 = W + 2
    L = H * W2                      # rows of the output/accumulation frame
    NROWS = (H + 3) * W2
    SHIFT = W2 + 1                  # output-frame row q -> h_ref row q + SHIFT
    n_chunks = L // R

    # Zero only the halo strips that the masked chunk stores below do NOT
    # rewrite (head: top pad row + first left pad; tail: bottom pad rows).
    # Done every grid step -> megacore-safe; ~10 vregs of stores total.
    h_ref[pl.ds(0, SHIFT), :] = jnp.zeros((SHIFT, Chid), jnp.float32)
    h_ref[pl.ds(L + SHIFT, NROWS - L - SHIFT), :] = jnp.zeros(
        (NROWS - L - SHIFT, Chid), jnp.float32)

    # ---------------- layer 1: 3x3 SAME conv -> ReLU, row-chunked -----------
    for c in range(n_chunks):
        base = c * R
        acc = jnp.zeros((R, Chid), jnp.float32)
        for kh in range(3):
            off = base + kh * W2
            # kw-fused LHS: three contiguous sublane-offset slices, K = 3*Cin.
            lhs = jnp.concatenate(
                [x_ref[0, pl.ds(off + kw, R), :].astype(jnp.bfloat16)
                 for kw in range(3)], axis=-1)
            acc = acc + jnp.dot(lhs, w1_ref[kh],
                                preferred_element_type=jnp.float32)
        hidden = jnp.maximum(acc + b1_ref[...], 0.0)
        # Mask the 2 garbage columns of the stride-(W+2) frame; after the
        # shifted store they land exactly on the halo columns (must be zero).
        q = base + lax.broadcasted_iota(jnp.int32, (R, 1), 0)
        hidden = jnp.where((q % W2) < W, hidden, 0.0)
        h_ref[pl.ds(base + SHIFT, R), :] = hidden

    # ---------------- layer 2: 3x3 SAME conv -> tanh -------------------------
    for c in range(n_chunks):
        base = c * R
        if Cout == 1:
            # Hoisted reduction: accumulate on the VPU across the 9 taps,
            # one cross-lane sum at the end (keeps the MXU/XLU free).
            accv = jnp.zeros((R, Chid), jnp.float32)
            for kh in range(3):
                for kw in range(3):
                    h_tap = h_ref[pl.ds(base + kh * W2 + kw, R), :]
                    accv = accv + h_tap * w2_ref[pl.ds(3 * kh + kw, 1), :]
            out = jnp.sum(accv, axis=-1, keepdims=True)
        else:
            out = jnp.zeros((R, Cout), jnp.float32)
            for kh in range(3):
                for kw in range(3):
                    h_tap = h_ref[pl.ds(base + kh * W2 + kw, R), :]
                    out = out + jnp.dot(h_tap.astype(jnp.bfloat16),
                                        w2_ref[3 * kh + kw],
                                        preferred_element_type=jnp.float32)
        o_ref[0, pl.ds(base, R), :] = jnp.tanh(out + b2_ref[...]).astype(o_ref.dtype)


# ----------------------------------------------------------------------------
# OffsetHead forward (NCHW in / NCHW out, matching the PyTorch module).
# ----------------------------------------------------------------------------
def offset_head_forward(x_nchw, params):
    w1f = params["w1f"]            # (3, 3*Cin, Chid) bf16
    b1 = params["b1"]              # (1, Chid) f32
    w2f = params["w2f"]            # (9, Chid) f32  or  (9, Chid, Cout) bf16
    b2 = params["b2"]              # (1, Cout) f32

    B, Cin, H, W = x_nchw.shape
    Chid = b1.shape[1]
    Cout = b2.shape[1]
    W2 = W + 2
    L = H * W2
    NROWS = (H + 3) * W2
    R = _pick_chunk_rows(L)

    # NCHW -> NHWC, 1-px zero halo (+1 extra bottom row so the garbage-column
    # taps of the last rows stay in bounds), flatten to the stride-(W+2) frame.
    # TODO(synk): fold this transpose/pad into the kernel to drop 2 XLA launches.
    x = jnp.transpose(x_nchw, (0, 2, 3, 1))
    x = jnp.pad(x, ((0, 0), (1, 2), (1, 1), (0, 0)))
    x = x.reshape(B, NROWS, Cin)

    kernel = functools.partial(_offset_head_kernel, H=H, W=W, Cin=Cin,
                               Chid=Chid, Cout=Cout, R=R)

    w2_spec = (pl.BlockSpec((9, Chid), lambda b: (0, 0)) if Cout == 1 else
               pl.BlockSpec((9, Chid, Cout), lambda b: (0, 0, 0)))

    out = pl.pallas_call(
        kernel,
        out_shape=jax.ShapeDtypeStruct((B, L, Cout), jnp.float32),
        grid=(B,),
        in_specs=[
            pl.BlockSpec((1, NROWS, Cin), lambda b: (b, 0, 0)),
            pl.BlockSpec((3, 3 * Cin, Chid), lambda b: (0, 0, 0)),
            pl.BlockSpec((1, Chid), lambda b: (0, 0)),
            w2_spec,
            pl.BlockSpec((1, Cout), lambda b: (0, 0)),
        ],
        out_specs=pl.BlockSpec((1, L, Cout), lambda b: (b, 0, 0)),
        scratch_shapes=[pltpu.VMEM((NROWS, Chid), jnp.float32)],
        compiler_params=pltpu.CompilerParams(
            dimension_semantics=("parallel",),
        ),
    )(x, w1f, b1, w2f, b2)

    # Drop the 2 garbage columns of the padded frame; reshape straight to NCHW.
    out = out.reshape(B, H, W2, Cout)[:, :, :W, :]
    return jnp.transpose(out, (0, 3, 1, 2))


# ----------------------------------------------------------------------------
# Deterministic parameter init (PyTorch-conv-like uniform, fan_in = 9*Cin).
# ----------------------------------------------------------------------------
def init_params(key, input_dim, hidden_dim, output_dim):
    k1, k2, k3, k4 = jax.random.split(key, 4)
    bound1 = 1.0 / jnp.sqrt(9.0 * input_dim)
    bound2 = 1.0 / jnp.sqrt(9.0 * hidden_dim)
    w1_hwio = jax.random.uniform(k1, (3, 3, input_dim, hidden_dim),
                                 jnp.float32, -bound1, bound1)
    b1 = jax.random.uniform(k2, (hidden_dim,), jnp.float32, -bound1, bound1)
    w2_hwio = jax.random.uniform(k3, (3, 3, hidden_dim, output_dim),
                                 jnp.float32, -bound2, bound2)
    b2 = jax.random.uniform(k4, (output_dim,), jnp.float32, -bound2, bound2)
    params = {
        # kw taps fused along K for the layer-1 MXU matmuls.
        "w1f": w1_hwio.reshape(3, 3 * input_dim, hidden_dim).astype(jnp.bfloat16),
        "b1": b1.reshape(1, hidden_dim),
        "b2": b2.reshape(1, output_dim),
    }
    if output_dim == 1:
        params["w2f"] = w2_hwio.reshape(9, hidden_dim)                 # f32 VPU path
    else:
        params["w2f"] = w2_hwio.reshape(9, hidden_dim, output_dim).astype(jnp.bfloat16)
    return params, (w1_hwio, b1, w2_hwio, b2)


# ----------------------------------------------------------------------------
# Pure-JAX reference (lax.conv, f32) for correctness checking.
# ----------------------------------------------------------------------------
def reference_forward(x_nchw, w1_hwio, b1, w2_hwio, b2):
    dn = ("NCHW", "HWIO", "NCHW")
    y = lax.conv_general_dilated(x_nchw, w1_hwio, (1, 1), "SAME",
                                 dimension_numbers=dn)
    y = jnp.maximum(y + b1.reshape(1, -1, 1, 1), 0.0)
    z = lax.conv_general_dilated(y, w2_hwio, (1, 1), "SAME",
                                 dimension_numbers=dn)
    return jnp.tanh(z + b2.reshape(1, -1, 1, 1))


if __name__ == "__main__":
    # Module-default channel counts (input_dim=128, hidden_dim=256,
    # output_dim=1), small batch / spatial size.
    B, Cin, H, W = 2, 128, 16, 16
    Chid, Cout = 256, 1

    key = jax.random.PRNGKey(0)
    kx, kp = jax.random.split(key)
    x = jax.random.normal(kx, (B, Cin, H, W), jnp.float32)   # NCHW input

    params, (w1_hwio, b1, w2_hwio, b2) = init_params(kp, Cin, Chid, Cout)

    out = jax.jit(offset_head_forward)(x, params)
    out = jax.block_until_ready(out)

    ref = reference_forward(x, w1_hwio, b1, w2_hwio, b2)
    assert out.shape == (B, Cout, H, W), out.shape
    # bf16 MXU inputs for layer 1 (f32 accumulation, f32 layer 2) -> relaxed
    # tolerance vs the f32 reference.
    max_err = float(jnp.max(jnp.abs(out - ref)))
    assert jnp.allclose(out, ref, rtol=2e-2, atol=2e-2), max_err

    print("KERNEL_OK")
</pallas_src>

<mosaic_0001>
module attributes {stable_mosaic.version = 11 : i64} {
  func.func @_offset_head_kernel(%arg0: i32, %arg1: memref<1x342x128xf32, #tpu.memory_space<vmem>>, %arg2: memref<3x384x256xbf16, #tpu.memory_space<vmem>>, %arg3: memref<1x256xf32, #tpu.memory_space<vmem>>, %arg4: memref<9x256xf32, #tpu.memory_space<vmem>>, %arg5: memref<1x1xf32, #tpu.memory_space<vmem>>, %arg6: memref<1x288x1xf32, #tpu.memory_space<vmem>>, %arg7: memref<342x256xf32, #tpu.memory_space<vmem>>) attributes {dimension_semantics = [#tpu.dimension_semantics<parallel>], iteration_bounds = array<i64: 2>, scalar_prefetch = 0 : i64, scratch_operands = 1 : i64, tpu.core_type = #tpu.core_type<tc>, window_params = [{transform_indices = @transform_0, window_bounds = array<i64: 1, 342, 128>}, {pipeline_mode = #tpu.pipeline_mode<synchronous>, transform_indices = @transform_1, window_bounds = array<i64: 3, 384, 256>}, {pipeline_mode = #tpu.pipeline_mode<synchronous>, transform_indices = @transform_2, window_bounds = array<i64: 1, 256>}, {pipeline_mode = #tpu.pipeline_mode<synchronous>, transform_indices = @transform_3, window_bounds = array<i64: 9, 256>}, {pipeline_mode = #tpu.pipeline_mode<synchronous>, transform_indices = @transform_4, window_bounds = array<i64: 1, 1>}, {transform_indices = @transform_5, window_bounds = array<i64: 1, 288, 1>}]} {
    %cst = arith.constant 0.000000e+00 : f32
    %0 = vector.broadcast %cst : f32 to vector<19x256xf32>
    %c0 = arith.constant 0 : index
    %c0_0 = arith.constant 0 : index
    %1 = vector.load %arg7[%c0, %c0_0] : memref<342x256xf32, #tpu.memory_space<vmem>>, vector<19x256xf32>
    tpu.vector_store %arg7[%c0, %c0_0], %0 {strides = array<i32>} : memref<342x256xf32, #tpu.memory_space<vmem>>, vector<19x256xf32>,
    %cst_1 = arith.constant 0.000000e+00 : f32
    %2 = vector.broadcast %cst_1 : f32 to vector<35x256xf32>
    %c307 = arith.constant 307 : index
    %c0_2 = arith.constant 0 : index
    %3 = vector.load %arg7[%c307, %c0_2] : memref<342x256xf32, #tpu.memory_space<vmem>>, vector<35x256xf32>
    tpu.vector_store %arg7[%c307, %c0_2], %2 {strides = array<i32>} : memref<342x256xf32, #tpu.memory_space<vmem>>, vector<35x256xf32>,
    %cst_3 = arith.constant 0.000000e+00 : f32
    %4 = vector.broadcast %cst_3 : f32 to vector<96x256xf32>
    %c0_4 = arith.constant 0 : index
    %c0_5 = arith.constant 0 : index
    %c0_6 = arith.constant 0 : index
    %5 = vector.load %arg1[%c0_4, %c0_5, %c0_6] : memref<1x342x128xf32, #tpu.memory_space<vmem>>, vector<1x96x128xf32>
    %6 = vector.shape_cast %5 : vector<1x96x128xf32> to vector<96x128xf32>
    %7 = arith.truncf %6 : vector<96x128xf32> to vector<96x128xbf16>
    %c0_7 = arith.constant 0 : index
    %c1 = arith.constant 1 : index
    %c0_8 = arith.constant 0 : index
    %8 = vector.load %arg1[%c0_7, %c1, %c0_8] : memref<1x342x128xf32, #tpu.memory_space<vmem>>, vector<1x96x128xf32>
    %9 = vector.shape_cast %8 : vector<1x96x128xf32> to vector<96x128xf32>
    %10 = arith.truncf %9 : vector<96x128xf32> to vector<96x128xbf16>
    %c0_9 = arith.constant 0 : index
    %c2 = arith.constant 2 : index
    %c0_10 = arith.constant 0 : index
    %11 = vector.load %arg1[%c0_9, %c2, %c0_10] : memref<1x342x128xf32, #tpu.memory_space<vmem>>, vector<1x96x128xf32>
    %12 = vector.shape_cast %11 : vector<1x96x128xf32> to vector<96x128xf32>
    %13 = arith.truncf %12 : vector<96x128xf32> to vector<96x128xbf16>
    %14 = tpu.concatenate %7, %10, %13 in 1 : vector<96x128xbf16>, vector<96x128xbf16>, vector<96x128xbf16> -> vector<96x384xbf16>
    %c0_11 = arith.constant 0 : index
    %c0_12 = arith.constant 0 : index
    %c0_13 = arith.constant 0 : index
    %15 = vector.load %arg2[%c0_11, %c0_12, %c0_13] : memref<3x384x256xbf16, #tpu.memory_space<vmem>>, vector<1x384x256xbf16>
    %16 = vector.shape_cast %15 : vector<1x384x256xbf16> to vector<384x256xbf16>
    %cst_14 = arith.constant dense<0.000000e+00> : vector<96x256xf32>
    %17 = tpu.matmul %14, %16, %cst_14 {dimension_numbers = #tpu.dot_dimension_numbers<[1], [0], [0], [1], [0, 0, 1, 1], [], []>} : vector<96x384xbf16>, vector<384x256xbf16>, vector<96x256xf32> -> vector<96x256xf32>
    %18 = arith.addf %4, %17 : vector<96x256xf32>
    %c0_15 = arith.constant 0 : index
    %c18 = arith.constant 18 : index
    %c0_16 = arith.constant 0 : index
    %19 = vector.load %arg1[%c0_15, %c18, %c0_16] : memref<1x342x128xf32, #tpu.memory_space<vmem>>, vector<1x96x128xf32>
    %20 = vector.shape_cast %19 : vector<1x96x128xf32> to vector<96x128xf32>
    %21 = arith.truncf %20 : vector<96x128xf32> to vector<96x128xbf16>
    %c0_17 = arith.constant 0 : index
    %c19 = arith.constant 19 : index
    %c0_18 = arith.constant 0 : index
    %22 = vector.load %arg1[%c0_17, %c19, %c0_18] : memref<1x342x128xf32, #tpu.memory_space<vmem>>, vector<1x96x128xf32>
    %23 = vector.shape_cast %22 : vector<1x96x128xf32> to vector<96x128xf32>
    %24 = arith.truncf %23 : vector<96x128xf32> to vector<96x128xbf16>
    %c0_19 = arith.constant 0 : index
    %c20 = arith.constant 20 : index
    %c0_20 = arith.constant 0 : index
    %25 = vector.load %arg1[%c0_19, %c20, %c0_20] : memref<1x342x128xf32, #tpu.memory_space<vmem>>, vector<1x96x128xf32>
    %26 = vector.shape_cast %25 : vector<1x96x128xf32> to vector<96x128xf32>
    %27 = arith.truncf %26 : vector<96x128xf32> to vector<96x128xbf16>
    %28 = tpu.concatenate %21, %24, %27 in 1 : vector<96x128xbf16>, vector<96x128xbf16>, vector<96x128xbf16> -> vector<96x384xbf16>
    %c1_21 = arith.constant 1 : index
    %c0_22 = arith.constant 0 : index
    %c0_23 = arith.constant 0 : index
    %29 = vector.load %arg2[%c1_21, %c0_22, %c0_23] : memref<3x384x256xbf16, #tpu.memory_space<vmem>>, vector<1x384x256xbf16>
    %30 = vector.shape_cast %29 : vector<1x384x256xbf16> to vector<384x256xbf16>
    %cst_24 = arith.constant dense<0.000000e+00> : vector<96x256xf32>
    %31 = tpu.matmul %28, %30, %cst_24 {dimension_numbers = #tpu.dot_dimension_numbers<[1], [0], [0], [1], [0, 0, 1, 1], [], []>} : vector<96x384xbf16>, vector<384x256xbf16>, vector<96x256xf32> -> vector<96x256xf32>
    %32 = arith.addf %18, %31 : vector<96x256xf32>
    %c0_25 = arith.constant 0 : index
    %c36 = arith.constant 36 : index
    %c0_26 = arith.constant 0 : index
    %33 = vector.load %arg1[%c0_25, %c36, %c0_26] : memref<1x342x128xf32, #tpu.memory_space<vmem>>, vector<1x96x128xf32>
    %34 = vector.shape_cast %33 : vector<1x96x128xf32> to vector<96x128xf32>
    %35 = arith.truncf %34 : vector<96x128xf32> to vector<96x128xbf16>
    %c0_27 = arith.constant 0 : index
    %c37 = arith.constant 37 : index
    %c0_28 = arith.constant 0 : index
    %36 = vector.load %arg1[%c0_27, %c37, %c0_28] : memref<1x342x128xf32, #tpu.memory_space<vmem>>, vector<1x96x128xf32>
    %37 = vector.shape_cast %36 : vector<1x96x128xf32> to vector<96x128xf32>
    %38 = arith.truncf %37 : vector<96x128xf32> to vector<96x128xbf16>
    %c0_29 = arith.constant 0 : index
    %c38 = arith.constant 38 : index
    %c0_30 = arith.constant 0 : index
    %39 = vector.load %arg1[%c0_29, %c38, %c0_30] : memref<1x342x128xf32, #tpu.memory_space<vmem>>, vector<1x96x128xf32>
    %40 = vector.shape_cast %39 : vector<1x96x128xf32> to vector<96x128xf32>
    %41 = arith.truncf %40 : vector<96x128xf32> to vector<96x128xbf16>
    %42 = tpu.concatenate %35, %38, %41 in 1 : vector<96x128xbf16>, vector<96x128xbf16>, vector<96x128xbf16> -> vector<96x384xbf16>
    %c2_31 = arith.constant 2 : index
    %c0_32 = arith.constant 0 : index
    %c0_33 = arith.constant 0 : index
    %43 = vector.load %arg2[%c2_31, %c0_32, %c0_33] : memref<3x384x256xbf16, #tpu.memory_space<vmem>>, vector<1x384x256xbf16>
    %44 = vector.shape_cast %43 : vector<1x384x256xbf16> to vector<384x256xbf16>
    %cst_34 = arith.constant dense<0.000000e+00> : vector<96x256xf32>
    %45 = tpu.matmul %42, %44, %cst_34 {dimension_numbers = #tpu.dot_dimension_numbers<[1], [0], [0], [1], [0, 0, 1, 1], [], []>} : vector<96x384xbf16>, vector<384x256xbf16>, vector<96x256xf32> -> vector<96x256xf32>
    %46 = arith.addf %32, %45 : vector<96x256xf32>
    %c0_35 = arith.constant 0 : index
    %c0_36 = arith.constant 0 : index
    %47 = vector.load %arg3[%c0_35, %c0_36] : memref<1x256xf32, #tpu.memory_space<vmem>>, vector<1x256xf32>
    %48 = vector.broadcast %47 : vector<1x256xf32> to vector<96x256xf32>
    %49 = arith.addf %46, %48 : vector<96x256xf32>
    %cst_37 = arith.constant 0.000000e+00 : f32
    %50 = vector.broadcast %cst_37 : f32 to vector<96x256xf32>
    %51 = arith.maximumf %49, %50 : vector<96x256xf32>
    %52 = tpu.iota {dimensions = array<i32: 0>} : vector<96x1xi32>
    %c0_i32 = arith.constant 0 : i32
    %53 = vector.broadcast %c0_i32 : i32 to vector<96x1xi32>
    %54 = arith.addi %53, %52 : vector<96x1xi32>
    %c18_i32 = arith.constant 18 : i32
    %c0_i32_38 = arith.constant 0 : i32
    %55 = arith.cmpi eq, %c18_i32, %c0_i32_38 : i32
    %c1_i32 = arith.constant 1 : i32
    %56 = arith.select %55, %c1_i32, %c18_i32 : i32
    %57 = vector.broadcast %56 : i32 to vector<96x1xi32>
    %58 = arith.remsi %54, %57 : vector<96x1xi32>
    %c0_i32_39 = arith.constant 0 : i32
    %59 = vector.broadcast %c0_i32_39 : i32 to vector<96x1xi32>
    %60 = arith.cmpi ne, %58, %59 : vector<96x1xi32>
    %c0_i32_40 = arith.constant 0 : i32
    %61 = vector.broadcast %c0_i32_40 : i32 to vector<96x1xi32>
    %62 = arith.cmpi slt, %58, %61 : vector<96x1xi32>
    %c0_i32_41 = arith.constant 0 : i32
    %63 = arith.cmpi slt, %56, %c0_i32_41 : i32
    %64 = vector.broadcast %63 : i1 to vector<96x1xi1>
    %65 = vector.broadcast %64 : vector<96x1xi1> to vector<96x1xi1>
    %66 = arith.xori %62, %65 : vector<96x1xi1>
    %67 = arith.andi %66, %60 : vector<96x1xi1>
    %68 = vector.broadcast %56 : i32 to vector<96x1xi32>
    %69 = arith.addi %58, %68 : vector<96x1xi32>
    %70 = arith.select %67, %69, %58 : vector<96x1xi1>, vector<96x1xi32>
    %c16_i32 = arith.constant 16 : i32
    %71 = vector.broadcast %c16_i32 : i32 to vector<96x1xi32>
    %72 = arith.cmpi slt, %70, %71 : vector<96x1xi32>
    %cst_42 = arith.constant 0.000000e+00 : f32
    %73 = vector.shape_cast %72 : vector<96x1xi1> to vector<96x1xi1>
    %74 = vector.broadcast %73 : vector<96x1xi1> to vector<96x256xi1>
    %75 = vector.broadcast %cst_42 : f32 to vector<96x256xf32>
    %76 = arith.select %74, %51, %75 : vector<96x256xi1>, vector<96x256xf32>
    %c19_43 = arith.constant 19 : index
    %c0_44 = arith.constant 0 : index
    %77 = vector.load %arg7[%c19_43, %c0_44] : memref<342x256xf32, #tpu.memory_space<vmem>>, vector<96x256xf32>
    tpu.vector_store %arg7[%c19_43, %c0_44], %76 {strides = array<i32>} : memref<342x256xf32, #tpu.memory_space<vmem>>, vector<96x256xf32>,
    %cst_45 = arith.constant 0.000000e+00 : f32
    %78 = vector.broadcast %cst_45 : f32 to vector<96x256xf32>
    %c0_46 = arith.constant 0 : index
    %c96 = arith.constant 96 : index
    %c0_47 = arith.constant 0 : index
    %79 = vector.load %arg1[%c0_46, %c96, %c0_47] : memref<1x342x128xf32, #tpu.memory_space<vmem>>, vector<1x96x128xf32>
    %80 = vector.shape_cast %79 : vector<1x96x128xf32> to vector<96x128xf32>
    %81 = arith.truncf %80 : vector<96x128xf32> to vector<96x128xbf16>
    %c0_48 = arith.constant 0 : index
    %c97 = arith.constant 97 : index
    %c0_49 = arith.constant 0 : index
    %82 = vector.load %arg1[%c0_48, %c97, %c0_49] : memref<1x342x128xf32, #tpu.memory_space<vmem>>, vector<1x96x128xf32>
    %83 = vector.shape_cast %82 : vector<1x96x128xf32> to vector<96x128xf32>
    %84 = arith.truncf %83 : vector<96x128xf32> to vector<96x128xbf16>
    %c0_50 = arith.constant 0 : index
    %c98 = arith.constant 98 : index
    %c0_51 = arith.constant 0 : index
    %85 = vector.load %arg1[%c0_50, %c98, %c0_51] : memref<1x342x128xf32, #tpu.memory_space<vmem>>, vector<1x96x128xf32>
    %86 = vector.shape_cast %85 : vector<1x96x128xf32> to vector<96x128xf32>
    %87 = arith.truncf %86 : vector<96x128xf32> to vector<96x128xbf16>
    %88 = tpu.concatenate %81, %84, %87 in 1 : vector<96x128xbf16>, vector<96x128xbf16>, vector<96x128xbf16> -> vector<96x384xbf16>
    %c0_52 = arith.constant 0 : index
    %c0_53 = arith.constant 0 : index
    %c0_54 = arith.constant 0 : index
    %89 = vector.load %arg2[%c0_52, %c0_53, %c0_54] : memref<3x384x256xbf16, #tpu.memory_space<vmem>>, vector<1x384x256xbf16>
    %90 = vector.shape_cast %89 : vector<1x384x256xbf16> to vector<384x256xbf16>
    %cst_55 = arith.constant dense<0.000000e+00> : vector<96x256xf32>
    %91 = tpu.matmul %88, %90, %cst_55 {dimension_numbers = #tpu.dot_dimension_numbers<[1], [0], [0], [1], [0, 0, 1, 1], [], []>} : vector<96x384xbf16>, vector<384x256xbf16>, vector<96x256xf32> -> vector<96x256xf32>
    %92 = arith.addf %78, %91 : vector<96x256xf32>
    %c0_56 = arith.constant 0 : index
    %c114 = arith.constant 114 : index
    %c0_57 = arith.constant 0 : index
    %93 = vector.load %arg1[%c0_56, %c114, %c0_57] : memref<1x342x128xf32, #tpu.memory_space<vmem>>, vector<1x96x128xf32>
    %94 = vector.shape_cast %93 : vector<1x96x128xf32> to vector<96x128xf32>
    %95 = arith.truncf %94 : vector<96x128xf32> to vector<96x128xbf16>
    %c0_58 = arith.constant 0 : index
    %c115 = arith.constant 115 : index
    %c0_59 = arith.constant 0 : index
    %96 = vector.load %arg1[%c0_58, %c115, %c0_59] : memref<1x342x128xf32, #tpu.memory_space<vmem>>, vector<1x96x128xf32>
    %97 = vector.shape_cast %96 : vector<1x96x128xf32> to vector<96x128xf32>
    %98 = arith.truncf %97 : vector<96x128xf32> to vector<96x128xbf16>
    %c0_60 = arith.constant 0 : index
    %c116 = arith.constant 116 : index
    %c0_61 = arith.constant 0 : index
    %99 = vector.load %arg1[%c0_60, %c116, %c0_61] : memref<1x342x128xf32, #tpu.memory_space<vmem>>, vector<1x96x128xf32>
    %100 = vector.shape_cast %99 : vector<1x96x128xf32> to vector<96x128xf32>
    %101 = arith.truncf %100 : vector<96x128xf32> to vector<96x128xbf16>
    %102 = tpu.concatenate %95, %98, %101 in 1 : vector<96x128xbf16>, vector<96x128xbf16>, vector<96x128xbf16> -> vector<96x384xbf16>
    %c1_62 = arith.constant 1 : index
    %c0_63 = arith.constant 0 : index
    %c0_64 = arith.constant 0 : index
    %103 = vector.load %arg2[%c1_62, %c0_63, %c0_64] : memref<3x384x256xbf16, #tpu.memory_space<vmem>>, vector<1x384x256xbf16>
    %104 = vector.shape_cast %103 : vector<1x384x256xbf16> to vector<384x256xbf16>
    %cst_65 = arith.constant dense<0.000000e+00> : vector<96x256xf32>
    %105 = tpu.matmul %102, %104, %cst_65 {dimension_numbers = #tpu.dot_dimension_numbers<[1], [0], [0], [1], [0, 0, 1, 1], [], []>} : vector<96x384xbf16>, vector<384x256xbf16>, vector<96x256xf32> -> vector<96x256xf32>
    %106 = arith.addf %92, %105 : vector<96x256xf32>
    %c0_66 = arith.constant 0 : index
    %c132 = arith.constant 132 : index
    %c0_67 = arith.constant 0 : index
    %107 = vector.load %arg1[%c0_66, %c132, %c0_67] : memref<1x342x128xf32, #tpu.memory_space<vmem>>, vector<1x96x128xf32>
    %108 = vector.shape_cast %107 : vector<1x96x128xf32> to vector<96x128xf32>
    %109 = arith.truncf %108 : vector<96x128xf32> to vector<96x128xbf16>
    %c0_68 = arith.constant 0 : index
    %c133 = arith.constant 133 : index
    %c0_69 = arith.constant 0 : index
    %110 = vector.load %arg1[%c0_68, %c133, %c0_69] : memref<1x342x128xf32, #tpu.memory_space<vmem>>, vector<1x96x128xf32>
    %111 = vector.shape_cast %110 : vector<1x96x128xf32> to vector<96x128xf32>
    %112 = arith.truncf %111 : vector<96x128xf32> to vector<96x128xbf16>
    %c0_70 = arith.constant 0 : index
    %c134 = arith.constant 134 : index
    %c0_71 = arith.constant 0 : index
    %113 = vector.load %arg1[%c0_70, %c134, %c0_71] : memref<1x342x128xf32, #tpu.memory_space<vmem>>, vector<1x96x128xf32>
    %114 = vector.shape_cast %113 : vector<1x96x128xf32> to vector<96x128xf32>
    %115 = arith.truncf %114 : vector<96x128xf32> to vector<96x128xbf16>
    %116 = tpu.concatenate %109, %112, %115 in 1 : vector<96x128xbf16>, vector<96x128xbf16>, vector<96x128xbf16> -> vector<96x384xbf16>
    %c2_72 = arith.constant 2 : index
    %c0_73 = arith.constant 0 : index
    %c0_74 = arith.constant 0 : index
    %117 = vector.load %arg2[%c2_72, %c0_73, %c0_74] : memref<3x384x256xbf16, #tpu.memory_space<vmem>>, vector<1x384x256xbf16>
    %118 = vector.shape_cast %117 : vector<1x384x256xbf16> to vector<384x256xbf16>
    %cst_75 = arith.constant dense<0.000000e+00> : vector<96x256xf32>
    %119 = tpu.matmul %116, %118, %cst_75 {dimension_numbers = #tpu.dot_dimension_numbers<[1], [0], [0], [1], [0, 0, 1, 1], [], []>} : vector<96x384xbf16>, vector<384x256xbf16>, vector<96x256xf32> -> vector<96x256xf32>
    %120 = arith.addf %106, %119 : vector<96x256xf32>
    %c0_76 = arith.constant 0 : index
    %c0_77 = arith.constant 0 : index
    %121 = vector.load %arg3[%c0_76, %c0_77] : memref<1x256xf32, #tpu.memory_space<vmem>>, vector<1x256xf32>
    %122 = vector.broadcast %121 : vector<1x256xf32> to vector<96x256xf32>
    %123 = arith.addf %120, %122 : vector<96x256xf32>
    %cst_78 = arith.constant 0.000000e+00 : f32
    %124 = vector.broadcast %cst_78 : f32 to vector<96x256xf32>
    %125 = arith.maximumf %123, %124 : vector<96x256xf32>
    %126 = tpu.iota {dimensions = array<i32: 0>} : vector<96x1xi32>
    %c96_i32 = arith.constant 96 : i32
    %127 = vector.broadcast %c96_i32 : i32 to vector<96x1xi32>
    %128 = arith.addi %127, %126 : vector<96x1xi32>
    %c18_i32_79 = arith.constant 18 : i32
    %c0_i32_80 = arith.constant 0 : i32
    %129 = arith.cmpi eq, %c18_i32_79, %c0_i32_80 : i32
    %c1_i32_81 = arith.constant 1 : i32
    %130 = arith.select %129, %c1_i32_81, %c18_i32_79 : i32
    %131 = vector.broadcast %130 : i32 to vector<96x1xi32>
    %132 = arith.remsi %128, %131 : vector<96x1xi32>
    %c0_i32_82 = arith.constant 0 : i32
    %133 = vector.broadcast %c0_i32_82 : i32 to vector<96x1xi32>
    %134 = arith.cmpi ne, %132, %133 : vector<96x1xi32>
    %c0_i32_83 = arith.constant 0 : i32
    %135 = vector.broadcast %c0_i32_83 : i32 to vector<96x1xi32>
    %136 = arith.cmpi slt, %132, %135 : vector<96x1xi32>
    %c0_i32_84 = arith.constant 0 : i32
    %137 = arith.cmpi slt, %130, %c0_i32_84 : i32
    %138 = vector.broadcast %137 : i1 to vector<96x1xi1>
    %139 = vector.broadcast %138 : vector<96x1xi1> to vector<96x1xi1>
    %140 = arith.xori %136, %139 : vector<96x1xi1>
    %141 = arith.andi %140, %134 : vector<96x1xi1>
    %142 = vector.broadcast %130 : i32 to vector<96x1xi32>
    %143 = arith.addi %132, %142 : vector<96x1xi32>
    %144 = arith.select %141, %143, %132 : vector<96x1xi1>, vector<96x1xi32>
    %c16_i32_85 = arith.constant 16 : i32
    %145 = vector.broadcast %c16_i32_85 : i32 to vector<96x1xi32>
    %146 = arith.cmpi slt, %144, %145 : vector<96x1xi32>
    %cst_86 = arith.constant 0.000000e+00 : f32
    %147 = vector.shape_cast %146 : vector<96x1xi1> to vector<96x1xi1>
    %148 = vector.broadcast %147 : vector<96x1xi1> to vector<96x256xi1>
    %149 = vector.broadcast %cst_86 : f32 to vector<96x256xf32>
    %150 = arith.select %148, %125, %149 : vector<96x256xi1>, vector<96x256xf32>
    %c115_87 = arith.constant 115 : index
    %c0_88 = arith.constant 0 : index
    %151 = vector.load %arg7[%c115_87, %c0_88] : memref<342x256xf32, #tpu.memory_space<vmem>>, vector<96x256xf32>
    tpu.vector_store %arg7[%c115_87, %c0_88], %150 {strides = array<i32>} : memref<342x256xf32, #tpu.memory_space<vmem>>, vector<96x256xf32>,
    %cst_89 = arith.constant 0.000000e+00 : f32
    %152 = vector.broadcast %cst_89 : f32 to vector<96x256xf32>
    %c0_90 = arith.constant 0 : index
    %c192 = arith.constant 192 : index
    %c0_91 = arith.constant 0 : index
    %153 = vector.load %arg1[%c0_90, %c192, %c0_91] : memref<1x342x128xf32, #tpu.memory_space<vmem>>, vector<1x96x128xf32>
    %154 = vector.shape_cast %153 : vector<1x96x128xf32> to vector<96x128xf32>
    %155 = arith.truncf %154 : vector<96x128xf32> to vector<96x128xbf16>
    %c0_92 = arith.constant 0 : index
    %c193 = arith.constant 193 : index
    %c0_93 = arith.constant 0 : index
    %156 = vector.load %arg1[%c0_92, %c193, %c0_93] : memref<1x342x128xf32, #tpu.memory_space<vmem>>, vector<1x96x128xf32>
    %157 = vector.shape_cast %156 : vector<1x96x128xf32> to vector<96x128xf32>
    %158 = arith.truncf %157 : vector<96x128xf32> to vector<96x128xbf16>
    %c0_94 = arith.constant 0 : index
    %c194 = arith.constant 194 : index
    %c0_95 = arith.constant 0 : index
    %159 = vector.load %arg1[%c0_94, %c194, %c0_95] : memref<1x342x128xf32, #tpu.memory_space<vmem>>, vector<1x96x128xf32>
    %160 = vector.shape_cast %159 : vector<1x96x128xf32> to vector<96x128xf32>
    %161 = arith.truncf %160 : vector<96x128xf32> to vector<96x128xbf16>
    %162 = tpu.concatenate %155, %158, %161 in 1 : vector<96x128xbf16>, vector<96x128xbf16>, vector<96x128xbf16> -> vector<96x384xbf16>
    %c0_96 = arith.constant 0 : index
    %c0_97 = arith.constant 0 : index
    %c0_98 = arith.constant 0 : index
    %163 = vector.load %arg2[%c0_96, %c0_97, %c0_98] : memref<3x384x256xbf16, #tpu.memory_space<vmem>>, vector<1x384x256xbf16>
    %164 = vector.shape_cast %163 : vector<1x384x256xbf16> to vector<384x256xbf16>
    %cst_99 = arith.constant dense<0.000000e+00> : vector<96x256xf32>
    %165 = tpu.matmul %162, %164, %cst_99 {dimension_numbers = #tpu.dot_dimension_numbers<[1], [0], [0], [1], [0, 0, 1, 1], [], []>} : vector<96x384xbf16>, vector<384x256xbf16>, vector<96x256xf32> -> vector<96x256xf32>
    %166 = arith.addf %152, %165 : vector<96x256xf32>
    %c0_100 = arith.constant 0 : index
    %c210 = arith.constant 210 : index
    %c0_101 = arith.constant 0 : index
    %167 = vector.load %arg1[%c0_100, %c210, %c0_101] : memref<1x342x128xf32, #tpu.memory_space<vmem>>, vector<1x96x128xf32>
    %168 = vector.shape_cast %167 : vector<1x96x128xf32> to vector<96x128xf32>
    %169 = arith.truncf %168 : vector<96x128xf32> to vector<96x128xbf16>
    %c0_102 = arith.constant 0 : index
    %c211 = arith.constant 211 : index
    %c0_103 = arith.constant 0 : index
    %170 = vector.load %arg1[%c0_102, %c211, %c0_103] : memref<1x342x128xf32, #tpu.memory_space<vmem>>, vector<1x96x128xf32>
    %171 = vector.shape_cast %170 : vector<1x96x128xf32> to vector<96x128xf32>
    %172 = arith.truncf %171 : vector<96x128xf32> to vector<96x128xbf16>
    %c0_104 = arith.constant 0 : index
    %c212 = arith.constant 212 : index
    %c0_105 = arith.constant 0 : index
    %173 = vector.load %arg1[%c0_104, %c212, %c0_105] : memref<1x342x128xf32, #tpu.memory_space<vmem>>, vector<1x96x128xf32>
    %174 = vector.shape_cast %173 : vector<1x96x128xf32> to vector<96x128xf32>
    %175 = arith.truncf %174 : vector<96x128xf32> to vector<96x128xbf16>
    %176 = tpu.concatenate %169, %172, %175 in 1 : vector<96x128xbf16>, vector<96x128xbf16>, vector<96x128xbf16> -> vector<96x384xbf16>
    %c1_106 = arith.constant 1 : index
    %c0_107 = arith.constant 0 : index
    %c0_108 = arith.constant 0 : index
    %177 = vector.load %arg2[%c1_106, %c0_107, %c0_108] : memref<3x384x256xbf16, #tpu.memory_space<vmem>>, vector<1x384x256xbf16>
    %178 = vector.shape_cast %177 : vector<1x384x256xbf16> to vector<384x256xbf16>
    %cst_109 = arith.constant dense<0.000000e+00> : vector<96x256xf32>
    %179 = tpu.matmul %176, %178, %cst_109 {dimension_numbers = #tpu.dot_dimension_numbers<[1], [0], [0], [1], [0, 0, 1, 1], [], []>} : vector<96x384xbf16>, vector<384x256xbf16>, vector<96x256xf32> -> vector<96x256xf32>
    %180 = arith.addf %166, %179 : vector<96x256xf32>
    %c0_110 = arith.constant 0 : index
    %c228 = arith.constant 228 : index
    %c0_111 = arith.constant 0 : index
    %181 = vector.load %arg1[%c0_110, %c228, %c0_111] : memref<1x342x128xf32, #tpu.memory_space<vmem>>, vector<1x96x128xf32>
    %182 = vector.shape_cast %181 : vector<1x96x128xf32> to vector<96x128xf32>
    %183 = arith.truncf %182 : vector<96x128xf32> to vector<96x128xbf16>
    %c0_112 = arith.constant 0 : index
    %c229 = arith.constant 229 : index
    %c0_113 = arith.constant 0 : index
    %184 = vector.load %arg1[%c0_112, %c229, %c0_113] : memref<1x342x128xf32, #tpu.memory_space<vmem>>, vector<1x96x128xf32>
    %185 = vector.shape_cast %184 : vector<1x96x128xf32> to vector<96x128xf32>
    %186 = arith.truncf %185 : vector<96x128xf32> to vector<96x128xbf16>
    %c0_114 = arith.constant 0 : index
    %c230 = arith.constant 230 : index
    %c0_115 = arith.constant 0 : index
    %187 = vector.load %arg1[%c0_114, %c230, %c0_115] : memref<1x342x128xf32, #tpu.memory_space<vmem>>, vector<1x96x128xf32>
    %188 = vector.shape_cast %187 : vector<1x96x128xf32> to vector<96x128xf32>
    %189 = arith.truncf %188 : vector<96x128xf32> to vector<96x128xbf16>
    %190 = tpu.concatenate %183, %186, %189 in 1 : vector<96x128xbf16>, vector<96x128xbf16>, vector<96x128xbf16> -> vector<96x384xbf16>
    %c2_116 = arith.constant 2 : index
    %c0_117 = arith.constant 0 : index
    %c0_118 = arith.constant 0 : index
    %191 = vector.load %arg2[%c2_116, %c0_117, %c0_118] : memref<3x384x256xbf16, #tpu.memory_space<vmem>>, vector<1x384x256xbf16>
    %192 = vector.shape_cast %191 : vector<1x384x256xbf16> to vector<384x256xbf16>
    %cst_119 = arith.constant dense<0.000000e+00> : vector<96x256xf32>
    %193 = tpu.matmul %190, %192, %cst_119 {dimension_numbers = #tpu.dot_dimension_numbers<[1], [0], [0], [1], [0, 0, 1, 1], [], []>} : vector<96x384xbf16>, vector<384x256xbf16>, vector<96x256xf32> -> vector<96x256xf32>
    %194 = arith.addf %180, %193 : vector<96x256xf32>
    %c0_120 = arith.constant 0 : index
    %c0_121 = arith.constant 0 : index
    %195 = vector.load %arg3[%c0_120, %c0_121] : memref<1x256xf32, #tpu.memory_space<vmem>>, vector<1x256xf32>
    %196 = vector.broadcast %195 : vector<1x256xf32> to vector<96x256xf32>
    %197 = arith.addf %194, %196 : vector<96x256xf32>
    %cst_122 = arith.constant 0.000000e+00 : f32
    %198 = vector.broadcast %cst_122 : f32 to vector<96x256xf32>
    %199 = arith.maximumf %197, %198 : vector<96x256xf32>
    %200 = tpu.iota {dimensions = array<i32: 0>} : vector<96x1xi32>
    %c192_i32 = arith.constant 192 : i32
    %201 = vector.broadcast %c192_i32 : i32 to vector<96x1xi32>
    %202 = arith.addi %201, %200 : vector<96x1xi32>
    %c18_i32_123 = arith.constant 18 : i32
    %c0_i32_124 = arith.constant 0 : i32
    %203 = arith.cmpi eq, %c18_i32_123, %c0_i32_124 : i32
    %c1_i32_125 = arith.constant 1 : i32
    %204 = arith.select %203, %c1_i32_125, %c18_i32_123 : i32
    %205 = vector.broadcast %204 : i32 to vector<96x1xi32>
    %206 = arith.remsi %202, %205 : vector<96x1xi32>
    %c0_i32_126 = arith.constant 0 : i32
    %207 = vector.broadcast %c0_i32_126 : i32 to vector<96x1xi32>
    %208 = arith.cmpi ne, %206, %207 : vector<96x1xi32>
    %c0_i32_127 = arith.constant 0 : i32
    %209 = vector.broadcast %c0_i32_127 : i32 to vector<96x1xi32>
    %210 = arith.cmpi slt, %206, %209 : vector<96x1xi32>
    %c0_i32_128 = arith.constant 0 : i32
    %211 = arith.cmpi slt, %204, %c0_i32_128 : i32
    %212 = vector.broadcast %211 : i1 to vector<96x1xi1>
    %213 = vector.broadcast %212 : vector<96x1xi1> to vector<96x1xi1>
    %214 = arith.xori %210, %213 : vector<96x1xi1>
    %215 = arith.andi %214, %208 : vector<96x1xi1>
    %216 = vector.broadcast %204 : i32 to vector<96x1xi32>
    %217 = arith.addi %206, %216 : vector<96x1xi32>
    %218 = arith.select %215, %217, %206 : vector<96x1xi1>, vector<96x1xi32>
    %c16_i32_129 = arith.constant 16 : i32
    %219 = vector.broadcast %c16_i32_129 : i32 to vector<96x1xi32>
    %220 = arith.cmpi slt, %218, %219 : vector<96x1xi32>
    %cst_130 = arith.constant 0.000000e+00 : f32
    %221 = vector.shape_cast %220 : vector<96x1xi1> to vector<96x1xi1>
    %222 = vector.broadcast %221 : vector<96x1xi1> to vector<96x256xi1>
    %223 = vector.broadcast %cst_130 : f32 to vector<96x256xf32>
    %224 = arith.select %222, %199, %223 : vector<96x256xi1>, vector<96x256xf32>
    %c211_131 = arith.constant 211 : index
    %c0_132 = arith.constant 0 : index
    %225 = vector.load %arg7[%c211_131, %c0_132] : memref<342x256xf32, #tpu.memory_space<vmem>>, vector<96x256xf32>
    tpu.vector_store %arg7[%c211_131, %c0_132], %224 {strides = array<i32>} : memref<342x256xf32, #tpu.memory_space<vmem>>, vector<96x256xf32>,
    %cst_133 = arith.constant 0.000000e+00 : f32
    %226 = vector.broadcast %cst_133 : f32 to vector<96x256xf32>
    %c0_134 = arith.constant 0 : index
    %c0_135 = arith.constant 0 : index
    %227 = vector.load %arg7[%c0_134, %c0_135] : memref<342x256xf32, #tpu.memory_space<vmem>>, vector<96x256xf32>
    %c0_136 = arith.constant 0 : index
    %c0_137 = arith.constant 0 : index
    %228 = vector.load %arg4[%c0_136, %c0_137] : memref<9x256xf32, #tpu.memory_space<vmem>>, vector<1x256xf32>
    %229 = vector.broadcast %228 : vector<1x256xf32> to vector<96x256xf32>
    %230 = arith.mulf %227, %229 : vector<96x256xf32>
    %231 = arith.addf %226, %230 : vector<96x256xf32>
    %c1_138 = arith.constant 1 : index
    %c0_139 = arith.constant 0 : index
    %232 = vector.load %arg7[%c1_138, %c0_139] : memref<342x256xf32, #tpu.memory_space<vmem>>, vector<96x256xf32>
    %c1_140 = arith.constant 1 : index
    %c0_141 = arith.constant 0 : index
    %233 = vector.load %arg4[%c1_140, %c0_141] : memref<9x256xf32, #tpu.memory_space<vmem>>, vector<1x256xf32>
    %234 = vector.broadcast %233 : vector<1x256xf32> to vector<96x256xf32>
    %235 = arith.mulf %232, %234 : vector<96x256xf32>
    %236 = arith.addf %231, %235 : vector<96x256xf32>
    %c2_142 = arith.constant 2 : index
    %c0_143 = arith.constant 0 : index
    %237 = vector.load %arg7[%c2_142, %c0_143] : memref<342x256xf32, #tpu.memory_space<vmem>>, vector<96x256xf32>
    %c2_144 = arith.constant 2 : index
    %c0_145 = arith.constant 0 : index
    %238 = vector.load %arg4[%c2_144, %c0_145] : memref<9x256xf32, #tpu.memory_space<vmem>>, vector<1x256xf32>
    %239 = vector.broadcast %238 : vector<1x256xf32> to vector<96x256xf32>
    %240 = arith.mulf %237, %239 : vector<96x256xf32>
    %241 = arith.addf %236, %240 : vector<96x256xf32>
    %c18_146 = arith.constant 18 : index
    %c0_147 = arith.constant 0 : index
    %242 = vector.load %arg7[%c18_146, %c0_147] : memref<342x256xf32, #tpu.memory_space<vmem>>, vector<96x256xf32>
    %c3 = arith.constant 3 : index
    %c0_148 = arith.constant 0 : index
    %243 = vector.load %arg4[%c3, %c0_148] : memref<9x256xf32, #tpu.memory_space<vmem>>, vector<1x256xf32>
    %244 = vector.broadcast %243 : vector<1x256xf32> to vector<96x256xf32>
    %245 = arith.mulf %242, %244 : vector<96x256xf32>
    %246 = arith.addf %241, %245 : vector<96x256xf32>
    %c19_149 = arith.constant 19 : index
    %c0_150 = arith.constant 0 : index
    %247 = vector.load %arg7[%c19_149, %c0_150] : memref<342x256xf32, #tpu.memory_space<vmem>>, vector<96x256xf32>
    %c4 = arith.constant 4 : index
    %c0_151 = arith.constant 0 : index
    %248 = vector.load %arg4[%c4, %c0_151] : memref<9x256xf32, #tpu.memory_space<vmem>>, vector<1x256xf32>
    %249 = vector.broadcast %248 : vector<1x256xf32> to vector<96x256xf32>
    %250 = arith.mulf %247, %249 : vector<96x256xf32>
    %251 = arith.addf %246, %250 : vector<96x256xf32>
    %c20_152 = arith.constant 20 : index
    %c0_153 = arith.constant 0 : index
    %252 = vector.load %arg7[%c20_152, %c0_153] : memref<342x256xf32, #tpu.memory_space<vmem>>, vector<96x256xf32>
    %c5 = arith.constant 5 : index
    %c0_154 = arith.constant 0 : index
    %253 = vector.load %arg4[%c5, %c0_154] : memref<9x256xf32, #tpu.memory_space<vmem>>, vector<1x256xf32>
    %254 = vector.broadcast %253 : vector<1x256xf32> to vector<96x256xf32>
    %255 = arith.mulf %252, %254 : vector<96x256xf32>
    %256 = arith.addf %251, %255 : vector<96x256xf32>
    %c36_155 = arith.constant 36 : index
    %c0_156 = arith.constant 0 : index
    %257 = vector.load %arg7[%c36_155, %c0_156] : memref<342x256xf32, #tpu.memory_space<vmem>>, vector<96x256xf32>
    %c6 = arith.constant 6 : index
    %c0_157 = arith.constant 0 : index
    %258 = vector.load %arg4[%c6, %c0_157] : memref<9x256xf32, #tpu.memory_space<vmem>>, vector<1x256xf32>
    %259 = vector.broadcast %258 : vector<1x256xf32> to vector<96x256xf32>
    %260 = arith.mulf %257, %259 : vector<96x256xf32>
    %261 = arith.addf %256, %260 : vector<96x256xf32>
    %c37_158 = arith.constant 37 : index
    %c0_159 = arith.constant 0 : index
    %262 = vector.load %arg7[%c37_158, %c0_159] : memref<342x256xf32, #tpu.memory_space<vmem>>, vector<96x256xf32>
    %c7 = arith.constant 7 : index
    %c0_160 = arith.constant 0 : index
    %263 = vector.load %arg4[%c7, %c0_160] : memref<9x256xf32, #tpu.memory_space<vmem>>, vector<1x256xf32>
    %264 = vector.broadcast %263 : vector<1x256xf32> to vector<96x256xf32>
    %265 = arith.mulf %262, %264 : vector<96x256xf32>
    %266 = arith.addf %261, %265 : vector<96x256xf32>
    %c38_161 = arith.constant 38 : index
    %c0_162 = arith.constant 0 : index
    %267 = vector.load %arg7[%c38_161, %c0_162] : memref<342x256xf32, #tpu.memory_space<vmem>>, vector<96x256xf32>
    %c8 = arith.constant 8 : index
    %c0_163 = arith.constant 0 : index
    %268 = vector.load %arg4[%c8, %c0_163] : memref<9x256xf32, #tpu.memory_space<vmem>>, vector<1x256xf32>
    %269 = vector.broadcast %268 : vector<1x256xf32> to vector<96x256xf32>
    %270 = arith.mulf %267, %269 : vector<96x256xf32>
    %271 = arith.addf %266, %270 : vector<96x256xf32>
    %cst_164 = arith.constant dense<0.000000e+00> : vector<96xf32>
    %272 = vector.multi_reduction <add>, %271, %cst_164 [1] : vector<96x256xf32> to vector<96xf32>
    %273 = vector.shape_cast %272 : vector<96xf32> to vector<96x1xf32>
    %c0_165 = arith.constant 0 : index
    %c0_166 = arith.constant 0 : index
    %274 = vector.load %arg5[%c0_165, %c0_166] : memref<1x1xf32, #tpu.memory_space<vmem>>, vector<1x1xf32>
    %275 = vector.broadcast %274 : vector<1x1xf32> to vector<96x1xf32>
    %276 = arith.addf %273, %275 : vector<96x1xf32>
    %277 = math.tanh %276 : vector<96x1xf32>
    %c0_167 = arith.constant 0 : index
    %c0_168 = arith.constant 0 : index
    %c0_169 = arith.constant 0 : index
    %278 = vector.load %arg6[%c0_167, %c0_168, %c0_169] : memref<1x288x1xf32, #tpu.memory_space<vmem>>, vector<1x96x1xf32>
    %279 = vector.shape_cast %278 : vector<1x96x1xf32> to vector<96x1xf32>
    %280 = vector.shape_cast %277 : vector<96x1xf32> to vector<1x96x1xf32>
    tpu.vector_store %arg6[%c0_167, %c0_168, %c0_169], %280 {strides = array<i32>} : memref<1x288x1xf32, #tpu.memory_space<vmem>>, vector<1x96x1xf32>,
    %cst_170 = arith.constant 0.000000e+00 : f32
    %281 = vector.broadcast %cst_170 : f32 to vector<96x256xf32>
    %c96_171 = arith.constant 96 : index
    %c0_172 = arith.constant 0 : index
    %282 = vector.load %arg7[%c96_171, %c0_172] : memref<342x256xf32, #tpu.memory_space<vmem>>, vector<96x256xf32>
    %c0_173 = arith.constant 0 : index
    %c0_174 = arith.constant 0 : index
    %283 = vector.load %arg4[%c0_173, %c0_174] : memref<9x256xf32, #tpu.memory_space<vmem>>, vector<1x256xf32>
    %284 = vector.broadcast %283 : vector<1x256xf32> to vector<96x256xf32>
    %285 = arith.mulf %282, %284 : vector<96x256xf32>
    %286 = arith.addf %281, %285 : vector<96x256xf32>
    %c97_175 = arith.constant 97 : index
    %c0_176 = arith.constant 0 : index
    %287 = vector.load %arg7[%c97_175, %c0_176] : memref<342x256xf32, #tpu.memory_space<vmem>>, vector<96x256xf32>
    %c1_177 = arith.constant 1 : index
    %c0_178 = arith.constant 0 : index
    %288 = vector.load %arg4[%c1_177, %c0_178] : memref<9x256xf32, #tpu.memory_space<vmem>>, vector<1x256xf32>
    %289 = vector.broadcast %288 : vector<1x256xf32> to vector<96x256xf32>
    %290 = arith.mulf %287, %289 : vector<96x256xf32>
    %291 = arith.addf %286, %290 : vector<96x256xf32>
    %c98_179 = arith.constant 98 : index
    %c0_180 = arith.constant 0 : index
    %292 = vector.load %arg7[%c98_179, %c0_180] : memref<342x256xf32, #tpu.memory_space<vmem>>, vector<96x256xf32>
    %c2_181 = arith.constant 2 : index
    %c0_182 = arith.constant 0 : index
    %293 = vector.load %arg4[%c2_181, %c0_182] : memref<9x256xf32, #tpu.memory_space<vmem>>, vector<1x256xf32>
    %294 = vector.broadcast %293 : vector<1x256xf32> to vector<96x256xf32>
    %295 = arith.mulf %292, %294 : vector<96x256xf32>
    %296 = arith.addf %291, %295 : vector<96x256xf32>
    %c114_183 = arith.constant 114 : index
    %c0_184 = arith.constant 0 : index
    %297 = vector.load %arg7[%c114_183, %c0_184] : memref<342x256xf32, #tpu.memory_space<vmem>>, vector<96x256xf32>
    %c3_185 = arith.constant 3 : index
    %c0_186 = arith.constant 0 : index
    %298 = vector.load %arg4[%c3_185, %c0_186] : memref<9x256xf32, #tpu.memory_space<vmem>>, vector<1x256xf32>
    %299 = vector.broadcast %298 : vector<1x256xf32> to vector<96x256xf32>
    %300 = arith.mulf %297, %299 : vector<96x256xf32>
    %301 = arith.addf %296, %300 : vector<96x256xf32>
    %c115_187 = arith.constant 115 : index
    %c0_188 = arith.constant 0 : index
    %302 = vector.load %arg7[%c115_187, %c0_188] : memref<342x256xf32, #tpu.memory_space<vmem>>, vector<96x256xf32>
    %c4_189 = arith.constant 4 : index
    %c0_190 = arith.constant 0 : index
    %303 = vector.load %arg4[%c4_189, %c0_190] : memref<9x256xf32, #tpu.memory_space<vmem>>, vector<1x256xf32>
    %304 = vector.broadcast %303 : vector<1x256xf32> to vector<96x256xf32>
    %305 = arith.mulf %302, %304 : vector<96x256xf32>
    %306 = arith.addf %301, %305 : vector<96x256xf32>
    %c116_191 = arith.constant 116 : index
    %c0_192 = arith.constant 0 : index
    %307 = vector.load %arg7[%c116_191, %c0_192] : memref<342x256xf32, #tpu.memory_space<vmem>>, vector<96x256xf32>
    %c5_193 = arith.constant 5 : index
    %c0_194 = arith.constant 0 : index
    %308 = vector.load %arg4[%c5_193, %c0_194] : memref<9x256xf32, #tpu.memory_space<vmem>>, vector<1x256xf32>
    %309 = vector.broadcast %308 : vector<1x256xf32> to vector<96x256xf32>
    %310 = arith.mulf %307, %309 : vector<96x256xf32>
    %311 = arith.addf %306, %310 : vector<96x256xf32>
    %c132_195 = arith.constant 132 : index
    %c0_196 = arith.constant 0 : index
    %312 = vector.load %arg7[%c132_195, %c0_196] : memref<342x256xf32, #tpu.memory_space<vmem>>, vector<96x256xf32>
    %c6_197 = arith.constant 6 : index
    %c0_198 = arith.constant 0 : index
    %313 = vector.load %arg4[%c6_197, %c0_198] : memref<9x256xf32, #tpu.memory_space<vmem>>, vector<1x256xf32>
    %314 = vector.broadcast %313 : vector<1x256xf32> to vector<96x256xf32>
    %315 = arith.mulf %312, %314 : vector<96x256xf32>
    %316 = arith.addf %311, %315 : vector<96x256xf32>
    %c133_199 = arith.constant 133 : index
    %c0_200 = arith.constant 0 : index
    %317 = vector.load %arg7[%c133_199, %c0_200] : memref<342x256xf32, #tpu.memory_space<vmem>>, vector<96x256xf32>
    %c7_201 = arith.constant 7 : index
    %c0_202 = arith.constant 0 : index
    %318 = vector.load %arg4[%c7_201, %c0_202] : memref<9x256xf32, #tpu.memory_space<vmem>>, vector<1x256xf32>
    %319 = vector.broadcast %318 : vector<1x256xf32> to vector<96x256xf32>
    %320 = arith.mulf %317, %319 : vector<96x256xf32>
    %321 = arith.addf %316, %320 : vector<96x256xf32>
    %c134_203 = arith.constant 134 : index
    %c0_204 = arith.constant 0 : index
    %322 = vector.load %arg7[%c134_203, %c0_204] : memref<342x256xf32, #tpu.memory_space<vmem>>, vector<96x256xf32>
    %c8_205 = arith.constant 8 : index
    %c0_206 = arith.constant 0 : index
    %323 = vector.load %arg4[%c8_205, %c0_206] : memref<9x256xf32, #tpu.memory_space<vmem>>, vector<1x256xf32>
    %324 = vector.broadcast %323 : vector<1x256xf32> to vector<96x256xf32>
    %325 = arith.mulf %322, %324 : vector<96x256xf32>
    %326 = arith.addf %321, %325 : vector<96x256xf32>
    %cst_207 = arith.constant dense<0.000000e+00> : vector<96xf32>
    %327 = vector.multi_reduction <add>, %326, %cst_207 [1] : vector<96x256xf32> to vector<96xf32>
    %328 = vector.shape_cast %327 : vector<96xf32> to vector<96x1xf32>
    %c0_208 = arith.constant 0 : index
    %c0_209 = arith.constant 0 : index
    %329 = vector.load %arg5[%c0_208, %c0_209] : memref<1x1xf32, #tpu.memory_space<vmem>>, vector<1x1xf32>
    %330 = vector.broadcast %329 : vector<1x1xf32> to vector<96x1xf32>
    %331 = arith.addf %328, %330 : vector<96x1xf32>
    %332 = math.tanh %331 : vector<96x1xf32>
    %c0_210 = arith.constant 0 : index
    %c96_211 = arith.constant 96 : index
    %c0_212 = arith.constant 0 : index
    %333 = vector.load %arg6[%c0_210, %c96_211, %c0_212] : memref<1x288x1xf32, #tpu.memory_space<vmem>>, vector<1x96x1xf32>
    %334 = vector.shape_cast %333 : vector<1x96x1xf32> to vector<96x1xf32>
    %335 = vector.shape_cast %332 : vector<96x1xf32> to vector<1x96x1xf32>
    tpu.vector_store %arg6[%c0_210, %c96_211, %c0_212], %335 {strides = array<i32>} : memref<1x288x1xf32, #tpu.memory_space<vmem>>, vector<1x96x1xf32>,
    %cst_213 = arith.constant 0.000000e+00 : f32
    %336 = vector.broadcast %cst_213 : f32 to vector<96x256xf32>
    %c192_214 = arith.constant 192 : index
    %c0_215 = arith.constant 0 : index
    %337 = vector.load %arg7[%c192_214, %c0_215] : memref<342x256xf32, #tpu.memory_space<vmem>>, vector<96x256xf32>
    %c0_216 = arith.constant 0 : index
    %c0_217 = arith.constant 0 : index
    %338 = vector.load %arg4[%c0_216, %c0_217] : memref<9x256xf32, #tpu.memory_space<vmem>>, vector<1x256xf32>
    %339 = vector.broadcast %338 : vector<1x256xf32> to vector<96x256xf32>
    %340 = arith.mulf %337, %339 : vector<96x256xf32>
    %341 = arith.addf %336, %340 : vector<96x256xf32>
    %c193_218 = arith.constant 193 : index
    %c0_219 = arith.constant 0 : index
    %342 = vector.load %arg7[%c193_218, %c0_219] : memref<342x256xf32, #tpu.memory_space<vmem>>, vector<96x256xf32>
    %c1_220 = arith.constant 1 : index
    %c0_221 = arith.constant 0 : index
    %343 = vector.load %arg4[%c1_220, %c0_221] : memref<9x256xf32, #tpu.memory_space<vmem>>, vector<1x256xf32>
    %344 = vector.broadcast %343 : vector<1x256xf32> to vector<96x256xf32>
    %345 = arith.mulf %342, %344 : vector<96x256xf32>
    %346 = arith.addf %341, %345 : vector<96x256xf32>
    %c194_222 = arith.constant 194 : index
    %c0_223 = arith.constant 0 : index
    %347 = vector.load %arg7[%c194_222, %c0_223] : memref<342x256xf32, #tpu.memory_space<vmem>>, vector<96x256xf32>
    %c2_224 = arith.constant 2 : index
    %c0_225 = arith.constant 0 : index
    %348 = vector.load %arg4[%c2_224, %c0_225] : memref<9x256xf32, #tpu.memory_space<vmem>>, vector<1x256xf32>
    %349 = vector.broadcast %348 : vector<1x256xf32> to vector<96x256xf32>
    %350 = arith.mulf %347, %349 : vector<96x256xf32>
    %351 = arith.addf %346, %350 : vector<96x256xf32>
    %c210_226 = arith.constant 210 : index
    %c0_227 = arith.constant 0 : index
    %352 = vector.load %arg7[%c210_226, %c0_227] : memref<342x256xf32, #tpu.memory_space<vmem>>, vector<96x256xf32>
    %c3_228 = arith.constant 3 : index
    %c0_229 = arith.constant 0 : index
    %353 = vector.load %arg4[%c3_228, %c0_229] : memref<9x256xf32, #tpu.memory_space<vmem>>, vector<1x256xf32>
    %354 = vector.broadcast %353 : vector<1x256xf32> to vector<96x256xf32>
    %355 = arith.mulf %352, %354 : vector<96x256xf32>
    %356 = arith.addf %351, %355 : vector<96x256xf32>
    %c211_230 = arith.constant 211 : index
    %c0_231 = arith.constant 0 : index
    %357 = vector.load %arg7[%c211_230, %c0_231] : memref<342x256xf32, #tpu.memory_space<vmem>>, vector<96x256xf32>
    %c4_232 = arith.constant 4 : index
    %c0_233 = arith.constant 0 : index
    %358 = vector.load %arg4[%c4_232, %c0_233] : memref<9x256xf32, #tpu.memory_space<vmem>>, vector<1x256xf32>
    %359 = vector.broadcast %358 : vector<1x256xf32> to vector<96x256xf32>
    %360 = arith.mulf %357, %359 : vector<96x256xf32>
    %361 = arith.addf %356, %360 : vector<96x256xf32>
    %c212_234 = arith.constant 212 : index
    %c0_235 = arith.constant 0 : index
    %362 = vector.load %arg7[%c212_234, %c0_235] : memref<342x256xf32, #tpu.memory_space<vmem>>, vector<96x256xf32>
    %c5_236 = arith.constant 5 : index
    %c0_237 = arith.constant 0 : index
    %363 = vector.load %arg4[%c5_236, %c0_237] : memref<9x256xf32, #tpu.memory_space<vmem>>, vector<1x256xf32>
    %364 = vector.broadcast %363 : vector<1x256xf32> to vector<96x256xf32>
    %365 = arith.mulf %362, %364 : vector<96x256xf32>
    %366 = arith.addf %361, %365 : vector<96x256xf32>
    %c228_238 = arith.constant 228 : index
    %c0_239 = arith.constant 0 : index
    %367 = vector.load %arg7[%c228_238, %c0_239] : memref<342x256xf32, #tpu.memory_space<vmem>>, vector<96x256xf32>
    %c6_240 = arith.constant 6 : index
    %c0_241 = arith.constant 0 : index
    %368 = vector.load %arg4[%c6_240, %c0_241] : memref<9x256xf32, #tpu.memory_space<vmem>>, vector<1x256xf32>
    %369 = vector.broadcast %368 : vector<1x256xf32> to vector<96x256xf32>
    %370 = arith.mulf %367, %369 : vector<96x256xf32>
    %371 = arith.addf %366, %370 : vector<96x256xf32>
    %c229_242 = arith.constant 229 : index
    %c0_243 = arith.constant 0 : index
    %372 = vector.load %arg7[%c229_242, %c0_243] : memref<342x256xf32, #tpu.memory_space<vmem>>, vector<96x256xf32>
    %c7_244 = arith.constant 7 : index
    %c0_245 = arith.constant 0 : index
    %373 = vector.load %arg4[%c7_244, %c0_245] : memref<9x256xf32, #tpu.memory_space<vmem>>, vector<1x256xf32>
    %374 = vector.broadcast %373 : vector<1x256xf32> to vector<96x256xf32>
    %375 = arith.mulf %372, %374 : vector<96x256xf32>
    %376 = arith.addf %371, %375 : vector<96x256xf32>
    %c230_246 = arith.constant 230 : index
    %c0_247 = arith.constant 0 : index
    %377 = vector.load %arg7[%c230_246, %c0_247] : memref<342x256xf32, #tpu.memory_space<vmem>>, vector<96x256xf32>
    %c8_248 = arith.constant 8 : index
    %c0_249 = arith.constant 0 : index
    %378 = vector.load %arg4[%c8_248, %c0_249] : memref<9x256xf32, #tpu.memory_space<vmem>>, vector<1x256xf32>
    %379 = vector.broadcast %378 : vector<1x256xf32> to vector<96x256xf32>
    %380 = arith.mulf %377, %379 : vector<96x256xf32>
    %381 = arith.addf %376, %380 : vector<96x256xf32>
    %cst_250 = arith.constant dense<0.000000e+00> : vector<96xf32>
    %382 = vector.multi_reduction <add>, %381, %cst_250 [1] : vector<96x256xf32> to vector<96xf32>
    %383 = vector.shape_cast %382 : vector<96xf32> to vector<96x1xf32>
    %c0_251 = arith.constant 0 : index
    %c0_252 = arith.constant 0 : index
    %384 = vector.load %arg5[%c0_251, %c0_252] : memref<1x1xf32, #tpu.memory_space<vmem>>, vector<1x1xf32>
    %385 = vector.broadcast %384 : vector<1x1xf32> to vector<96x1xf32>
    %386 = arith.addf %383, %385 : vector<96x1xf32>
    %387 = math.tanh %386 : vector<96x1xf32>
    %c0_253 = arith.constant 0 : index
    %c192_254 = arith.constant 192 : index
    %c0_255 = arith.constant 0 : index
    %388 = vector.load %arg6[%c0_253, %c192_254, %c0_255] : memref<1x288x1xf32, #tpu.memory_space<vmem>>, vector<1x96x1xf32>
    %389 = vector.shape_cast %388 : vector<1x96x1xf32> to vector<96x1xf32>
    %390 = vector.shape_cast %387 : vector<96x1xf32> to vector<1x96x1xf32>
    tpu.vector_store %arg6[%c0_253, %c192_254, %c0_255], %390 {strides = array<i32>} : memref<1x288x1xf32, #tpu.memory_space<vmem>>, vector<1x96x1xf32>,
    return
  }
  func.func @transform_0(%arg0: i32) -> (i32, i32, i32) {
    %c0_i32 = arith.constant 0 : i32
    %c0_i32_0 = arith.constant 0 : i32
    %c0_i32_1 = arith.constant 0 : i32
    return %arg0, %c0_i32, %c0_i32_0 : i32, i32, i32
  }
  func.func @transform_1(%arg0: i32) -> (i32, i32, i32) {
    %c0_i32 = arith.constant 0 : i32
    %c0_i32_0 = arith.constant 0 : i32
    %c0_i32_1 = arith.constant 0 : i32
    %c0_i32_2 = arith.constant 0 : i32
    return %c0_i32, %c0_i32_0, %c0_i32_1 : i32, i32, i32
  }
  func.func @transform_2(%arg0: i32) -> (i32, i32) {
    %c0_i32 = arith.constant 0 : i32
    %c0_i32_0 = arith.constant 0 : i32
    %c0_i32_1 = arith.constant 0 : i32
    return %c0_i32, %c0_i32_0 : i32, i32
  }
  func.func @transform_3(%arg0: i32) -> (i32, i32) {
    %c0_i32 = arith.constant 0 : i32
    %c0_i32_0 = arith.constant 0 : i32
    %c0_i32_1 = arith.constant 0 : i32
    return %c0_i32, %c0_i32_0 : i32, i32
  }
  func.func @transform_4(%arg0: i32) -> (i32, i32) {
    %c0_i32 = arith.constant 0 : i32
    %c0_i32_0 = arith.constant 0 : i32
    %c0_i32_1 = arith.constant 0 : i32
    return %c0_i32, %c0_i32_0 : i32, i32
  }
  func.func @transform_5(%arg0: i32) -> (i32, i32, i32) {
    %c0_i32 = arith.constant 0 : i32
    %c0_i32_0 = arith.constant 0 : i32
    %c0_i32_1 = arith.constant 0 : i32
    return %arg0, %c0_i32, %c0_i32_0 : i32, i32, i32
  }
}

</mosaic_0001>

<llo_original>
// kernel: offset_head_forward.1
$region0: #{offset_head_forward.1}
  #allocation0 [shape = 'u32[]', space=smem, size = 0x4, offset = 0x4, fixed_abs, tag = 'smem constant byte address 0x4 - core index']
  #allocation1 [shape = 'u32[144,128]{1,0:T(1,128)}', space=vmem, size = 0x12000, scoped, tag = 'internal scratch']
  #allocation2 [shape = 'f32[342,256]{1,0:T(8,128)}', space=vmem, size = 0x56000, scoped, tag = 'scratch operand']
  #allocation3 [shape = 'f32[1,1]{1,0:T(1,128)S(1)}', space=vmem, size = 0x200, scoped, tag = 'scoped memory for offset_head_forward.1']
  %s0 = inlined_call_operand.vmem [shape: f32[2,342,128], index: 0, kind: input, shape index: {}]
  %s1 = inlined_call_operand.vmem [shape: bf16[3,384,256], index: 1, kind: input, shape index: {}]
  %s2 = inlined_call_operand.vmem [shape: f32[1,256], index: 2, kind: input, shape index: {}]
  %s3 = inlined_call_operand.vmem [shape: f32[9,256], index: 3, kind: input, shape index: {}]
  %s4 = inlined_call_operand.<no memory space> [shape: f32[1,1], index: 4, kind: input, shape index: {}]
  %s5 = inlined_call_operand.vmem [shape: f32[2,288,1], index: 5, kind: output, shape index: {}]
  %s6 = sld [smem:[#allocation0]]
  $region53: #{offset_head_forward.1} parent=0
    _
  %s8 = ssub.s32 1, %s6
  %s9 = scalar_select 0, %s8, %s6
  %v10 = vstv %s4
  %11 = vst [vmem:[#allocation3] sm:$0x1] %v10
  loop: start=0, step=1, limit=4
  $region2: #{offset_head_forward.1} parent=0 // loop_pre_header
    _
  $region3: #{offset_head_forward.1} parent=0 // loop_header
    %s13 = sphi 0, %s17
    %p14 = scmp.ge.s32.totalorder %s13, 4
    %s23 = sphi 0, %s25
    %s26 = sphi 0, %s23
    %s27 = sphi 0, %s26
    %s43 = sphi 0, %s27
    %s47 = sphi 0, %s47
    %s49 = sphi 0, %s47
    %s50 = sphi 0, %s49
    %s64 = sphi 0, %s50
    %s68 = sphi 0, %s68
    %s70 = sphi 0, %s68
    %s71 = sphi 0, %s70
    %s85 = sphi 0, %s71
    %s89 = sphi 0, %s89
    %s91 = sphi 0, %s89
    %s92 = sphi 0, %s91
    %s106 = sphi 0, %s92
    %s110 = sphi 0, %s110
    %s112 = sphi 0, %s110
    %s113 = sphi 0, %s112
    %s127 = sphi 0, %s113
    %s133 = sphi 0, %s135
    %s136 = sphi 0, %s133
    %s137 = sphi 0, %s136
    %s153 = sphi 0, %s137
  $region4: #{offset_head_forward.1} parent=0 // loop_header_branch
    %16 = sbr.rel (%p14) target = $region8
  $region5: #{offset_head_forward.1} parent=0 // loop_body
    %s18 = ssub.s32 %s13, 1
    %s19 = ssub.s32 %s13, 2
    %s20 = sadd.s32 %s13, 1
    %s21 = ssub.s32 %s13, %s20
    %p22 = scmp.eq.s32.totalorder %s21, 0
    %s24 = sadd.s32 %s23, 1
    %s25 = scalar_select %p22, %s23, %s24
    %p28 = pneg %p22
    %p29 = scmp.eq.s32.totalorder %s13, 1
    %p30 = por %p28, %p29
    %p31 = scmp.ne.s32.totalorder %s23, %s26
    %p32 = scmp.eq.s32.totalorder %s13, 0
    %p33 = por %p31, %p32
    %p34 = scmp.ne.s32.totalorder %s23, %s26
    %p35 = scmp.eq.s32.totalorder %s18, 1
    %p36 = por %p34, %p35
    %p37 = scmp.ne.s32.totalorder %s26, %s27
    %p38 = scmp.eq.s32.totalorder %s18, 0
    %p39 = por %p37, %p38
    %p40 = scmp.ne.s32.totalorder %s26, %s27
    %p41 = scmp.eq.s32.totalorder %s19, 1
    %p42 = por %p40, %p41
    %p44 = scmp.ne.s32.totalorder %s27, %s43
    %p45 = scmp.eq.s32.totalorder %s19, 0
    %p46 = por %p44, %p45
    %s48 = sadd.s32 %s47, 1
    %p51 = scmp.eq.s32.totalorder %s13, 1
    %p52 = scmp.ne.s32.totalorder %s47, %s49
    %p53 = scmp.eq.s32.totalorder %s13, 0
    %p54 = por %p52, %p53
    %p55 = scmp.ne.s32.totalorder %s47, %s49
    %p56 = scmp.eq.s32.totalorder %s18, 1
    %p57 = por %p55, %p56
    %p58 = scmp.ne.s32.totalorder %s49, %s50
    %p59 = scmp.eq.s32.totalorder %s18, 0
    %p60 = por %p58, %p59
    %p61 = scmp.ne.s32.totalorder %s49, %s50
    %p62 = scmp.eq.s32.totalorder %s19, 1
    %p63 = por %p61, %p62
    %p65 = scmp.ne.s32.totalorder %s50, %s64
    %p66 = scmp.eq.s32.totalorder %s19, 0
    %p67 = por %p65, %p66
    %s69 = sadd.s32 %s68, 1
    %p72 = scmp.eq.s32.totalorder %s13, 1
    %p73 = scmp.ne.s32.totalorder %s68, %s70
    %p74 = scmp.eq.s32.totalorder %s13, 0
    %p75 = por %p73, %p74
    %p76 = scmp.ne.s32.totalorder %s68, %s70
    %p77 = scmp.eq.s32.totalorder %s18, 1
    %p78 = por %p76, %p77
    %p79 = scmp.ne.s32.totalorder %s70, %s71
    %p80 = scmp.eq.s32.totalorder %s18, 0
    %p81 = por %p79, %p80
    %p82 = scmp.ne.s32.totalorder %s70, %s71
    %p83 = scmp.eq.s32.totalorder %s19, 1
    %p84 = por %p82, %p83
    %p86 = scmp.ne.s32.totalorder %s71, %s85
    %p87 = scmp.eq.s32.totalorder %s19, 0
    %p88 = por %p86, %p87
    %s90 = sadd.s32 %s89, 1
    %p93 = scmp.eq.s32.totalorder %s13, 1
    %p94 = scmp.ne.s32.totalorder %s89, %s91
    %p95 = scmp.eq.s32.totalorder %s13, 0
    %p96 = por %p94, %p95
    %p97 = scmp.ne.s32.totalorder %s89, %s91
    %p98 = scmp.eq.s32.totalorder %s18, 1
    %p99 = por %p97, %p98
    %p100 = scmp.ne.s32.totalorder %s91, %s92
    %p101 = scmp.eq.s32.totalorder %s18, 0
    %p102 = por %p100, %p101
    %p103 = scmp.ne.s32.totalorder %s91, %s92
    %p104 = scmp.eq.s32.totalorder %s19, 1
    %p105 = por %p103, %p104
    %p107 = scmp.ne.s32.totalorder %s92, %s106
    %p108 = scmp.eq.s32.totalorder %s19, 0
    %p109 = por %p107, %p108
    %s111 = sadd.s32 %s110, 1
    %p114 = scmp.eq.s32.totalorder %s13, 1
    %p115 = scmp.ne.s32.totalorder %s110, %s112
    %p116 = scmp.eq.s32.totalorder %s13, 0
    %p117 = por %p115, %p116
    %p118 = scmp.ne.s32.totalorder %s110, %s112
    %p119 = scmp.eq.s32.totalorder %s18, 1
    %p120 = por %p118, %p119
    %p121 = scmp.ne.s32.totalorder %s112, %s113
    %p122 = scmp.eq.s32.totalorder %s18, 0
    %p123 = por %p121, %p122
    %p124 = scmp.ne.s32.totalorder %s112, %s113
    %p125 = scmp.eq.s32.totalorder %s19, 1
    %p126 = por %p124, %p125
    %p128 = scmp.ne.s32.totalorder %s113, %s127
    %p129 = scmp.eq.s32.totalorder %s19, 0
    %p130 = por %p128, %p129
    %s131 = ssub.s32 %s13, %s20
    %p132 = scmp.eq.s32.totalorder %s131, 0
    %s134 = sadd.s32 %s133, 1
    %s135 = scalar_select %p132, %s133, %s134
    %p138 = pneg %p132
    %p139 = scmp.eq.s32.totalorder %s13, 1
    %p140 = por %p138, %p139
    %p141 = scmp.ne.s32.totalorder %s133, %s136
    %p142 = scmp.eq.s32.totalorder %s13, 0
    %p143 = por %p141, %p142
    %p144 = scmp.ne.s32.totalorder %s133, %s136
    %p145 = scmp.eq.s32.totalorder %s18, 1
    %p146 = por %p144, %p145
    %p147 = scmp.ne.s32.totalorder %s136, %s137
    %p148 = scmp.eq.s32.totalorder %s18, 0
    %p149 = por %p147, %p148
    %p150 = scmp.ne.s32.totalorder %s136, %s137
    %p151 = scmp.eq.s32.totalorder %s19, 1
    %p152 = por %p150, %p151
    %p154 = scmp.ne.s32.totalorder %s137, %s153
    %p155 = scmp.eq.s32.totalorder %s19, 0
    %p156 = por %p154, %p155
    %p157 = scmp.le.s32.totalorder 1, %s13
    %p158 = scmp.lt.s32.totalorder %s13, 3
    %p159 = pnand %p157, %p158
    %p160 = pneg %p159
    // Predicated region
    $region9: #{offset_head_forward.1} parent=5 // pred_check
      _
    $region10: #{offset_head_forward.1} parent=5 // pred_check_branch
      %162 = sbr.rel (%p159) target = $region12
    $region11: #{offset_head_forward.1} parent=5 // pred_region
      %s163 = ssub.s32 %s13, 1
      // Predicated region
      $region13: #{offset_head_forward.1} parent=11 // pred_check
        %p164 = pneg %p60
      $region14: #{offset_head_forward.1} parent=11 // pred_check_branch
        %166 = sbr.rel (%p164) target = $region16
      $region15: #{offset_head_forward.1} parent=11 // pred_region
        _
      $region16: #{offset_head_forward.1} parent=11 // pred_fallthru
        _
      // Predicated region
      $region17: #{offset_head_forward.1} parent=11 // pred_check
        %p167 = pneg %p81
      $region18: #{offset_head_forward.1} parent=11 // pred_check_branch
        %169 = sbr.rel (%p167) target = $region20
      $region19: #{offset_head_forward.1} parent=11 // pred_region
        _
      $region20: #{offset_head_forward.1} parent=11 // pred_fallthru
        _
      // Predicated region
      $region21: #{offset_head_forward.1} parent=11 // pred_check
        %p170 = pneg %p102
      $region22: #{offset_head_forward.1} parent=11 // pred_check_branch
        %172 = sbr.rel (%p170) target = $region24
      $region23: #{offset_head_forward.1} parent=11 // pred_region
        _
      $region24: #{offset_head_forward.1} parent=11 // pred_fallthru
        _
      // Predicated region
      $region25: #{offset_head_forward.1} parent=11 // pred_check
        %p173 = pneg %p123
      $region26: #{offset_head_forward.1} parent=11 // pred_check_branch
        %175 = sbr.rel (%p173) target = $region28
      $region27: #{offset_head_forward.1} parent=11 // pred_region
        _
      $region28: #{offset_head_forward.1} parent=11 // pred_fallthru
        _
    $region12: #{offset_head_forward.1} parent=5 // pred_fallthru
      _
    %p176 = scmp.lt.s32.totalorder %s13, 2
    // Predicated region
    $region29: #{offset_head_forward.1} parent=5 // pred_check
      %p177 = pneg %p176
    $region30: #{offset_head_forward.1} parent=5 // pred_check_branch
      %179 = sbr.rel (%p177) target = $region32
    $region31: #{offset_head_forward.1} parent=5 // pred_region
      // Predicated region
      $region33: #{offset_head_forward.1} parent=31 // pred_check
        %p180 = pneg %p33
      $region34: #{offset_head_forward.1} parent=31 // pred_check_branch
        %182 = sbr.rel (%p180) target = $region36
      $region35: #{offset_head_forward.1} parent=31 // pred_region
        %p183 = scmp.lt.s32.totalorder %s13, 1
        %s184 = scalar_select %p183, %s13, 1
        %s185 = smul.addr %s184, 43
        %s186 = smul.addr %s185, 8
        %s187 = scalar_lea.vmem %s0, %s186
      $region36: #{offset_head_forward.1} parent=31 // pred_fallthru
        _
    $region32: #{offset_head_forward.1} parent=5 // pred_fallthru
      _
    %p188 = scmp.le.s32.totalorder 1, %s13
    %p189 = scmp.lt.s32.totalorder %s13, 3
    %p190 = pnand %p188, %p189
    %p191 = pneg %p190
    // Predicated region
    $region37: #{offset_head_forward.1} parent=5 // pred_check
      _
    $region38: #{offset_head_forward.1} parent=5 // pred_check_branch
      %193 = sbr.rel (%p190) target = $region40
    $region39: #{offset_head_forward.1} parent=5 // pred_region
      %s194 = ssub.s32 %s13, 1
      %p195 = scmp.lt.s32.totalorder %s18, 1
      %s196 = scalar_select %p195, %s18, 1
      %s197 = smul.addr %s196, 43
      %s198 = smul.addr %s197, 8
      %s199 = scalar_lea.vmem %s0, %s198
      %p200 = pneg %p39
      %p201 = pneg %p36
      %p202 = pneg %p60
      %p203 = pneg %p57
      %p204 = pneg %p81
      %p205 = pneg %p78
      %p206 = pneg %p102
      %p207 = pneg %p99
      %p208 = pneg %p123
      %p209 = pneg %p120
      %p210 = pneg %p149
      %p211 = pneg %p146
      %p212 = scmp.lt.s32.totalorder %s18, 1
      %s213 = scalar_select %p212, %s18, 1
      %s214 = smul.addr %s213, 36
      %s215 = smul.addr %s214, 8
      %s216 = scalar_lea.vmem %s5, %s215
      %p217 = scmp.lt.s32.totalorder %s18, 1
      %s218 = scalar_select %p217, %s18, 1
      %s219 = smul.addr %s218, 43
      %s220 = smul.addr %s219, 8
      %s221 = scalar_lea.vmem %s0, %s220
      %p222 = scmp.lt.s32.totalorder %s18, 1
      %s223 = scalar_select %p222, %s18, 1
      %s224 = smul.addr %s223, 36
      %s225 = smul.addr %s224, 8
      %s226 = scalar_lea.vmem %s5, %s225
      %228 = vst [vmem:[#allocation2] sm:$0xff] 0.0
      %229 = vst [vmem:[#allocation2 + $0x8] sm:$0xff] 0.0
      %230 = vst [vmem:[#allocation2 + $0x10] sm:$0xff] 0.0
      %231 = vst [vmem:[#allocation2 + $0x18] sm:$0xff] 0.0
      %232 = vst [vmem:[#allocation2 + $0x20] sm:$0x7] 0.0
      %233 = vst [vmem:[#allocation2 + $0x28] sm:$0x7] 0.0
      %234 = vst [vmem:[#allocation2 + $0x260] sm:$0xf8] 0.0
      %235 = vst [vmem:[#allocation2 + $0x268] sm:$0xf8] 0.0
      %236 = vst [vmem:[#allocation2 + $0x270] sm:$0xff] 0.0
      %237 = vst [vmem:[#allocation2 + $0x278] sm:$0xff] 0.0
      %238 = vst [vmem:[#allocation2 + $0x280] sm:$0xff] 0.0
      %239 = vst [vmem:[#allocation2 + $0x288] sm:$0xff] 0.0
      %240 = vst [vmem:[#allocation2 + $0x290] sm:$0xff] 0.0
      %241 = vst [vmem:[#allocation2 + $0x298] sm:$0xff] 0.0
      %242 = vst [vmem:[#allocation2 + $0x2a0] sm:$0x3f] 0.0
      %243 = vst [vmem:[#allocation2 + $0x2a8] sm:$0x3f] 0.0
      %v244 = vld [vmem:[%s221] sm:$0xff]
      %v245 = vld [vmem:[%s221 + $0x8] sm:$0xff]
      %v246 = vld [vmem:[%s221 + $0x10] sm:$0xff]
      %v247 = vld [vmem:[%s221 + $0x18] sm:$0xff]
      %v248 = vld [vmem:[%s221 + $0x20] sm:$0xff]
      %v249 = vld [vmem:[%s221 + $0x28] sm:$0xff]
      %v250 = vld [vmem:[%s221 + $0x30] sm:$0xff]
      %v251 = vld [vmem:[%s221 + $0x38] sm:$0xff]
      %v252 = vld [vmem:[%s221 + $0x40] sm:$0xff]
      %v253 = vld [vmem:[%s221 + $0x48] sm:$0xff]
      %v254 = vld [vmem:[%s221 + $0x50] sm:$0xff]
      %v255 = vld [vmem:[%s221 + $0x58] sm:$0xff]
      %v256 = vpack.c.bf16 %v245, %v244
      %v257 = vpack.c.bf16 %v247, %v246
      %v258 = vpack.c.bf16 %v249, %v248
      %v259 = vpack.c.bf16 %v251, %v250
      %v260 = vpack.c.bf16 %v253, %v252
      %v261 = vpack.c.bf16 %v255, %v254
      %v262 = vld [vmem:[%s221 + $0x1] sm:$0xff]
      %v263 = vld [vmem:[%s221 + $0x9] sm:$0xff]
      %v264 = vld [vmem:[%s221 + $0x11] sm:$0xff]
      %v265 = vld [vmem:[%s221 + $0x19] sm:$0xff]
      %v266 = vld [vmem:[%s221 + $0x21] sm:$0xff]
      %v267 = vld [vmem:[%s221 + $0x29] sm:$0xff]
      %v268 = vld [vmem:[%s221 + $0x31] sm:$0xff]
      %v269 = vld [vmem:[%s221 + $0x39] sm:$0xff]
      %v270 = vld [vmem:[%s221 + $0x41] sm:$0xff]
      %v271 = vld [vmem:[%s221 + $0x49] sm:$0xff]
      %v272 = vld [vmem:[%s221 + $0x51] sm:$0xff]
      %v273 = vld [vmem:[%s221 + $0x59] sm:$0xff]
      %v274 = vpack.c.bf16 %v263, %v262
      %v275 = vpack.c.bf16 %v265, %v264
      %v276 = vpack.c.bf16 %v267, %v266
      %v277 = vpack.c.bf16 %v269, %v268
      %v278 = vpack.c.bf16 %v271, %v270
      %v279 = vpack.c.bf16 %v273, %v272
      %v280 = vld [vmem:[%s221 + $0x2] sm:$0xff]
      %v281 = vld [vmem:[%s221 + $0xa] sm:$0xff]
      %v282 = vld [vmem:[%s221 + $0x12] sm:$0xff]
      %v283 = vld [vmem:[%s221 + $0x1a] sm:$0xff]
      %v284 = vld [vmem:[%s221 + $0x22] sm:$0xff]
      %v285 = vld [vmem:[%s221 + $0x2a] sm:$0xff]
      %v286 = vld [vmem:[%s221 + $0x32] sm:$0xff]
      %v287 = vld [vmem:[%s221 + $0x3a] sm:$0xff]
      %v288 = vld [vmem:[%s221 + $0x42] sm:$0xff]
      %v289 = vld [vmem:[%s221 + $0x4a] sm:$0xff]
      %v290 = vld [vmem:[%s221 + $0x52] sm:$0xff]
      %v291 = vld [vmem:[%s221 + $0x5a] sm:$0xff]
      %v292 = vpack.c.bf16 %v281, %v280
      %v293 = vpack.c.bf16 %v283, %v282
      %v294 = vpack.c.bf16 %v285, %v284
      %v295 = vpack.c.bf16 %v287, %v286
      %v296 = vpack.c.bf16 %v289, %v288
      %v297 = vpack.c.bf16 %v291, %v290
      %v298 = vld [vmem:[%s1] sm:$0xff]
      %v299 = vld [vmem:[%s1 + $0x8] sm:$0xff]
      %v300 = vld [vmem:[%s1 + $0x10] sm:$0xff]
      %v301 = vld [vmem:[%s1 + $0x18] sm:$0xff]
      %v302 = vld [vmem:[%s1 + $0x20] sm:$0xff]
      %v303 = vld [vmem:[%s1 + $0x28] sm:$0xff]
      %v304 = vld [vmem:[%s1 + $0x30] sm:$0xff]
      %v305 = vld [vmem:[%s1 + $0x38] sm:$0xff]
      %v306 = vld [vmem:[%s1 + $0x40] sm:$0xff]
      %v307 = vld [vmem:[%s1 + $0x48] sm:$0xff]
      %v308 = vld [vmem:[%s1 + $0x50] sm:$0xff]
      %v309 = vld [vmem:[%s1 + $0x58] sm:$0xff]
      %v310 = vld [vmem:[%s1 + $0x60] sm:$0xff]
      %v311 = vld [vmem:[%s1 + $0x68] sm:$0xff]
      %v312 = vld [vmem:[%s1 + $0x70] sm:$0xff]
      %v313 = vld [vmem:[%s1 + $0x78] sm:$0xff]
      %v314 = vld [vmem:[%s1 + $0x80] sm:$0xff]
      %v315 = vld [vmem:[%s1 + $0x88] sm:$0xff]
      %v316 = vld [vmem:[%s1 + $0x90] sm:$0xff]
      %v317 = vld [vmem:[%s1 + $0x98] sm:$0xff]
      %v318 = vld [vmem:[%s1 + $0xa0] sm:$0xff]
      %v319 = vld [vmem:[%s1 + $0xa8] sm:$0xff]
      %v320 = vld [vmem:[%s1 + $0xb0] sm:$0xff]
      %v321 = vld [vmem:[%s1 + $0xb8] sm:$0xff]
      %v322 = vld [vmem:[%s1 + $0xc0] sm:$0xff]
      %v323 = vld [vmem:[%s1 + $0xc8] sm:$0xff]
      %v324 = vld [vmem:[%s1 + $0xd0] sm:$0xff]
      %v325 = vld [vmem:[%s1 + $0xd8] sm:$0xff]
      %v326 = vld [vmem:[%s1 + $0xe0] sm:$0xff]
      %v327 = vld [vmem:[%s1 + $0xe8] sm:$0xff]
      %v328 = vld [vmem:[%s1 + $0xf0] sm:$0xff]
      %v329 = vld [vmem:[%s1 + $0xf8] sm:$0xff]
      %v330 = vld [vmem:[%s1 + $0x100] sm:$0xff]
      %v331 = vld [vmem:[%s1 + $0x108] sm:$0xff]
      %v332 = vld [vmem:[%s1 + $0x110] sm:$0xff]
      %v333 = vld [vmem:[%s1 + $0x118] sm:$0xff]
      %v334 = vld [vmem:[%s1 + $0x120] sm:$0xff]
      %v335 = vld [vmem:[%s1 + $0x128] sm:$0xff]
      %v336 = vld [vmem:[%s1 + $0x130] sm:$0xff]
      %v337 = vld [vmem:[%s1 + $0x138] sm:$0xff]
      %v338 = vld [vmem:[%s1 + $0x140] sm:$0xff]
      %v339 = vld [vmem:[%s1 + $0x148] sm:$0xff]
      %v340 = vld [vmem:[%s1 + $0x150] sm:$0xff]
      %v341 = vld [vmem:[%s1 + $0x158] sm:$0xff]
      %v342 = vld [vmem:[%s1 + $0x160] sm:$0xff]
      %v343 = vld [vmem:[%s1 + $0x168] sm:$0xff]
      %v344 = vld [vmem:[%s1 + $0x170] sm:$0xff]
      %v345 = vld [vmem:[%s1 + $0x178] sm:$0xff]
      %v346 = vld [vmem:[%s221 + $0x62] sm:$0xff]
      %v347 = vld [vmem:[%s221 + $0x6a] sm:$0xff]
      %v348 = vpack.c.bf16 %v347, %v346
      %v349 = vld [vmem:[%s221 + $0x13] sm:$0xff]
      %v350 = vld [vmem:[%s221 + $0x1b] sm:$0xff]
      %v351 = vld [vmem:[%s221 + $0x23] sm:$0xff]
      %v352 = vld [vmem:[%s221 + $0x2b] sm:$0xff]
      %v353 = vld [vmem:[%s221 + $0x33] sm:$0xff]
      %v354 = vld [vmem:[%s221 + $0x3b] sm:$0xff]
      %v355 = vld [vmem:[%s221 + $0x43] sm:$0xff]
      %v356 = vld [vmem:[%s221 + $0x4b] sm:$0xff]
      %v357 = vld [vmem:[%s221 + $0x53] sm:$0xff]
      %v358 = vld [vmem:[%s221 + $0x5b] sm:$0xff]
      %v359 = vld [vmem:[%s221 + $0x63] sm:$0xff]
      %v360 = vld [vmem:[%s221 + $0x6b] sm:$0xff]
      %v361 = vpack.c.bf16 %v350, %v349
      %v362 = vpack.c.bf16 %v352, %v351
      %v363 = vpack.c.bf16 %v354, %v353
      %v364 = vpack.c.bf16 %v356, %v355
      %v365 = vpack.c.bf16 %v358, %v357
      %v366 = vpack.c.bf16 %v360, %v359
      %v367 = vld [vmem:[%s221 + $0x14] sm:$0xff]
      %v368 = vld [vmem:[%s221 + $0x1c] sm:$0xff]
      %v369 = vld [vmem:[%s221 + $0x24] sm:$0xff]
      %v370 = vld [vmem:[%s221 + $0x2c] sm:$0xff]
      %v371 = vld [vmem:[%s221 + $0x34] sm:$0xff]
      %v372 = vld [vmem:[%s221 + $0x3c] sm:$0xff]
      %v373 = vld [vmem:[%s221 + $0x44] sm:$0xff]
      %v374 = vld [vmem:[%s221 + $0x4c] sm:$0xff]
      %v375 = vld [vmem:[%s221 + $0x54] sm:$0xff]
      %v376 = vld [vmem:[%s221 + $0x5c] sm:$0xff]
      %v377 = vld [vmem:[%s221 + $0x64] sm:$0xff]
      %v378 = vld [vmem:[%s221 + $0x6c] sm:$0xff]
      %v379 = vpack.c.bf16 %v368, %v367
      %v380 = vpack.c.bf16 %v370, %v369
      %v381 = vpack.c.bf16 %v372, %v371
      %v382 = vpack.c.bf16 %v374, %v373
      %v383 = vpack.c.bf16 %v376, %v375
      %v384 = vpack.c.bf16 %v378, %v377
      %s385 = scalar_lea.vmem %s1, 384
      %v386 = vld [vmem:[%s385] sm:$0xff]
      %v387 = vld [vmem:[%s385 + $0x8] sm:$0xff]
      %v388 = vld [vmem:[%s385 + $0x10] sm:$0xff]
      %v389 = vld [vmem:[%s385 + $0x18] sm:$0xff]
      %v390 = vld [vmem:[%s385 + $0x20] sm:$0xff]
      %v391 = vld [vmem:[%s385 + $0x28] sm:$0xff]
      %v392 = vld [vmem:[%s385 + $0x30] sm:$0xff]
      %v393 = vld [vmem:[%s385 + $0x38] sm:$0xff]
      %v394 = vld [vmem:[%s385 + $0x40] sm:$0xff]
      %v395 = vld [vmem:[%s385 + $0x48] sm:$0xff]
      %v396 = vld [vmem:[%s385 + $0x50] sm:$0xff]
      %v397 = vld [vmem:[%s385 + $0x58] sm:$0xff]
      %v398 = vld [vmem:[%s385 + $0x60] sm:$0xff]
      %v399 = vld [vmem:[%s385 + $0x68] sm:$0xff]
      %v400 = vld [vmem:[%s385 + $0x70] sm:$0xff]
      %v401 = vld [vmem:[%s385 + $0x78] sm:$0xff]
      %v402 = vld [vmem:[%s385 + $0x80] sm:$0xff]
      %v403 = vld [vmem:[%s385 + $0x88] sm:$0xff]
      %v404 = vld [vmem:[%s385 + $0x90] sm:$0xff]
      %v405 = vld [vmem:[%s385 + $0x98] sm:$0xff]
      %v406 = vld [vmem:[%s385 + $0xa0] sm:$0xff]
      %v407 = vld [vmem:[%s385 + $0xa8] sm:$0xff]
      %v408 = vld [vmem:[%s385 + $0xb0] sm:$0xff]
      %v409 = vld [vmem:[%s385 + $0xb8] sm:$0xff]
      %v410 = vld [vmem:[%s385 + $0xc0] sm:$0xff]
      %v411 = vld [vmem:[%s385 + $0xc8] sm:$0xff]
      %v412 = vld [vmem:[%s385 + $0xd0] sm:$0xff]
      %v413 = vld [vmem:[%s385 + $0xd8] sm:$0xff]
      %v414 = vld [vmem:[%s385 + $0xe0] sm:$0xff]
      %v415 = vld [vmem:[%s385 + $0xe8] sm:$0xff]
      %v416 = vld [vmem:[%s385 + $0xf0] sm:$0xff]
      %v417 = vld [vmem:[%s385 + $0xf8] sm:$0xff]
      %v418 = vld [vmem:[%s385 + $0x100] sm:$0xff]
      %v419 = vld [vmem:[%s385 + $0x108] sm:$0xff]
      %v420 = vld [vmem:[%s385 + $0x110] sm:$0xff]
      %v421 = vld [vmem:[%s385 + $0x118] sm:$0xff]
      %v422 = vld [vmem:[%s385 + $0x120] sm:$0xff]
      %v423 = vld [vmem:[%s385 + $0x128] sm:$0xff]
      %v424 = vld [vmem:[%s385 + $0x130] sm:$0xff]
      %v425 = vld [vmem:[%s385 + $0x138] sm:$0xff]
      %v426 = vld [vmem:[%s385 + $0x140] sm:$0xff]
      %v427 = vld [vmem:[%s385 + $0x148] sm:$0xff]
      %v428 = vld [vmem:[%s385 + $0x150] sm:$0xff]
      %v429 = vld [vmem:[%s385 + $0x158] sm:$0xff]
      %v430 = vld [vmem:[%s385 + $0x160] sm:$0xff]
      %v431 = vld [vmem:[%s385 + $0x168] sm:$0xff]
      %v432 = vld [vmem:[%s385 + $0x170] sm:$0xff]
      %v433 = vld [vmem:[%s385 + $0x178] sm:$0xff]
      %v482 = vunpack.c.l.b16 %v386
      %v483 = vunpack.c.h.b16 %v386
      %v484 = vunpack.c.l.b16 %v387
      %v485 = vunpack.c.h.b16 %v387
      %v486 = vunpack.c.l.b16 %v388
      %v487 = vunpack.c.h.b16 %v388
      %v488 = vunpack.c.l.b16 %v389
      %v489 = vunpack.c.h.b16 %v389
      %v490 = vunpack.c.l.b16 %v390
      %v491 = vunpack.c.h.b16 %v390
      %v492 = vunpack.c.l.b16 %v391
      %v493 = vunpack.c.h.b16 %v391
      %v494 = vunpack.c.l.b16 %v392
      %v495 = vunpack.c.h.b16 %v392
      %v496 = vunpack.c.l.b16 %v393
      %v497 = vunpack.c.h.b16 %v393
      %v498 = vunpack.c.l.b16 %v394
      %v499 = vunpack.c.h.b16 %v394
      %v500 = vunpack.c.l.b16 %v395
      %v501 = vunpack.c.h.b16 %v395
      %v502 = vunpack.c.l.b16 %v396
      %v503 = vunpack.c.h.b16 %v396
      %v504 = vunpack.c.l.b16 %v397
      %v505 = vunpack.c.h.b16 %v397
      %v506 = vunpack.c.l.b16 %v398
      %v507 = vunpack.c.h.b16 %v398
      %v508 = vunpack.c.l.b16 %v399
      %v509 = vunpack.c.h.b16 %v399
      %v510 = vunpack.c.l.b16 %v400
      %v511 = vunpack.c.h.b16 %v400
      %v512 = vunpack.c.l.b16 %v401
      %v513 = vunpack.c.h.b16 %v401
      %v514 = vunpack.c.l.b16 %v402
      %v515 = vunpack.c.h.b16 %v402
      %v516 = vunpack.c.l.b16 %v403
      %v517 = vunpack.c.h.b16 %v403
      %v518 = vunpack.c.l.b16 %v404
      %v519 = vunpack.c.h.b16 %v404
      %v520 = vunpack.c.l.b16 %v405
      %v521 = vunpack.c.h.b16 %v405
      %v522 = vunpack.c.l.b16 %v406
      %v523 = vunpack.c.h.b16 %v406
      %v524 = vunpack.c.l.b16 %v407
      %v525 = vunpack.c.h.b16 %v407
      %v526 = vunpack.c.l.b16 %v408
      %v527 = vunpack.c.h.b16 %v408
      %v528 = vunpack.c.l.b16 %v409
      %v529 = vunpack.c.h.b16 %v409
      %v530 = vunpack.c.l.b16 %v410
      %v531 = vunpack.c.h.b16 %v410
      %v532 = vunpack.c.l.b16 %v411
      %v533 = vunpack.c.h.b16 %v411
      %v534 = vunpack.c.l.b16 %v412
      %v535 = vunpack.c.h.b16 %v412
      %v536 = vunpack.c.l.b16 %v413
      %v537 = vunpack.c.h.b16 %v413
      %v538 = vunpack.c.l.b16 %v414
      %v539 = vunpack.c.h.b16 %v414
      %v540 = vunpack.c.l.b16 %v415
      %v541 = vunpack.c.h.b16 %v415
      %v542 = vunpack.c.l.b16 %v416
      %v543 = vunpack.c.h.b16 %v416
      %v544 = vunpack.c.l.b16 %v417
      %v545 = vunpack.c.h.b16 %v417
      %v546 = vunpack.c.l.b16 %v418
      %v547 = vunpack.c.h.b16 %v418
      %v548 = vunpack.c.l.b16 %v419
      %v549 = vunpack.c.h.b16 %v419
      %v550 = vunpack.c.l.b16 %v420
      %v551 = vunpack.c.h.b16 %v420
      %v552 = vunpack.c.l.b16 %v421
      %v553 = vunpack.c.h.b16 %v421
      %v554 = vunpack.c.l.b16 %v422
      %v555 = vunpack.c.h.b16 %v422
      %v556 = vunpack.c.l.b16 %v423
      %v557 = vunpack.c.h.b16 %v423
      %v558 = vunpack.c.l.b16 %v424
      %v559 = vunpack.c.h.b16 %v424
      %v560 = vunpack.c.l.b16 %v425
      %v561 = vunpack.c.h.b16 %v425
      %v562 = vunpack.c.l.b16 %v426
      %v563 = vunpack.c.h.b16 %v426
      %v564 = vunpack.c.l.b16 %v427
      %v565 = vunpack.c.h.b16 %v427
      %v566 = vunpack.c.l.b16 %v428
      %v567 = vunpack.c.h.b16 %v428
      %v568 = vunpack.c.l.b16 %v429
      %v569 = vunpack.c.h.b16 %v429
      %v570 = vunpack.c.l.b16 %v430
      %v571 = vunpack.c.h.b16 %v430
      %v572 = vunpack.c.l.b16 %v431
      %v573 = vunpack.c.h.b16 %v431
      %v574 = vunpack.c.l.b16 %v432
      %v575 = vunpack.c.h.b16 %v432
      %v576 = vunpack.c.l.b16 %v433
      %v577 = vunpack.c.h.b16 %v433
      %v578 = vpack.c.b16 %v484, %v482
      %v579 = vpack.c.b16 %v485, %v483
      %v580 = vpack.c.b16 %v488, %v486
      %v581 = vpack.c.b16 %v489, %v487
      %v582 = vpack.c.b16 %v492, %v490
      %v583 = vpack.c.b16 %v493, %v491
      %v584 = vpack.c.b16 %v496, %v494
      %v585 = vpack.c.b16 %v497, %v495
      %v586 = vpack.c.b16 %v500, %v498
      %v587 = vpack.c.b16 %v501, %v499
      %v588 = vpack.c.b16 %v504, %v502
      %v589 = vpack.c.b16 %v505, %v503
      %v590 = vpack.c.b16 %v508, %v506
      %v591 = vpack.c.b16 %v509, %v507
      %v592 = vpack.c.b16 %v512, %v510
      %v593 = vpack.c.b16 %v513, %v511
      %v594 = vpack.c.b16 %v516, %v514
      %v595 = vpack.c.b16 %v517, %v515
      %v596 = vpack.c.b16 %v520, %v518
      %v597 = vpack.c.b16 %v521, %v519
      %v598 = vpack.c.b16 %v524, %v522
      %v599 = vpack.c.b16 %v525, %v523
      %v600 = vpack.c.b16 %v528, %v526
      %v601 = vpack.c.b16 %v529, %v527
      %v602 = vpack.c.b16 %v532, %v530
      %v603 = vpack.c.b16 %v533, %v531
      %v604 = vpack.c.b16 %v536, %v534
      %v605 = vpack.c.b16 %v537, %v535
      %v606 = vpack.c.b16 %v540, %v538
      %v607 = vpack.c.b16 %v541, %v539
      %v608 = vpack.c.b16 %v544, %v542
      %v609 = vpack.c.b16 %v545, %v543
      %v610 = vpack.c.b16 %v548, %v546
      %v611 = vpack.c.b16 %v549, %v547
      %v612 = vpack.c.b16 %v552, %v550
      %v613 = vpack.c.b16 %v553, %v551
      %v614 = vpack.c.b16 %v556, %v554
      %v615 = vpack.c.b16 %v557, %v555
      %v616 = vpack.c.b16 %v560, %v558
      %v617 = vpack.c.b16 %v561, %v559
      %v618 = vpack.c.b16 %v564, %v562
      %v619 = vpack.c.b16 %v565, %v563
      %v620 = vpack.c.b16 %v568, %v566
      %v621 = vpack.c.b16 %v569, %v567
      %v622 = vpack.c.b16 %v572, %v570
      %v623 = vpack.c.b16 %v573, %v571
      %v624 = vpack.c.b16 %v576, %v574
      %v625 = vpack.c.b16 %v577, %v575
      %674 = vmatprep.subr.bf16.mxu0 %v579
      %675 = vmatpush1.bf16.msra.mxu0 %v578
      %676 = vmatprep.subr.bf16.mxu0 %v581
      %677 = vmatpush1.bf16.msra.mxu0 %v580
      %678 = vmatprep.subr.bf16.mxu0 %v583
      %679 = vmatpush1.bf16.msra.mxu0 %v582
      %680 = vmatprep.subr.bf16.mxu0 %v585
      %681 = vmatpush1.bf16.msra.mxu0 %v584
      %682 = vmatprep.subr.bf16.mxu0 %v587
      %683 = vmatpush1.bf16.msra.mxu0 %v586
      %684 = vmatprep.subr.bf16.mxu0 %v589
      %685 = vmatpush1.bf16.msra.mxu0 %v588
      %686 = vmatprep.subr.bf16.mxu0 %v591
      %687 = vmatpush1.bf16.msra.mxu0 %v590
      %688 = vmatprep.subr.bf16.mxu0 %v593
      %689 = vmatpush1.bf16.msra.mxu0 %v592
      %690 = vmatprep.subr.bf16.mxu0 %v595
      %691 = vmatpush1.bf16.msra.mxu0 %v594
      %692 = vmatprep.subr.bf16.mxu0 %v597
      %693 = vmatpush1.bf16.msra.mxu0 %v596
      %694 = vmatprep.subr.bf16.mxu0 %v599
      %695 = vmatpush1.bf16.msra.mxu0 %v598
      %696 = vmatprep.subr.bf16.mxu0 %v601
      %697 = vmatpush1.bf16.msra.mxu0 %v600
      %698 = vmatprep.subr.bf16.mxu0 %v603
      %699 = vmatpush1.bf16.msra.mxu0 %v602
      %700 = vmatprep.subr.bf16.mxu0 %v605
      %701 = vmatpush1.bf16.msra.mxu0 %v604
      %702 = vmatprep.subr.bf16.mxu0 %v607
      %703 = vmatpush1.bf16.msra.mxu0 %v606
      %704 = vmatprep.subr.bf16.mxu0 %v609
      %705 = vmatpush1.bf16.msra.mxu0 %v608
      %706 = vmatprep.mubr.bf16.mxu0 %v361
      %707 = vmatmul.mubr.bf16.gmra.mrb[0].mxu0 %v293
      %v708 = vpop.f32.mrb[0].mxu0
      %v709 = vadd.f32 0.0, %v708
      %v710 = vpop.f32.mrb[0].mxu0
      %v711 = vadd.f32 0.0, %v710
      %v712 = vpop.f32.mrb[0].mxu0
      %v713 = vadd.f32 0.0, %v712
      %v714 = vpop.f32.mrb[0].mxu0
      %v715 = vadd.f32 0.0, %v714
      %716 = vmatprep.mubr.bf16.mxu0 %v362
      %717 = vmatmul.mubr.bf16.gmra.mrb[0].mxu0 %v294
      %v718 = vpop.f32.mrb[0].mxu0
      %v719 = vadd.f32 0.0, %v718
      %v720 = vpop.f32.mrb[0].mxu0
      %v721 = vadd.f32 0.0, %v720
      %v722 = vpop.f32.mrb[0].mxu0
      %v723 = vadd.f32 0.0, %v722
      %v724 = vpop.f32.mrb[0].mxu0
      %v725 = vadd.f32 0.0, %v724
      %726 = vmatprep.mubr.bf16.mxu0 %v363
      %727 = vmatmul.mubr.bf16.gmra.mrb[0].mxu0 %v295
      %v728 = vpop.f32.mrb[0].mxu0
      %v729 = vadd.f32 0.0, %v728
      %v730 = vpop.f32.mrb[0].mxu0
      %v731 = vadd.f32 0.0, %v730
      %v732 = vpop.f32.mrb[0].mxu0
      %v733 = vadd.f32 0.0, %v732
      %v734 = vpop.f32.mrb[0].mxu0
      %v735 = vadd.f32 0.0, %v734
      %736 = vmatprep.mubr.bf16.mxu0 %v364
      %737 = vmatmul.mubr.bf16.gmra.mrb[0].mxu0 %v296
      %v738 = vpop.f32.mrb[0].mxu0
      %v739 = vadd.f32 0.0, %v738
      %v740 = vpop.f32.mrb[0].mxu0
      %v741 = vadd.f32 0.0, %v740
      %v742 = vpop.f32.mrb[0].mxu0
      %v743 = vadd.f32 0.0, %v742
      %v744 = vpop.f32.mrb[0].mxu0
      %v745 = vadd.f32 0.0, %v744
      %746 = vmatprep.mubr.bf16.mxu0 %v365
      %747 = vmatmul.mubr.bf16.gmra.mrb[0].mxu0 %v297
      %v748 = vpop.f32.mrb[0].mxu0
      %v749 = vadd.f32 0.0, %v748
      %v750 = vpop.f32.mrb[0].mxu0
      %v751 = vadd.f32 0.0, %v750
      %v752 = vpop.f32.mrb[0].mxu0
      %v753 = vadd.f32 0.0, %v752
      %v754 = vpop.f32.mrb[0].mxu0
      %v755 = vadd.f32 0.0, %v754
      %756 = vmatprep.mubr.bf16.mxu0 %v366
      %757 = vmatmul.mubr.bf16.gmra.mrb[0].mxu0 %v348
      %v758 = vpop.f32.mrb[0].mxu0
      %v759 = vadd.f32 0.0, %v758
      %v760 = vpop.f32.mrb[0].mxu0
      %v761 = vadd.f32 0.0, %v760
      %v762 = vpop.f32.mrb[0].mxu0
      %v763 = vadd.f32 0.0, %v762
      %v764 = vpop.f32.mrb[0].mxu0
      %v765 = vadd.f32 0.0, %v764
      %766 = vdwg.mxu0
      %767 = vmatprep.subr.bf16.mxu0 %v611
      %768 = vmatpush1.bf16.msra.mxu0 %v610
      %769 = vmatprep.subr.bf16.mxu0 %v613
      %770 = vmatpush1.bf16.msra.mxu0 %v612
      %771 = vmatprep.subr.bf16.mxu0 %v615
      %772 = vmatpush1.bf16.msra.mxu0 %v614
      %773 = vmatprep.subr.bf16.mxu0 %v617
      %774 = vmatpush1.bf16.msra.mxu0 %v616
      %775 = vmatprep.subr.bf16.mxu0 %v619
      %776 = vmatpush1.bf16.msra.mxu0 %v618
      %777 = vmatprep.subr.bf16.mxu0 %v621
      %778 = vmatpush1.bf16.msra.mxu0 %v620
      %779 = vmatprep.subr.bf16.mxu0 %v623
      %780 = vmatpush1.bf16.msra.mxu0 %v622
      %781 = vmatprep.subr.bf16.mxu0 %v625
      %782 = vmatpush1.bf16.msra.mxu0 %v624
      %783 = vmatprep.subr.bf16.mxu0 0
      %784 = vmatpush1.bf16.msra.mxu0 0
      %785 = vmatprep.subr.bf16.mxu0 0
      %786 = vmatpush1.bf16.msra.mxu0 0
      %787 = vmatprep.subr.bf16.mxu0 0
      %788 = vmatpush1.bf16.msra.mxu0 0
      %789 = vmatprep.subr.bf16.mxu0 0
      %790 = vmatpush1.bf16.msra.mxu0 0
      %791 = vmatprep.subr.bf16.mxu0 0
      %792 = vmatpush1.bf16.msra.mxu0 0
      %793 = vmatprep.subr.bf16.mxu0 0
      %794 = vmatpush1.bf16.msra.mxu0 0
      %795 = vmatprep.subr.bf16.mxu0 0
      %796 = vmatpush1.bf16.msra.mxu0 0
      %797 = vmatprep.subr.bf16.mxu0 0
      %798 = vmatpush1.bf16.msra.mxu0 0
      %799 = vmatprep.mubr.bf16.mxu0 0
      %800 = vmatmul.mubr.bf16.gmra.mrb[0].mxu0 %v379
      %v801 = vpop.f32.mrb[0].mxu0
      %v802 = vadd.f32 %v709, %v801
      %v803 = vpop.f32.mrb[0].mxu0
      %v804 = vadd.f32 %v711, %v803
      %v805 = vpop.f32.mrb[0].mxu0
      %v806 = vadd.f32 %v713, %v805
      %v807 = vpop.f32.mrb[0].mxu0
      %v808 = vadd.f32 %v715, %v807
      %809 = vmatprep.mubr.bf16.mxu0 0
      %810 = vmatmul.mubr.bf16.gmra.mrb[0].mxu0 %v380
      %v811 = vpop.f32.mrb[0].mxu0
      %v812 = vadd.f32 %v719, %v811
      %v813 = vpop.f32.mrb[0].mxu0
      %v814 = vadd.f32 %v721, %v813
      %v815 = vpop.f32.mrb[0].mxu0
      %v816 = vadd.f32 %v723, %v815
      %v817 = vpop.f32.mrb[0].mxu0
      %v818 = vadd.f32 %v725, %v817
      %819 = vmatprep.mubr.bf16.mxu0 0
      %820 = vmatmul.mubr.bf16.gmra.mrb[0].mxu0 %v381
      %v821 = vpop.f32.mrb[0].mxu0
      %v822 = vadd.f32 %v729, %v821
      %v823 = vpop.f32.mrb[0].mxu0
      %v824 = vadd.f32 %v731, %v823
      %v825 = vpop.f32.mrb[0].mxu0
      %v826 = vadd.f32 %v733, %v825
      %v827 = vpop.f32.mrb[0].mxu0
      %v828 = vadd.f32 %v735, %v827
      %829 = vmatprep.mubr.bf16.mxu0 0
      %830 = vmatmul.mubr.bf16.gmra.mrb[0].mxu0 %v382
      %v831 = vpop.f32.mrb[0].mxu0
      %v832 = vadd.f32 %v739, %v831
      %v833 = vpop.f32.mrb[0].mxu0
      %v834 = vadd.f32 %v741, %v833
      %v835 = vpop.f32.mrb[0].mxu0
      %v836 = vadd.f32 %v743, %v835
      %v837 = vpop.f32.mrb[0].mxu0
      %v838 = vadd.f32 %v745, %v837
      %839 = vmatprep.mubr.bf16.mxu0 0
      %840 = vmatmul.mubr.bf16.gmra.mrb[0].mxu0 %v383
      %v841 = vpop.f32.mrb[0].mxu0
      %v842 = vadd.f32 %v749, %v841
      %v843 = vpop.f32.mrb[0].mxu0
      %v844 = vadd.f32 %v751, %v843
      %v845 = vpop.f32.mrb[0].mxu0
      %v846 = vadd.f32 %v753, %v845
      %v847 = vpop.f32.mrb[0].mxu0
      %v848 = vadd.f32 %v755, %v847
      %849 = vmatprep.mubr.bf16.mxu0 0
      %850 = vmatmul.mubr.bf16.gmra.mrb[0].mxu0 %v384
      %v851 = vpop.f32.mrb[0].mxu0
      %v852 = vadd.f32 %v759, %v851
      %v853 = vpop.f32.mrb[0].mxu0
      %v854 = vadd.f32 %v761, %v853
      %v855 = vpop.f32.mrb[0].mxu0
      %v856 = vadd.f32 %v763, %v855
      %v857 = vpop.f32.mrb[0].mxu0
      %v858 = vadd.f32 %v765, %v857
      %859 = vdwg.mxu0
      %v908 = vunpack.c.l.b16 %v298
      %v909 = vunpack.c.h.b16 %v298
      %v910 = vunpack.c.l.b16 %v299
      %v911 = vunpack.c.h.b16 %v299
      %v912 = vunpack.c.l.b16 %v300
      %v913 = vunpack.c.h.b16 %v300
      %v914 = vunpack.c.l.b16 %v301
      %v915 = vunpack.c.h.b16 %v301
      %v916 = vunpack.c.l.b16 %v302
      %v917 = vunpack.c.h.b16 %v302
      %v918 = vunpack.c.l.b16 %v303
      %v919 = vunpack.c.h.b16 %v303
      %v920 = vunpack.c.l.b16 %v304
      %v921 = vunpack.c.h.b16 %v304
      %v922 = vunpack.c.l.b16 %v305
      %v923 = vunpack.c.h.b16 %v305
      %v924 = vunpack.c.l.b16 %v306
      %v925 = vunpack.c.h.b16 %v306
      %v926 = vunpack.c.l.b16 %v307
      %v927 = vunpack.c.h.b16 %v307
      %v928 = vunpack.c.l.b16 %v308
      %v929 = vunpack.c.h.b16 %v308
      %v930 = vunpack.c.l.b16 %v309
      %v931 = vunpack.c.h.b16 %v309
      %v932 = vunpack.c.l.b16 %v310
      %v933 = vunpack.c.h.b16 %v310
      %v934 = vunpack.c.l.b16 %v311
      %v935 = vunpack.c.h.b16 %v311
      %v936 = vunpack.c.l.b16 %v312
      %v937 = vunpack.c.h.b16 %v312
      %v938 = vunpack.c.l.b16 %v313
      %v939 = vunpack.c.h.b16 %v313
      %v940 = vunpack.c.l.b16 %v314
      %v941 = vunpack.c.h.b16 %v314
      %v942 = vunpack.c.l.b16 %v315
      %v943 = vunpack.c.h.b16 %v315
      %v944 = vunpack.c.l.b16 %v316
      %v945 = vunpack.c.h.b16 %v316
      %v946 = vunpack.c.l.b16 %v317
      %v947 = vunpack.c.h.b16 %v317
      %v948 = vunpack.c.l.b16 %v318
      %v949 = vunpack.c.h.b16 %v318
      %v950 = vunpack.c.l.b16 %v319
      %v951 = vunpack.c.h.b16 %v319
      %v952 = vunpack.c.l.b16 %v320
      %v953 = vunpack.c.h.b16 %v320
      %v954 = vunpack.c.l.b16 %v321
      %v955 = vunpack.c.h.b16 %v321
      %v956 = vunpack.c.l.b16 %v322
      %v957 = vunpack.c.h.b16 %v322
      %v958 = vunpack.c.l.b16 %v323
      %v959 = vunpack.c.h.b16 %v323
      %v960 = vunpack.c.l.b16 %v324
      %v961 = vunpack.c.h.b16 %v324
      %v962 = vunpack.c.l.b16 %v325
      %v963 = vunpack.c.h.b16 %v325
      %v964 = vunpack.c.l.b16 %v326
      %v965 = vunpack.c.h.b16 %v326
      %v966 = vunpack.c.l.b16 %v327
      %v967 = vunpack.c.h.b16 %v327
      %v968 = vunpack.c.l.b16 %v328
      %v969 = vunpack.c.h.b16 %v328
      %v970 = vunpack.c.l.b16 %v329
      %v971 = vunpack.c.h.b16 %v329
      %v972 = vunpack.c.l.b16 %v330
      %v973 = vunpack.c.h.b16 %v330
      %v974 = vunpack.c.l.b16 %v331
      %v975 = vunpack.c.h.b16 %v331
      %v976 = vunpack.c.l.b16 %v332
      %v977 = vunpack.c.h.b16 %v332
      %v978 = vunpack.c.l.b16 %v333
      %v979 = vunpack.c.h.b16 %v333
      %v980 = vunpack.c.l.b16 %v334
      %v981 = vunpack.c.h.b16 %v334
      %v982 = vunpack.c.l.b16 %v335
      %v983 = vunpack.c.h.b16 %v335
      %v984 = vunpack.c.l.b16 %v336
      %v985 = vunpack.c.h.b16 %v336
      %v986 = vunpack.c.l.b16 %v337
      %v987 = vunpack.c.h.b16 %v337
      %v988 = vunpack.c.l.b16 %v338
      %v989 = vunpack.c.h.b16 %v338
      %v990 = vunpack.c.l.b16 %v339
      %v991 = vunpack.c.h.b16 %v339
      %v992 = vunpack.c.l.b16 %v340
      %v993 = vunpack.c.h.b16 %v340
      %v994 = vunpack.c.l.b16 %v341
      %v995 = vunpack.c.h.b16 %v341
      %v996 = vunpack.c.l.b16 %v342
      %v997 = vunpack.c.h.b16 %v342
      %v998 = vunpack.c.l.b16 %v343
      %v999 = vunpack.c.h.b16 %v343
      %v1000 = vunpack.c.l.b16 %v344
      %v1001 = vunpack.c.h.b16 %v344
      %v1002 = vunpack.c.l.b16 %v345
      %v1003 = vunpack.c.h.b16 %v345
      %v1004 = vpack.c.b16 %v910, %v908
      %v1005 = vpack.c.b16 %v911, %v909
      %v1006 = vpack.c.b16 %v914, %v912
      %v1007 = vpack.c.b16 %v915, %v913
      %v1008 = vpack.c.b16 %v918, %v916
      %v1009 = vpack.c.b16 %v919, %v917
      %v1010 = vpack.c.b16 %v922, %v920
      %v1011 = vpack.c.b16 %v923, %v921
      %v1012 = vpack.c.b16 %v926, %v924
      %v1013 = vpack.c.b16 %v927, %v925
      %v1014 = vpack.c.b16 %v930, %v928
      %v1015 = vpack.c.b16 %v931, %v929
      %v1016 = vpack.c.b16 %v934, %v932
      %v1017 = vpack.c.b16 %v935, %v933
      %v1018 = vpack.c.b16 %v938, %v936
      %v1019 = vpack.c.b16 %v939, %v937
      %v1020 = vpack.c.b16 %v942, %v940
      %v1021 = vpack.c.b16 %v943, %v941
      %v1022 = vpack.c.b16 %v946, %v944
      %v1023 = vpack.c.b16 %v947, %v945
      %v1024 = vpack.c.b16 %v950, %v948
      %v1025 = vpack.c.b16 %v951, %v949
      %v1026 = vpack.c.b16 %v954, %v952
      %v1027 = vpack.c.b16 %v955, %v953
      %v1028 = vpack.c.b16 %v958, %v956
      %v1029 = vpack.c.b16 %v959, %v957
      %v1030 = vpack.c.b16 %v962, %v960
      %v1031 = vpack.c.b16 %v963, %v961
      %v1032 = vpack.c.b16 %v966, %v964
      %v1033 = vpack.c.b16 %v967, %v965
      %v1034 = vpack.c.b16 %v970, %v968
      %v1035 = vpack.c.b16 %v971, %v969
      %v1036 = vpack.c.b16 %v974, %v972
      %v1037 = vpack.c.b16 %v975, %v973
      %v1038 = vpack.c.b16 %v978, %v976
      %v1039 = vpack.c.b16 %v979, %v977
      %v1040 = vpack.c.b16 %v982, %v980
      %v1041 = vpack.c.b16 %v983, %v981
      %v1042 = vpack.c.b16 %v986, %v984
      %v1043 = vpack.c.b16 %v987, %v985
      %v1044 = vpack.c.b16 %v990, %v988
      %v1045 = vpack.c.b16 %v991, %v989
      %v1046 = vpack.c.b16 %v994, %v992
      %v1047 = vpack.c.b16 %v995, %v993
      %v1048 = vpack.c.b16 %v998, %v996
      %v1049 = vpack.c.b16 %v999, %v997
      %v1050 = vpack.c.b16 %v1002, %v1000
      %v1051 = vpack.c.b16 %v1003, %v1001
      %1100 = vmatprep.subr.bf16.mxu0 %v1005
      %1101 = vmatpush1.bf16.msra.mxu0 %v1004
      %1102 = vmatprep.subr.bf16.mxu0 %v1007
      %1103 = vmatpush1.bf16.msra.mxu0 %v1006
      %1104 = vmatprep.subr.bf16.mxu0 %v1009
      %1105 = vmatpush1.bf16.msra.mxu0 %v1008
      %1106 = vmatprep.subr.bf16.mxu0 %v1011
      %1107 = vmatpush1.bf16.msra.mxu0 %v1010
      %1108 = vmatprep.subr.bf16.mxu0 %v1013
      %1109 = vmatpush1.bf16.msra.mxu0 %v1012
      %1110 = vmatprep.subr.bf16.mxu0 %v1015
      %1111 = vmatpush1.bf16.msra.mxu0 %v1014
      %1112 = vmatprep.subr.bf16.mxu0 %v1017
      %1113 = vmatpush1.bf16.msra.mxu0 %v1016
      %1114 = vmatprep.subr.bf16.mxu0 %v1019
      %1115 = vmatpush1.bf16.msra.mxu0 %v1018
      %1116 = vmatprep.subr.bf16.mxu0 %v1021
      %1117 = vmatpush1.bf16.msra.mxu0 %v1020
      %1118 = vmatprep.subr.bf16.mxu0 %v1023
      %1119 = vmatpush1.bf16.msra.mxu0 %v1022
      %1120 = vmatprep.subr.bf16.mxu0 %v1025
      %1121 = vmatpush1.bf16.msra.mxu0 %v1024
      %1122 = vmatprep.subr.bf16.mxu0 %v1027
      %1123 = vmatpush1.bf16.msra.mxu0 %v1026
      %1124 = vmatprep.subr.bf16.mxu0 %v1029
      %1125 = vmatpush1.bf16.msra.mxu0 %v1028
      %1126 = vmatprep.subr.bf16.mxu0 %v1031
      %1127 = vmatpush1.bf16.msra.mxu0 %v1030
      %1128 = vmatprep.subr.bf16.mxu0 %v1033
      %1129 = vmatpush1.bf16.msra.mxu0 %v1032
      %1130 = vmatprep.subr.bf16.mxu0 %v1035
      %1131 = vmatpush1.bf16.msra.mxu0 %v1034
      %1132 = vmatprep.mubr.bf16.mxu0 %v274
      %1133 = vmatmul.mubr.bf16.gmra.mrb[0].mxu0 %v256
      %v1134 = vpop.f32.mrb[0].mxu0
      %v1135 = vadd.f32 %v802, %v1134
      %v1136 = vpop.f32.mrb[0].mxu0
      %v1137 = vadd.f32 %v804, %v1136
      %v1138 = vpop.f32.mrb[0].mxu0
      %v1139 = vadd.f32 %v806, %v1138
      %v1140 = vpop.f32.mrb[0].mxu0
      %v1141 = vadd.f32 %v808, %v1140
      %1142 = vmatprep.mubr.bf16.mxu0 %v275
      %1143 = vmatmul.mubr.bf16.gmra.mrb[0].mxu0 %v257
      %v1144 = vpop.f32.mrb[0].mxu0
      %v1145 = vadd.f32 %v812, %v1144
      %v1146 = vpop.f32.mrb[0].mxu0
      %v1147 = vadd.f32 %v814, %v1146
      %v1148 = vpop.f32.mrb[0].mxu0
      %v1149 = vadd.f32 %v816, %v1148
      %v1150 = vpop.f32.mrb[0].mxu0
      %v1151 = vadd.f32 %v818, %v1150
      %1152 = vmatprep.mubr.bf16.mxu0 %v276
      %1153 = vmatmul.mubr.bf16.gmra.mrb[0].mxu0 %v258
      %v1154 = vpop.f32.mrb[0].mxu0
      %v1155 = vadd.f32 %v822, %v1154
      %v1156 = vpop.f32.mrb[0].mxu0
      %v1157 = vadd.f32 %v824, %v1156
      %v1158 = vpop.f32.mrb[0].mxu0
      %v1159 = vadd.f32 %v826, %v1158
      %v1160 = vpop.f32.mrb[0].mxu0
      %v1161 = vadd.f32 %v828, %v1160
      %1162 = vmatprep.mubr.bf16.mxu0 %v277
      %1163 = vmatmul.mubr.bf16.gmra.mrb[0].mxu0 %v259
      %v1164 = vpop.f32.mrb[0].mxu0
      %v1165 = vadd.f32 %v832, %v1164
      %v1166 = vpop.f32.mrb[0].mxu0
      %v1167 = vadd.f32 %v834, %v1166
      %v1168 = vpop.f32.mrb[0].mxu0
      %v1169 = vadd.f32 %v836, %v1168
      %v1170 = vpop.f32.mrb[0].mxu0
      %v1171 = vadd.f32 %v838, %v1170
      %1172 = vmatprep.mubr.bf16.mxu0 %v278
      %1173 = vmatmul.mubr.bf16.gmra.mrb[0].mxu0 %v260
      %v1174 = vpop.f32.mrb[0].mxu0
      %v1175 = vadd.f32 %v842, %v1174
      %v1176 = vpop.f32.mrb[0].mxu0
      %v1177 = vadd.f32 %v844, %v1176
      %v1178 = vpop.f32.mrb[0].mxu0
      %v1179 = vadd.f32 %v846, %v1178
      %v1180 = vpop.f32.mrb[0].mxu0
      %v1181 = vadd.f32 %v848, %v1180
      %1182 = vmatprep.mubr.bf16.mxu0 %v279
      %1183 = vmatmul.mubr.bf16.gmra.mrb[0].mxu0 %v261
      %v1184 = vpop.f32.mrb[0].mxu0
      %v1185 = vadd.f32 %v852, %v1184
      %v1186 = vpop.f32.mrb[0].mxu0
      %v1187 = vadd.f32 %v854, %v1186
      %v1188 = vpop.f32.mrb[0].mxu0
      %v1189 = vadd.f32 %v856, %v1188
      %v1190 = vpop.f32.mrb[0].mxu0
      %v1191 = vadd.f32 %v858, %v1190
      %1192 = vdwg.mxu0
      %1193 = vmatprep.subr.bf16.mxu0 %v1037
      %1194 = vmatpush1.bf16.msra.mxu0 %v1036
      %1195 = vmatprep.subr.bf16.mxu0 %v1039
      %1196 = vmatpush1.bf16.msra.mxu0 %v1038
      %1197 = vmatprep.subr.bf16.mxu0 %v1041
      %1198 = vmatpush1.bf16.msra.mxu0 %v1040
      %1199 = vmatprep.subr.bf16.mxu0 %v1043
      %1200 = vmatpush1.bf16.msra.mxu0 %v1042
      %1201 = vmatprep.subr.bf16.mxu0 %v1045
      %1202 = vmatpush1.bf16.msra.mxu0 %v1044
      %1203 = vmatprep.subr.bf16.mxu0 %v1047
      %1204 = vmatpush1.bf16.msra.mxu0 %v1046
      %1205 = vmatprep.subr.bf16.mxu0 %v1049
      %1206 = vmatpush1.bf16.msra.mxu0 %v1048
      %1207 = vmatprep.subr.bf16.mxu0 %v1051
      %1208 = vmatpush1.bf16.msra.mxu0 %v1050
      %1209 = vmatprep.subr.bf16.mxu0 0
      %1210 = vmatpush1.bf16.msra.mxu0 0
      %1211 = vmatprep.subr.bf16.mxu0 0
      %1212 = vmatpush1.bf16.msra.mxu0 0
      %1213 = vmatprep.subr.bf16.mxu0 0
      %1214 = vmatpush1.bf16.msra.mxu0 0
      %1215 = vmatprep.subr.bf16.mxu0 0
      %1216 = vmatpush1.bf16.msra.mxu0 0
      %1217 = vmatprep.subr.bf16.mxu0 0
      %1218 = vmatpush1.bf16.msra.mxu0 0
      %1219 = vmatprep.subr.bf16.mxu0 0
      %1220 = vmatpush1.bf16.msra.mxu0 0
      %1221 = vmatprep.subr.bf16.mxu0 0
      %1222 = vmatpush1.bf16.msra.mxu0 0
      %1223 = vmatprep.subr.bf16.mxu0 0
      %1224 = vmatpush1.bf16.msra.mxu0 0
      %1225 = vmatprep.mubr.bf16.mxu0 0
      %1226 = vmatmul.mubr.bf16.gmra.mrb[0].mxu0 %v292
      %v1227 = vpop.f32.mrb[0].mxu0
      %v1228 = vadd.f32 %v1135, %v1227
      %v1229 = vpop.f32.mrb[0].mxu0
      %v1230 = vadd.f32 %v1137, %v1229
      %v1231 = vpop.f32.mrb[0].mxu0
      %v1232 = vadd.f32 %v1139, %v1231
      %v1233 = vpop.f32.mrb[0].mxu0
      %v1234 = vadd.f32 %v1141, %v1233
      %1235 = vmatprep.mubr.bf16.mxu0 0
      %1236 = vmatmul.mubr.bf16.gmra.mrb[0].mxu0 %v293
      %v1237 = vpop.f32.mrb[0].mxu0
      %v1238 = vadd.f32 %v1145, %v1237
      %v1239 = vpop.f32.mrb[0].mxu0
      %v1240 = vadd.f32 %v1147, %v1239
      %v1241 = vpop.f32.mrb[0].mxu0
      %v1242 = vadd.f32 %v1149, %v1241
      %v1243 = vpop.f32.mrb[0].mxu0
      %v1244 = vadd.f32 %v1151, %v1243
      %1245 = vmatprep.mubr.bf16.mxu0 0
      %1246 = vmatmul.mubr.bf16.gmra.mrb[0].mxu0 %v294
      %v1247 = vpop.f32.mrb[0].mxu0
      %v1248 = vadd.f32 %v1155, %v1247
      %v1249 = vpop.f32.mrb[0].mxu0
      %v1250 = vadd.f32 %v1157, %v1249
      %v1251 = vpop.f32.mrb[0].mxu0
      %v1252 = vadd.f32 %v1159, %v1251
      %v1253 = vpop.f32.mrb[0].mxu0
      %v1254 = vadd.f32 %v1161, %v1253
      %1255 = vmatprep.mubr.bf16.mxu0 0
      %1256 = vmatmul.mubr.bf16.gmra.mrb[0].mxu0 %v295
      %v1257 = vpop.f32.mrb[0].mxu0
      %v1258 = vadd.f32 %v1165, %v1257
      %v1259 = vpop.f32.mrb[0].mxu0
      %v1260 = vadd.f32 %v1167, %v1259
      %v1261 = vpop.f32.mrb[0].mxu0
      %v1262 = vadd.f32 %v1169, %v1261
      %v1263 = vpop.f32.mrb[0].mxu0
      %v1264 = vadd.f32 %v1171, %v1263
      %1265 = vmatprep.mubr.bf16.mxu0 0
      %1266 = vmatmul.mubr.bf16.gmra.mrb[0].mxu0 %v296
      %v1267 = vpop.f32.mrb[0].mxu0
      %v1268 = vadd.f32 %v1175, %v1267
      %v1269 = vpop.f32.mrb[0].mxu0
      %v1270 = vadd.f32 %v1177, %v1269
      %v1271 = vpop.f32.mrb[0].mxu0
      %v1272 = vadd.f32 %v1179, %v1271
      %v1273 = vpop.f32.mrb[0].mxu0
      %v1274 = vadd.f32 %v1181, %v1273
      %1275 = vmatprep.mubr.bf16.mxu0 0
      %1276 = vmatmul.mubr.bf16.gmra.mrb[0].mxu0 %v297
      %v1277 = vpop.f32.mrb[0].mxu0
      %v1278 = vadd.f32 %v1185, %v1277
      %v1279 = vpop.f32.mrb[0].mxu0
      %v1280 = vadd.f32 %v1187, %v1279
      %v1281 = vpop.f32.mrb[0].mxu0
      %v1282 = vadd.f32 %v1189, %v1281
      %v1283 = vpop.f32.mrb[0].mxu0
      %v1284 = vadd.f32 %v1191, %v1283
      %1285 = vdwg.mxu0
      %v1286 = vld [vmem:[%s221 + $0x24] sm:$0xff]
      %v1287 = vld [vmem:[%s221 + $0x2c] sm:$0xff]
      %v1288 = vld [vmem:[%s221 + $0x34] sm:$0xff]
      %v1289 = vld [vmem:[%s221 + $0x3c] sm:$0xff]
      %v1290 = vld [vmem:[%s221 + $0x44] sm:$0xff]
      %v1291 = vld [vmem:[%s221 + $0x4c] sm:$0xff]
      %v1292 = vld [vmem:[%s221 + $0x54] sm:$0xff]
      %v1293 = vld [vmem:[%s221 + $0x5c] sm:$0xff]
      %v1294 = vld [vmem:[%s221 + $0x64] sm:$0xff]
      %v1295 = vld [vmem:[%s221 + $0x6c] sm:$0xff]
      %v1296 = vld [vmem:[%s221 + $0x74] sm:$0xff]
      %v1297 = vld [vmem:[%s221 + $0x7c] sm:$0xff]
      %v1298 = vpack.c.bf16 %v1287, %v1286
      %v1299 = vpack.c.bf16 %v1289, %v1288
      %v1300 = vpack.c.bf16 %v1291, %v1290
      %v1301 = vpack.c.bf16 %v1293, %v1292
      %v1302 = vpack.c.bf16 %v1295, %v1294
      %v1303 = vpack.c.bf16 %v1297, %v1296
      %v1304 = vld [vmem:[%s221 + $0x25] sm:$0xff]
      %v1305 = vld [vmem:[%s221 + $0x2d] sm:$0xff]
      %v1306 = vld [vmem:[%s221 + $0x35] sm:$0xff]
      %v1307 = vld [vmem:[%s221 + $0x3d] sm:$0xff]
      %v1308 = vld [vmem:[%s221 + $0x45] sm:$0xff]
      %v1309 = vld [vmem:[%s221 + $0x4d] sm:$0xff]
      %v1310 = vld [vmem:[%s221 + $0x55] sm:$0xff]
      %v1311 = vld [vmem:[%s221 + $0x5d] sm:$0xff]
      %v1312 = vld [vmem:[%s221 + $0x65] sm:$0xff]
      %v1313 = vld [vmem:[%s221 + $0x6d] sm:$0xff]
      %v1314 = vld [vmem:[%s221 + $0x75] sm:$0xff]
      %v1315 = vld [vmem:[%s221 + $0x7d] sm:$0xff]
      %v1316 = vpack.c.bf16 %v1305, %v1304
      %v1317 = vpack.c.bf16 %v1307, %v1306
      %v1318 = vpack.c.bf16 %v1309, %v1308
      %v1319 = vpack.c.bf16 %v1311, %v1310
      %v1320 = vpack.c.bf16 %v1313, %v1312
      %v1321 = vpack.c.bf16 %v1315, %v1314
      %v1322 = vld [vmem:[%s221 + $0x26] sm:$0xff]
      %v1323 = vld [vmem:[%s221 + $0x2e] sm:$0xff]
      %v1324 = vld [vmem:[%s221 + $0x36] sm:$0xff]
      %v1325 = vld [vmem:[%s221 + $0x3e] sm:$0xff]
      %v1326 = vld [vmem:[%s221 + $0x46] sm:$0xff]
      %v1327 = vld [vmem:[%s221 + $0x4e] sm:$0xff]
      %v1328 = vld [vmem:[%s221 + $0x56] sm:$0xff]
      %v1329 = vld [vmem:[%s221 + $0x5e] sm:$0xff]
      %v1330 = vld [vmem:[%s221 + $0x66] sm:$0xff]
      %v1331 = vld [vmem:[%s221 + $0x6e] sm:$0xff]
      %v1332 = vld [vmem:[%s221 + $0x76] sm:$0xff]
      %v1333 = vld [vmem:[%s221 + $0x7e] sm:$0xff]
      %v1334 = vpack.c.bf16 %v1323, %v1322
      %v1335 = vpack.c.bf16 %v1325, %v1324
      %v1336 = vpack.c.bf16 %v1327, %v1326
      %v1337 = vpack.c.bf16 %v1329, %v1328
      %v1338 = vpack.c.bf16 %v1331, %v1330
      %v1339 = vpack.c.bf16 %v1333, %v1332
      %s1340 = scalar_lea.vmem %s1, 768
      %v1341 = vld [vmem:[%s1340] sm:$0xff]
      %v1342 = vld [vmem:[%s1340 + $0x8] sm:$0xff]
      %v1343 = vld [vmem:[%s1340 + $0x10] sm:$0xff]
      %v1344 = vld [vmem:[%s1340 + $0x18] sm:$0xff]
      %v1345 = vld [vmem:[%s1340 + $0x20] sm:$0xff]
      %v1346 = vld [vmem:[%s1340 + $0x28] sm:$0xff]
      %v1347 = vld [vmem:[%s1340 + $0x30] sm:$0xff]
      %v1348 = vld [vmem:[%s1340 + $0x38] sm:$0xff]
      %v1349 = vld [vmem:[%s1340 + $0x40] sm:$0xff]
      %v1350 = vld [vmem:[%s1340 + $0x48] sm:$0xff]
      %v1351 = vld [vmem:[%s1340 + $0x50] sm:$0xff]
      %v1352 = vld [vmem:[%s1340 + $0x58] sm:$0xff]
      %v1353 = vld [vmem:[%s1340 + $0x60] sm:$0xff]
      %v1354 = vld [vmem:[%s1340 + $0x68] sm:$0xff]
      %v1355 = vld [vmem:[%s1340 + $0x70] sm:$0xff]
      %v1356 = vld [vmem:[%s1340 + $0x78] sm:$0xff]
      %v1357 = vld [vmem:[%s1340 + $0x80] sm:$0xff]
      %v1358 = vld [vmem:[%s1340 + $0x88] sm:$0xff]
      %v1359 = vld [vmem:[%s1340 + $0x90] sm:$0xff]
      %v1360 = vld [vmem:[%s1340 + $0x98] sm:$0xff]
      %v1361 = vld [vmem:[%s1340 + $0xa0] sm:$0xff]
      %v1362 = vld [vmem:[%s1340 + $0xa8] sm:$0xff]
      %v1363 = vld [vmem:[%s1340 + $0xb0] sm:$0xff]
      %v1364 = vld [vmem:[%s1340 + $0xb8] sm:$0xff]
      %v1365 = vld [vmem:[%s1340 + $0xc0] sm:$0xff]
      %v1366 = vld [vmem:[%s1340 + $0xc8] sm:$0xff]
      %v1367 = vld [vmem:[%s1340 + $0xd0] sm:$0xff]
      %v1368 = vld [vmem:[%s1340 + $0xd8] sm:$0xff]
      %v1369 = vld [vmem:[%s1340 + $0xe0] sm:$0xff]
      %v1370 = vld [vmem:[%s1340 + $0xe8] sm:$0xff]
      %v1371 = vld [vmem:[%s1340 + $0xf0] sm:$0xff]
      %v1372 = vld [vmem:[%s1340 + $0xf8] sm:$0xff]
      %v1373 = vld [vmem:[%s1340 + $0x100] sm:$0xff]
      %v1374 = vld [vmem:[%s1340 + $0x108] sm:$0xff]
      %v1375 = vld [vmem:[%s1340 + $0x110] sm:$0xff]
      %v1376 = vld [vmem:[%s1340 + $0x118] sm:$0xff]
      %v1377 = vld [vmem:[%s1340 + $0x120] sm:$0xff]
      %v1378 = vld [vmem:[%s1340 + $0x128] sm:$0xff]
      %v1379 = vld [vmem:[%s1340 + $0x130] sm:$0xff]
      %v1380 = vld [vmem:[%s1340 + $0x138] sm:$0xff]
      %v1381 = vld [vmem:[%s1340 + $0x140] sm:$0xff]
      %v1382 = vld [vmem:[%s1340 + $0x148] sm:$0xff]
      %v1383 = vld [vmem:[%s1340 + $0x150] sm:$0xff]
      %v1384 = vld [vmem:[%s1340 + $0x158] sm:$0xff]
      %v1385 = vld [vmem:[%s1340 + $0x160] sm:$0xff]
      %v1386 = vld [vmem:[%s1340 + $0x168] sm:$0xff]
      %v1387 = vld [vmem:[%s1340 + $0x170] sm:$0xff]
      %v1388 = vld [vmem:[%s1340 + $0x178] sm:$0xff]
      %v1437 = vunpack.c.l.b16 %v1341
      %v1438 = vunpack.c.h.b16 %v1341
      %v1439 = vunpack.c.l.b16 %v1342
      %v1440 = vunpack.c.h.b16 %v1342
      %v1441 = vunpack.c.l.b16 %v1343
      %v1442 = vunpack.c.h.b16 %v1343
      %v1443 = vunpack.c.l.b16 %v1344
      %v1444 = vunpack.c.h.b16 %v1344
      %v1445 = vunpack.c.l.b16 %v1345
      %v1446 = vunpack.c.h.b16 %v1345
      %v1447 = vunpack.c.l.b16 %v1346
      %v1448 = vunpack.c.h.b16 %v1346
      %v1449 = vunpack.c.l.b16 %v1347
      %v1450 = vunpack.c.h.b16 %v1347
      %v1451 = vunpack.c.l.b16 %v1348
      %v1452 = vunpack.c.h.b16 %v1348
      %v1453 = vunpack.c.l.b16 %v1349
      %v1454 = vunpack.c.h.b16 %v1349
      %v1455 = vunpack.c.l.b16 %v1350
      %v1456 = vunpack.c.h.b16 %v1350
      %v1457 = vunpack.c.l.b16 %v1351
      %v1458 = vunpack.c.h.b16 %v1351
      %v1459 = vunpack.c.l.b16 %v1352
      %v1460 = vunpack.c.h.b16 %v1352
      %v1461 = vunpack.c.l.b16 %v1353
      %v1462 = vunpack.c.h.b16 %v1353
      %v1463 = vunpack.c.l.b16 %v1354
      %v1464 = vunpack.c.h.b16 %v1354
      %v1465 = vunpack.c.l.b16 %v1355
      %v1466 = vunpack.c.h.b16 %v1355
      %v1467 = vunpack.c.l.b16 %v1356
      %v1468 = vunpack.c.h.b16 %v1356
      %v1469 = vunpack.c.l.b16 %v1357
      %v1470 = vunpack.c.h.b16 %v1357
      %v1471 = vunpack.c.l.b16 %v1358
      %v1472 = vunpack.c.h.b16 %v1358
      %v1473 = vunpack.c.l.b16 %v1359
      %v1474 = vunpack.c.h.b16 %v1359
      %v1475 = vunpack.c.l.b16 %v1360
      %v1476 = vunpack.c.h.b16 %v1360
      %v1477 = vunpack.c.l.b16 %v1361
      %v1478 = vunpack.c.h.b16 %v1361
      %v1479 = vunpack.c.l.b16 %v1362
      %v1480 = vunpack.c.h.b16 %v1362
      %v1481 = vunpack.c.l.b16 %v1363
      %v1482 = vunpack.c.h.b16 %v1363
      %v1483 = vunpack.c.l.b16 %v1364
      %v1484 = vunpack.c.h.b16 %v1364
      %v1485 = vunpack.c.l.b16 %v1365
      %v1486 = vunpack.c.h.b16 %v1365
      %v1487 = vunpack.c.l.b16 %v1366
      %v1488 = vunpack.c.h.b16 %v1366
      %v1489 = vunpack.c.l.b16 %v1367
      %v1490 = vunpack.c.h.b16 %v1367
      %v1491 = vunpack.c.l.b16 %v1368
      %v1492 = vunpack.c.h.b16 %v1368
      %v1493 = vunpack.c.l.b16 %v1369
      %v1494 = vunpack.c.h.b16 %v1369
      %v1495 = vunpack.c.l.b16 %v1370
      %v1496 = vunpack.c.h.b16 %v1370
      %v1497 = vunpack.c.l.b16 %v1371
      %v1498 = vunpack.c.h.b16 %v1371
      %v1499 = vunpack.c.l.b16 %v1372
      %v1500 = vunpack.c.h.b16 %v1372
      %v1501 = vunpack.c.l.b16 %v1373
      %v1502 = vunpack.c.h.b16 %v1373
      %v1503 = vunpack.c.l.b16 %v1374
      %v1504 = vunpack.c.h.b16 %v1374
      %v1505 = vunpack.c.l.b16 %v1375
      %v1506 = vunpack.c.h.b16 %v1375
      %v1507 = vunpack.c.l.b16 %v1376
      %v1508 = vunpack.c.h.b16 %v1376
      %v1509 = vunpack.c.l.b16 %v1377
      %v1510 = vunpack.c.h.b16 %v1377
      %v1511 = vunpack.c.l.b16 %v1378
      %v1512 = vunpack.c.h.b16 %v1378
      %v1513 = vunpack.c.l.b16 %v1379
      %v1514 = vunpack.c.h.b16 %v1379
      %v1515 = vunpack.c.l.b16 %v1380
      %v1516 = vunpack.c.h.b16 %v1380
      %v1517 = vunpack.c.l.b16 %v1381
      %v1518 = vunpack.c.h.b16 %v1381
      %v1519 = vunpack.c.l.b16 %v1382
      %v1520 = vunpack.c.h.b16 %v1382
      %v1521 = vunpack.c.l.b16 %v1383
      %v1522 = vunpack.c.h.b16 %v1383
      %v1523 = vunpack.c.l.b16 %v1384
      %v1524 = vunpack.c.h.b16 %v1384
      %v1525 = vunpack.c.l.b16 %v1385
      %v1526 = vunpack.c.h.b16 %v1385
      %v1527 = vunpack.c.l.b16 %v1386
      %v1528 = vunpack.c.h.b16 %v1386
      %v1529 = vunpack.c.l.b16 %v1387
      %v1530 = vunpack.c.h.b16 %v1387
      %v1531 = vunpack.c.l.b16 %v1388
      %v1532 = vunpack.c.h.b16 %v1388
      %v1533 = vpack.c.b16 %v1439, %v1437
      %v1534 = vpack.c.b16 %v1440, %v1438
      %v1535 = vpack.c.b16 %v1443, %v1441
      %v1536 = vpack.c.b16 %v1444, %v1442
      %v1537 = vpack.c.b16 %v1447, %v1445
      %v1538 = vpack.c.b16 %v1448, %v1446
      %v1539 = vpack.c.b16 %v1451, %v1449
      %v1540 = vpack.c.b16 %v1452, %v1450
      %v1541 = vpack.c.b16 %v1455, %v1453
      %v1542 = vpack.c.b16 %v1456, %v1454
      %v1543 = vpack.c.b16 %v1459, %v1457
      %v1544 = vpack.c.b16 %v1460, %v1458
      %v1545 = vpack.c.b16 %v1463, %v1461
      %v1546 = vpack.c.b16 %v1464, %v1462
      %v1547 = vpack.c.b16 %v1467, %v1465
      %v1548 = vpack.c.b16 %v1468, %v1466
      %v1549 = vpack.c.b16 %v1471, %v1469
      %v1550 = vpack.c.b16 %v1472, %v1470
      %v1551 = vpack.c.b16 %v1475, %v1473
      %v1552 = vpack.c.b16 %v1476, %v1474
      %v1553 = vpack.c.b16 %v1479, %v1477
      %v1554 = vpack.c.b16 %v1480, %v1478
      %v1555 = vpack.c.b16 %v1483, %v1481
      %v1556 = vpack.c.b16 %v1484, %v1482
      %v1557 = vpack.c.b16 %v1487, %v1485
      %v1558 = vpack.c.b16 %v1488, %v1486
      %v1559 = vpack.c.b16 %v1491, %v1489
      %v1560 = vpack.c.b16 %v1492, %v1490
      %v1561 = vpack.c.b16 %v1495, %v1493
      %v1562 = vpack.c.b16 %v1496, %v1494
      %v1563 = vpack.c.b16 %v1499, %v1497
      %v1564 = vpack.c.b16 %v1500, %v1498
      %v1565 = vpack.c.b16 %v1503, %v1501
      %v1566 = vpack.c.b16 %v1504, %v1502
      %v1567 = vpack.c.b16 %v1507, %v1505
      %v1568 = vpack.c.b16 %v1508, %v1506
      %v1569 = vpack.c.b16 %v1511, %v1509
      %v1570 = vpack.c.b16 %v1512, %v1510
      %v1571 = vpack.c.b16 %v1515, %v1513
      %v1572 = vpack.c.b16 %v1516, %v1514
      %v1573 = vpack.c.b16 %v1519, %v1517
      %v1574 = vpack.c.b16 %v1520, %v1518
      %v1575 = vpack.c.b16 %v1523, %v1521
      %v1576 = vpack.c.b16 %v1524, %v1522
      %v1577 = vpack.c.b16 %v1527, %v1525
      %v1578 = vpack.c.b16 %v1528, %v1526
      %v1579 = vpack.c.b16 %v1531, %v1529
      %v1580 = vpack.c.b16 %v1532, %v1530
      %1629 = vmatprep.subr.bf16.mxu0 %v1534
      %1630 = vmatpush1.bf16.msra.mxu0 %v1533
      %1631 = vmatprep.subr.bf16.mxu0 %v1536
      %1632 = vmatpush1.bf16.msra.mxu0 %v1535
      %1633 = vmatprep.subr.bf16.mxu0 %v1538
      %1634 = vmatpush1.bf16.msra.mxu0 %v1537
      %1635 = vmatprep.subr.bf16.mxu0 %v1540
      %1636 = vmatpush1.bf16.msra.mxu0 %v1539
      %1637 = vmatprep.subr.bf16.mxu0 %v1542
      %1638 = vmatpush1.bf16.msra.mxu0 %v1541
      %1639 = vmatprep.subr.bf16.mxu0 %v1544
      %1640 = vmatpush1.bf16.msra.mxu0 %v1543
      %1641 = vmatprep.subr.bf16.mxu0 %v1546
      %1642 = vmatpush1.bf16.msra.mxu0 %v1545
      %1643 = vmatprep.subr.bf16.mxu0 %v1548
      %1644 = vmatpush1.bf16.msra.mxu0 %v1547
      %1645 = vmatprep.subr.bf16.mxu0 %v1550
      %1646 = vmatpush1.bf16.msra.mxu0 %v1549
      %1647 = vmatprep.subr.bf16.mxu0 %v1552
      %1648 = vmatpush1.bf16.msra.mxu0 %v1551
      %1649 = vmatprep.subr.bf16.mxu0 %v1554
      %1650 = vmatpush1.bf16.msra.mxu0 %v1553
      %1651 = vmatprep.subr.bf16.mxu0 %v1556
      %1652 = vmatpush1.bf16.msra.mxu0 %v1555
      %1653 = vmatprep.subr.bf16.mxu0 %v1558
      %1654 = vmatpush1.bf16.msra.mxu0 %v1557
      %1655 = vmatprep.subr.bf16.mxu0 %v1560
      %1656 = vmatpush1.bf16.msra.mxu0 %v1559
      %1657 = vmatprep.subr.bf16.mxu0 %v1562
      %1658 = vmatpush1.bf16.msra.mxu0 %v1561
      %1659 = vmatprep.subr.bf16.mxu0 %v1564
      %1660 = vmatpush1.bf16.msra.mxu0 %v1563
      %1661 = vmatprep.mubr.bf16.mxu0 %v1316
      %1662 = vmatmul.mubr.bf16.gmra.mrb[0].mxu0 %v1298
      %v1663 = vpop.f32.mrb[0].mxu0
      %v1664 = vadd.f32 0.0, %v1663
      %v1665 = vpop.f32.mrb[0].mxu0
      %v1666 = vadd.f32 0.0, %v1665
      %v1667 = vpop.f32.mrb[0].mxu0
      %v1668 = vadd.f32 0.0, %v1667
      %v1669 = vpop.f32.mrb[0].mxu0
      %v1670 = vadd.f32 0.0, %v1669
      %1671 = vmatprep.mubr.bf16.mxu0 %v1317
      %1672 = vmatmul.mubr.bf16.gmra.mrb[0].mxu0 %v1299
      %v1673 = vpop.f32.mrb[0].mxu0
      %v1674 = vadd.f32 0.0, %v1673
      %v1675 = vpop.f32.mrb[0].mxu0
      %v1676 = vadd.f32 0.0, %v1675
      %v1677 = vpop.f32.mrb[0].mxu0
      %v1678 = vadd.f32 0.0, %v1677
      %v1679 = vpop.f32.mrb[0].mxu0
      %v1680 = vadd.f32 0.0, %v1679
      %1681 = vmatprep.mubr.bf16.mxu0 %v1318
      %1682 = vmatmul.mubr.bf16.gmra.mrb[0].mxu0 %v1300
      %v1683 = vpop.f32.mrb[0].mxu0
      %v1684 = vadd.f32 0.0, %v1683
      %v1685 = vpop.f32.mrb[0].mxu0
      %v1686 = vadd.f32 0.0, %v1685
      %v1687 = vpop.f32.mrb[0].mxu0
      %v1688 = vadd.f32 0.0, %v1687
      %v1689 = vpop.f32.mrb[0].mxu0
      %v1690 = vadd.f32 0.0, %v1689
      %1691 = vmatprep.mubr.bf16.mxu0 %v1319
      %1692 = vmatmul.mubr.bf16.gmra.mrb[0].mxu0 %v1301
      %v1693 = vpop.f32.mrb[0].mxu0
      %v1694 = vadd.f32 0.0, %v1693
      %v1695 = vpop.f32.mrb[0].mxu0
      %v1696 = vadd.f32 0.0, %v1695
      %v1697 = vpop.f32.mrb[0].mxu0
      %v1698 = vadd.f32 0.0, %v1697
      %v1699 = vpop.f32.mrb[0].mxu0
      %v1700 = vadd.f32 0.0, %v1699
      %1701 = vmatprep.mubr.bf16.mxu0 %v1320
      %1702 = vmatmul.mubr.bf16.gmra.mrb[0].mxu0 %v1302
      %v1703 = vpop.f32.mrb[0].mxu0
      %v1704 = vadd.f32 0.0, %v1703
      %v1705 = vpop.f32.mrb[0].mxu0
      %v1706 = vadd.f32 0.0, %v1705
      %v1707 = vpop.f32.mrb[0].mxu0
      %v1708 = vadd.f32 0.0, %v1707
      %v1709 = vpop.f32.mrb[0].mxu0
      %v1710 = vadd.f32 0.0, %v1709
      %1711 = vmatprep.mubr.bf16.mxu0 %v1321
      %1712 = vmatmul.mubr.bf16.gmra.mrb[0].mxu0 %v1303
      %v1713 = vpop.f32.mrb[0].mxu0
      %v1714 = vadd.f32 0.0, %v1713
      %v1715 = vpop.f32.mrb[0].mxu0
      %v1716 = vadd.f32 0.0, %v1715
      %v1717 = vpop.f32.mrb[0].mxu0
      %v1718 = vadd.f32 0.0, %v1717
      %v1719 = vpop.f32.mrb[0].mxu0
      %v1720 = vadd.f32 0.0, %v1719
      %1721 = vdwg.mxu0
      %1722 = vmatprep.subr.bf16.mxu0 %v1566
      %1723 = vmatpush1.bf16.msra.mxu0 %v1565
      %1724 = vmatprep.subr.bf16.mxu0 %v1568
      %1725 = vmatpush1.bf16.msra.mxu0 %v1567
      %1726 = vmatprep.subr.bf16.mxu0 %v1570
      %1727 = vmatpush1.bf16.msra.mxu0 %v1569
      %1728 = vmatprep.subr.bf16.mxu0 %v1572
      %1729 = vmatpush1.bf16.msra.mxu0 %v1571
      %1730 = vmatprep.subr.bf16.mxu0 %v1574
      %1731 = vmatpush1.bf16.msra.mxu0 %v1573
      %1732 = vmatprep.subr.bf16.mxu0 %v1576
      %1733 = vmatpush1.bf16.msra.mxu0 %v1575
      %1734 = vmatprep.subr.bf16.mxu0 %v1578
      %1735 = vmatpush1.bf16.msra.mxu0 %v1577
      %1736 = vmatprep.subr.bf16.mxu0 %v1580
      %1737 = vmatpush1.bf16.msra.mxu0 %v1579
      %1738 = vmatprep.subr.bf16.mxu0 0
      %1739 = vmatpush1.bf16.msra.mxu0 0
      %1740 = vmatprep.subr.bf16.mxu0 0
      %1741 = vmatpush1.bf16.msra.mxu0 0
      %1742 = vmatprep.subr.bf16.mxu0 0
      %1743 = vmatpush1.bf16.msra.mxu0 0
      %1744 = vmatprep.subr.bf16.mxu0 0
      %1745 = vmatpush1.bf16.msra.mxu0 0
      %1746 = vmatprep.subr.bf16.mxu0 0
      %1747 = vmatpush1.bf16.msra.mxu0 0
      %1748 = vmatprep.subr.bf16.mxu0 0
      %1749 = vmatpush1.bf16.msra.mxu0 0
      %1750 = vmatprep.subr.bf16.mxu0 0
      %1751 = vmatpush1.bf16.msra.mxu0 0
      %1752 = vmatprep.subr.bf16.mxu0 0
      %1753 = vmatpush1.bf16.msra.mxu0 0
      %1754 = vmatprep.mubr.bf16.mxu0 0
      %1755 = vmatmul.mubr.bf16.gmra.mrb[0].mxu0 %v1334
      %v1756 = vpop.f32.mrb[0].mxu0
      %v1757 = vadd.f32 %v1664, %v1756
      %v1758 = vpop.f32.mrb[0].mxu0
      %v1759 = vadd.f32 %v1666, %v1758
      %v1760 = vpop.f32.mrb[0].mxu0
      %v1761 = vadd.f32 %v1668, %v1760
      %v1762 = vpop.f32.mrb[0].mxu0
      %v1763 = vadd.f32 %v1670, %v1762
      %1764 = vmatprep.mubr.bf16.mxu0 0
      %1765 = vmatmul.mubr.bf16.gmra.mrb[0].mxu0 %v1335
      %v1766 = vpop.f32.mrb[0].mxu0
      %v1767 = vadd.f32 %v1674, %v1766
      %v1768 = vpop.f32.mrb[0].mxu0
      %v1769 = vadd.f32 %v1676, %v1768
      %v1770 = vpop.f32.mrb[0].mxu0
      %v1771 = vadd.f32 %v1678, %v1770
      %v1772 = vpop.f32.mrb[0].mxu0
      %v1773 = vadd.f32 %v1680, %v1772
      %1774 = vmatprep.mubr.bf16.mxu0 0
      %1775 = vmatmul.mubr.bf16.gmra.mrb[0].mxu0 %v1336
      %v1776 = vpop.f32.mrb[0].mxu0
      %v1777 = vadd.f32 %v1684, %v1776
      %v1778 = vpop.f32.mrb[0].mxu0
      %v1779 = vadd.f32 %v1686, %v1778
      %v1780 = vpop.f32.mrb[0].mxu0
      %v1781 = vadd.f32 %v1688, %v1780
      %v1782 = vpop.f32.mrb[0].mxu0
      %v1783 = vadd.f32 %v1690, %v1782
      %1784 = vmatprep.mubr.bf16.mxu0 0
      %1785 = vmatmul.mubr.bf16.gmra.mrb[0].mxu0 %v1337
      %v1786 = vpop.f32.mrb[0].mxu0
      %v1787 = vadd.f32 %v1694, %v1786
      %v1788 = vpop.f32.mrb[0].mxu0
      %v1789 = vadd.f32 %v1696, %v1788
      %v1790 = vpop.f32.mrb[0].mxu0
      %v1791 = vadd.f32 %v1698, %v1790
      %v1792 = vpop.f32.mrb[0].mxu0
      %v1793 = vadd.f32 %v1700, %v1792
      %1794 = vmatprep.mubr.bf16.mxu0 0
      %1795 = vmatmul.mubr.bf16.gmra.mrb[0].mxu0 %v1338
      %v1796 = vpop.f32.mrb[0].mxu0
      %v1797 = vadd.f32 %v1704, %v1796
      %v1798 = vpop.f32.mrb[0].mxu0
      %v1799 = vadd.f32 %v1706, %v1798
      %v1800 = vpop.f32.mrb[0].mxu0
      %v1801 = vadd.f32 %v1708, %v1800
      %v1802 = vpop.f32.mrb[0].mxu0
      %v1803 = vadd.f32 %v1710, %v1802
      %1804 = vmatprep.mubr.bf16.mxu0 0
      %1805 = vmatmul.mubr.bf16.gmra.mrb[0].mxu0 %v1339
      %v1806 = vpop.f32.mrb[0].mxu0
      %v1807 = vadd.f32 %v1714, %v1806
      %v1808 = vpop.f32.mrb[0].mxu0
      %v1809 = vadd.f32 %v1716, %v1808
      %v1810 = vpop.f32.mrb[0].mxu0
      %v1811 = vadd.f32 %v1718, %v1810
      %v1812 = vpop.f32.mrb[0].mxu0
      %v1813 = vadd.f32 %v1720, %v1812
      %1814 = vdwg.mxu0
      %v1815 = vadd.f32 %v1228, %v1757
      %v1816 = vadd.f32 %v1230, %v1759
      %v1817 = vadd.f32 %v1232, %v1761
      %v1818 = vadd.f32 %v1234, %v1763
      %v1819 = vadd.f32 %v1238, %v1767
      %v1820 = vadd.f32 %v1240, %v1769
      %v1821 = vadd.f32 %v1242, %v1771
      %v1822 = vadd.f32 %v1244, %v1773
      %v1823 = vadd.f32 %v1248, %v1777
      %v1824 = vadd.f32 %v1250, %v1779
      %v1825 = vadd.f32 %v1252, %v1781
      %v1826 = vadd.f32 %v1254, %v1783
      %v1827 = vadd.f32 %v1258, %v1787
      %v1828 = vadd.f32 %v1260, %v1789
      %v1829 = vadd.f32 %v1262, %v1791
      %v1830 = vadd.f32 %v1264, %v1793
      %v1831 = vadd.f32 %v1268, %v1797
      %v1832 = vadd.f32 %v1270, %v1799
      %v1833 = vadd.f32 %v1272, %v1801
      %v1834 = vadd.f32 %v1274, %v1803
      %v1835 = vadd.f32 %v1278, %v1807
      %v1836 = vadd.f32 %v1280, %v1809
      %v1837 = vadd.f32 %v1282, %v1811
      %v1838 = vadd.f32 %v1284, %v1813
      %v1839 = vld [vmem:[%s2] sm:$0x3]
      %v1841 = vlaneseq
      %v1842 = vshrl.u32 %v1841, 7
      %v1843 = vsub.s32 0, %v1842
      %v1844 = vrot.slane %v1839, %v1843
      %v1845 = vlaneseq
      %v1846 = vshrl.u32 %v1845, 7
      %v1847 = vsub.s32 1, %v1846
      %v1848 = vrot.slane %v1839, %v1847
      %v1851 = vadd.f32 %v1815, %v1844
      %v1852 = vadd.f32 %v1816, %v1848
      %v1853 = vadd.f32 %v1817, %v1844
      %v1854 = vadd.f32 %v1818, %v1848
      %v1855 = vadd.f32 %v1819, %v1844
      %v1856 = vadd.f32 %v1820, %v1848
      %v1857 = vadd.f32 %v1821, %v1844
      %v1858 = vadd.f32 %v1822, %v1848
      %v1859 = vadd.f32 %v1823, %v1844
      %v1860 = vadd.f32 %v1824, %v1848
      %v1861 = vadd.f32 %v1825, %v1844
      %v1862 = vadd.f32 %v1826, %v1848
      %v1863 = vadd.f32 %v1827, %v1844
      %v1864 = vadd.f32 %v1828, %v1848
      %v1865 = vadd.f32 %v1829, %v1844
      %v1866 = vadd.f32 %v1830, %v1848
      %v1867 = vadd.f32 %v1831, %v1844
      %v1868 = vadd.f32 %v1832, %v1848
      %v1869 = vadd.f32 %v1833, %v1844
      %v1870 = vadd.f32 %v1834, %v1848
      %v1871 = vadd.f32 %v1835, %v1844
      %v1872 = vadd.f32 %v1836, %v1848
      %v1873 = vadd.f32 %v1837, %v1844
      %v1874 = vadd.f32 %v1838, %v1848
      %v1875 = vmax.f32 %v1851, 0.0
      %v1876 = vmax.f32 %v1852, 0.0
      %v1877 = vmax.f32 %v1853, 0.0
      %v1878 = vmax.f32 %v1854, 0.0
      %v1879 = vmax.f32 %v1855, 0.0
      %v1880 = vmax.f32 %v1856, 0.0
      %v1881 = vmax.f32 %v1857, 0.0
      %v1882 = vmax.f32 %v1858, 0.0
      %v1883 = vmax.f32 %v1859, 0.0
      %v1884 = vmax.f32 %v1860, 0.0
      %v1885 = vmax.f32 %v1861, 0.0
      %v1886 = vmax.f32 %v1862, 0.0
      %v1887 = vmax.f32 %v1863, 0.0
      %v1888 = vmax.f32 %v1864, 0.0
      %v1889 = vmax.f32 %v1865, 0.0
      %v1890 = vmax.f32 %v1866, 0.0
      %v1891 = vmax.f32 %v1867, 0.0
      %v1892 = vmax.f32 %v1868, 0.0
      %v1893 = vmax.f32 %v1869, 0.0
      %v1894 = vmax.f32 %v1870, 0.0
      %v1895 = vmax.f32 %v1871, 0.0
      %v1896 = vmax.f32 %v1872, 0.0
      %v1897 = vmax.f32 %v1873, 0.0
      %v1898 = vmax.f32 %v1874, 0.0
      %v1899 = vlaneseq
      %v1900 = vshrl.u32 %v1899, 7
      %v1901 = vadd.s32 %v1900, 8
      %v1902 = vadd.s32 %v1900, 16
      %v1903 = vadd.s32 %v1900, 24
      %v1904 = vadd.s32 %v1900, 32
      %v1905 = vadd.s32 %v1900, 40
      %v1906 = vadd.s32 %v1900, 48
      %v1907 = vadd.s32 %v1900, 56
      %v1908 = vadd.s32 %v1900, 64
      %v1909 = vadd.s32 %v1900, 72
      %v1910 = vadd.s32 %v1900, 80
      %v1911 = vadd.s32 %v1900, 88
      %vm1912 = vcmp.lt.s32.totalorder %v1900, 0
      %v1913 = vsub.s32 0, %v1900
      %v1914 = vsel %vm1912, %v1913, %v1900
      %v1915 = vmul.u32.u64.compose %v1914, 3817748708
      %v1916 = vextract.low.u32 %v1915
      %v1917 = vextract.high.u32 %v1915
      %v1918 = vshrl.u32 %v1917, 4
      %v1919 = vmul.u32 %v1918, 18
      %v1920 = vsub.s32 %v1914, %v1919
      %v1921 = vsub.s32 0, %v1920
      %v1922 = vsel %vm1912, %v1921, %v1920
      %vm1923 = vcmp.lt.s32.totalorder %v1901, 0
      %v1924 = vsub.s32 0, %v1901
      %v1925 = vsel %vm1923, %v1924, %v1901
      %v1926 = vmul.u32.u64.compose %v1925, 3817748708
      %v1927 = vextract.low.u32 %v1926
      %v1928 = vextract.high.u32 %v1926
      %v1929 = vshrl.u32 %v1928, 4
      %v1930 = vmul.u32 %v1929, 18
      %v1931 = vsub.s32 %v1925, %v1930
      %v1932 = vsub.s32 0, %v1931
      %v1933 = vsel %vm1923, %v1932, %v1931
      %vm1934 = vcmp.lt.s32.totalorder %v1902, 0
      %v1935 = vsub.s32 0, %v1902
      %v1936 = vsel %vm1934, %v1935, %v1902
      %v1937 = vmul.u32.u64.compose %v1936, 3817748708
      %v1938 = vextract.low.u32 %v1937
      %v1939 = vextract.high.u32 %v1937
      %v1940 = vshrl.u32 %v1939, 4
      %v1941 = vmul.u32 %v1940, 18
      %v1942 = vsub.s32 %v1936, %v1941
      %v1943 = vsub.s32 0, %v1942
      %v1944 = vsel %vm1934, %v1943, %v1942
      %vm1945 = vcmp.lt.s32.totalorder %v1903, 0
      %v1946 = vsub.s32 0, %v1903
      %v1947 = vsel %vm1945, %v1946, %v1903
      %v1948 = vmul.u32.u64.compose %v1947, 3817748708
      %v1949 = vextract.low.u32 %v1948
      %v1950 = vextract.high.u32 %v1948
      %v1951 = vshrl.u32 %v1950, 4
      %v1952 = vmul.u32 %v1951, 18
      %v1953 = vsub.s32 %v1947, %v1952
      %v1954 = vsub.s32 0, %v1953
      %v1955 = vsel %vm1945, %v1954, %v1953
      %vm1956 = vcmp.lt.s32.totalorder %v1904, 0
      %v1957 = vsub.s32 0, %v1904
      %v1958 = vsel %vm1956, %v1957, %v1904
      %v1959 = vmul.u32.u64.compose %v1958, 3817748708
      %v1960 = vextract.low.u32 %v1959
      %v1961 = vextract.high.u32 %v1959
      %v1962 = vshrl.u32 %v1961, 4
      %v1963 = vmul.u32 %v1962, 18
      %v1964 = vsub.s32 %v1958, %v1963
      %v1965 = vsub.s32 0, %v1964
      %v1966 = vsel %vm1956, %v1965, %v1964
      %vm1967 = vcmp.lt.s32.totalorder %v1905, 0
      %v1968 = vsub.s32 0, %v1905
      %v1969 = vsel %vm1967, %v1968, %v1905
      %v1970 = vmul.u32.u64.compose %v1969, 3817748708
      %v1971 = vextract.low.u32 %v1970
      %v1972 = vextract.high.u32 %v1970
      %v1973 = vshrl.u32 %v1972, 4
      %v1974 = vmul.u32 %v1973, 18
      %v1975 = vsub.s32 %v1969, %v1974
      %v1976 = vsub.s32 0, %v1975
      %v1977 = vsel %vm1967, %v1976, %v1975
      %vm1978 = vcmp.lt.s32.totalorder %v1906, 0
      %v1979 = vsub.s32 0, %v1906
      %v1980 = vsel %vm1978, %v1979, %v1906
      %v1981 = vmul.u32.u64.compose %v1980, 3817748708
      %v1982 = vextract.low.u32 %v1981
      %v1983 = vextract.high.u32 %v1981
      %v1984 = vshrl.u32 %v1983, 4
      %v1985 = vmul.u32 %v1984, 18
      %v1986 = vsub.s32 %v1980, %v1985
      %v1987 = vsub.s32 0, %v1986
      %v1988 = vsel %vm1978, %v1987, %v1986
      %vm1989 = vcmp.lt.s32.totalorder %v1907, 0
      %v1990 = vsub.s32 0, %v1907
      %v1991 = vsel %vm1989, %v1990, %v1907
      %v1992 = vmul.u32.u64.compose %v1991, 3817748708
      %v1993 = vextract.low.u32 %v1992
      %v1994 = vextract.high.u32 %v1992
      %v1995 = vshrl.u32 %v1994, 4
      %v1996 = vmul.u32 %v1995, 18
      %v1997 = vsub.s32 %v1991, %v1996
      %v1998 = vsub.s32 0, %v1997
      %v1999 = vsel %vm1989, %v1998, %v1997
      %vm2000 = vcmp.lt.s32.totalorder %v1908, 0
      %v2001 = vsub.s32 0, %v1908
      %v2002 = vsel %vm2000, %v2001, %v1908
      %v2003 = vmul.u32.u64.compose %v2002, 3817748708
      %v2004 = vextract.low.u32 %v2003
      %v2005 = vextract.high.u32 %v2003
      %v2006 = vshrl.u32 %v2005, 4
      %v2007 = vmul.u32 %v2006, 18
      %v2008 = vsub.s32 %v2002, %v2007
      %v2009 = vsub.s32 0, %v2008
      %v2010 = vsel %vm2000, %v2009, %v2008
      %vm2011 = vcmp.lt.s32.totalorder %v1909, 0
      %v2012 = vsub.s32 0, %v1909
      %v2013 = vsel %vm2011, %v2012, %v1909
      %v2014 = vmul.u32.u64.compose %v2013, 3817748708
      %v2015 = vextract.low.u32 %v2014
      %v2016 = vextract.high.u32 %v2014
      %v2017 = vshrl.u32 %v2016, 4
      %v2018 = vmul.u32 %v2017, 18
      %v2019 = vsub.s32 %v2013, %v2018
      %v2020 = vsub.s32 0, %v2019
      %v2021 = vsel %vm2011, %v2020, %v2019
      %vm2022 = vcmp.lt.s32.totalorder %v1910, 0
      %v2023 = vsub.s32 0, %v1910
      %v2024 = vsel %vm2022, %v2023, %v1910
      %v2025 = vmul.u32.u64.compose %v2024, 3817748708
      %v2026 = vextract.low.u32 %v2025
      %v2027 = vextract.high.u32 %v2025
      %v2028 = vshrl.u32 %v2027, 4
      %v2029 = vmul.u32 %v2028, 18
      %v2030 = vsub.s32 %v2024, %v2029
      %v2031 = vsub.s32 0, %v2030
      %v2032 = vsel %vm2022, %v2031, %v2030
      %vm2033 = vcmp.lt.s32.totalorder %v1911, 0
      %v2034 = vsub.s32 0, %v1911
      %v2035 = vsel %vm2033, %v2034, %v1911
      %v2036 = vmul.u32.u64.compose %v2035, 3817748708
      %v2037 = vextract.low.u32 %v2036
      %v2038 = vextract.high.u32 %v2036
      %v2039 = vshrl.u32 %v2038, 4
      %v2040 = vmul.u32 %v2039, 18
      %v2041 = vsub.s32 %v2035, %v2040
      %v2042 = vsub.s32 0, %v2041
      %v2043 = vsel %vm2033, %v2042, %v2041
      %vm2044 = vcmp.ne.s32.totalorder %v1922, 0
      %vm2045 = vcmp.ne.s32.totalorder %v1933, 0
      %vm2046 = vcmp.ne.s32.totalorder %v1944, 0
      %vm2047 = vcmp.ne.s32.totalorder %v1955, 0
      %vm2048 = vcmp.ne.s32.totalorder %v1966, 0
      %vm2049 = vcmp.ne.s32.totalorder %v1977, 0
      %vm2050 = vcmp.ne.s32.totalorder %v1988, 0
      %vm2051 = vcmp.ne.s32.totalorder %v1999, 0
      %vm2052 = vcmp.ne.s32.totalorder %v2010, 0
      %vm2053 = vcmp.ne.s32.totalorder %v2021, 0
      %vm2054 = vcmp.ne.s32.totalorder %v2032, 0
      %vm2055 = vcmp.ne.s32.totalorder %v2043, 0
      %vm2056 = vcmp.lt.s32.totalorder %v1922, 0
      %vm2057 = vcmp.lt.s32.totalorder %v1933, 0
      %vm2058 = vcmp.lt.s32.totalorder %v1944, 0
      %vm2059 = vcmp.lt.s32.totalorder %v1955, 0
      %vm2060 = vcmp.lt.s32.totalorder %v1966, 0
      %vm2061 = vcmp.lt.s32.totalorder %v1977, 0
      %vm2062 = vcmp.lt.s32.totalorder %v1988, 0
      %vm2063 = vcmp.lt.s32.totalorder %v1999, 0
      %vm2064 = vcmp.lt.s32.totalorder %v2010, 0
      %vm2065 = vcmp.lt.s32.totalorder %v2021, 0
      %vm2066 = vcmp.lt.s32.totalorder %v2032, 0
      %vm2067 = vcmp.lt.s32.totalorder %v2043, 0
      %vm2068 = vmand %vm2056, %vm2044
      %vm2069 = vmand %vm2057, %vm2045
      %vm2070 = vmand %vm2058, %vm2046
      %vm2071 = vmand %vm2059, %vm2047
      %vm2072 = vmand %vm2060, %vm2048
      %vm2073 = vmand %vm2061, %vm2049
      %vm2074 = vmand %vm2062, %vm2050
      %vm2075 = vmand %vm2063, %vm2051
      %vm2076 = vmand %vm2064, %vm2052
      %vm2077 = vmand %vm2065, %vm2053
      %vm2078 = vmand %vm2066, %vm2054
      %vm2079 = vmand %vm2067, %vm2055
      %v2080 = vadd.s32 %v1922, 18
      %v2081 = vadd.s32 %v1933, 18
      %v2082 = vadd.s32 %v1944, 18
      %v2083 = vadd.s32 %v1955, 18
      %v2084 = vadd.s32 %v1966, 18
      %v2085 = vadd.s32 %v1977, 18
      %v2086 = vadd.s32 %v1988, 18
      %v2087 = vadd.s32 %v1999, 18
      %v2088 = vadd.s32 %v2010, 18
      %v2089 = vadd.s32 %v2021, 18
      %v2090 = vadd.s32 %v2032, 18
      %v2091 = vadd.s32 %v2043, 18
      %v2092 = vsel %vm2068, %v2080, %v1922
      %v2093 = vsel %vm2069, %v2081, %v1933
      %v2094 = vsel %vm2070, %v2082, %v1944
      %v2095 = vsel %vm2071, %v2083, %v1955
      %v2096 = vsel %vm2072, %v2084, %v1966
      %v2097 = vsel %vm2073, %v2085, %v1977
      %v2098 = vsel %vm2074, %v2086, %v1988
      %v2099 = vsel %vm2075, %v2087, %v1999
      %v2100 = vsel %vm2076, %v2088, %v2010
      %v2101 = vsel %vm2077, %v2089, %v2021
      %v2102 = vsel %vm2078, %v2090, %v2032
      %v2103 = vsel %vm2079, %v2091, %v2043
      %vm2104 = vcmp.lt.s32.totalorder %v2092, 16
      %vm2105 = vcmp.lt.s32.totalorder %v2093, 16
      %vm2106 = vcmp.lt.s32.totalorder %v2094, 16
      %vm2107 = vcmp.lt.s32.totalorder %v2095, 16
      %vm2108 = vcmp.lt.s32.totalorder %v2096, 16
      %vm2109 = vcmp.lt.s32.totalorder %v2097, 16
      %vm2110 = vcmp.lt.s32.totalorder %v2098, 16
      %vm2111 = vcmp.lt.s32.totalorder %v2099, 16
      %vm2112 = vcmp.lt.s32.totalorder %v2100, 16
      %vm2113 = vcmp.lt.s32.totalorder %v2101, 16
      %vm2114 = vcmp.lt.s32.totalorder %v2102, 16
      %vm2115 = vcmp.lt.s32.totalorder %v2103, 16
      %v2116 = vsel %vm2104, 1, 0
      %v2117 = vsel %vm2105, 1, 0
      %v2118 = vsel %vm2106, 1, 0
      %v2119 = vsel %vm2107, 1, 0
      %v2120 = vsel %vm2108, 1, 0
      %v2121 = vsel %vm2109, 1, 0
      %v2122 = vsel %vm2110, 1, 0
      %v2123 = vsel %vm2111, 1, 0
      %v2124 = vsel %vm2112, 1, 0
      %v2125 = vsel %vm2113, 1, 0
      %v2126 = vsel %vm2114, 1, 0
      %v2127 = vsel %vm2115, 1, 0
      %vm2128 = vcmp.eq.s32.totalorder %v2116, 1
      %vm2129 = vcmp.eq.s32.totalorder %v2117, 1
      %vm2130 = vcmp.eq.s32.totalorder %v2118, 1
      %vm2131 = vcmp.eq.s32.totalorder %v2119, 1
      %vm2132 = vcmp.eq.s32.totalorder %v2120, 1
      %vm2133 = vcmp.eq.s32.totalorder %v2121, 1
      %vm2134 = vcmp.eq.s32.totalorder %v2122, 1
      %vm2135 = vcmp.eq.s32.totalorder %v2123, 1
      %vm2136 = vcmp.eq.s32.totalorder %v2124, 1
      %vm2137 = vcmp.eq.s32.totalorder %v2125, 1
      %vm2138 = vcmp.eq.s32.totalorder %v2126, 1
      %vm2139 = vcmp.eq.s32.totalorder %v2127, 1
      %v2140 = vsel %vm2128, %v1875, 0.0
      %v2141 = vsel %vm2128, %v1876, 0.0
      %v2142 = vsel %vm2129, %v1877, 0.0
      %v2143 = vsel %vm2129, %v1878, 0.0
      %v2144 = vsel %vm2130, %v1879, 0.0
      %v2145 = vsel %vm2130, %v1880, 0.0
      %v2146 = vsel %vm2131, %v1881, 0.0
      %v2147 = vsel %vm2131, %v1882, 0.0
      %v2148 = vsel %vm2132, %v1883, 0.0
      %v2149 = vsel %vm2132, %v1884, 0.0
      %v2150 = vsel %vm2133, %v1885, 0.0
      %v2151 = vsel %vm2133, %v1886, 0.0
      %v2152 = vsel %vm2134, %v1887, 0.0
      %v2153 = vsel %vm2134, %v1888, 0.0
      %v2154 = vsel %vm2135, %v1889, 0.0
      %v2155 = vsel %vm2135, %v1890, 0.0
      %v2156 = vsel %vm2136, %v1891, 0.0
      %v2157 = vsel %vm2136, %v1892, 0.0
      %v2158 = vsel %vm2137, %v1893, 0.0
      %v2159 = vsel %vm2137, %v1894, 0.0
      %v2160 = vsel %vm2138, %v1895, 0.0
      %v2161 = vsel %vm2138, %v1896, 0.0
      %v2162 = vsel %vm2139, %v1897, 0.0
      %v2163 = vsel %vm2139, %v1898, 0.0
      %vm2188 = vcmask 1042432
      %v2189 = vrot.slane %v2140, 5
      %v2190 = vrot.slane %v2141, 5
      %v2191 = vrot.slane %v2142, 5
      %v2192 = vsel %vm2188, %v2189, %v2191
      %v2193 = vrot.slane %v2143, 5
      %v2194 = vsel %vm2188, %v2190, %v2193
      %v2195 = vrot.slane %v2144, 5
      %v2196 = vsel %vm2188, %v2191, %v2195
      %v2197 = vrot.slane %v2145, 5
      %v2198 = vsel %vm2188, %v2193, %v2197
      %v2199 = vrot.slane %v2146, 5
      %v2200 = vsel %vm2188, %v2195, %v2199
      %v2201 = vrot.slane %v2147, 5
      %v2202 = vsel %vm2188, %v2197, %v2201
      %v2203 = vrot.slane %v2148, 5
      %v2204 = vsel %vm2188, %v2199, %v2203
      %v2205 = vrot.slane %v2149, 5
      %v2206 = vsel %vm2188, %v2201, %v2205
      %v2207 = vrot.slane %v2150, 5
      %v2208 = vsel %vm2188, %v2203, %v2207
      %v2209 = vrot.slane %v2151, 5
      %v2210 = vsel %vm2188, %v2205, %v2209
      %v2211 = vrot.slane %v2152, 5
      %v2212 = vsel %vm2188, %v2207, %v2211
      %v2213 = vrot.slane %v2153, 5
      %v2214 = vsel %vm2188, %v2209, %v2213
      %v2215 = vrot.slane %v2154, 5
      %v2216 = vsel %vm2188, %v2211, %v2215
      %v2217 = vrot.slane %v2155, 5
      %v2218 = vsel %vm2188, %v2213, %v2217
      %v2219 = vrot.slane %v2156, 5
      %v2220 = vsel %vm2188, %v2215, %v2219
      %v2221 = vrot.slane %v2157, 5
      %v2222 = vsel %vm2188, %v2217, %v2221
      %v2223 = vrot.slane %v2158, 5
      %v2224 = vsel %vm2188, %v2219, %v2223
      %v2225 = vrot.slane %v2159, 5
      %v2226 = vsel %vm2188, %v2221, %v2225
      %v2227 = vrot.slane %v2160, 5
      %v2228 = vsel %vm2188, %v2223, %v2227
      %v2229 = vrot.slane %v2161, 5
      %v2230 = vsel %vm2188, %v2225, %v2229
      %v2231 = vrot.slane %v2162, 5
      %v2232 = vsel %vm2188, %v2227, %v2231
      %v2233 = vrot.slane %v2163, 5
      %v2234 = vsel %vm2188, %v2229, %v2233
      %2261 = vst [vmem:[#allocation2 + $0x20] sm:$0xf8] %v2189
      %2262 = vst [vmem:[#allocation2 + $0x28] sm:$0xf8] %v2190
      %2263 = vst [vmem:[#allocation2 + $0x30] sm:$0xff] %v2192
      %2264 = vst [vmem:[#allocation2 + $0x38] sm:$0xff] %v2194
      %2265 = vst [vmem:[#allocation2 + $0x40] sm:$0xff] %v2196
      %2266 = vst [vmem:[#allocation2 + $0x48] sm:$0xff] %v2198
      %2267 = vst [vmem:[#allocation2 + $0x50] sm:$0xff] %v2200
      %2268 = vst [vmem:[#allocation2 + $0x58] sm:$0xff] %v2202
      %2269 = vst [vmem:[#allocation2 + $0x60] sm:$0xff] %v2204
      %2270 = vst [vmem:[#allocation2 + $0x68] sm:$0xff] %v2206
      %2271 = vst [vmem:[#allocation2 + $0x70] sm:$0xff] %v2208
      %2272 = vst [vmem:[#allocation2 + $0x78] sm:$0xff] %v2210
      %2273 = vst [vmem:[#allocation2 + $0x80] sm:$0xff] %v2212
      %2274 = vst [vmem:[#allocation2 + $0x88] sm:$0xff] %v2214
      %2275 = vst [vmem:[#allocation2 + $0x90] sm:$0xff] %v2216
      %2276 = vst [vmem:[#allocation2 + $0x98] sm:$0xff] %v2218
      %2277 = vst [vmem:[#allocation2 + $0xa0] sm:$0xff] %v2220
      %2278 = vst [vmem:[#allocation2 + $0xa8] sm:$0xff] %v2222
      %2279 = vst [vmem:[#allocation2 + $0xb0] sm:$0xff] %v2224
      %2280 = vst [vmem:[#allocation2 + $0xb8] sm:$0xff] %v2226
      %2281 = vst [vmem:[#allocation2 + $0xc0] sm:$0xff] %v2228
      %2282 = vst [vmem:[#allocation2 + $0xc8] sm:$0xff] %v2230
      %2283 = vst [vmem:[#allocation2 + $0xd0] sm:$0xff] %v2232
      %2284 = vst [vmem:[#allocation2 + $0xd8] sm:$0xff] %v2234
      %2285 = vst [vmem:[#allocation2 + $0xe0] sm:$0x7] %v2231
      %2286 = vst [vmem:[#allocation2 + $0xe8] sm:$0x7] %v2233
      %v2287 = vld [vmem:[%s221 + $0x60] sm:$0xff]
      %v2288 = vld [vmem:[%s221 + $0x68] sm:$0xff]
      %v2289 = vld [vmem:[%s221 + $0x70] sm:$0xff]
      %v2290 = vld [vmem:[%s221 + $0x78] sm:$0xff]
      %v2291 = vld [vmem:[%s221 + $0x80] sm:$0xff]
      %v2292 = vld [vmem:[%s221 + $0x88] sm:$0xff]
      %v2293 = vld [vmem:[%s221 + $0x90] sm:$0xff]
      %v2294 = vld [vmem:[%s221 + $0x98] sm:$0xff]
      %v2295 = vld [vmem:[%s221 + $0xa0] sm:$0xff]
      %v2296 = vld [vmem:[%s221 + $0xa8] sm:$0xff]
      %v2297 = vld [vmem:[%s221 + $0xb0] sm:$0xff]
      %v2298 = vld [vmem:[%s221 + $0xb8] sm:$0xff]
      %v2299 = vpack.c.bf16 %v2288, %v2287
      %v2300 = vpack.c.bf16 %v2290, %v2289
      %v2301 = vpack.c.bf16 %v2292, %v2291
      %v2302 = vpack.c.bf16 %v2294, %v2293
      %v2303 = vpack.c.bf16 %v2296, %v2295
      %v2304 = vpack.c.bf16 %v2298, %v2297
      %v2305 = vld [vmem:[%s221 + $0x61] sm:$0xff]
      %v2306 = vld [vmem:[%s221 + $0x69] sm:$0xff]
      %v2307 = vld [vmem:[%s221 + $0x71] sm:$0xff]
      %v2308 = vld [vmem:[%s221 + $0x79] sm:$0xff]
      %v2309 = vld [vmem:[%s221 + $0x81] sm:$0xff]
      %v2310 = vld [vmem:[%s221 + $0x89] sm:$0xff]
      %v2311 = vld [vmem:[%s221 + $0x91] sm:$0xff]
      %v2312 = vld [vmem:[%s221 + $0x99] sm:$0xff]
      %v2313 = vld [vmem:[%s221 + $0xa1] sm:$0xff]
      %v2314 = vld [vmem:[%s221 + $0xa9] sm:$0xff]
      %v2315 = vld [vmem:[%s221 + $0xb1] sm:$0xff]
      %v2316 = vld [vmem:[%s221 + $0xb9] sm:$0xff]
      %v2317 = vpack.c.bf16 %v2306, %v2305
      %v2318 = vpack.c.bf16 %v2308, %v2307
      %v2319 = vpack.c.bf16 %v2310, %v2309
      %v2320 = vpack.c.bf16 %v2312, %v2311
      %v2321 = vpack.c.bf16 %v2314, %v2313
      %v2322 = vpack.c.bf16 %v2316, %v2315
      %v2323 = vld [vmem:[%s221 + $0x62] sm:$0xff]
      %v2324 = vld [vmem:[%s221 + $0x6a] sm:$0xff]
      %v2325 = vld [vmem:[%s221 + $0x72] sm:$0xff]
      %v2326 = vld [vmem:[%s221 + $0x7a] sm:$0xff]
      %v2327 = vld [vmem:[%s221 + $0x82] sm:$0xff]
      %v2328 = vld [vmem:[%s221 + $0x8a] sm:$0xff]
      %v2329 = vld [vmem:[%s221 + $0x92] sm:$0xff]
      %v2330 = vld [vmem:[%s221 + $0x9a] sm:$0xff]
      %v2331 = vld [vmem:[%s221 + $0xa2] sm:$0xff]
      %v2332 = vld [vmem:[%s221 + $0xaa] sm:$0xff]
      %v2333 = vld [vmem:[%s221 + $0xb2] sm:$0xff]
      %v2334 = vld [vmem:[%s221 + $0xba] sm:$0xff]
      %v2335 = vpack.c.bf16 %v2324, %v2323
      %v2336 = vpack.c.bf16 %v2326, %v2325
      %v2337 = vpack.c.bf16 %v2328, %v2327
      %v2338 = vpack.c.bf16 %v2330, %v2329
      %v2339 = vpack.c.bf16 %v2332, %v2331
      %v2340 = vpack.c.bf16 %v2334, %v2333
      %v2341 = vld [vmem:[%s1] sm:$0xff]
      %v2342 = vld [vmem:[%s1 + $0x8] sm:$0xff]
      %v2343 = vld [vmem:[%s1 + $0x10] sm:$0xff]
      %v2344 = vld [vmem:[%s1 + $0x18] sm:$0xff]
      %v2345 = vld [vmem:[%s1 + $0x20] sm:$0xff]
      %v2346 = vld [vmem:[%s1 + $0x28] sm:$0xff]
      %v2347 = vld [vmem:[%s1 + $0x30] sm:$0xff]
      %v2348 = vld [vmem:[%s1 + $0x38] sm:$0xff]
      %v2349 = vld [vmem:[%s1 + $0x40] sm:$0xff]
      %v2350 = vld [vmem:[%s1 + $0x48] sm:$0xff]
      %v2351 = vld [vmem:[%s1 + $0x50] sm:$0xff]
      %v2352 = vld [vmem:[%s1 + $0x58] sm:$0xff]
      %v2353 = vld [vmem:[%s1 + $0x60] sm:$0xff]
      %v2354 = vld [vmem:[%s1 + $0x68] sm:$0xff]
      %v2355 = vld [vmem:[%s1 + $0x70] sm:$0xff]
      %v2356 = vld [vmem:[%s1 + $0x78] sm:$0xff]
      %v2357 = vld [vmem:[%s1 + $0x80] sm:$0xff]
      %v2358 = vld [vmem:[%s1 + $0x88] sm:$0xff]
      %v2359 = vld [vmem:[%s1 + $0x90] sm:$0xff]
      %v2360 = vld [vmem:[%s1 + $0x98] sm:$0xff]
      %v2361 = vld [vmem:[%s1 + $0xa0] sm:$0xff]
      %v2362 = vld [vmem:[%s1 + $0xa8] sm:$0xff]
      %v2363 = vld [vmem:[%s1 + $0xb0] sm:$0xff]
      %v2364 = vld [vmem:[%s1 + $0xb8] sm:$0xff]
      %v2365 = vld [vmem:[%s1 + $0xc0] sm:$0xff]
      %v2366 = vld [vmem:[%s1 + $0xc8] sm:$0xff]
      %v2367 = vld [vmem:[%s1 + $0xd0] sm:$0xff]
      %v2368 = vld [vmem:[%s1 + $0xd8] sm:$0xff]
      %v2369 = vld [vmem:[%s1 + $0xe0] sm:$0xff]
      %v2370 = vld [vmem:[%s1 + $0xe8] sm:$0xff]
      %v2371 = vld [vmem:[%s1 + $0xf0] sm:$0xff]
      %v2372 = vld [vmem:[%s1 + $0xf8] sm:$0xff]
      %v2373 = vld [vmem:[%s1 + $0x100] sm:$0xff]
      %v2374 = vld [vmem:[%s1 + $0x108] sm:$0xff]
      %v2375 = vld [vmem:[%s1 + $0x110] sm:$0xff]
      %v2376 = vld [vmem:[%s1 + $0x118] sm:$0xff]
      %v2377 = vld [vmem:[%s1 + $0x120] sm:$0xff]
      %v2378 = vld [vmem:[%s1 + $0x128] sm:$0xff]
      %v2379 = vld [vmem:[%s1 + $0x130] sm:$0xff]
      %v2380 = vld [vmem:[%s1 + $0x138] sm:$0xff]
      %v2381 = vld [vmem:[%s1 + $0x140] sm:$0xff]
      %v2382 = vld [vmem:[%s1 + $0x148] sm:$0xff]
      %v2383 = vld [vmem:[%s1 + $0x150] sm:$0xff]
      %v2384 = vld [vmem:[%s1 + $0x158] sm:$0xff]
      %v2385 = vld [vmem:[%s1 + $0x160] sm:$0xff]
      %v2386 = vld [vmem:[%s1 + $0x168] sm:$0xff]
      %v2387 = vld [vmem:[%s1 + $0x170] sm:$0xff]
      %v2388 = vld [vmem:[%s1 + $0x178] sm:$0xff]
      %v2389 = vld [vmem:[%s221 + $0xc2] sm:$0xff]
      %v2390 = vld [vmem:[%s221 + $0xca] sm:$0xff]
      %v2391 = vpack.c.bf16 %v2390, %v2389
      %v2392 = vld [vmem:[%s221 + $0x73] sm:$0xff]
      %v2393 = vld [vmem:[%s221 + $0x7b] sm:$0xff]
      %v2394 = vld [vmem:[%s221 + $0x83] sm:$0xff]
      %v2395 = vld [vmem:[%s221 + $0x8b] sm:$0xff]
      %v2396 = vld [vmem:[%s221 + $0x93] sm:$0xff]
      %v2397 = vld [vmem:[%s221 + $0x9b] sm:$0xff]
      %v2398 = vld [vmem:[%s221 + $0xa3] sm:$0xff]
      %v2399 = vld [vmem:[%s221 + $0xab] sm:$0xff]
      %v2400 = vld [vmem:[%s221 + $0xb3] sm:$0xff]
      %v2401 = vld [vmem:[%s221 + $0xbb] sm:$0xff]
      %v2402 = vld [vmem:[%s221 + $0xc3] sm:$0xff]
      %v2403 = vld [vmem:[%s221 + $0xcb] sm:$0xff]
      %v2404 = vpack.c.bf16 %v2393, %v2392
      %v2405 = vpack.c.bf16 %v2395, %v2394
      %v2406 = vpack.c.bf16 %v2397, %v2396
      %v2407 = vpack.c.bf16 %v2399, %v2398
      %v2408 = vpack.c.bf16 %v2401, %v2400
      %v2409 = vpack.c.bf16 %v2403, %v2402
      %v2410 = vld [vmem:[%s221 + $0x74] sm:$0xff]
      %v2411 = vld [vmem:[%s221 + $0x7c] sm:$0xff]
      %v2412 = vld [vmem:[%s221 + $0x84] sm:$0xff]
      %v2413 = vld [vmem:[%s221 + $0x8c] sm:$0xff]
      %v2414 = vld [vmem:[%s221 + $0x94] sm:$0xff]
      %v2415 = vld [vmem:[%s221 + $0x9c] sm:$0xff]
      %v2416 = vld [vmem:[%s221 + $0xa4] sm:$0xff]
      %v2417 = vld [vmem:[%s221 + $0xac] sm:$0xff]
      %v2418 = vld [vmem:[%s221 + $0xb4] sm:$0xff]
      %v2419 = vld [vmem:[%s221 + $0xbc] sm:$0xff]
      %v2420 = vld [vmem:[%s221 + $0xc4] sm:$0xff]
      %v2421 = vld [vmem:[%s221 + $0xcc] sm:$0xff]
      %v2422 = vpack.c.bf16 %v2411, %v2410
      %v2423 = vpack.c.bf16 %v2413, %v2412
      %v2424 = vpack.c.bf16 %v2415, %v2414
      %v2425 = vpack.c.bf16 %v2417, %v2416
      %v2426 = vpack.c.bf16 %v2419, %v2418
      %v2427 = vpack.c.bf16 %v2421, %v2420
      %v2428 = vld [vmem:[%s385] sm:$0xff]
      %v2429 = vld [vmem:[%s385 + $0x8] sm:$0xff]
      %v2430 = vld [vmem:[%s385 + $0x10] sm:$0xff]
      %v2431 = vld [vmem:[%s385 + $0x18] sm:$0xff]
      %v2432 = vld [vmem:[%s385 + $0x20] sm:$0xff]
      %v2433 = vld [vmem:[%s385 + $0x28] sm:$0xff]
      %v2434 = vld [vmem:[%s385 + $0x30] sm:$0xff]
      %v2435 = vld [vmem:[%s385 + $0x38] sm:$0xff]
      %v2436 = vld [vmem:[%s385 + $0x40] sm:$0xff]
      %v2437 = vld [vmem:[%s385 + $0x48] sm:$0xff]
      %v2438 = vld [vmem:[%s385 + $0x50] sm:$0xff]
      %v2439 = vld [vmem:[%s385 + $0x58] sm:$0xff]
      %v2440 = vld [vmem:[%s385 + $0x60] sm:$0xff]
      %v2441 = vld [vmem:[%s385 + $0x68] sm:$0xff]
      %v2442 = vld [vmem:[%s385 + $0x70] sm:$0xff]
      %v2443 = vld [vmem:[%s385 + $0x78] sm:$0xff]
      %v2444 = vld [vmem:[%s385 + $0x80] sm:$0xff]
      %v2445 = vld [vmem:[%s385 + $0x88] sm:$0xff]
      %v2446 = vld [vmem:[%s385 + $0x90] sm:$0xff]
      %v2447 = vld [vmem:[%s385 + $0x98] sm:$0xff]
      %v2448 = vld [vmem:[%s385 + $0xa0] sm:$0xff]
      %v2449 = vld [vmem:[%s385 + $0xa8] sm:$0xff]
      %v2450 = vld [vmem:[%s385 + $0xb0] sm:$0xff]
      %v2451 = vld [vmem:[%s385 + $0xb8] sm:$0xff]
      %v2452 = vld [vmem:[%s385 + $0xc0] sm:$0xff]
      %v2453 = vld [vmem:[%s385 + $0xc8] sm:$0xff]
      %v2454 = vld [vmem:[%s385 + $0xd0] sm:$0xff]
      %v2455 = vld [vmem:[%s385 + $0xd8] sm:$0xff]
      %v2456 = vld [vmem:[%s385 + $0xe0] sm:$0xff]
      %v2457 = vld [vmem:[%s385 + $0xe8] sm:$0xff]
      %v2458 = vld [vmem:[%s385 + $0xf0] sm:$0xff]
      %v2459 = vld [vmem:[%s385 + $0xf8] sm:$0xff]
      %v2460 = vld [vmem:[%s385 + $0x100] sm:$0xff]
      %v2461 = vld [vmem:[%s385 + $0x108] sm:$0xff]
      %v2462 = vld [vmem:[%s385 + $0x110] sm:$0xff]
      %v2463 = vld [vmem:[%s385 + $0x118] sm:$0xff]
      %v2464 = vld [vmem:[%s385 + $0x120] sm:$0xff]
      %v2465 = vld [vmem:[%s385 + $0x128] sm:$0xff]
      %v2466 = vld [vmem:[%s385 + $0x130] sm:$0xff]
      %v2467 = vld [vmem:[%s385 + $0x138] sm:$0xff]
      %v2468 = vld [vmem:[%s385 + $0x140] sm:$0xff]
      %v2469 = vld [vmem:[%s385 + $0x148] sm:$0xff]
      %v2470 = vld [vmem:[%s385 + $0x150] sm:$0xff]
      %v2471 = vld [vmem:[%s385 + $0x158] sm:$0xff]
      %v2472 = vld [vmem:[%s385 + $0x160] sm:$0xff]
      %v2473 = vld [vmem:[%s385 + $0x168] sm:$0xff]
      %v2474 = vld [vmem:[%s385 + $0x170] sm:$0xff]
      %v2475 = vld [vmem:[%s385 + $0x178] sm:$0xff]
      %v2524 = vunpack.c.l.b16 %v2428
      %v2525 = vunpack.c.h.b16 %v2428
      %v2526 = vunpack.c.l.b16 %v2429
      %v2527 = vunpack.c.h.b16 %v2429
      %v2528 = vunpack.c.l.b16 %v2430
      %v2529 = vunpack.c.h.b16 %v2430
      %v2530 = vunpack.c.l.b16 %v2431
      %v2531 = vunpack.c.h.b16 %v2431
      %v2532 = vunpack.c.l.b16 %v2432
      %v2533 = vunpack.c.h.b16 %v2432
      %v2534 = vunpack.c.l.b16 %v2433
      %v2535 = vunpack.c.h.b16 %v2433
      %v2536 = vunpack.c.l.b16 %v2434
      %v2537 = vunpack.c.h.b16 %v2434
      %v2538 = vunpack.c.l.b16 %v2435
      %v2539 = vunpack.c.h.b16 %v2435
      %v2540 = vunpack.c.l.b16 %v2436
      %v2541 = vunpack.c.h.b16 %v2436
      %v2542 = vunpack.c.l.b16 %v2437
      %v2543 = vunpack.c.h.b16 %v2437
      %v2544 = vunpack.c.l.b16 %v2438
      %v2545 = vunpack.c.h.b16 %v2438
      %v2546 = vunpack.c.l.b16 %v2439
      %v2547 = vunpack.c.h.b16 %v2439
      %v2548 = vunpack.c.l.b16 %v2440
      %v2549 = vunpack.c.h.b16 %v2440
      %v2550 = vunpack.c.l.b16 %v2441
      %v2551 = vunpack.c.h.b16 %v2441
      %v2552 = vunpack.c.l.b16 %v2442
      %v2553 = vunpack.c.h.b16 %v2442
      %v2554 = vunpack.c.l.b16 %v2443
      %v2555 = vunpack.c.h.b16 %v2443
      %v2556 = vunpack.c.l.b16 %v2444
      %v2557 = vunpack.c.h.b16 %v2444
      %v2558 = vunpack.c.l.b16 %v2445
      %v2559 = vunpack.c.h.b16 %v2445
      %v2560 = vunpack.c.l.b16 %v2446
      %v2561 = vunpack.c.h.b16 %v2446
      %v2562 = vunpack.c.l.b16 %v2447
      %v2563 = vunpack.c.h.b16 %v2447
      %v2564 = vunpack.c.l.b16 %v2448
      %v2565 = vunpack.c.h.b16 %v2448
      %v2566 = vunpack.c.l.b16 %v2449
      %v2567 = vunpack.c.h.b16 %v2449
      %v2568 = vunpack.c.l.b16 %v2450
      %v2569 = vunpack.c.h.b16 %v2450
      %v2570 = vunpack.c.l.b16 %v2451
      %v2571 = vunpack.c.h.b16 %v2451
      %v2572 = vunpack.c.l.b16 %v2452
      %v2573 = vunpack.c.h.b16 %v2452
      %v2574 = vunpack.c.l.b16 %v2453
      %v2575 = vunpack.c.h.b16 %v2453
      %v2576 = vunpack.c.l.b16 %v2454
      %v2577 = vunpack.c.h.b16 %v2454
      %v2578 = vunpack.c.l.b16 %v2455
      %v2579 = vunpack.c.h.b16 %v2455
      %v2580 = vunpack.c.l.b16 %v2456
      %v2581 = vunpack.c.h.b16 %v2456
      %v2582 = vunpack.c.l.b16 %v2457
      %v2583 = vunpack.c.h.b16 %v2457
      %v2584 = vunpack.c.l.b16 %v2458
      %v2585 = vunpack.c.h.b16 %v2458
      %v2586 = vunpack.c.l.b16 %v2459
      %v2587 = vunpack.c.h.b16 %v2459
      %v2588 = vunpack.c.l.b16 %v2460
      %v2589 = vunpack.c.h.b16 %v2460
      %v2590 = vunpack.c.l.b16 %v2461
      %v2591 = vunpack.c.h.b16 %v2461
      %v2592 = vunpack.c.l.b16 %v2462
      %v2593 = vunpack.c.h.b16 %v2462
      %v2594 = vunpack.c.l.b16 %v2463
      %v2595 = vunpack.c.h.b16 %v2463
      %v2596 = vunpack.c.l.b16 %v2464
      %v2597 = vunpack.c.h.b16 %v2464
      %v2598 = vunpack.c.l.b16 %v2465
      %v2599 = vunpack.c.h.b16 %v2465
      %v2600 = vunpack.c.l.b16 %v2466
      %v2601 = vunpack.c.h.b16 %v2466
      %v2602 = vunpack.c.l.b16 %v2467
      %v2603 = vunpack.c.h.b16 %v2467
      %v2604 = vunpack.c.l.b16 %v2468
      %v2605 = vunpack.c.h.b16 %v2468
      %v2606 = vunpack.c.l.b16 %v2469
      %v2607 = vunpack.c.h.b16 %v2469
      %v2608 = vunpack.c.l.b16 %v2470
      %v2609 = vunpack.c.h.b16 %v2470
      %v2610 = vunpack.c.l.b16 %v2471
      %v2611 = vunpack.c.h.b16 %v2471
      %v2612 = vunpack.c.l.b16 %v2472
      %v2613 = vunpack.c.h.b16 %v2472
      %v2614 = vunpack.c.l.b16 %v2473
      %v2615 = vunpack.c.h.b16 %v2473
      %v2616 = vunpack.c.l.b16 %v2474
      %v2617 = vunpack.c.h.b16 %v2474
      %v2618 = vunpack.c.l.b16 %v2475
      %v2619 = vunpack.c.h.b16 %v2475
      %v2620 = vpack.c.b16 %v2526, %v2524
      %v2621 = vpack.c.b16 %v2527, %v2525
      %v2622 = vpack.c.b16 %v2530, %v2528
      %v2623 = vpack.c.b16 %v2531, %v2529
      %v2624 = vpack.c.b16 %v2534, %v2532
      %v2625 = vpack.c.b16 %v2535, %v2533
      %v2626 = vpack.c.b16 %v2538, %v2536
      %v2627 = vpack.c.b16 %v2539, %v2537
      %v2628 = vpack.c.b16 %v2542, %v2540
      %v2629 = vpack.c.b16 %v2543, %v2541
      %v2630 = vpack.c.b16 %v2546, %v2544
      %v2631 = vpack.c.b16 %v2547, %v2545
      %v2632 = vpack.c.b16 %v2550, %v2548
      %v2633 = vpack.c.b16 %v2551, %v2549
      %v2634 = vpack.c.b16 %v2554, %v2552
      %v2635 = vpack.c.b16 %v2555, %v2553
      %v2636 = vpack.c.b16 %v2558, %v2556
      %v2637 = vpack.c.b16 %v2559, %v2557
      %v2638 = vpack.c.b16 %v2562, %v2560
      %v2639 = vpack.c.b16 %v2563, %v2561
      %v2640 = vpack.c.b16 %v2566, %v2564
      %v2641 = vpack.c.b16 %v2567, %v2565
      %v2642 = vpack.c.b16 %v2570, %v2568
      %v2643 = vpack.c.b16 %v2571, %v2569
      %v2644 = vpack.c.b16 %v2574, %v2572
      %v2645 = vpack.c.b16 %v2575, %v2573
      %v2646 = vpack.c.b16 %v2578, %v2576
      %v2647 = vpack.c.b16 %v2579, %v2577
      %v2648 = vpack.c.b16 %v2582, %v2580
      %v2649 = vpack.c.b16 %v2583, %v2581
      %v2650 = vpack.c.b16 %v2586, %v2584
      %v2651 = vpack.c.b16 %v2587, %v2585
      %v2652 = vpack.c.b16 %v2590, %v2588
      %v2653 = vpack.c.b16 %v2591, %v2589
      %v2654 = vpack.c.b16 %v2594, %v2592
      %v2655 = vpack.c.b16 %v2595, %v2593
      %v2656 = vpack.c.b16 %v2598, %v2596
      %v2657 = vpack.c.b16 %v2599, %v2597
      %v2658 = vpack.c.b16 %v2602, %v2600
      %v2659 = vpack.c.b16 %v2603, %v2601
      %v2660 = vpack.c.b16 %v2606, %v2604
      %v2661 = vpack.c.b16 %v2607, %v2605
      %v2662 = vpack.c.b16 %v2610, %v2608
      %v2663 = vpack.c.b16 %v2611, %v2609
      %v2664 = vpack.c.b16 %v2614, %v2612
      %v2665 = vpack.c.b16 %v2615, %v2613
      %v2666 = vpack.c.b16 %v2618, %v2616
      %v2667 = vpack.c.b16 %v2619, %v2617
      %2716 = vmatprep.subr.bf16.mxu0 %v2621
      %2717 = vmatpush1.bf16.msra.mxu0 %v2620
      %2718 = vmatprep.subr.bf16.mxu0 %v2623
      %2719 = vmatpush1.bf16.msra.mxu0 %v2622
      %2720 = vmatprep.subr.bf16.mxu0 %v2625
      %2721 = vmatpush1.bf16.msra.mxu0 %v2624
      %2722 = vmatprep.subr.bf16.mxu0 %v2627
      %2723 = vmatpush1.bf16.msra.mxu0 %v2626
      %2724 = vmatprep.subr.bf16.mxu0 %v2629
      %2725 = vmatpush1.bf16.msra.mxu0 %v2628
      %2726 = vmatprep.subr.bf16.mxu0 %v2631
      %2727 = vmatpush1.bf16.msra.mxu0 %v2630
      %2728 = vmatprep.subr.bf16.mxu0 %v2633
      %2729 = vmatpush1.bf16.msra.mxu0 %v2632
      %2730 = vmatprep.subr.bf16.mxu0 %v2635
      %2731 = vmatpush1.bf16.msra.mxu0 %v2634
      %2732 = vmatprep.subr.bf16.mxu0 %v2637
      %2733 = vmatpush1.bf16.msra.mxu0 %v2636
      %2734 = vmatprep.subr.bf16.mxu0 %v2639
      %2735 = vmatpush1.bf16.msra.mxu0 %v2638
      %2736 = vmatprep.subr.bf16.mxu0 %v2641
      %2737 = vmatpush1.bf16.msra.mxu0 %v2640
      %2738 = vmatprep.subr.bf16.mxu0 %v2643
      %2739 = vmatpush1.bf16.msra.mxu0 %v2642
      %2740 = vmatprep.subr.bf16.mxu0 %v2645
      %2741 = vmatpush1.bf16.msra.mxu0 %v2644
      %2742 = vmatprep.subr.bf16.mxu0 %v2647
      %2743 = vmatpush1.bf16.msra.mxu0 %v2646
      %2744 = vmatprep.subr.bf16.mxu0 %v2649
      %2745 = vmatpush1.bf16.msra.mxu0 %v2648
      %2746 = vmatprep.subr.bf16.mxu0 %v2651
      %2747 = vmatpush1.bf16.msra.mxu0 %v2650
      %2748 = vmatprep.mubr.bf16.mxu0 %v2404
      %2749 = vmatmul.mubr.bf16.gmra.mrb[0].mxu0 %v2336
      %v2750 = vpop.f32.mrb[0].mxu0
      %v2751 = vadd.f32 0.0, %v2750
      %v2752 = vpop.f32.mrb[0].mxu0
      %v2753 = vadd.f32 0.0, %v2752
      %v2754 = vpop.f32.mrb[0].mxu0
      %v2755 = vadd.f32 0.0, %v2754
      %v2756 = vpop.f32.mrb[0].mxu0
      %v2757 = vadd.f32 0.0, %v2756
      %2758 = vmatprep.mubr.bf16.mxu0 %v2405
      %2759 = vmatmul.mubr.bf16.gmra.mrb[0].mxu0 %v2337
      %v2760 = vpop.f32.mrb[0].mxu0
      %v2761 = vadd.f32 0.0, %v2760
      %v2762 = vpop.f32.mrb[0].mxu0
      %v2763 = vadd.f32 0.0, %v2762
      %v2764 = vpop.f32.mrb[0].mxu0
      %v2765 = vadd.f32 0.0, %v2764
      %v2766 = vpop.f32.mrb[0].mxu0
      %v2767 = vadd.f32 0.0, %v2766
      %2768 = vmatprep.mubr.bf16.mxu0 %v2406
      %2769 = vmatmul.mubr.bf16.gmra.mrb[0].mxu0 %v2338
      %v2770 = vpop.f32.mrb[0].mxu0
      %v2771 = vadd.f32 0.0, %v2770
      %v2772 = vpop.f32.mrb[0].mxu0
      %v2773 = vadd.f32 0.0, %v2772
      %v2774 = vpop.f32.mrb[0].mxu0
      %v2775 = vadd.f32 0.0, %v2774
      %v2776 = vpop.f32.mrb[0].mxu0
      %v2777 = vadd.f32 0.0, %v2776
      %2778 = vmatprep.mubr.bf16.mxu0 %v2407
      %2779 = vmatmul.mubr.bf16.gmra.mrb[0].mxu0 %v2339
      %v2780 = vpop.f32.mrb[0].mxu0
      %v2781 = vadd.f32 0.0, %v2780
      %v2782 = vpop.f32.mrb[0].mxu0
      %v2783 = vadd.f32 0.0, %v2782
      %v2784 = vpop.f32.mrb[0].mxu0
      %v2785 = vadd.f32 0.0, %v2784
      %v2786 = vpop.f32.mrb[0].mxu0
      %v2787 = vadd.f32 0.0, %v2786
      %2788 = vmatprep.mubr.bf16.mxu0 %v2408
      %2789 = vmatmul.mubr.bf16.gmra.mrb[0].mxu0 %v2340
      %v2790 = vpop.f32.mrb[0].mxu0
      %v2791 = vadd.f32 0.0, %v2790
      %v2792 = vpop.f32.mrb[0].mxu0
      %v2793 = vadd.f32 0.0, %v2792
      %v2794 = vpop.f32.mrb[0].mxu0
      %v2795 = vadd.f32 0.0, %v2794
      %v2796 = vpop.f32.mrb[0].mxu0
      %v2797 = vadd.f32 0.0, %v2796
      %2798 = vmatprep.mubr.bf16.mxu0 %v2409
      %2799 = vmatmul.mubr.bf16.gmra.mrb[0].mxu0 %v2391
      %v2800 = vpop.f32.mrb[0].mxu0
      %v2801 = vadd.f32 0.0, %v2800
      %v2802 = vpop.f32.mrb[0].mxu0
      %v2803 = vadd.f32 0.0, %v2802
      %v2804 = vpop.f32.mrb[0].mxu0
      %v2805 = vadd.f32 0.0, %v2804
      %v2806 = vpop.f32.mrb[0].mxu0
      %v2807 = vadd.f32 0.0, %v2806
      %2808 = vdwg.mxu0
      %2809 = vmatprep.subr.bf16.mxu0 %v2653
      %2810 = vmatpush1.bf16.msra.mxu0 %v2652
      %2811 = vmatprep.subr.bf16.mxu0 %v2655
      %2812 = vmatpush1.bf16.msra.mxu0 %v2654
      %2813 = vmatprep.subr.bf16.mxu0 %v2657
      %2814 = vmatpush1.bf16.msra.mxu0 %v2656
      %2815 = vmatprep.subr.bf16.mxu0 %v2659
      %2816 = vmatpush1.bf16.msra.mxu0 %v2658
      %2817 = vmatprep.subr.bf16.mxu0 %v2661
      %2818 = vmatpush1.bf16.msra.mxu0 %v2660
      %2819 = vmatprep.subr.bf16.mxu0 %v2663
      %2820 = vmatpush1.bf16.msra.mxu0 %v2662
      %2821 = vmatprep.subr.bf16.mxu0 %v2665
      %2822 = vmatpush1.bf16.msra.mxu0 %v2664
      %2823 = vmatprep.subr.bf16.mxu0 %v2667
      %2824 = vmatpush1.bf16.msra.mxu0 %v2666
      %2825 = vmatprep.subr.bf16.mxu0 0
      %2826 = vmatpush1.bf16.msra.mxu0 0
      %2827 = vmatprep.subr.bf16.mxu0 0
      %2828 = vmatpush1.bf16.msra.mxu0 0
      %2829 = vmatprep.subr.bf16.mxu0 0
      %2830 = vmatpush1.bf16.msra.mxu0 0
      %2831 = vmatprep.subr.bf16.mxu0 0
      %2832 = vmatpush1.bf16.msra.mxu0 0
      %2833 = vmatprep.subr.bf16.mxu0 0
      %2834 = vmatpush1.bf16.msra.mxu0 0
      %2835 = vmatprep.subr.bf16.mxu0 0
      %2836 = vmatpush1.bf16.msra.mxu0 0
      %2837 = vmatprep.subr.bf16.mxu0 0
      %2838 = vmatpush1.bf16.msra.mxu0 0
      %2839 = vmatprep.subr.bf16.mxu0 0
      %2840 = vmatpush1.bf16.msra.mxu0 0
      %2841 = vmatprep.mubr.bf16.mxu0 0
      %2842 = vmatmul.mubr.bf16.gmra.mrb[0].mxu0 %v2422
      %v2843 = vpop.f32.mrb[0].mxu0
      %v2844 = vadd.f32 %v2751, %v2843
      %v2845 = vpop.f32.mrb[0].mxu0
      %v2846 = vadd.f32 %v2753, %v2845
      %v2847 = vpop.f32.mrb[0].mxu0
      %v2848 = vadd.f32 %v2755, %v2847
      %v2849 = vpop.f32.mrb[0].mxu0
      %v2850 = vadd.f32 %v2757, %v2849
      %2851 = vmatprep.mubr.bf16.mxu0 0
      %2852 = vmatmul.mubr.bf16.gmra.mrb[0].mxu0 %v2423
      %v2853 = vpop.f32.mrb[0].mxu0
      %v2854 = vadd.f32 %v2761, %v2853
      %v2855 = vpop.f32.mrb[0].mxu0
      %v2856 = vadd.f32 %v2763, %v2855
      %v2857 = vpop.f32.mrb[0].mxu0
      %v2858 = vadd.f32 %v2765, %v2857
      %v2859 = vpop.f32.mrb[0].mxu0
      %v2860 = vadd.f32 %v2767, %v2859
      %2861 = vmatprep.mubr.bf16.mxu0 0
      %2862 = vmatmul.mubr.bf16.gmra.mrb[0].mxu0 %v2424
      %v2863 = vpop.f32.mrb[0].mxu0
      %v2864 = vadd.f32 %v2771, %v2863
      %v2865 = vpop.f32.mrb[0].mxu0
      %v2866 = vadd.f32 %v2773, %v2865
      %v2867 = vpop.f32.mrb[0].mxu0
      %v2868 = vadd.f32 %v2775, %v2867
      %v2869 = vpop.f32.mrb[0].mxu0
      %v2870 = vadd.f32 %v2777, %v2869
      %2871 = vmatprep.mubr.bf16.mxu0 0
      %2872 = vmatmul.mubr.bf16.gmra.mrb[0].mxu0 %v2425
      %v2873 = vpop.f32.mrb[0].mxu0
      %v2874 = vadd.f32 %v2781, %v2873
      %v2875 = vpop.f32.mrb[0].mxu0
      %v2876 = vadd.f32 %v2783, %v2875
      %v2877 = vpop.f32.mrb[0].mxu0
      %v2878 = vadd.f32 %v2785, %v2877
      %v2879 = vpop.f32.mrb[0].mxu0
      %v2880 = vadd.f32 %v2787, %v2879
      %2881 = vmatprep.mubr.bf16.mxu0 0
      %2882 = vmatmul.mubr.bf16.gmra.mrb[0].mxu0 %v2426
      %v2883 = vpop.f32.mrb[0].mxu0
      %v2884 = vadd.f32 %v2791, %v2883
      %v2885 = vpop.f32.mrb[0].mxu0
      %v2886 = vadd.f32 %v2793, %v2885
      %v2887 = vpop.f32.mrb[0].mxu0
      %v2888 = vadd.f32 %v2795, %v2887
      %v2889 = vpop.f32.mrb[0].mxu0
      %v2890 = vadd.f32 %v2797, %v2889
      %2891 = vmatprep.mubr.bf16.mxu0 0
      %2892 = vmatmul.mubr.bf16.gmra.mrb[0].mxu0 %v2427
      %v2893 = vpop.f32.mrb[0].mxu0
      %v2894 = vadd.f32 %v2801, %v2893
      %v2895 = vpop.f32.mrb[0].mxu0
      %v2896 = vadd.f32 %v2803, %v2895
      %v2897 = vpop.f32.mrb[0].mxu0
      %v2898 = vadd.f32 %v2805, %v2897
      %v2899 = vpop.f32.mrb[0].mxu0
      %v2900 = vadd.f32 %v2807, %v2899
      %2901 = vdwg.mxu0
      %v2950 = vunpack.c.l.b16 %v2341
      %v2951 = vunpack.c.h.b16 %v2341
      %v2952 = vunpack.c.l.b16 %v2342
      %v2953 = vunpack.c.h.b16 %v2342
      %v2954 = vunpack.c.l.b16 %v2343
      %v2955 = vunpack.c.h.b16 %v2343
      %v2956 = vunpack.c.l.b16 %v2344
      %v2957 = vunpack.c.h.b16 %v2344
      %v2958 = vunpack.c.l.b16 %v2345
      %v2959 = vunpack.c.h.b16 %v2345
      %v2960 = vunpack.c.l.b16 %v2346
      %v2961 = vunpack.c.h.b16 %v2346
      %v2962 = vunpack.c.l.b16 %v2347
      %v2963 = vunpack.c.h.b16 %v2347
      %v2964 = vunpack.c.l.b16 %v2348
      %v2965 = vunpack.c.h.b16 %v2348
      %v2966 = vunpack.c.l.b16 %v2349
      %v2967 = vunpack.c.h.b16 %v2349
      %v2968 = vunpack.c.l.b16 %v2350
      %v2969 = vunpack.c.h.b16 %v2350
      %v2970 = vunpack.c.l.b16 %v2351
      %v2971 = vunpack.c.h.b16 %v2351
      %v2972 = vunpack.c.l.b16 %v2352
      %v2973 = vunpack.c.h.b16 %v2352
      %v2974 = vunpack.c.l.b16 %v2353
      %v2975 = vunpack.c.h.b16 %v2353
      %v2976 = vunpack.c.l.b16 %v2354
      %v2977 = vunpack.c.h.b16 %v2354
      %v2978 = vunpack.c.l.b16 %v2355
      %v2979 = vunpack.c.h.b16 %v2355
      %v2980 = vunpack.c.l.b16 %v2356
      %v2981 = vunpack.c.h.b16 %v2356
      %v2982 = vunpack.c.l.b16 %v2357
      %v2983 = vunpack.c.h.b16 %v2357
      %v2984 = vunpack.c.l.b16 %v2358
      %v2985 = vunpack.c.h.b16 %v2358
      %v2986 = vunpack.c.l.b16 %v2359
      %v2987 = vunpack.c.h.b16 %v2359
      %v2988 = vunpack.c.l.b16 %v2360
      %v2989 = vunpack.c.h.b16 %v2360
      %v2990 = vunpack.c.l.b16 %v2361
      %v2991 = vunpack.c.h.b16 %v2361
      %v2992 = vunpack.c.l.b16 %v2362
      %v2993 = vunpack.c.h.b16 %v2362
      %v2994 = vunpack.c.l.b16 %v2363
      %v2995 = vunpack.c.h.b16 %v2363
      %v2996 = vunpack.c.l.b16 %v2364
      %v2997 = vunpack.c.h.b16 %v2364
      %v2998 = vunpack.c.l.b16 %v2365
      %v2999 = vunpack.c.h.b16 %v2365
      %v3000 = vunpack.c.l.b16 %v2366
      %v3001 = vunpack.c.h.b16 %v2366
      %v3002 = vunpack.c.l.b16 %v2367
      %v3003 = vunpack.c.h.b16 %v2367
      %v3004 = vunpack.c.l.b16 %v2368
      %v3005 = vunpack.c.h.b16 %v2368
      %v3006 = vunpack.c.l.b16 %v2369
      %v3007 = vunpack.c.h.b16 %v2369
      %v3008 = vunpack.c.l.b16 %v2370
      %v3009 = vunpack.c.h.b16 %v2370
      %v3010 = vunpack.c.l.b16 %v2371
      %v3011 = vunpack.c.h.b16 %v2371
      %v3012 = vunpack.c.l.b16 %v2372
      %v3013 = vunpack.c.h.b16 %v2372
      %v3014 = vunpack.c.l.b16 %v2373
      %v3015 = vunpack.c.h.b16 %v2373
      %v3016 = vunpack.c.l.b16 %v2374
      %v3017 = vunpack.c.h.b16 %v2374
      %v3018 = vunpack.c.l.b16 %v2375
      %v3019 = vunpack.c.h.b16 %v2375
      %v3020 = vunpack.c.l.b16 %v2376
      %v3021 = vunpack.c.h.b16 %v2376
      %v3022 = vunpack.c.l.b16 %v2377
      %v3023 = vunpack.c.h.b16 %v2377
      %v3024 = vunpack.c.l.b16 %v2378
      %v3025 = vunpack.c.h.b16 %v2378
      %v3026 = vunpack.c.l.b16 %v2379
      %v3027 = vunpack.c.h.b16 %v2379
      %v3028 = vunpack.c.l.b16 %v2380
      %v3029 = vunpack.c.h.b16 %v2380
      %v3030 = vunpack.c.l.b16 %v2381
      %v3031 = vunpack.c.h.b16 %v2381
      %v3032 = vunpack.c.l.b16 %v2382
      %v3033 = vunpack.c.h.b16 %v2382
      %v3034 = vunpack.c.l.b16 %v2383
      %v3035 = vunpack.c.h.b16 %v2383
      %v3036 = vunpack.c.l.b16 %v2384
      %v3037 = vunpack.c.h.b16 %v2384
      %v3038 = vunpack.c.l.b16 %v2385
      %v3039 = vunpack.c.h.b16 %v2385
      %v3040 = vunpack.c.l.b16 %v2386
      %v3041 = vunpack.c.h.b16 %v2386
      %v3042 = vunpack.c.l.b16 %v2387
      %v3043 = vunpack.c.h.b16 %v2387
      %v3044 = vunpack.c.l.b16 %v2388
      %v3045 = vunpack.c.h.b16 %v2388
      %v3046 = vpack.c.b16 %v2952, %v2950
      %v3047 = vpack.c.b16 %v2953, %v2951
      %v3048 = vpack.c.b16 %v2956, %v2954
      %v3049 = vpack.c.b16 %v2957, %v2955
      %v3050 = vpack.c.b16 %v2960, %v2958
      %v3051 = vpack.c.b16 %v2961, %v2959
      %v3052 = vpack.c.b16 %v2964, %v2962
      %v3053 = vpack.c.b16 %v2965, %v2963
      %v3054 = vpack.c.b16 %v2968, %v2966
      %v3055 = vpack.c.b16 %v2969, %v2967
      %v3056 = vpack.c.b16 %v2972, %v2970
      %v3057 = vpack.c.b16 %v2973, %v2971
      %v3058 = vpack.c.b16 %v2976, %v2974
      %v3059 = vpack.c.b16 %v2977, %v2975
      %v3060 = vpack.c.b16 %v2980, %v2978
      %v3061 = vpack.c.b16 %v2981, %v2979
      %v3062 = vpack.c.b16 %v2984, %v2982
      %v3063 = vpack.c.b16 %v2985, %v2983
      %v3064 = vpack.c.b16 %v2988, %v2986
      %v3065 = vpack.c.b16 %v2989, %v2987
      %v3066 = vpack.c.b16 %v2992, %v2990
      %v3067 = vpack.c.b16 %v2993, %v2991
      %v3068 = vpack.c.b16 %v2996, %v2994
      %v3069 = vpack.c.b16 %v2997, %v2995
      %v3070 = vpack.c.b16 %v3000, %v2998
      %v3071 = vpack.c.b16 %v3001, %v2999
      %v3072 = vpack.c.b16 %v3004, %v3002
      %v3073 = vpack.c.b16 %v3005, %v3003
      %v3074 = vpack.c.b16 %v3008, %v3006
      %v3075 = vpack.c.b16 %v3009, %v3007
      %v3076 = vpack.c.b16 %v3012, %v3010
      %v3077 = vpack.c.b16 %v3013, %v3011
      %v3078 = vpack.c.b16 %v3016, %v3014
      %v3079 = vpack.c.b16 %v3017, %v3015
      %v3080 = vpack.c.b16 %v3020, %v3018
      %v3081 = vpack.c.b16 %v3021, %v3019
      %v3082 = vpack.c.b16 %v3024, %v3022
      %v3083 = vpack.c.b16 %v3025, %v3023
      %v3084 = vpack.c.b16 %v3028, %v3026
      %v3085 = vpack.c.b16 %v3029, %v3027
      %v3086 = vpack.c.b16 %v3032, %v3030
      %v3087 = vpack.c.b16 %v3033, %v3031
      %v3088 = vpack.c.b16 %v3036, %v3034
      %v3089 = vpack.c.b16 %v3037, %v3035
      %v3090 = vpack.c.b16 %v3040, %v3038
      %v3091 = vpack.c.b16 %v3041, %v3039
      %v3092 = vpack.c.b16 %v3044, %v3042
      %v3093 = vpack.c.b16 %v3045, %v3043
      %3142 = vmatprep.subr.bf16.mxu0 %v3047
      %3143 = vmatpush1.bf16.msra.mxu0 %v3046
      %3144 = vmatprep.subr.bf16.mxu0 %v3049
      %3145 = vmatpush1.bf16.msra.mxu0 %v3048
      %3146 = vmatprep.subr.bf16.mxu0 %v3051
      %3147 = vmatpush1.bf16.msra.mxu0 %v3050
      %3148 = vmatprep.subr.bf16.mxu0 %v3053
      %3149 = vmatpush1.bf16.msra.mxu0 %v3052
      %3150 = vmatprep.subr.bf16.mxu0 %v3055
      %3151 = vmatpush1.bf16.msra.mxu0 %v3054
      %3152 = vmatprep.subr.bf16.mxu0 %v3057
      %3153 = vmatpush1.bf16.msra.mxu0 %v3056
      %3154 = vmatprep.subr.bf16.mxu0 %v3059
      %3155 = vmatpush1.bf16.msra.mxu0 %v3058
      %3156 = vmatprep.subr.bf16.mxu0 %v3061
      %3157 = vmatpush1.bf16.msra.mxu0 %v3060
      %3158 = vmatprep.subr.bf16.mxu0 %v3063
      %3159 = vmatpush1.bf16.msra.mxu0 %v3062
      %3160 = vmatprep.subr.bf16.mxu0 %v3065
      %3161 = vmatpush1.bf16.msra.mxu0 %v3064
      %3162 = vmatprep.subr.bf16.mxu0 %v3067
      %3163 = vmatpush1.bf16.msra.mxu0 %v3066
      %3164 = vmatprep.subr.bf16.mxu0 %v3069
      %3165 = vmatpush1.bf16.msra.mxu0 %v3068
      %3166 = vmatprep.subr.bf16.mxu0 %v3071
      %3167 = vmatpush1.bf16.msra.mxu0 %v3070
      %3168 = vmatprep.subr.bf16.mxu0 %v3073
      %3169 = vmatpush1.bf16.msra.mxu0 %v3072
      %3170 = vmatprep.subr.bf16.mxu0 %v3075
      %3171 = vmatpush1.bf16.msra.mxu0 %v3074
      %3172 = vmatprep.subr.bf16.mxu0 %v3077
      %3173 = vmatpush1.bf16.msra.mxu0 %v3076
      %3174 = vmatprep.mubr.bf16.mxu0 %v2317
      %3175 = vmatmul.mubr.bf16.gmra.mrb[0].mxu0 %v2299
      %v3176 = vpop.f32.mrb[0].mxu0
      %v3177 = vadd.f32 %v2844, %v3176
      %v3178 = vpop.f32.mrb[0].mxu0
      %v3179 = vadd.f32 %v2846, %v3178
      %v3180 = vpop.f32.mrb[0].mxu0
      %v3181 = vadd.f32 %v2848, %v3180
      %v3182 = vpop.f32.mrb[0].mxu0
      %v3183 = vadd.f32 %v2850, %v3182
      %3184 = vmatprep.mubr.bf16.mxu0 %v2318
      %3185 = vmatmul.mubr.bf16.gmra.mrb[0].mxu0 %v2300
      %v3186 = vpop.f32.mrb[0].mxu0
      %v3187 = vadd.f32 %v2854, %v3186
      %v3188 = vpop.f32.mrb[0].mxu0
      %v3189 = vadd.f32 %v2856, %v3188
      %v3190 = vpop.f32.mrb[0].mxu0
      %v3191 = vadd.f32 %v2858, %v3190
      %v3192 = vpop.f32.mrb[0].mxu0
      %v3193 = vadd.f32 %v2860, %v3192
      %3194 = vmatprep.mubr.bf16.mxu0 %v2319
      %3195 = vmatmul.mubr.bf16.gmra.mrb[0].mxu0 %v2301
      %v3196 = vpop.f32.mrb[0].mxu0
      %v3197 = vadd.f32 %v2864, %v3196
      %v3198 = vpop.f32.mrb[0].mxu0
      %v3199 = vadd.f32 %v2866, %v3198
      %v3200 = vpop.f32.mrb[0].mxu0
      %v3201 = vadd.f32 %v2868, %v3200
      %v3202 = vpop.f32.mrb[0].mxu0
      %v3203 = vadd.f32 %v2870, %v3202
      %3204 = vmatprep.mubr.bf16.mxu0 %v2320
      %3205 = vmatmul.mubr.bf16.gmra.mrb[0].mxu0 %v2302
      %v3206 = vpop.f32.mrb[0].mxu0
      %v3207 = vadd.f32 %v2874, %v3206
      %v3208 = vpop.f32.mrb[0].mxu0
      %v3209 = vadd.f32 %v2876, %v3208
      %v3210 = vpop.f32.mrb[0].mxu0
      %v3211 = vadd.f32 %v2878, %v3210
      %v3212 = vpop.f32.mrb[0].mxu0
      %v3213 = vadd.f32 %v2880, %v3212
      %3214 = vmatprep.mubr.bf16.mxu0 %v2321
      %3215 = vmatmul.mubr.bf16.gmra.mrb[0].mxu0 %v2303
      %v3216 = vpop.f32.mrb[0].mxu0
      %v3217 = vadd.f32 %v2884, %v3216
      %v3218 = vpop.f32.mrb[0].mxu0
      %v3219 = vadd.f32 %v2886, %v3218
      %v3220 = vpop.f32.mrb[0].mxu0
      %v3221 = vadd.f32 %v2888, %v3220
      %v3222 = vpop.f32.mrb[0].mxu0
      %v3223 = vadd.f32 %v2890, %v3222
      %3224 = vmatprep.mubr.bf16.mxu0 %v2322
      %3225 = vmatmul.mubr.bf16.gmra.mrb[0].mxu0 %v2304
      %v3226 = vpop.f32.mrb[0].mxu0
      %v3227 = vadd.f32 %v2894, %v3226
      %v3228 = vpop.f32.mrb[0].mxu0
      %v3229 = vadd.f32 %v2896, %v3228
      %v3230 = vpop.f32.mrb[0].mxu0
      %v3231 = vadd.f32 %v2898, %v3230
      %v3232 = vpop.f32.mrb[0].mxu0
      %v3233 = vadd.f32 %v2900, %v3232
      %3234 = vdwg.mxu0
      %3235 = vmatprep.subr.bf16.mxu0 %v3079
      %3236 = vmatpush1.bf16.msra.mxu0 %v3078
      %3237 = vmatprep.subr.bf16.mxu0 %v3081
      %3238 = vmatpush1.bf16.msra.mxu0 %v3080
      %3239 = vmatprep.subr.bf16.mxu0 %v3083
      %3240 = vmatpush1.bf16.msra.mxu0 %v3082
      %3241 = vmatprep.subr.bf16.mxu0 %v3085
      %3242 = vmatpush1.bf16.msra.mxu0 %v3084
      %3243 = vmatprep.subr.bf16.mxu0 %v3087
      %3244 = vmatpush1.bf16.msra.mxu0 %v3086
      %3245 = vmatprep.subr.bf16.mxu0 %v3089
      %3246 = vmatpush1.bf16.msra.mxu0 %v3088
      %3247 = vmatprep.subr.bf16.mxu0 %v3091
      %3248 = vmatpush1.bf16.msra.mxu0 %v3090
      %3249 = vmatprep.subr.bf16.mxu0 %v3093
      %3250 = vmatpush1.bf16.msra.mxu0 %v3092
      %3251 = vmatprep.subr.bf16.mxu0 0
      %3252 = vmatpush1.bf16.msra.mxu0 0
      %3253 = vmatprep.subr.bf16.mxu0 0
      %3254 = vmatpush1.bf16.msra.mxu0 0
      %3255 = vmatprep.subr.bf16.mxu0 0
      %3256 = vmatpush1.bf16.msra.mxu0 0
      %3257 = vmatprep.subr.bf16.mxu0 0
      %3258 = vmatpush1.bf16.msra.mxu0 0
      %3259 = vmatprep.subr.bf16.mxu0 0
      %3260 = vmatpush1.bf16.msra.mxu0 0
      %3261 = vmatprep.subr.bf16.mxu0 0
      %3262 = vmatpush1.bf16.msra.mxu0 0
      %3263 = vmatprep.subr.bf16.mxu0 0
      %3264 = vmatpush1.bf16.msra.mxu0 0
      %3265 = vmatprep.subr.bf16.mxu0 0
      %3266 = vmatpush1.bf16.msra.mxu0 0
      %3267 = vmatprep.mubr.bf16.mxu0 0
      %3268 = vmatmul.mubr.bf16.gmra.mrb[0].mxu0 %v2335
      %v3269 = vpop.f32.mrb[0].mxu0
      %v3270 = vadd.f32 %v3177, %v3269
      %v3271 = vpop.f32.mrb[0].mxu0
      %v3272 = vadd.f32 %v3179, %v3271
      %v3273 = vpop.f32.mrb[0].mxu0
      %v3274 = vadd.f32 %v3181, %v3273
      %v3275 = vpop.f32.mrb[0].mxu0
      %v3276 = vadd.f32 %v3183, %v3275
      %3277 = vmatprep.mubr.bf16.mxu0 0
      %3278 = vmatmul.mubr.bf16.gmra.mrb[0].mxu0 %v2336
      %v3279 = vpop.f32.mrb[0].mxu0
      %v3280 = vadd.f32 %v3187, %v3279
      %v3281 = vpop.f32.mrb[0].mxu0
      %v3282 = vadd.f32 %v3189, %v3281
      %v3283 = vpop.f32.mrb[0].mxu0
      %v3284 = vadd.f32 %v3191, %v3283
      %v3285 = vpop.f32.mrb[0].mxu0
      %v3286 = vadd.f32 %v3193, %v3285
      %3287 = vmatprep.mubr.bf16.mxu0 0
      %3288 = vmatmul.mubr.bf16.gmra.mrb[0].mxu0 %v2337
      %v3289 = vpop.f32.mrb[0].mxu0
      %v3290 = vadd.f32 %v3197, %v3289
      %v3291 = vpop.f32.mrb[0].mxu0
      %v3292 = vadd.f32 %v3199, %v3291
      %v3293 = vpop.f32.mrb[0].mxu0
      %v3294 = vadd.f32 %v3201, %v3293
      %v3295 = vpop.f32.mrb[0].mxu0
      %v3296 = vadd.f32 %v3203, %v3295
      %3297 = vmatprep.mubr.bf16.mxu0 0
      %3298 = vmatmul.mubr.bf16.gmra.mrb[0].mxu0 %v2338
      %v3299 = vpop.f32.mrb[0].mxu0
      %v3300 = vadd.f32 %v3207, %v3299
      %v3301 = vpop.f32.mrb[0].mxu0
      %v3302 = vadd.f32 %v3209, %v3301
      %v3303 = vpop.f32.mrb[0].mxu0
      %v3304 = vadd.f32 %v3211, %v3303
      %v3305 = vpop.f32.mrb[0].mxu0
      %v3306 = vadd.f32 %v3213, %v3305
      %3307 = vmatprep.mubr.bf16.mxu0 0
      %3308 = vmatmul.mubr.bf16.gmra.mrb[0].mxu0 %v2339
      %v3309 = vpop.f32.mrb[0].mxu0
      %v3310 = vadd.f32 %v3217, %v3309
      %v3311 = vpop.f32.mrb[0].mxu0
      %v3312 = vadd.f32 %v3219, %v3311
      %v3313 = vpop.f32.mrb[0].mxu0
      %v3314 = vadd.f32 %v3221, %v3313
      %v3315 = vpop.f32.mrb[0].mxu0
      %v3316 = vadd.f32 %v3223, %v3315
      %3317 = vmatprep.mubr.bf16.mxu0 0
      %3318 = vmatmul.mubr.bf16.gmra.mrb[0].mxu0 %v2340
      %v3319 = vpop.f32.mrb[0].mxu0
      %v3320 = vadd.f32 %v3227, %v3319
      %v3321 = vpop.f32.mrb[0].mxu0
      %v3322 = vadd.f32 %v3229, %v3321
      %v3323 = vpop.f32.mrb[0].mxu0
      %v3324 = vadd.f32 %v3231, %v3323
      %v3325 = vpop.f32.mrb[0].mxu0
      %v3326 = vadd.f32 %v3233, %v3325
      %3327 = vdwg.mxu0
      %v3328 = vld [vmem:[%s221 + $0x84] sm:$0xff]
      %v3329 = vld [vmem:[%s221 + $0x8c] sm:$0xff]
      %v3330 = vld [vmem:[%s221 + $0x94] sm:$0xff]
      %v3331 = vld [vmem:[%s221 + $0x9c] sm:$0xff]
      %v3332 = vld [vmem:[%s221 + $0xa4] sm:$0xff]
      %v3333 = vld [vmem:[%s221 + $0xac] sm:$0xff]
      %v3334 = vld [vmem:[%s221 + $0xb4] sm:$0xff]
      %v3335 = vld [vmem:[%s221 + $0xbc] sm:$0xff]
      %v3336 = vld [vmem:[%s221 + $0xc4] sm:$0xff]
      %v3337 = vld [vmem:[%s221 + $0xcc] sm:$0xff]
      %v3338 = vld [vmem:[%s221 + $0xd4] sm:$0xff]
      %v3339 = vld [vmem:[%s221 + $0xdc] sm:$0xff]
      %v3340 = vpack.c.bf16 %v3329, %v3328
      %v3341 = vpack.c.bf16 %v3331, %v3330
      %v3342 = vpack.c.bf16 %v3333, %v3332
      %v3343 = vpack.c.bf16 %v3335, %v3334
      %v3344 = vpack.c.bf16 %v3337, %v3336
      %v3345 = vpack.c.bf16 %v3339, %v3338
      %v3346 = vld [vmem:[%s221 + $0x85] sm:$0xff]
      %v3347 = vld [vmem:[%s221 + $0x8d] sm:$0xff]
      %v3348 = vld [vmem:[%s221 + $0x95] sm:$0xff]
      %v3349 = vld [vmem:[%s221 + $0x9d] sm:$0xff]
      %v3350 = vld [vmem:[%s221 + $0xa5] sm:$0xff]
      %v3351 = vld [vmem:[%s221 + $0xad] sm:$0xff]
      %v3352 = vld [vmem:[%s221 + $0xb5] sm:$0xff]
      %v3353 = vld [vmem:[%s221 + $0xbd] sm:$0xff]
      %v3354 = vld [vmem:[%s221 + $0xc5] sm:$0xff]
      %v3355 = vld [vmem:[%s221 + $0xcd] sm:$0xff]
      %v3356 = vld [vmem:[%s221 + $0xd5] sm:$0xff]
      %v3357 = vld [vmem:[%s221 + $0xdd] sm:$0xff]
      %v3358 = vpack.c.bf16 %v3347, %v3346
      %v3359 = vpack.c.bf16 %v3349, %v3348
      %v3360 = vpack.c.bf16 %v3351, %v3350
      %v3361 = vpack.c.bf16 %v3353, %v3352
      %v3362 = vpack.c.bf16 %v3355, %v3354
      %v3363 = vpack.c.bf16 %v3357, %v3356
      %v3364 = vld [vmem:[%s221 + $0x86] sm:$0xff]
      %v3365 = vld [vmem:[%s221 + $0x8e] sm:$0xff]
      %v3366 = vld [vmem:[%s221 + $0x96] sm:$0xff]
      %v3367 = vld [vmem:[%s221 + $0x9e] sm:$0xff]
      %v3368 = vld [vmem:[%s221 + $0xa6] sm:$0xff]
      %v3369 = vld [vmem:[%s221 + $0xae] sm:$0xff]
      %v3370 = vld [vmem:[%s221 + $0xb6] sm:$0xff]
      %v3371 = vld [vmem:[%s221 + $0xbe] sm:$0xff]
      %v3372 = vld [vmem:[%s221 + $0xc6] sm:$0xff]
      %v3373 = vld [vmem:[%s221 + $0xce] sm:$0xff]
      %v3374 = vld [vmem:[%s221 + $0xd6] sm:$0xff]
      %v3375 = vld [vmem:[%s221 + $0xde] sm:$0xff]
      %v3376 = vpack.c.bf16 %v3365, %v3364
      %v3377 = vpack.c.bf16 %v3367, %v3366
      %v3378 = vpack.c.bf16 %v3369, %v3368
      %v3379 = vpack.c.bf16 %v3371, %v3370
      %v3380 = vpack.c.bf16 %v3373, %v3372
      %v3381 = vpack.c.bf16 %v3375, %v3374
      %v3382 = vld [vmem:[%s1340] sm:$0xff]
      %v3383 = vld [vmem:[%s1340 + $0x8] sm:$0xff]
      %v3384 = vld [vmem:[%s1340 + $0x10] sm:$0xff]
      %v3385 = vld [vmem:[%s1340 + $0x18] sm:$0xff]
      %v3386 = vld [vmem:[%s1340 + $0x20] sm:$0xff]
      %v3387 = vld [vmem:[%s1340 + $0x28] sm:$0xff]
      %v3388 = vld [vmem:[%s1340 + $0x30] sm:$0xff]
      %v3389 = vld [vmem:[%s1340 + $0x38] sm:$0xff]
      %v3390 = vld [vmem:[%s1340 + $0x40] sm:$0xff]
      %v3391 = vld [vmem:[%s1340 + $0x48] sm:$0xff]
      %v3392 = vld [vmem:[%s1340 + $0x50] sm:$0xff]
      %v3393 = vld [vmem:[%s1340 + $0x58] sm:$0xff]
      %v3394 = vld [vmem:[%s1340 + $0x60] sm:$0xff]
      %v3395 = vld [vmem:[%s1340 + $0x68] sm:$0xff]
      %v3396 = vld [vmem:[%s1340 + $0x70] sm:$0xff]
      %v3397 = vld [vmem:[%s1340 + $0x78] sm:$0xff]
      %v3398 = vld [vmem:[%s1340 + $0x80] sm:$0xff]
      %v3399 = vld [vmem:[%s1340 + $0x88] sm:$0xff]
      %v3400 = vld [vmem:[%s1340 + $0x90] sm:$0xff]
      %v3401 = vld [vmem:[%s1340 + $0x98] sm:$0xff]
      %v3402 = vld [vmem:[%s1340 + $0xa0] sm:$0xff]
      %v3403 = vld [vmem:[%s1340 + $0xa8] sm:$0xff]
      %v3404 = vld [vmem:[%s1340 + $0xb0] sm:$0xff]
      %v3405 = vld [vmem:[%s1340 + $0xb8] sm:$0xff]
      %v3406 = vld [vmem:[%s1340 + $0xc0] sm:$0xff]
      %v3407 = vld [vmem:[%s1340 + $0xc8] sm:$0xff]
      %v3408 = vld [vmem:[%s1340 + $0xd0] sm:$0xff]
      %v3409 = vld [vmem:[%s1340 + $0xd8] sm:$0xff]
      %v3410 = vld [vmem:[%s1340 + $0xe0] sm:$0xff]
      %v3411 = vld [vmem:[%s1340 + $0xe8] sm:$0xff]
      %v3412 = vld [vmem:[%s1340 + $0xf0] sm:$0xff]
      %v3413 = vld [vmem:[%s1340 + $0xf8] sm:$0xff]
      %v3414 = vld [vmem:[%s1340 + $0x100] sm:$0xff]
      %v3415 = vld [vmem:[%s1340 + $0x108] sm:$0xff]
      %v3416 = vld [vmem:[%s1340 + $0x110] sm:$0xff]
      %v3417 = vld [vmem:[%s1340 + $0x118] sm:$0xff]
      %v3418 = vld [vmem:[%s1340 + $0x120] sm:$0xff]
      %v3419 = vld [vmem:[%s1340 + $0x128] sm:$0xff]
      %v3420 = vld [vmem:[%s1340 + $0x130] sm:$0xff]
      %v3421 = vld [vmem:[%s1340 + $0x138] sm:$0xff]
      %v3422 = vld [vmem:[%s1340 + $0x140] sm:$0xff]
      %v3423 = vld [vmem:[%s1340 + $0x148] sm:$0xff]
      %v3424 = vld [vmem:[%s1340 + $0x150] sm:$0xff]
      %v3425 = vld [vmem:[%s1340 + $0x158] sm:$0xff]
      %v3426 = vld [vmem:[%s1340 + $0x160] sm:$0xff]
      %v3427 = vld [vmem:[%s1340 + $0x168] sm:$0xff]
      %v3428 = vld [vmem:[%s1340 + $0x170] sm:$0xff]
      %v3429 = vld [vmem:[%s1340 + $0x178] sm:$0xff]
      %v3478 = vunpack.c.l.b16 %v3382
      %v3479 = vunpack.c.h.b16 %v3382
      %v3480 = vunpack.c.l.b16 %v3383
      %v3481 = vunpack.c.h.b16 %v3383
      %v3482 = vunpack.c.l.b16 %v3384
      %v3483 = vunpack.c.h.b16 %v3384
      %v3484 = vunpack.c.l.b16 %v3385
      %v3485 = vunpack.c.h.b16 %v3385
      %v3486 = vunpack.c.l.b16 %v3386
      %v3487 = vunpack.c.h.b16 %v3386
      %v3488 = vunpack.c.l.b16 %v3387
      %v3489 = vunpack.c.h.b16 %v3387
      %v3490 = vunpack.c.l.b16 %v3388
      %v3491 = vunpack.c.h.b16 %v3388
      %v3492 = vunpack.c.l.b16 %v3389
      %v3493 = vunpack.c.h.b16 %v3389
      %v3494 = vunpack.c.l.b16 %v3390
      %v3495 = vunpack.c.h.b16 %v3390
      %v3496 = vunpack.c.l.b16 %v3391
      %v3497 = vunpack.c.h.b16 %v3391
      %v3498 = vunpack.c.l.b16 %v3392
      %v3499 = vunpack.c.h.b16 %v3392
      %v3500 = vunpack.c.l.b16 %v3393
      %v3501 = vunpack.c.h.b16 %v3393
      %v3502 = vunpack.c.l.b16 %v3394
      %v3503 = vunpack.c.h.b16 %v3394
      %v3504 = vunpack.c.l.b16 %v3395
      %v3505 = vunpack.c.h.b16 %v3395
      %v3506 = vunpack.c.l.b16 %v3396
      %v3507 = vunpack.c.h.b16 %v3396
      %v3508 = vunpack.c.l.b16 %v3397
      %v3509 = vunpack.c.h.b16 %v3397
      %v3510 = vunpack.c.l.b16 %v3398
      %v3511 = vunpack.c.h.b16 %v3398
      %v3512 = vunpack.c.l.b16 %v3399
      %v3513 = vunpack.c.h.b16 %v3399
      %v3514 = vunpack.c.l.b16 %v3400
      %v3515 = vunpack.c.h.b16 %v3400
      %v3516 = vunpack.c.l.b16 %v3401
      %v3517 = vunpack.c.h.b16 %v3401
      %v3518 = vunpack.c.l.b16 %v3402
      %v3519 = vunpack.c.h.b16 %v3402
      %v3520 = vunpack.c.l.b16 %v3403
      %v3521 = vunpack.c.h.b16 %v3403
      %v3522 = vunpack.c.l.b16 %v3404
      %v3523 = vunpack.c.h.b16 %v3404
      %v3524 = vunpack.c.l.b16 %v3405
      %v3525 = vunpack.c.h.b16 %v3405
      %v3526 = vunpack.c.l.b16 %v3406
      %v3527 = vunpack.c.h.b16 %v3406
      %v3528 = vunpack.c.l.b16 %v3407
      %v3529 = vunpack.c.h.b16 %v3407
      %v3530 = vunpack.c.l.b16 %v3408
      %v3531 = vunpack.c.h.b16 %v3408
      %v3532 = vunpack.c.l.b16 %v3409
      %v3533 = vunpack.c.h.b16 %v3409
      %v3534 = vunpack.c.l.b16 %v3410
      %v3535 = vunpack.c.h.b16 %v3410
      %v3536 = vunpack.c.l.b16 %v3411
      %v3537 = vunpack.c.h.b16 %v3411
      %v3538 = vunpack.c.l.b16 %v3412
      %v3539 = vunpack.c.h.b16 %v3412
      %v3540 = vunpack.c.l.b16 %v3413
      %v3541 = vunpack.c.h.b16 %v3413
      %v3542 = vunpack.c.l.b16 %v3414
      %v3543 = vunpack.c.h.b16 %v3414
      %v3544 = vunpack.c.l.b16 %v3415
      %v3545 = vunpack.c.h.b16 %v3415
      %v3546 = vunpack.c.l.b16 %v3416
      %v3547 = vunpack.c.h.b16 %v3416
      %v3548 = vunpack.c.l.b16 %v3417
      %v3549 = vunpack.c.h.b16 %v3417
      %v3550 = vunpack.c.l.b16 %v3418
      %v3551 = vunpack.c.h.b16 %v3418
      %v3552 = vunpack.c.l.b16 %v3419
      %v3553 = vunpack.c.h.b16 %v3419
      %v3554 = vunpack.c.l.b16 %v3420
      %v3555 = vunpack.c.h.b16 %v3420
      %v3556 = vunpack.c.l.b16 %v3421
      %v3557 = vunpack.c.h.b16 %v3421
      %v3558 = vunpack.c.l.b16 %v3422
      %v3559 = vunpack.c.h.b16 %v3422
      %v3560 = vunpack.c.l.b16 %v3423
      %v3561 = vunpack.c.h.b16 %v3423
      %v3562 = vunpack.c.l.b16 %v3424
      %v3563 = vunpack.c.h.b16 %v3424
      %v3564 = vunpack.c.l.b16 %v3425
      %v3565 = vunpack.c.h.b16 %v3425
      %v3566 = vunpack.c.l.b16 %v3426
      %v3567 = vunpack.c.h.b16 %v3426
      %v3568 = vunpack.c.l.b16 %v3427
      %v3569 = vunpack.c.h.b16 %v3427
      %v3570 = vunpack.c.l.b16 %v3428
      %v3571 = vunpack.c.h.b16 %v3428
      %v3572 = vunpack.c.l.b16 %v3429
      %v3573 = vunpack.c.h.b16 %v3429
      %v3574 = vpack.c.b16 %v3480, %v3478
      %v3575 = vpack.c.b16 %v3481, %v3479
      %v3576 = vpack.c.b16 %v3484, %v3482
      %v3577 = vpack.c.b16 %v3485, %v3483
      %v3578 = vpack.c.b16 %v3488, %v3486
      %v3579 = vpack.c.b16 %v3489, %v3487
      %v3580 = vpack.c.b16 %v3492, %v3490
      %v3581 = vpack.c.b16 %v3493, %v3491
      %v3582 = vpack.c.b16 %v3496, %v3494
      %v3583 = vpack.c.b16 %v3497, %v3495
      %v3584 = vpack.c.b16 %v3500, %v3498
      %v3585 = vpack.c.b16 %v3501, %v3499
      %v3586 = vpack.c.b16 %v3504, %v3502
      %v3587 = vpack.c.b16 %v3505, %v3503
      %v3588 = vpack.c.b16 %v3508, %v3506
      %v3589 = vpack.c.b16 %v3509, %v3507
      %v3590 = vpack.c.b16 %v3512, %v3510
      %v3591 = vpack.c.b16 %v3513, %v3511
      %v3592 = vpack.c.b16 %v3516, %v3514
      %v3593 = vpack.c.b16 %v3517, %v3515
      %v3594 = vpack.c.b16 %v3520, %v3518
      %v3595 = vpack.c.b16 %v3521, %v3519
      %v3596 = vpack.c.b16 %v3524, %v3522
      %v3597 = vpack.c.b16 %v3525, %v3523
      %v3598 = vpack.c.b16 %v3528, %v3526
      %v3599 = vpack.c.b16 %v3529, %v3527
      %v3600 = vpack.c.b16 %v3532, %v3530
      %v3601 = vpack.c.b16 %v3533, %v3531
      %v3602 = vpack.c.b16 %v3536, %v3534
      %v3603 = vpack.c.b16 %v3537, %v3535
      %v3604 = vpack.c.b16 %v3540, %v3538
      %v3605 = vpack.c.b16 %v3541, %v3539
      %v3606 = vpack.c.b16 %v3544, %v3542
      %v3607 = vpack.c.b16 %v3545, %v3543
      %v3608 = vpack.c.b16 %v3548, %v3546
      %v3609 = vpack.c.b16 %v3549, %v3547
      %v3610 = vpack.c.b16 %v3552, %v3550
      %v3611 = vpack.c.b16 %v3553, %v3551
      %v3612 = vpack.c.b16 %v3556, %v3554
      %v3613 = vpack.c.b16 %v3557, %v3555
      %v3614 = vpack.c.b16 %v3560, %v3558
      %v3615 = vpack.c.b16 %v3561, %v3559
      %v3616 = vpack.c.b16 %v3564, %v3562
      %v3617 = vpack.c.b16 %v3565, %v3563
      %v3618 = vpack.c.b16 %v3568, %v3566
      %v3619 = vpack.c.b16 %v3569, %v3567
      %v3620 = vpack.c.b16 %v3572, %v3570
      %v3621 = vpack.c.b16 %v3573, %v3571
      %3670 = vmatprep.subr.bf16.mxu0 %v3575
      %3671 = vmatpush1.bf16.msra.mxu0 %v3574
      %3672 = vmatprep.subr.bf16.mxu0 %v3577
      %3673 = vmatpush1.bf16.msra.mxu0 %v3576
      %3674 = vmatprep.subr.bf16.mxu0 %v3579
      %3675 = vmatpush1.bf16.msra.mxu0 %v3578
      %3676 = vmatprep.subr.bf16.mxu0 %v3581
      %3677 = vmatpush1.bf16.msra.mxu0 %v3580
      %3678 = vmatprep.subr.bf16.mxu0 %v3583
      %3679 = vmatpush1.bf16.msra.mxu0 %v3582
      %3680 = vmatprep.subr.bf16.mxu0 %v3585
      %3681 = vmatpush1.bf16.msra.mxu0 %v3584
      %3682 = vmatprep.subr.bf16.mxu0 %v3587
      %3683 = vmatpush1.bf16.msra.mxu0 %v3586
      %3684 = vmatprep.subr.bf16.mxu0 %v3589
      %3685 = vmatpush1.bf16.msra.mxu0 %v3588
      %3686 = vmatprep.subr.bf16.mxu0 %v3591
      %3687 = vmatpush1.bf16.msra.mxu0 %v3590
      %3688 = vmatprep.subr.bf16.mxu0 %v3593
      %3689 = vmatpush1.bf16.msra.mxu0 %v3592
      %3690 = vmatprep.subr.bf16.mxu0 %v3595
      %3691 = vmatpush1.bf16.msra.mxu0 %v3594
      %3692 = vmatprep.subr.bf16.mxu0 %v3597
      %3693 = vmatpush1.bf16.msra.mxu0 %v3596
      %3694 = vmatprep.subr.bf16.mxu0 %v3599
      %3695 = vmatpush1.bf16.msra.mxu0 %v3598
      %3696 = vmatprep.subr.bf16.mxu0 %v3601
      %3697 = vmatpush1.bf16.msra.mxu0 %v3600
      %3698 = vmatprep.subr.bf16.mxu0 %v3603
      %3699 = vmatpush1.bf16.msra.mxu0 %v3602
      %3700 = vmatprep.subr.bf16.mxu0 %v3605
      %3701 = vmatpush1.bf16.msra.mxu0 %v3604
      %3702 = vmatprep.mubr.bf16.mxu0 %v3358
      %3703 = vmatmul.mubr.bf16.gmra.mrb[0].mxu0 %v3340
      %v3704 = vpop.f32.mrb[0].mxu0
      %v3705 = vadd.f32 0.0, %v3704
      %v3706 = vpop.f32.mrb[0].mxu0
      %v3707 = vadd.f32 0.0, %v3706
      %v3708 = vpop.f32.mrb[0].mxu0
      %v3709 = vadd.f32 0.0, %v3708
      %v3710 = vpop.f32.mrb[0].mxu0
      %v3711 = vadd.f32 0.0, %v3710
      %3712 = vmatprep.mubr.bf16.mxu0 %v3359
      %3713 = vmatmul.mubr.bf16.gmra.mrb[0].mxu0 %v3341
      %v3714 = vpop.f32.mrb[0].mxu0
      %v3715 = vadd.f32 0.0, %v3714
      %v3716 = vpop.f32.mrb[0].mxu0
      %v3717 = vadd.f32 0.0, %v3716
      %v3718 = vpop.f32.mrb[0].mxu0
      %v3719 = vadd.f32 0.0, %v3718
      %v3720 = vpop.f32.mrb[0].mxu0
      %v3721 = vadd.f32 0.0, %v3720
      %3722 = vmatprep.mubr.bf16.mxu0 %v3360
      %3723 = vmatmul.mubr.bf16.gmra.mrb[0].mxu0 %v3342
      %v3724 = vpop.f32.mrb[0].mxu0
      %v3725 = vadd.f32 0.0, %v3724
      %v3726 = vpop.f32.mrb[0].mxu0
      %v3727 = vadd.f32 0.0, %v3726
      %v3728 = vpop.f32.mrb[0].mxu0
      %v3729 = vadd.f32 0.0, %v3728
      %v3730 = vpop.f32.mrb[0].mxu0
      %v3731 = vadd.f32 0.0, %v3730
      %3732 = vmatprep.mubr.bf16.mxu0 %v3361
      %3733 = vmatmul.mubr.bf16.gmra.mrb[0].mxu0 %v3343
      %v3734 = vpop.f32.mrb[0].mxu0
      %v3735 = vadd.f32 0.0, %v3734
      %v3736 = vpop.f32.mrb[0].mxu0
      %v3737 = vadd.f32 0.0, %v3736
      %v3738 = vpop.f32.mrb[0].mxu0
      %v3739 = vadd.f32 0.0, %v3738
      %v3740 = vpop.f32.mrb[0].mxu0
      %v3741 = vadd.f32 0.0, %v3740
      %3742 = vmatprep.mubr.bf16.mxu0 %v3362
      %3743 = vmatmul.mubr.bf16.gmra.mrb[0].mxu0 %v3344
      %v3744 = vpop.f32.mrb[0].mxu0
      %v3745 = vadd.f32 0.0, %v3744
      %v3746 = vpop.f32.mrb[0].mxu0
      %v3747 = vadd.f32 0.0, %v3746
      %v3748 = vpop.f32.mrb[0].mxu0
      %v3749 = vadd.f32 0.0, %v3748
      %v3750 = vpop.f32.mrb[0].mxu0
      %v3751 = vadd.f32 0.0, %v3750
      %3752 = vmatprep.mubr.bf16.mxu0 %v3363
      %3753 = vmatmul.mubr.bf16.gmra.mrb[0].mxu0 %v3345
      %v3754 = vpop.f32.mrb[0].mxu0
      %v3755 = vadd.f32 0.0, %v3754
      %v3756 = vpop.f32.mrb[0].mxu0
      %v3757 = vadd.f32 0.0, %v3756
      %v3758 = vpop.f32.mrb[0].mxu0
      %v3759 = vadd.f32 0.0, %v3758
      %v3760 = vpop.f32.mrb[0].mxu0
      %v3761 = vadd.f32 0.0, %v3760
      %3762 = vdwg.mxu0
      %3763 = vmatprep.subr.bf16.mxu0 %v3607
      %3764 = vmatpush1.bf16.msra.mxu0 %v3606
      %3765 = vmatprep.subr.bf16.mxu0 %v3609
      %3766 = vmatpush1.bf16.msra.mxu0 %v3608
      %3767 = vmatprep.subr.bf16.mxu0 %v3611
      %3768 = vmatpush1.bf16.msra.mxu0 %v3610
      %3769 = vmatprep.subr.bf16.mxu0 %v3613
      %3770 = vmatpush1.bf16.msra.mxu0 %v3612
      %3771 = vmatprep.subr.bf16.mxu0 %v3615
      %3772 = vmatpush1.bf16.msra.mxu0 %v3614
      %3773 = vmatprep.subr.bf16.mxu0 %v3617
      %3774 = vmatpush1.bf16.msra.mxu0 %v3616
      %3775 = vmatprep.subr.bf16.mxu0 %v3619
      %3776 = vmatpush1.bf16.msra.mxu0 %v3618
      %3777 = vmatprep.subr.bf16.mxu0 %v3621
      %3778 = vmatpush1.bf16.msra.mxu0 %v3620
      %3779 = vmatprep.subr.bf16.mxu0 0
      %3780 = vmatpush1.bf16.msra.mxu0 0
      %3781 = vmatprep.subr.bf16.mxu0 0
      %3782 = vmatpush1.bf16.msra.mxu0 0
      %3783 = vmatprep.subr.bf16.mxu0 0
      %3784 = vmatpush1.bf16.msra.mxu0 0
      %3785 = vmatprep.subr.bf16.mxu0 0
      %3786 = vmatpush1.bf16.msra.mxu0 0
      %3787 = vmatprep.subr.bf16.mxu0 0
      %3788 = vmatpush1.bf16.msra.mxu0 0
      %3789 = vmatprep.subr.bf16.mxu0 0
      %3790 = vmatpush1.bf16.msra.mxu0 0
      %3791 = vmatprep.subr.bf16.mxu0 0
      %3792 = vmatpush1.bf16.msra.mxu0 0
      %3793 = vmatprep.subr.bf16.mxu0 0
      %3794 = vmatpush1.bf16.msra.mxu0 0
      %3795 = vmatprep.mubr.bf16.mxu0 0
      %3796 = vmatmul.mubr.bf16.gmra.mrb[0].mxu0 %v3376
      %v3797 = vpop.f32.mrb[0].mxu0
      %v3798 = vadd.f32 %v3705, %v3797
      %v3799 = vpop.f32.mrb[0].mxu0
      %v3800 = vadd.f32 %v3707, %v3799
      %v3801 = vpop.f32.mrb[0].mxu0
      %v3802 = vadd.f32 %v3709, %v3801
      %v3803 = vpop.f32.mrb[0].mxu0
      %v3804 = vadd.f32 %v3711, %v3803
      %3805 = vmatprep.mubr.bf16.mxu0 0
      %3806 = vmatmul.mubr.bf16.gmra.mrb[0].mxu0 %v3377
      %v3807 = vpop.f32.mrb[0].mxu0
      %v3808 = vadd.f32 %v3715, %v3807
      %v3809 = vpop.f32.mrb[0].mxu0
      %v3810 = vadd.f32 %v3717, %v3809
      %v3811 = vpop.f32.mrb[0].mxu0
      %v3812 = vadd.f32 %v3719, %v3811
      %v3813 = vpop.f32.mrb[0].mxu0
      %v3814 = vadd.f32 %v3721, %v3813
      %3815 = vmatprep.mubr.bf16.mxu0 0
      %3816 = vmatmul.mubr.bf16.gmra.mrb[0].mxu0 %v3378
      %v3817 = vpop.f32.mrb[0].mxu0
      %v3818 = vadd.f32 %v3725, %v3817
      %v3819 = vpop.f32.mrb[0].mxu0
      %v3820 = vadd.f32 %v3727, %v3819
      %v3821 = vpop.f32.mrb[0].mxu0
      %v3822 = vadd.f32 %v3729, %v3821
      %v3823 = vpop.f32.mrb[0].mxu0
      %v3824 = vadd.f32 %v3731, %v3823
      %3825 = vmatprep.mubr.bf16.mxu0 0
      %3826 = vmatmul.mubr.bf16.gmra.mrb[0].mxu0 %v3379
      %v3827 = vpop.f32.mrb[0].mxu0
      %v3828 = vadd.f32 %v3735, %v3827
      %v3829 = vpop.f32.mrb[0].mxu0
      %v3830 = vadd.f32 %v3737, %v3829
      %v3831 = vpop.f32.mrb[0].mxu0
      %v3832 = vadd.f32 %v3739, %v3831
      %v3833 = vpop.f32.mrb[0].mxu0
      %v3834 = vadd.f32 %v3741, %v3833
      %3835 = vmatprep.mubr.bf16.mxu0 0
      %3836 = vmatmul.mubr.bf16.gmra.mrb[0].mxu0 %v3380
      %v3837 = vpop.f32.mrb[0].mxu0
      %v3838 = vadd.f32 %v3745, %v3837
      %v3839 = vpop.f32.mrb[0].mxu0
      %v3840 = vadd.f32 %v3747, %v3839
      %v3841 = vpop.f32.mrb[0].mxu0
      %v3842 = vadd.f32 %v3749, %v3841
      %v3843 = vpop.f32.mrb[0].mxu0
      %v3844 = vadd.f32 %v3751, %v3843
      %3845 = vmatprep.mubr.bf16.mxu0 0
      %3846 = vmatmul.mubr.bf16.gmra.mrb[0].mxu0 %v3381
      %v3847 = vpop.f32.mrb[0].mxu0
      %v3848 = vadd.f32 %v3755, %v3847
      %v3849 = vpop.f32.mrb[0].mxu0
      %v3850 = vadd.f32 %v3757, %v3849
      %v3851 = vpop.f32.mrb[0].mxu0
      %v3852 = vadd.f32 %v3759, %v3851
      %v3853 = vpop.f32.mrb[0].mxu0
      %v3854 = vadd.f32 %v3761, %v3853
      %3855 = vdwg.mxu0
      %v3856 = vadd.f32 %v3270, %v3798
      %v3857 = vadd.f32 %v3272, %v3800
      %v3858 = vadd.f32 %v3274, %v3802
      %v3859 = vadd.f32 %v3276, %v3804
      %v3860 = vadd.f32 %v3280, %v3808
      %v3861 = vadd.f32 %v3282, %v3810
      %v3862 = vadd.f32 %v3284, %v3812
      %v3863 = vadd.f32 %v3286, %v3814
      %v3864 = vadd.f32 %v3290, %v3818
      %v3865 = vadd.f32 %v3292, %v3820
      %v3866 = vadd.f32 %v3294, %v3822
      %v3867 = vadd.f32 %v3296, %v3824
      %v3868 = vadd.f32 %v3300, %v3828
      %v3869 = vadd.f32 %v3302, %v3830
      %v3870 = vadd.f32 %v3304, %v3832
      %v3871 = vadd.f32 %v3306, %v3834
      %v3872 = vadd.f32 %v3310, %v3838
      %v3873 = vadd.f32 %v3312, %v3840
      %v3874 = vadd.f32 %v3314, %v3842
      %v3875 = vadd.f32 %v3316, %v3844
      %v3876 = vadd.f32 %v3320, %v3848
      %v3877 = vadd.f32 %v3322, %v3850
      %v3878 = vadd.f32 %v3324, %v3852
      %v3879 = vadd.f32 %v3326, %v3854
      %v3880 = vld [vmem:[%s2] sm:$0x3]
      %v3882 = vlaneseq
      %v3883 = vshrl.u32 %v3882, 7
      %v3884 = vsub.s32 0, %v3883
      %v3885 = vrot.slane %v3880, %v3884
      %v3886 = vlaneseq
      %v3887 = vshrl.u32 %v3886, 7
      %v3888 = vsub.s32 1, %v3887
      %v3889 = vrot.slane %v3880, %v3888
      %v3892 = vadd.f32 %v3856, %v3885
      %v3893 = vadd.f32 %v3857, %v3889
      %v3894 = vadd.f32 %v3858, %v3885
      %v3895 = vadd.f32 %v3859, %v3889
      %v3896 = vadd.f32 %v3860, %v3885
      %v3897 = vadd.f32 %v3861, %v3889
      %v3898 = vadd.f32 %v3862, %v3885
      %v3899 = vadd.f32 %v3863, %v3889
      %v3900 = vadd.f32 %v3864, %v3885
      %v3901 = vadd.f32 %v3865, %v3889
      %v3902 = vadd.f32 %v3866, %v3885
      %v3903 = vadd.f32 %v3867, %v3889
      %v3904 = vadd.f32 %v3868, %v3885
      %v3905 = vadd.f32 %v3869, %v3889
      %v3906 = vadd.f32 %v3870, %v3885
      %v3907 = vadd.f32 %v3871, %v3889
      %v3908 = vadd.f32 %v3872, %v3885
      %v3909 = vadd.f32 %v3873, %v3889
      %v3910 = vadd.f32 %v3874, %v3885
      %v3911 = vadd.f32 %v3875, %v3889
      %v3912 = vadd.f32 %v3876, %v3885
      %v3913 = vadd.f32 %v3877, %v3889
      %v3914 = vadd.f32 %v3878, %v3885
      %v3915 = vadd.f32 %v3879, %v3889
      %v3916 = vmax.f32 %v3892, 0.0
      %v3917 = vmax.f32 %v3893, 0.0
      %v3918 = vmax.f32 %v3894, 0.0
      %v3919 = vmax.f32 %v3895, 0.0
      %v3920 = vmax.f32 %v3896, 0.0
      %v3921 = vmax.f32 %v3897, 0.0
      %v3922 = vmax.f32 %v3898, 0.0
      %v3923 = vmax.f32 %v3899, 0.0
      %v3924 = vmax.f32 %v3900, 0.0
      %v3925 = vmax.f32 %v3901, 0.0
      %v3926 = vmax.f32 %v3902, 0.0
      %v3927 = vmax.f32 %v3903, 0.0
      %v3928 = vmax.f32 %v3904, 0.0
      %v3929 = vmax.f32 %v3905, 0.0
      %v3930 = vmax.f32 %v3906, 0.0
      %v3931 = vmax.f32 %v3907, 0.0
      %v3932 = vmax.f32 %v3908, 0.0
      %v3933 = vmax.f32 %v3909, 0.0
      %v3934 = vmax.f32 %v3910, 0.0
      %v3935 = vmax.f32 %v3911, 0.0
      %v3936 = vmax.f32 %v3912, 0.0
      %v3937 = vmax.f32 %v3913, 0.0
      %v3938 = vmax.f32 %v3914, 0.0
      %v3939 = vmax.f32 %v3915, 0.0
      %v3940 = vadd.s32 %v1900, 96
      %v3941 = vadd.s32 %v1901, 96
      %v3942 = vadd.s32 %v1902, 96
      %v3943 = vadd.s32 %v1903, 96
      %v3944 = vadd.s32 %v1904, 96
      %v3945 = vadd.s32 %v1905, 96
      %v3946 = vadd.s32 %v1906, 96
      %v3947 = vadd.s32 %v1907, 96
      %v3948 = vadd.s32 %v1908, 96
      %v3949 = vadd.s32 %v1909, 96
      %v3950 = vadd.s32 %v1910, 96
      %v3951 = vadd.s32 %v1911, 96
      %vm3952 = vcmp.lt.s32.totalorder %v3940, 0
      %v3953 = vsub.s32 0, %v3940
      %v3954 = vsel %vm3952, %v3953, %v3940
      %v3955 = vmul.u32.u64.compose %v3954, 3817748708
      %v3956 = vextract.low.u32 %v3955
      %v3957 = vextract.high.u32 %v3955
      %v3958 = vshrl.u32 %v3957, 4
      %v3959 = vmul.u32 %v3958, 18
      %v3960 = vsub.s32 %v3954, %v3959
      %v3961 = vsub.s32 0, %v3960
      %v3962 = vsel %vm3952, %v3961, %v3960
      %vm3963 = vcmp.lt.s32.totalorder %v3941, 0
      %v3964 = vsub.s32 0, %v3941
      %v3965 = vsel %vm3963, %v3964, %v3941
      %v3966 = vmul.u32.u64.compose %v3965, 3817748708
      %v3967 = vextract.low.u32 %v3966
      %v3968 = vextract.high.u32 %v3966
      %v3969 = vshrl.u32 %v3968, 4
      %v3970 = vmul.u32 %v3969, 18
      %v3971 = vsub.s32 %v3965, %v3970
      %v3972 = vsub.s32 0, %v3971
      %v3973 = vsel %vm3963, %v3972, %v3971
      %vm3974 = vcmp.lt.s32.totalorder %v3942, 0
      %v3975 = vsub.s32 0, %v3942
      %v3976 = vsel %vm3974, %v3975, %v3942
      %v3977 = vmul.u32.u64.compose %v3976, 3817748708
      %v3978 = vextract.low.u32 %v3977
      %v3979 = vextract.high.u32 %v3977
      %v3980 = vshrl.u32 %v3979, 4
      %v3981 = vmul.u32 %v3980, 18
      %v3982 = vsub.s32 %v3976, %v3981
      %v3983 = vsub.s32 0, %v3982
      %v3984 = vsel %vm3974, %v3983, %v3982
      %vm3985 = vcmp.lt.s32.totalorder %v3943, 0
      %v3986 = vsub.s32 0, %v3943
      %v3987 = vsel %vm3985, %v3986, %v3943
      %v3988 = vmul.u32.u64.compose %v3987, 3817748708
      %v3989 = vextract.low.u32 %v3988
      %v3990 = vextract.high.u32 %v3988
      %v3991 = vshrl.u32 %v3990, 4
      %v3992 = vmul.u32 %v3991, 18
      %v3993 = vsub.s32 %v3987, %v3992
      %v3994 = vsub.s32 0, %v3993
      %v3995 = vsel %vm3985, %v3994, %v3993
      %vm3996 = vcmp.lt.s32.totalorder %v3944, 0
      %v3997 = vsub.s32 0, %v3944
      %v3998 = vsel %vm3996, %v3997, %v3944
      %v3999 = vmul.u32.u64.compose %v3998, 3817748708
      %v4000 = vextract.low.u32 %v3999
      %v4001 = vextract.high.u32 %v3999
      %v4002 = vshrl.u32 %v4001, 4
      %v4003 = vmul.u32 %v4002, 18
      %v4004 = vsub.s32 %v3998, %v4003
      %v4005 = vsub.s32 0, %v4004
      %v4006 = vsel %vm3996, %v4005, %v4004
      %vm4007 = vcmp.lt.s32.totalorder %v3945, 0
      %v4008 = vsub.s32 0, %v3945
      %v4009 = vsel %vm4007, %v4008, %v3945
      %v4010 = vmul.u32.u64.compose %v4009, 3817748708
      %v4011 = vextract.low.u32 %v4010
      %v4012 = vextract.high.u32 %v4010
      %v4013 = vshrl.u32 %v4012, 4
      %v4014 = vmul.u32 %v4013, 18
      %v4015 = vsub.s32 %v4009, %v4014
      %v4016 = vsub.s32 0, %v4015
      %v4017 = vsel %vm4007, %v4016, %v4015
      %vm4018 = vcmp.lt.s32.totalorder %v3946, 0
      %v4019 = vsub.s32 0, %v3946
      %v4020 = vsel %vm4018, %v4019, %v3946
      %v4021 = vmul.u32.u64.compose %v4020, 3817748708
      %v4022 = vextract.low.u32 %v4021
      %v4023 = vextract.high.u32 %v4021
      %v4024 = vshrl.u32 %v4023, 4
      %v4025 = vmul.u32 %v4024, 18
      %v4026 = vsub.s32 %v4020, %v4025
      %v4027 = vsub.s32 0, %v4026
      %v4028 = vsel %vm4018, %v4027, %v4026
      %vm4029 = vcmp.lt.s32.totalorder %v3947, 0
      %v4030 = vsub.s32 0, %v3947
      %v4031 = vsel %vm4029, %v4030, %v3947
      %v4032 = vmul.u32.u64.compose %v4031, 3817748708
      %v4033 = vextract.low.u32 %v4032
      %v4034 = vextract.high.u32 %v4032
      %v4035 = vshrl.u32 %v4034, 4
      %v4036 = vmul.u32 %v4035, 18
      %v4037 = vsub.s32 %v4031, %v4036
      %v4038 = vsub.s32 0, %v4037
      %v4039 = vsel %vm4029, %v4038, %v4037
      %vm4040 = vcmp.lt.s32.totalorder %v3948, 0
      %v4041 = vsub.s32 0, %v3948
      %v4042 = vsel %vm4040, %v4041, %v3948
      %v4043 = vmul.u32.u64.compose %v4042, 3817748708
      %v4044 = vextract.low.u32 %v4043
      %v4045 = vextract.high.u32 %v4043
      %v4046 = vshrl.u32 %v4045, 4
      %v4047 = vmul.u32 %v4046, 18
      %v4048 = vsub.s32 %v4042, %v4047
      %v4049 = vsub.s32 0, %v4048
      %v4050 = vsel %vm4040, %v4049, %v4048
      %vm4051 = vcmp.lt.s32.totalorder %v3949, 0
      %v4052 = vsub.s32 0, %v3949
      %v4053 = vsel %vm4051, %v4052, %v3949
      %v4054 = vmul.u32.u64.compose %v4053, 3817748708
      %v4055 = vextract.low.u32 %v4054
      %v4056 = vextract.high.u32 %v4054
      %v4057 = vshrl.u32 %v4056, 4
      %v4058 = vmul.u32 %v4057, 18
      %v4059 = vsub.s32 %v4053, %v4058
      %v4060 = vsub.s32 0, %v4059
      %v4061 = vsel %vm4051, %v4060, %v4059
      %vm4062 = vcmp.lt.s32.totalorder %v3950, 0
      %v4063 = vsub.s32 0, %v3950
      %v4064 = vsel %vm4062, %v4063, %v3950
      %v4065 = vmul.u32.u64.compose %v4064, 3817748708
      %v4066 = vextract.low.u32 %v4065
      %v4067 = vextract.high.u32 %v4065
      %v4068 = vshrl.u32 %v4067, 4
      %v4069 = vmul.u32 %v4068, 18
      %v4070 = vsub.s32 %v4064, %v4069
      %v4071 = vsub.s32 0, %v4070
      %v4072 = vsel %vm4062, %v4071, %v4070
      %vm4073 = vcmp.lt.s32.totalorder %v3951, 0
      %v4074 = vsub.s32 0, %v3951
      %v4075 = vsel %vm4073, %v4074, %v3951
      %v4076 = vmul.u32.u64.compose %v4075, 3817748708
      %v4077 = vextract.low.u32 %v4076
      %v4078 = vextract.high.u32 %v4076
      %v4079 = vshrl.u32 %v4078, 4
      %v4080 = vmul.u32 %v4079, 18
      %v4081 = vsub.s32 %v4075, %v4080
      %v4082 = vsub.s32 0, %v4081
      %v4083 = vsel %vm4073, %v4082, %v4081
      %vm4084 = vcmp.ne.s32.totalorder %v3962, 0
      %vm4085 = vcmp.ne.s32.totalorder %v3973, 0
      %vm4086 = vcmp.ne.s32.totalorder %v3984, 0
      %vm4087 = vcmp.ne.s32.totalorder %v3995, 0
      %vm4088 = vcmp.ne.s32.totalorder %v4006, 0
      %vm4089 = vcmp.ne.s32.totalorder %v4017, 0
      %vm4090 = vcmp.ne.s32.totalorder %v4028, 0
      %vm4091 = vcmp.ne.s32.totalorder %v4039, 0
      %vm4092 = vcmp.ne.s32.totalorder %v4050, 0
      %vm4093 = vcmp.ne.s32.totalorder %v4061, 0
      %vm4094 = vcmp.ne.s32.totalorder %v4072, 0
      %vm4095 = vcmp.ne.s32.totalorder %v4083, 0
      %vm4096 = vcmp.lt.s32.totalorder %v3962, 0
      %vm4097 = vcmp.lt.s32.totalorder %v3973, 0
      %vm4098 = vcmp.lt.s32.totalorder %v3984, 0
      %vm4099 = vcmp.lt.s32.totalorder %v3995, 0
      %vm4100 = vcmp.lt.s32.totalorder %v4006, 0
      %vm4101 = vcmp.lt.s32.totalorder %v4017, 0
      %vm4102 = vcmp.lt.s32.totalorder %v4028, 0
      %vm4103 = vcmp.lt.s32.totalorder %v4039, 0
      %vm4104 = vcmp.lt.s32.totalorder %v4050, 0
      %vm4105 = vcmp.lt.s32.totalorder %v4061, 0
      %vm4106 = vcmp.lt.s32.totalorder %v4072, 0
      %vm4107 = vcmp.lt.s32.totalorder %v4083, 0
      %vm4108 = vmand %vm4096, %vm4084
      %vm4109 = vmand %vm4097, %vm4085
      %vm4110 = vmand %vm4098, %vm4086
      %vm4111 = vmand %vm4099, %vm4087
      %vm4112 = vmand %vm4100, %vm4088
      %vm4113 = vmand %vm4101, %vm4089
      %vm4114 = vmand %vm4102, %vm4090
      %vm4115 = vmand %vm4103, %vm4091
      %vm4116 = vmand %vm4104, %vm4092
      %vm4117 = vmand %vm4105, %vm4093
      %vm4118 = vmand %vm4106, %vm4094
      %vm4119 = vmand %vm4107, %vm4095
      %v4120 = vadd.s32 %v3962, 18
      %v4121 = vadd.s32 %v3973, 18
      %v4122 = vadd.s32 %v3984, 18
      %v4123 = vadd.s32 %v3995, 18
      %v4124 = vadd.s32 %v4006, 18
      %v4125 = vadd.s32 %v4017, 18
      %v4126 = vadd.s32 %v4028, 18
      %v4127 = vadd.s32 %v4039, 18
      %v4128 = vadd.s32 %v4050, 18
      %v4129 = vadd.s32 %v4061, 18
      %v4130 = vadd.s32 %v4072, 18
      %v4131 = vadd.s32 %v4083, 18
      %v4132 = vsel %vm4108, %v4120, %v3962
      %v4133 = vsel %vm4109, %v4121, %v3973
      %v4134 = vsel %vm4110, %v4122, %v3984
      %v4135 = vsel %vm4111, %v4123, %v3995
      %v4136 = vsel %vm4112, %v4124, %v4006
      %v4137 = vsel %vm4113, %v4125, %v4017
      %v4138 = vsel %vm4114, %v4126, %v4028
      %v4139 = vsel %vm4115, %v4127, %v4039
      %v4140 = vsel %vm4116, %v4128, %v4050
      %v4141 = vsel %vm4117, %v4129, %v4061
      %v4142 = vsel %vm4118, %v4130, %v4072
      %v4143 = vsel %vm4119, %v4131, %v4083
      %vm4144 = vcmp.lt.s32.totalorder %v4132, 16
      %vm4145 = vcmp.lt.s32.totalorder %v4133, 16
      %vm4146 = vcmp.lt.s32.totalorder %v4134, 16
      %vm4147 = vcmp.lt.s32.totalorder %v4135, 16
      %vm4148 = vcmp.lt.s32.totalorder %v4136, 16
      %vm4149 = vcmp.lt.s32.totalorder %v4137, 16
      %vm4150 = vcmp.lt.s32.totalorder %v4138, 16
      %vm4151 = vcmp.lt.s32.totalorder %v4139, 16
      %vm4152 = vcmp.lt.s32.totalorder %v4140, 16
      %vm4153 = vcmp.lt.s32.totalorder %v4141, 16
      %vm4154 = vcmp.lt.s32.totalorder %v4142, 16
      %vm4155 = vcmp.lt.s32.totalorder %v4143, 16
      %v4156 = vsel %vm4144, 1, 0
      %v4157 = vsel %vm4145, 1, 0
      %v4158 = vsel %vm4146, 1, 0
      %v4159 = vsel %vm4147, 1, 0
      %v4160 = vsel %vm4148, 1, 0
      %v4161 = vsel %vm4149, 1, 0
      %v4162 = vsel %vm4150, 1, 0
      %v4163 = vsel %vm4151, 1, 0
      %v4164 = vsel %vm4152, 1, 0
      %v4165 = vsel %vm4153, 1, 0
      %v4166 = vsel %vm4154, 1, 0
      %v4167 = vsel %vm4155, 1, 0
      %vm4168 = vcmp.eq.s32.totalorder %v4156, 1
      %vm4169 = vcmp.eq.s32.totalorder %v4157, 1
      %vm4170 = vcmp.eq.s32.totalorder %v4158, 1
      %vm4171 = vcmp.eq.s32.totalorder %v4159, 1
      %vm4172 = vcmp.eq.s32.totalorder %v4160, 1
      %vm4173 = vcmp.eq.s32.totalorder %v4161, 1
      %vm4174 = vcmp.eq.s32.totalorder %v4162, 1
      %vm4175 = vcmp.eq.s32.totalorder %v4163, 1
      %vm4176 = vcmp.eq.s32.totalorder %v4164, 1
      %vm4177 = vcmp.eq.s32.totalorder %v4165, 1
      %vm4178 = vcmp.eq.s32.totalorder %v4166, 1
      %vm4179 = vcmp.eq.s32.totalorder %v4167, 1
      %v4180 = vsel %vm4168, %v3916, 0.0
      %v4181 = vsel %vm4168, %v3917, 0.0
      %v4182 = vsel %vm4169, %v3918, 0.0
      %v4183 = vsel %vm4169, %v3919, 0.0
      %v4184 = vsel %vm4170, %v3920, 0.0
      %v4185 = vsel %vm4170, %v3921, 0.0
      %v4186 = vsel %vm4171, %v3922, 0.0
      %v4187 = vsel %vm4171, %v3923, 0.0
      %v4188 = vsel %vm4172, %v3924, 0.0
      %v4189 = vsel %vm4172, %v3925, 0.0
      %v4190 = vsel %vm4173, %v3926, 0.0
      %v4191 = vsel %vm4173, %v3927, 0.0
      %v4192 = vsel %vm4174, %v3928, 0.0
      %v4193 = vsel %vm4174, %v3929, 0.0
      %v4194 = vsel %vm4175, %v3930, 0.0
      %v4195 = vsel %vm4175, %v3931, 0.0
      %v4196 = vsel %vm4176, %v3932, 0.0
      %v4197 = vsel %vm4176, %v3933, 0.0
      %v4198 = vsel %vm4177, %v3934, 0.0
      %v4199 = vsel %vm4177, %v3935, 0.0
      %v4200 = vsel %vm4178, %v3936, 0.0
      %v4201 = vsel %vm4178, %v3937, 0.0
      %v4202 = vsel %vm4179, %v3938, 0.0
      %v4203 = vsel %vm4179, %v3939, 0.0
      %v4228 = vrot.slane %v4180, 5
      %v4229 = vrot.slane %v4181, 5
      %v4230 = vrot.slane %v4182, 5
      %v4231 = vsel %vm2188, %v4228, %v4230
      %v4232 = vrot.slane %v4183, 5
      %v4233 = vsel %vm2188, %v4229, %v4232
      %v4234 = vrot.slane %v4184, 5
      %v4235 = vsel %vm2188, %v4230, %v4234
      %v4236 = vrot.slane %v4185, 5
      %v4237 = vsel %vm2188, %v4232, %v4236
      %v4238 = vrot.slane %v4186, 5
      %v4239 = vsel %vm2188, %v4234, %v4238
      %v4240 = vrot.slane %v4187, 5
      %v4241 = vsel %vm2188, %v4236, %v4240
      %v4242 = vrot.slane %v4188, 5
      %v4243 = vsel %vm2188, %v4238, %v4242
      %v4244 = vrot.slane %v4189, 5
      %v4245 = vsel %vm2188, %v4240, %v4244
      %v4246 = vrot.slane %v4190, 5
      %v4247 = vsel %vm2188, %v4242, %v4246
      %v4248 = vrot.slane %v4191, 5
      %v4249 = vsel %vm2188, %v4244, %v4248
      %v4250 = vrot.slane %v4192, 5
      %v4251 = vsel %vm2188, %v4246, %v4250
      %v4252 = vrot.slane %v4193, 5
      %v4253 = vsel %vm2188, %v4248, %v4252
      %v4254 = vrot.slane %v4194, 5
      %v4255 = vsel %vm2188, %v4250, %v4254
      %v4256 = vrot.slane %v4195, 5
      %v4257 = vsel %vm2188, %v4252, %v4256
      %v4258 = vrot.slane %v4196, 5
      %v4259 = vsel %vm2188, %v4254, %v4258
      %v4260 = vrot.slane %v4197, 5
      %v4261 = vsel %vm2188, %v4256, %v4260
      %v4262 = vrot.slane %v4198, 5
      %v4263 = vsel %vm2188, %v4258, %v4262
      %v4264 = vrot.slane %v4199, 5
      %v4265 = vsel %vm2188, %v4260, %v4264
      %v4266 = vrot.slane %v4200, 5
      %v4267 = vsel %vm2188, %v4262, %v4266
      %v4268 = vrot.slane %v4201, 5
      %v4269 = vsel %vm2188, %v4264, %v4268
      %v4270 = vrot.slane %v4202, 5
      %v4271 = vsel %vm2188, %v4266, %v4270
      %v4272 = vrot.slane %v4203, 5
      %v4273 = vsel %vm2188, %v4268, %v4272
      %4300 = vst [vmem:[#allocation2 + $0xe0] sm:$0xf8] %v4228
      %4301 = vst [vmem:[#allocation2 + $0xe8] sm:$0xf8] %v4229
      %4302 = vst [vmem:[#allocation2 + $0xf0] sm:$0xff] %v4231
      %4303 = vst [vmem:[#allocation2 + $0xf8] sm:$0xff] %v4233
      %4304 = vst [vmem:[#allocation2 + $0x100] sm:$0xff] %v4235
      %4305 = vst [vmem:[#allocation2 + $0x108] sm:$0xff] %v4237
      %4306 = vst [vmem:[#allocation2 + $0x110] sm:$0xff] %v4239
      %4307 = vst [vmem:[#allocation2 + $0x118] sm:$0xff] %v4241
      %4308 = vst [vmem:[#allocation2 + $0x120] sm:$0xff] %v4243
      %4309 = vst [vmem:[#allocation2 + $0x128] sm:$0xff] %v4245
      %4310 = vst [vmem:[#allocation2 + $0x130] sm:$0xff] %v4247
      %4311 = vst [vmem:[#allocation2 + $0x138] sm:$0xff] %v4249
      %4312 = vst [vmem:[#allocation2 + $0x140] sm:$0xff] %v4251
      %4313 = vst [vmem:[#allocation2 + $0x148] sm:$0xff] %v4253
      %4314 = vst [vmem:[#allocation2 + $0x150] sm:$0xff] %v4255
      %4315 = vst [vmem:[#allocation2 + $0x158] sm:$0xff] %v4257
      %4316 = vst [vmem:[#allocation2 + $0x160] sm:$0xff] %v4259
      %4317 = vst [vmem:[#allocation2 + $0x168] sm:$0xff] %v4261
      %4318 = vst [vmem:[#allocation2 + $0x170] sm:$0xff] %v4263
      %4319 = vst [vmem:[#allocation2 + $0x178] sm:$0xff] %v4265
      %4320 = vst [vmem:[#allocation2 + $0x180] sm:$0xff] %v4267
      %4321 = vst [vmem:[#allocation2 + $0x188] sm:$0xff] %v4269
      %4322 = vst [vmem:[#allocation2 + $0x190] sm:$0xff] %v4271
      %4323 = vst [vmem:[#allocation2 + $0x198] sm:$0xff] %v4273
      %4324 = vst [vmem:[#allocation2 + $0x1a0] sm:$0x7] %v4270
      %4325 = vst [vmem:[#allocation2 + $0x1a8] sm:$0x7] %v4272
      %v4326 = vld [vmem:[%s221 + $0xc0] sm:$0xff]
      %v4327 = vld [vmem:[%s221 + $0xc8] sm:$0xff]
      %v4328 = vld [vmem:[%s221 + $0xd0] sm:$0xff]
      %v4329 = vld [vmem:[%s221 + $0xd8] sm:$0xff]
      %v4330 = vld [vmem:[%s221 + $0xe0] sm:$0xff]
      %v4331 = vld [vmem:[%s221 + $0xe8] sm:$0xff]
      %v4332 = vld [vmem:[%s221 + $0xf0] sm:$0xff]
      %v4333 = vld [vmem:[%s221 + $0xf8] sm:$0xff]
      %v4334 = vld [vmem:[%s221 + $0x100] sm:$0xff]
      %v4335 = vld [vmem:[%s221 + $0x108] sm:$0xff]
      %v4336 = vld [vmem:[%s221 + $0x110] sm:$0xff]
      %v4337 = vld [vmem:[%s221 + $0x118] sm:$0xff]
      %v4338 = vpack.c.bf16 %v4327, %v4326
      %v4339 = vpack.c.bf16 %v4329, %v4328
      %v4340 = vpack.c.bf16 %v4331, %v4330
      %v4341 = vpack.c.bf16 %v4333, %v4332
      %v4342 = vpack.c.bf16 %v4335, %v4334
      %v4343 = vpack.c.bf16 %v4337, %v4336
      %v4344 = vld [vmem:[%s221 + $0xc1] sm:$0xff]
      %v4345 = vld [vmem:[%s221 + $0xc9] sm:$0xff]
      %v4346 = vld [vmem:[%s221 + $0xd1] sm:$0xff]
      %v4347 = vld [vmem:[%s221 + $0xd9] sm:$0xff]
      %v4348 = vld [vmem:[%s221 + $0xe1] sm:$0xff]
      %v4349 = vld [vmem:[%s221 + $0xe9] sm:$0xff]
      %v4350 = vld [vmem:[%s221 + $0xf1] sm:$0xff]
      %v4351 = vld [vmem:[%s221 + $0xf9] sm:$0xff]
      %v4352 = vld [vmem:[%s221 + $0x101] sm:$0xff]
      %v4353 = vld [vmem:[%s221 + $0x109] sm:$0xff]
      %v4354 = vld [vmem:[%s221 + $0x111] sm:$0xff]
      %v4355 = vld [vmem:[%s221 + $0x119] sm:$0xff]
      %v4356 = vpack.c.bf16 %v4345, %v4344
      %v4357 = vpack.c.bf16 %v4347, %v4346
      %v4358 = vpack.c.bf16 %v4349, %v4348
      %v4359 = vpack.c.bf16 %v4351, %v4350
      %v4360 = vpack.c.bf16 %v4353, %v4352
      %v4361 = vpack.c.bf16 %v4355, %v4354
      %v4362 = vld [vmem:[%s221 + $0xc2] sm:$0xff]
      %v4363 = vld [vmem:[%s221 + $0xca] sm:$0xff]
      %v4364 = vld [vmem:[%s221 + $0xd2] sm:$0xff]
      %v4365 = vld [vmem:[%s221 + $0xda] sm:$0xff]
      %v4366 = vld [vmem:[%s221 + $0xe2] sm:$0xff]
      %v4367 = vld [vmem:[%s221 + $0xea] sm:$0xff]
      %v4368 = vld [vmem:[%s221 + $0xf2] sm:$0xff]
      %v4369 = vld [vmem:[%s221 + $0xfa] sm:$0xff]
      %v4370 = vld [vmem:[%s221 + $0x102] sm:$0xff]
      %v4371 = vld [vmem:[%s221 + $0x10a] sm:$0xff]
      %v4372 = vld [vmem:[%s221 + $0x112] sm:$0xff]
      %v4373 = vld [vmem:[%s221 + $0x11a] sm:$0xff]
      %v4374 = vpack.c.bf16 %v4363, %v4362
      %v4375 = vpack.c.bf16 %v4365, %v4364
      %v4376 = vpack.c.bf16 %v4367, %v4366
      %v4377 = vpack.c.bf16 %v4369, %v4368
      %v4378 = vpack.c.bf16 %v4371, %v4370
      %v4379 = vpack.c.bf16 %v4373, %v4372
      %v4380 = vld [vmem:[%s1] sm:$0xff]
      %v4381 = vld [vmem:[%s1 + $0x8] sm:$0xff]
      %v4382 = vld [vmem:[%s1 + $0x10] sm:$0xff]
      %v4383 = vld [vmem:[%s1 + $0x18] sm:$0xff]
      %v4384 = vld [vmem:[%s1 + $0x20] sm:$0xff]
      %v4385 = vld [vmem:[%s1 + $0x28] sm:$0xff]
      %v4386 = vld [vmem:[%s1 + $0x30] sm:$0xff]
      %v4387 = vld [vmem:[%s1 + $0x38] sm:$0xff]
      %v4388 = vld [vmem:[%s1 + $0x40] sm:$0xff]
      %v4389 = vld [vmem:[%s1 + $0x48] sm:$0xff]
      %v4390 = vld [vmem:[%s1 + $0x50] sm:$0xff]
      %v4391 = vld [vmem:[%s1 + $0x58] sm:$0xff]
      %v4392 = vld [vmem:[%s1 + $0x60] sm:$0xff]
      %v4393 = vld [vmem:[%s1 + $0x68] sm:$0xff]
      %v4394 = vld [vmem:[%s1 + $0x70] sm:$0xff]
      %v4395 = vld [vmem:[%s1 + $0x78] sm:$0xff]
      %v4396 = vld [vmem:[%s1 + $0x80] sm:$0xff]
      %v4397 = vld [vmem:[%s1 + $0x88] sm:$0xff]
      %v4398 = vld [vmem:[%s1 + $0x90] sm:$0xff]
      %v4399 = vld [vmem:[%s1 + $0x98] sm:$0xff]
      %v4400 = vld [vmem:[%s1 + $0xa0] sm:$0xff]
      %v4401 = vld [vmem:[%s1 + $0xa8] sm:$0xff]
      %v4402 = vld [vmem:[%s1 + $0xb0] sm:$0xff]
      %v4403 = vld [vmem:[%s1 + $0xb8] sm:$0xff]
      %v4404 = vld [vmem:[%s1 + $0xc0] sm:$0xff]
      %v4405 = vld [vmem:[%s1 + $0xc8] sm:$0xff]
      %v4406 = vld [vmem:[%s1 + $0xd0] sm:$0xff]
      %v4407 = vld [vmem:[%s1 + $0xd8] sm:$0xff]
      %v4408 = vld [vmem:[%s1 + $0xe0] sm:$0xff]
      %v4409 = vld [vmem:[%s1 + $0xe8] sm:$0xff]
      %v4410 = vld [vmem:[%s1 + $0xf0] sm:$0xff]
      %v4411 = vld [vmem:[%s1 + $0xf8] sm:$0xff]
      %v4412 = vld [vmem:[%s1 + $0x100] sm:$0xff]
      %v4413 = vld [vmem:[%s1 + $0x108] sm:$0xff]
      %v4414 = vld [vmem:[%s1 + $0x110] sm:$0xff]
      %v4415 = vld [vmem:[%s1 + $0x118] sm:$0xff]
      %v4416 = vld [vmem:[%s1 + $0x120] sm:$0xff]
      %v4417 = vld [vmem:[%s1 + $0x128] sm:$0xff]
      %v4418 = vld [vmem:[%s1 + $0x130] sm:$0xff]
      %v4419 = vld [vmem:[%s1 + $0x138] sm:$0xff]
      %v4420 = vld [vmem:[%s1 + $0x140] sm:$0xff]
      %v4421 = vld [vmem:[%s1 + $0x148] sm:$0xff]
      %v4422 = vld [vmem:[%s1 + $0x150] sm:$0xff]
      %v4423 = vld [vmem:[%s1 + $0x158] sm:$0xff]
      %v4424 = vld [vmem:[%s1 + $0x160] sm:$0xff]
      %v4425 = vld [vmem:[%s1 + $0x168] sm:$0xff]
      %v4426 = vld [vmem:[%s1 + $0x170] sm:$0xff]
      %v4427 = vld [vmem:[%s1 + $0x178] sm:$0xff]
      %v4428 = vld [vmem:[%s221 + $0x122] sm:$0xff]
      %v4429 = vld [vmem:[%s221 + $0x12a] sm:$0xff]
      %v4430 = vpack.c.bf16 %v4429, %v4428
      %v4431 = vld [vmem:[%s221 + $0xd3] sm:$0xff]
      %v4432 = vld [vmem:[%s221 + $0xdb] sm:$0xff]
      %v4433 = vld [vmem:[%s221 + $0xe3] sm:$0xff]
      %v4434 = vld [vmem:[%s221 + $0xeb] sm:$0xff]
      %v4435 = vld [vmem:[%s221 + $0xf3] sm:$0xff]
      %v4436 = vld [vmem:[%s221 + $0xfb] sm:$0xff]
      %v4437 = vld [vmem:[%s221 + $0x103] sm:$0xff]
      %v4438 = vld [vmem:[%s221 + $0x10b] sm:$0xff]
      %v4439 = vld [vmem:[%s221 + $0x113] sm:$0xff]
      %v4440 = vld [vmem:[%s221 + $0x11b] sm:$0xff]
      %v4441 = vld [vmem:[%s221 + $0x123] sm:$0xff]
      %v4442 = vld [vmem:[%s221 + $0x12b] sm:$0xff]
      %v4443 = vpack.c.bf16 %v4432, %v4431
      %v4444 = vpack.c.bf16 %v4434, %v4433
      %v4445 = vpack.c.bf16 %v4436, %v4435
      %v4446 = vpack.c.bf16 %v4438, %v4437
      %v4447 = vpack.c.bf16 %v4440, %v4439
      %v4448 = vpack.c.bf16 %v4442, %v4441
      %v4449 = vld [vmem:[%s221 + $0xd4] sm:$0xff]
      %v4450 = vld [vmem:[%s221 + $0xdc] sm:$0xff]
      %v4451 = vld [vmem:[%s221 + $0xe4] sm:$0xff]
      %v4452 = vld [vmem:[%s221 + $0xec] sm:$0xff]
      %v4453 = vld [vmem:[%s221 + $0xf4] sm:$0xff]
      %v4454 = vld [vmem:[%s221 + $0xfc] sm:$0xff]
      %v4455 = vld [vmem:[%s221 + $0x104] sm:$0xff]
      %v4456 = vld [vmem:[%s221 + $0x10c] sm:$0xff]
      %v4457 = vld [vmem:[%s221 + $0x114] sm:$0xff]
      %v4458 = vld [vmem:[%s221 + $0x11c] sm:$0xff]
      %v4459 = vld [vmem:[%s221 + $0x124] sm:$0xff]
      %v4460 = vld [vmem:[%s221 + $0x12c] sm:$0xff]
      %v4461 = vpack.c.bf16 %v4450, %v4449
      %v4462 = vpack.c.bf16 %v4452, %v4451
      %v4463 = vpack.c.bf16 %v4454, %v4453
      %v4464 = vpack.c.bf16 %v4456, %v4455
      %v4465 = vpack.c.bf16 %v4458, %v4457
      %v4466 = vpack.c.bf16 %v4460, %v4459
      %v4467 = vld [vmem:[%s385] sm:$0xff]
      %v4468 = vld [vmem:[%s385 + $0x8] sm:$0xff]
      %v4469 = vld [vmem:[%s385 + $0x10] sm:$0xff]
      %v4470 = vld [vmem:[%s385 + $0x18] sm:$0xff]
      %v4471 = vld [vmem:[%s385 + $0x20] sm:$0xff]
      %v4472 = vld [vmem:[%s385 + $0x28] sm:$0xff]
      %v4473 = vld [vmem:[%s385 + $0x30] sm:$0xff]
      %v4474 = vld [vmem:[%s385 + $0x38] sm:$0xff]
      %v4475 = vld [vmem:[%s385 + $0x40] sm:$0xff]
      %v4476 = vld [vmem:[%s385 + $0x48] sm:$0xff]
      %v4477 = vld [vmem:[%s385 + $0x50] sm:$0xff]
      %v4478 = vld [vmem:[%s385 + $0x58] sm:$0xff]
      %v4479 = vld [vmem:[%s385 + $0x60] sm:$0xff]
      %v4480 = vld [vmem:[%s385 + $0x68] sm:$0xff]
      %v4481 = vld [vmem:[%s385 + $0x70] sm:$0xff]
      %v4482 = vld [vmem:[%s385 + $0x78] sm:$0xff]
      %v4483 = vld [vmem:[%s385 + $0x80] sm:$0xff]
      %v4484 = vld [vmem:[%s385 + $0x88] sm:$0xff]
      %v4485 = vld [vmem:[%s385 + $0x90] sm:$0xff]
      %v4486 = vld [vmem:[%s385 + $0x98] sm:$0xff]
      %v4487 = vld [vmem:[%s385 + $0xa0] sm:$0xff]
      %v4488 = vld [vmem:[%s385 + $0xa8] sm:$0xff]
      %v4489 = vld [vmem:[%s385 + $0xb0] sm:$0xff]
      %v4490 = vld [vmem:[%s385 + $0xb8] sm:$0xff]
      %v4491 = vld [vmem:[%s385 + $0xc0] sm:$0xff]
      %v4492 = vld [vmem:[%s385 + $0xc8] sm:$0xff]
      %v4493 = vld [vmem:[%s385 + $0xd0] sm:$0xff]
      %v4494 = vld [vmem:[%s385 + $0xd8] sm:$0xff]
      %v4495 = vld [vmem:[%s385 + $0xe0] sm:$0xff]
      %v4496 = vld [vmem:[%s385 + $0xe8] sm:$0xff]
      %v4497 = vld [vmem:[%s385 + $0xf0] sm:$0xff]
      %v4498 = vld [vmem:[%s385 + $0xf8] sm:$0xff]
      %v4499 = vld [vmem:[%s385 + $0x100] sm:$0xff]
      %v4500 = vld [vmem:[%s385 + $0x108] sm:$0xff]
      %v4501 = vld [vmem:[%s385 + $0x110] sm:$0xff]
      %v4502 = vld [vmem:[%s385 + $0x118] sm:$0xff]
      %v4503 = vld [vmem:[%s385 + $0x120] sm:$0xff]
      %v4504 = vld [vmem:[%s385 + $0x128] sm:$0xff]
      %v4505 = vld [vmem:[%s385 + $0x130] sm:$0xff]
      %v4506 = vld [vmem:[%s385 + $0x138] sm:$0xff]
      %v4507 = vld [vmem:[%s385 + $0x140] sm:$0xff]
      %v4508 = vld [vmem:[%s385 + $0x148] sm:$0xff]
      %v4509 = vld [vmem:[%s385 + $0x150] sm:$0xff]
      %v4510 = vld [vmem:[%s385 + $0x158] sm:$0xff]
      %v4511 = vld [vmem:[%s385 + $0x160] sm:$0xff]
      %v4512 = vld [vmem:[%s385 + $0x168] sm:$0xff]
      %v4513 = vld [vmem:[%s385 + $0x170] sm:$0xff]
      %v4514 = vld [vmem:[%s385 + $0x178] sm:$0xff]
      %v4563 = vunpack.c.l.b16 %v4467
      %v4564 = vunpack.c.h.b16 %v4467
      %v4565 = vunpack.c.l.b16 %v4468
      %v4566 = vunpack.c.h.b16 %v4468
      %v4567 = vunpack.c.l.b16 %v4469
      %v4568 = vunpack.c.h.b16 %v4469
      %v4569 = vunpack.c.l.b16 %v4470
      %v4570 = vunpack.c.h.b16 %v4470
      %v4571 = vunpack.c.l.b16 %v4471
      %v4572 = vunpack.c.h.b16 %v4471
      %v4573 = vunpack.c.l.b16 %v4472
      %v4574 = vunpack.c.h.b16 %v4472
      %v4575 = vunpack.c.l.b16 %v4473
      %v4576 = vunpack.c.h.b16 %v4473
      %v4577 = vunpack.c.l.b16 %v4474
      %v4578 = vunpack.c.h.b16 %v4474
      %v4579 = vunpack.c.l.b16 %v4475
      %v4580 = vunpack.c.h.b16 %v4475
      %v4581 = vunpack.c.l.b16 %v4476
      %v4582 = vunpack.c.h.b16 %v4476
      %v4583 = vunpack.c.l.b16 %v4477
      %v4584 = vunpack.c.h.b16 %v4477
      %v4585 = vunpack.c.l.b16 %v4478
      %v4586 = vunpack.c.h.b16 %v4478
      %v4587 = vunpack.c.l.b16 %v4479
      %v4588 = vunpack.c.h.b16 %v4479
      %v4589 = vunpack.c.l.b16 %v4480
      %v4590 = vunpack.c.h.b16 %v4480
      %v4591 = vunpack.c.l.b16 %v4481
      %v4592 = vunpack.c.h.b16 %v4481
      %v4593 = vunpack.c.l.b16 %v4482
      %v4594 = vunpack.c.h.b16 %v4482
      %v4595 = vunpack.c.l.b16 %v4483
      %v4596 = vunpack.c.h.b16 %v4483
      %v4597 = vunpack.c.l.b16 %v4484
      %v4598 = vunpack.c.h.b16 %v4484
      %v4599 = vunpack.c.l.b16 %v4485
      %v4600 = vunpack.c.h.b16 %v4485
      %v4601 = vunpack.c.l.b16 %v4486
      %v4602 = vunpack.c.h.b16 %v4486
      %v4603 = vunpack.c.l.b16 %v4487
      %v4604 = vunpack.c.h.b16 %v4487
      %v4605 = vunpack.c.l.b16 %v4488
      %v4606 = vunpack.c.h.b16 %v4488
      %v4607 = vunpack.c.l.b16 %v4489
      %v4608 = vunpack.c.h.b16 %v4489
      %v4609 = vunpack.c.l.b16 %v4490
      %v4610 = vunpack.c.h.b16 %v4490
      %v4611 = vunpack.c.l.b16 %v4491
      %v4612 = vunpack.c.h.b16 %v4491
      %v4613 = vunpack.c.l.b16 %v4492
      %v4614 = vunpack.c.h.b16 %v4492
      %v4615 = vunpack.c.l.b16 %v4493
      %v4616 = vunpack.c.h.b16 %v4493
      %v4617 = vunpack.c.l.b16 %v4494
      %v4618 = vunpack.c.h.b16 %v4494
      %v4619 = vunpack.c.l.b16 %v4495
      %v4620 = vunpack.c.h.b16 %v4495
      %v4621 = vunpack.c.l.b16 %v4496
      %v4622 = vunpack.c.h.b16 %v4496
      %v4623 = vunpack.c.l.b16 %v4497
      %v4624 = vunpack.c.h.b16 %v4497
      %v4625 = vunpack.c.l.b16 %v4498
      %v4626 = vunpack.c.h.b16 %v4498
      %v4627 = vunpack.c.l.b16 %v4499
      %v4628 = vunpack.c.h.b16 %v4499
      %v4629 = vunpack.c.l.b16 %v4500
      %v4630 = vunpack.c.h.b16 %v4500
      %v4631 = vunpack.c.l.b16 %v4501
      %v4632 = vunpack.c.h.b16 %v4501
      %v4633 = vunpack.c.l.b16 %v4502
      %v4634 = vunpack.c.h.b16 %v4502
      %v4635 = vunpack.c.l.b16 %v4503
      %v4636 = vunpack.c.h.b16 %v4503
      %v4637 = vunpack.c.l.b16 %v4504
      %v4638 = vunpack.c.h.b16 %v4504
      %v4639 = vunpack.c.l.b16 %v4505
      %v4640 = vunpack.c.h.b16 %v4505
      %v4641 = vunpack.c.l.b16 %v4506
      %v4642 = vunpack.c.h.b16 %v4506
      %v4643 = vunpack.c.l.b16 %v4507
      %v4644 = vunpack.c.h.b16 %v4507
      %v4645 = vunpack.c.l.b16 %v4508
      %v4646 = vunpack.c.h.b16 %v4508
      %v4647 = vunpack.c.l.b16 %v4509
      %v4648 = vunpack.c.h.b16 %v4509
      %v4649 = vunpack.c.l.b16 %v4510
      %v4650 = vunpack.c.h.b16 %v4510
      %v4651 = vunpack.c.l.b16 %v4511
      %v4652 = vunpack.c.h.b16 %v4511
      %v4653 = vunpack.c.l.b16 %v4512
      %v4654 = vunpack.c.h.b16 %v4512
      %v4655 = vunpack.c.l.b16 %v4513
      %v4656 = vunpack.c.h.b16 %v4513
      %v4657 = vunpack.c.l.b16 %v4514
      %v4658 = vunpack.c.h.b16 %v4514
      %v4659 = vpack.c.b16 %v4565, %v4563
      %v4660 = vpack.c.b16 %v4566, %v4564
      %v4661 = vpack.c.b16 %v4569, %v4567
      %v4662 = vpack.c.b16 %v4570, %v4568
      %v4663 = vpack.c.b16 %v4573, %v4571
      %v4664 = vpack.c.b16 %v4574, %v4572
      %v4665 = vpack.c.b16 %v4577, %v4575
      %v4666 = vpack.c.b16 %v4578, %v4576
      %v4667 = vpack.c.b16 %v4581, %v4579
      %v4668 = vpack.c.b16 %v4582, %v4580
      %v4669 = vpack.c.b16 %v4585, %v4583
      %v4670 = vpack.c.b16 %v4586, %v4584
      %v4671 = vpack.c.b16 %v4589, %v4587
      %v4672 = vpack.c.b16 %v4590, %v4588
      %v4673 = vpack.c.b16 %v4593, %v4591
      %v4674 = vpack.c.b16 %v4594, %v4592
      %v4675 = vpack.c.b16 %v4597, %v4595
      %v4676 = vpack.c.b16 %v4598, %v4596
      %v4677 = vpack.c.b16 %v4601, %v4599
      %v4678 = vpack.c.b16 %v4602, %v4600
      %v4679 = vpack.c.b16 %v4605, %v4603
      %v4680 = vpack.c.b16 %v4606, %v4604
      %v4681 = vpack.c.b16 %v4609, %v4607
      %v4682 = vpack.c.b16 %v4610, %v4608
      %v4683 = vpack.c.b16 %v4613, %v4611
      %v4684 = vpack.c.b16 %v4614, %v4612
      %v4685 = vpack.c.b16 %v4617, %v4615
      %v4686 = vpack.c.b16 %v4618, %v4616
      %v4687 = vpack.c.b16 %v4621, %v4619
      %v4688 = vpack.c.b16 %v4622, %v4620
      %v4689 = vpack.c.b16 %v4625, %v4623
      %v4690 = vpack.c.b16 %v4626, %v4624
      %v4691 = vpack.c.b16 %v4629, %v4627
      %v4692 = vpack.c.b16 %v4630, %v4628
      %v4693 = vpack.c.b16 %v4633, %v4631
      %v4694 = vpack.c.b16 %v4634, %v4632
      %v4695 = vpack.c.b16 %v4637, %v4635
      %v4696 = vpack.c.b16 %v4638, %v4636
      %v4697 = vpack.c.b16 %v4641, %v4639
      %v4698 = vpack.c.b16 %v4642, %v4640
      %v4699 = vpack.c.b16 %v4645, %v4643
      %v4700 = vpack.c.b16 %v4646, %v4644
      %v4701 = vpack.c.b16 %v4649, %v4647
      %v4702 = vpack.c.b16 %v4650, %v4648
      %v4703 = vpack.c.b16 %v4653, %v4651
      %v4704 = vpack.c.b16 %v4654, %v4652
      %v4705 = vpack.c.b16 %v4657, %v4655
      %v4706 = vpack.c.b16 %v4658, %v4656
      %4755 = vmatprep.subr.bf16.mxu0 %v4660
      %4756 = vmatpush1.bf16.msra.mxu0 %v4659
      %4757 = vmatprep.subr.bf16.mxu0 %v4662
      %4758 = vmatpush1.bf16.msra.mxu0 %v4661
      %4759 = vmatprep.subr.bf16.mxu0 %v4664
      %4760 = vmatpush1.bf16.msra.mxu0 %v4663
      %4761 = vmatprep.subr.bf16.mxu0 %v4666
      %4762 = vmatpush1.bf16.msra.mxu0 %v4665
      %4763 = vmatprep.subr.bf16.mxu0 %v4668
      %4764 = vmatpush1.bf16.msra.mxu0 %v4667
      %4765 = vmatprep.subr.bf16.mxu0 %v4670
      %4766 = vmatpush1.bf16.msra.mxu0 %v4669
      %4767 = vmatprep.subr.bf16.mxu0 %v4672
      %4768 = vmatpush1.bf16.msra.mxu0 %v4671
      %4769 = vmatprep.subr.bf16.mxu0 %v4674
      %4770 = vmatpush1.bf16.msra.mxu0 %v4673
      %4771 = vmatprep.subr.bf16.mxu0 %v4676
      %4772 = vmatpush1.bf16.msra.mxu0 %v4675
      %4773 = vmatprep.subr.bf16.mxu0 %v4678
      %4774 = vmatpush1.bf16.msra.mxu0 %v4677
      %4775 = vmatprep.subr.bf16.mxu0 %v4680
      %4776 = vmatpush1.bf16.msra.mxu0 %v4679
      %4777 = vmatprep.subr.bf16.mxu0 %v4682
      %4778 = vmatpush1.bf16.msra.mxu0 %v4681
      %4779 = vmatprep.subr.bf16.mxu0 %v4684
      %4780 = vmatpush1.bf16.msra.mxu0 %v4683
      %4781 = vmatprep.subr.bf16.mxu0 %v4686
      %4782 = vmatpush1.bf16.msra.mxu0 %v4685
      %4783 = vmatprep.subr.bf16.mxu0 %v4688
      %4784 = vmatpush1.bf16.msra.mxu0 %v4687
      %4785 = vmatprep.subr.bf16.mxu0 %v4690
      %4786 = vmatpush1.bf16.msra.mxu0 %v4689
      %4787 = vmatprep.mubr.bf16.mxu0 %v4443
      %4788 = vmatmul.mubr.bf16.gmra.mrb[0].mxu0 %v4375
      %v4789 = vpop.f32.mrb[0].mxu0
      %v4790 = vadd.f32 0.0, %v4789
      %v4791 = vpop.f32.mrb[0].mxu0
      %v4792 = vadd.f32 0.0, %v4791
      %v4793 = vpop.f32.mrb[0].mxu0
      %v4794 = vadd.f32 0.0, %v4793
      %v4795 = vpop.f32.mrb[0].mxu0
      %v4796 = vadd.f32 0.0, %v4795
      %4797 = vmatprep.mubr.bf16.mxu0 %v4444
      %4798 = vmatmul.mubr.bf16.gmra.mrb[0].mxu0 %v4376
      %v4799 = vpop.f32.mrb[0].mxu0
      %v4800 = vadd.f32 0.0, %v4799
      %v4801 = vpop.f32.mrb[0].mxu0
      %v4802 = vadd.f32 0.0, %v4801
      %v4803 = vpop.f32.mrb[0].mxu0
      %v4804 = vadd.f32 0.0, %v4803
      %v4805 = vpop.f32.mrb[0].mxu0
      %v4806 = vadd.f32 0.0, %v4805
      %4807 = vmatprep.mubr.bf16.mxu0 %v4445
      %4808 = vmatmul.mubr.bf16.gmra.mrb[0].mxu0 %v4377
      %v4809 = vpop.f32.mrb[0].mxu0
      %v4810 = vadd.f32 0.0, %v4809
      %v4811 = vpop.f32.mrb[0].mxu0
      %v4812 = vadd.f32 0.0, %v4811
      %v4813 = vpop.f32.mrb[0].mxu0
      %v4814 = vadd.f32 0.0, %v4813
      %v4815 = vpop.f32.mrb[0].mxu0
      %v4816 = vadd.f32 0.0, %v4815
      %4817 = vmatprep.mubr.bf16.mxu0 %v4446
      %4818 = vmatmul.mubr.bf16.gmra.mrb[0].mxu0 %v4378
      %v4819 = vpop.f32.mrb[0].mxu0
      %v4820 = vadd.f32 0.0, %v4819
      %v4821 = vpop.f32.mrb[0].mxu0
      %v4822 = vadd.f32 0.0, %v4821
      %v4823 = vpop.f32.mrb[0].mxu0
      %v4824 = vadd.f32 0.0, %v4823
      %v4825 = vpop.f32.mrb[0].mxu0
      %v4826 = vadd.f32 0.0, %v4825
      %4827 = vmatprep.mubr.bf16.mxu0 %v4447
      %4828 = vmatmul.mubr.bf16.gmra.mrb[0].mxu0 %v4379
      %v4829 = vpop.f32.mrb[0].mxu0
      %v4830 = vadd.f32 0.0, %v4829
      %v4831 = vpop.f32.mrb[0].mxu0
      %v4832 = vadd.f32 0.0, %v4831
      %v4833 = vpop.f32.mrb[0].mxu0
      %v4834 = vadd.f32 0.0, %v4833
      %v4835 = vpop.f32.mrb[0].mxu0
      %v4836 = vadd.f32 0.0, %v4835
      %4837 = vmatprep.mubr.bf16.mxu0 %v4448
      %4838 = vmatmul.mubr.bf16.gmra.mrb[0].mxu0 %v4430
      %v4839 = vpop.f32.mrb[0].mxu0
      %v4840 = vadd.f32 0.0, %v4839
      %v4841 = vpop.f32.mrb[0].mxu0
      %v4842 = vadd.f32 0.0, %v4841
      %v4843 = vpop.f32.mrb[0].mxu0
      %v4844 = vadd.f32 0.0, %v4843
      %v4845 = vpop.f32.mrb[0].mxu0
      %v4846 = vadd.f32 0.0, %v4845
      %4847 = vdwg.mxu0
      %4848 = vmatprep.subr.bf16.mxu0 %v4692
      %4849 = vmatpush1.bf16.msra.mxu0 %v4691
      %4850 = vmatprep.subr.bf16.mxu0 %v4694
      %4851 = vmatpush1.bf16.msra.mxu0 %v4693
      %4852 = vmatprep.subr.bf16.mxu0 %v4696
      %4853 = vmatpush1.bf16.msra.mxu0 %v4695
      %4854 = vmatprep.subr.bf16.mxu0 %v4698
      %4855 = vmatpush1.bf16.msra.mxu0 %v4697
      %4856 = vmatprep.subr.bf16.mxu0 %v4700
      %4857 = vmatpush1.bf16.msra.mxu0 %v4699
      %4858 = vmatprep.subr.bf16.mxu0 %v4702
      %4859 = vmatpush1.bf16.msra.mxu0 %v4701
      %4860 = vmatprep.subr.bf16.mxu0 %v4704
      %4861 = vmatpush1.bf16.msra.mxu0 %v4703
      %4862 = vmatprep.subr.bf16.mxu0 %v4706
      %4863 = vmatpush1.bf16.msra.mxu0 %v4705
      %4864 = vmatprep.subr.bf16.mxu0 0
      %4865 = vmatpush1.bf16.msra.mxu0 0
      %4866 = vmatprep.subr.bf16.mxu0 0
      %4867 = vmatpush1.bf16.msra.mxu0 0
      %4868 = vmatprep.subr.bf16.mxu0 0
      %4869 = vmatpush1.bf16.msra.mxu0 0
      %4870 = vmatprep.subr.bf16.mxu0 0
      %4871 = vmatpush1.bf16.msra.mxu0 0
      %4872 = vmatprep.subr.bf16.mxu0 0
      %4873 = vmatpush1.bf16.msra.mxu0 0
      %4874 = vmatprep.subr.bf16.mxu0 0
      %4875 = vmatpush1.bf16.msra.mxu0 0
      %4876 = vmatprep.subr.bf16.mxu0 0
      %4877 = vmatpush1.bf16.msra.mxu0 0
      %4878 = vmatprep.subr.bf16.mxu0 0
      %4879 = vmatpush1.bf16.msra.mxu0 0
      %4880 = vmatprep.mubr.bf16.mxu0 0
      %4881 = vmatmul.mubr.bf16.gmra.mrb[0].mxu0 %v4461
      %v4882 = vpop.f32.mrb[0].mxu0
      %v4883 = vadd.f32 %v4790, %v4882
      %v4884 = vpop.f32.mrb[0].mxu0
      %v4885 = vadd.f32 %v4792, %v4884
      %v4886 = vpop.f32.mrb[0].mxu0
      %v4887 = vadd.f32 %v4794, %v4886
      %v4888 = vpop.f32.mrb[0].mxu0
      %v4889 = vadd.f32 %v4796, %v4888
      %4890 = vmatprep.mubr.bf16.mxu0 0
      %4891 = vmatmul.mubr.bf16.gmra.mrb[0].mxu0 %v4462
      %v4892 = vpop.f32.mrb[0].mxu0
      %v4893 = vadd.f32 %v4800, %v4892
      %v4894 = vpop.f32.mrb[0].mxu0
      %v4895 = vadd.f32 %v4802, %v4894
      %v4896 = vpop.f32.mrb[0].mxu0
      %v4897 = vadd.f32 %v4804, %v4896
      %v4898 = vpop.f32.mrb[0].mxu0
      %v4899 = vadd.f32 %v4806, %v4898
      %4900 = vmatprep.mubr.bf16.mxu0 0
      %4901 = vmatmul.mubr.bf16.gmra.mrb[0].mxu0 %v4463
      %v4902 = vpop.f32.mrb[0].mxu0
      %v4903 = vadd.f32 %v4810, %v4902
      %v4904 = vpop.f32.mrb[0].mxu0
      %v4905 = vadd.f32 %v4812, %v4904
      %v4906 = vpop.f32.mrb[0].mxu0
      %v4907 = vadd.f32 %v4814, %v4906
      %v4908 = vpop.f32.mrb[0].mxu0
      %v4909 = vadd.f32 %v4816, %v4908
      %4910 = vmatprep.mubr.bf16.mxu0 0
      %4911 = vmatmul.mubr.bf16.gmra.mrb[0].mxu0 %v4464
      %v4912 = vpop.f32.mrb[0].mxu0
      %v4913 = vadd.f32 %v4820, %v4912
      %v4914 = vpop.f32.mrb[0].mxu0
      %v4915 = vadd.f32 %v4822, %v4914
      %v4916 = vpop.f32.mrb[0].mxu0
      %v4917 = vadd.f32 %v4824, %v4916
      %v4918 = vpop.f32.mrb[0].mxu0
      %v4919 = vadd.f32 %v4826, %v4918
      %4920 = vmatprep.mubr.bf16.mxu0 0
      %4921 = vmatmul.mubr.bf16.gmra.mrb[0].mxu0 %v4465
      %v4922 = vpop.f32.mrb[0].mxu0
      %v4923 = vadd.f32 %v4830, %v4922
      %v4924 = vpop.f32.mrb[0].mxu0
      %v4925 = vadd.f32 %v4832, %v4924
      %v4926 = vpop.f32.mrb[0].mxu0
      %v4927 = vadd.f32 %v4834, %v4926
      %v4928 = vpop.f32.mrb[0].mxu0
      %v4929 = vadd.f32 %v4836, %v4928
      %4930 = vmatprep.mubr.bf16.mxu0 0
      %4931 = vmatmul.mubr.bf16.gmra.mrb[0].mxu0 %v4466
      %v4932 = vpop.f32.mrb[0].mxu0
      %v4933 = vadd.f32 %v4840, %v4932
      %v4934 = vpop.f32.mrb[0].mxu0
      %v4935 = vadd.f32 %v4842, %v4934
      %v4936 = vpop.f32.mrb[0].mxu0
      %v4937 = vadd.f32 %v4844, %v4936
      %v4938 = vpop.f32.mrb[0].mxu0
      %v4939 = vadd.f32 %v4846, %v4938
      %4940 = vdwg.mxu0
      %v4989 = vunpack.c.l.b16 %v4380
      %v4990 = vunpack.c.h.b16 %v4380
      %v4991 = vunpack.c.l.b16 %v4381
      %v4992 = vunpack.c.h.b16 %v4381
      %v4993 = vunpack.c.l.b16 %v4382
      %v4994 = vunpack.c.h.b16 %v4382
      %v4995 = vunpack.c.l.b16 %v4383
      %v4996 = vunpack.c.h.b16 %v4383
      %v4997 = vunpack.c.l.b16 %v4384
      %v4998 = vunpack.c.h.b16 %v4384
      %v4999 = vunpack.c.l.b16 %v4385
      %v5000 = vunpack.c.h.b16 %v4385
      %v5001 = vunpack.c.l.b16 %v4386
      %v5002 = vunpack.c.h.b16 %v4386
      %v5003 = vunpack.c.l.b16 %v4387
      %v5004 = vunpack.c.h.b16 %v4387
      %v5005 = vunpack.c.l.b16 %v4388
      %v5006 = vunpack.c.h.b16 %v4388
      %v5007 = vunpack.c.l.b16 %v4389
      %v5008 = vunpack.c.h.b16 %v4389
      %v5009 = vunpack.c.l.b16 %v4390
      %v5010 = vunpack.c.h.b16 %v4390
      %v5011 = vunpack.c.l.b16 %v4391
      %v5012 = vunpack.c.h.b16 %v4391
      %v5013 = vunpack.c.l.b16 %v4392
      %v5014 = vunpack.c.h.b16 %v4392
      %v5015 = vunpack.c.l.b16 %v4393
      %v5016 = vunpack.c.h.b16 %v4393
      %v5017 = vunpack.c.l.b16 %v4394
      %v5018 = vunpack.c.h.b16 %v4394
      %v5019 = vunpack.c.l.b16 %v4395
      %v5020 = vunpack.c.h.b16 %v4395
      %v5021 = vunpack.c.l.b16 %v4396
      %v5022 = vunpack.c.h.b16 %v4396
      %v5023 = vunpack.c.l.b16 %v4397
      %v5024 = vunpack.c.h.b16 %v4397
      %v5025 = vunpack.c.l.b16 %v4398
      %v5026 = vunpack.c.h.b16 %v4398
      %v5027 = vunpack.c.l.b16 %v4399
      %v5028 = vunpack.c.h.b16 %v4399
      %v5029 = vunpack.c.l.b16 %v4400
      %v5030 = vunpack.c.h.b16 %v4400
      %v5031 = vunpack.c.l.b16 %v4401
      %v5032 = vunpack.c.h.b16 %v4401
      %v5033 = vunpack.c.l.b16 %v4402
      %v5034 = vunpack.c.h.b16 %v4402
      %v5035 = vunpack.c.l.b16 %v4403
      %v5036 = vunpack.c.h.b16 %v4403
      %v5037 = vunpack.c.l.b16 %v4404
      %v5038 = vunpack.c.h.b16 %v4404
      %v5039 = vunpack.c.l.b16 %v4405
      %v5040 = vunpack.c.h.b16 %v4405
      %v5041 = vunpack.c.l.b16 %v4406
      %v5042 = vunpack.c.h.b16 %v4406
      %v5043 = vunpack.c.l.b16 %v4407
      %v5044 = vunpack.c.h.b16 %v4407
      %v5045 = vunpack.c.l.b16 %v4408
      %v5046 = vunpack.c.h.b16 %v4408
      %v5047 = vunpack.c.l.b16 %v4409
      %v5048 = vunpack.c.h.b16 %v4409
      %v5049 = vunpack.c.l.b16 %v4410
      %v5050 = vunpack.c.h.b16 %v4410
      %v5051 = vunpack.c.l.b16 %v4411
      %v5052 = vunpack.c.h.b16 %v4411
      %v5053 = vunpack.c.l.b16 %v4412
      %v5054 = vunpack.c.h.b16 %v4412
      %v5055 = vunpack.c.l.b16 %v4413
      %v5056 = vunpack.c.h.b16 %v4413
      %v5057 = vunpack.c.l.b16 %v4414
      %v5058 = vunpack.c.h.b16 %v4414
      %v5059 = vunpack.c.l.b16 %v4415
      %v5060 = vunpack.c.h.b16 %v4415
      %v5061 = vunpack.c.l.b16 %v4416
      %v5062 = vunpack.c.h.b16 %v4416
      %v5063 = vunpack.c.l.b16 %v4417
      %v5064 = vunpack.c.h.b16 %v4417
      %v5065 = vunpack.c.l.b16 %v4418
      %v5066 = vunpack.c.h.b16 %v4418
      %v5067 = vunpack.c.l.b16 %v4419
      %v5068 = vunpack.c.h.b16 %v4419
      %v5069 = vunpack.c.l.b16 %v4420
      %v5070 = vunpack.c.h.b16 %v4420
      %v5071 = vunpack.c.l.b16 %v4421
      %v5072 = vunpack.c.h.b16 %v4421
      %v5073 = vunpack.c.l.b16 %v4422
      %v5074 = vunpack.c.h.b16 %v4422
      %v5075 = vunpack.c.l.b16 %v4423
      %v5076 = vunpack.c.h.b16 %v4423
      %v5077 = vunpack.c.l.b16 %v4424
      %v5078 = vunpack.c.h.b16 %v4424
      %v5079 = vunpack.c.l.b16 %v4425
      %v5080 = vunpack.c.h.b16 %v4425
      %v5081 = vunpack.c.l.b16 %v4426
      %v5082 = vunpack.c.h.b16 %v4426
      %v5083 = vunpack.c.l.b16 %v4427
      %v5084 = vunpack.c.h.b16 %v4427
      %v5085 = vpack.c.b16 %v4991, %v4989
      %v5086 = vpack.c.b16 %v4992, %v4990
      %v5087 = vpack.c.b16 %v4995, %v4993
      %v5088 = vpack.c.b16 %v4996, %v4994
      %v5089 = vpack.c.b16 %v4999, %v4997
      %v5090 = vpack.c.b16 %v5000, %v4998
      %v5091 = vpack.c.b16 %v5003, %v5001
      %v5092 = vpack.c.b16 %v5004, %v5002
      %v5093 = vpack.c.b16 %v5007, %v5005
      %v5094 = vpack.c.b16 %v5008, %v5006
      %v5095 = vpack.c.b16 %v5011, %v5009
      %v5096 = vpack.c.b16 %v5012, %v5010
      %v5097 = vpack.c.b16 %v5015, %v5013
      %v5098 = vpack.c.b16 %v5016, %v5014
      %v5099 = vpack.c.b16 %v5019, %v5017
      %v5100 = vpack.c.b16 %v5020, %v5018
      %v5101 = vpack.c.b16 %v5023, %v5021
      %v5102 = vpack.c.b16 %v5024, %v5022
      %v5103 = vpack.c.b16 %v5027, %v5025
      %v5104 = vpack.c.b16 %v5028, %v5026
      %v5105 = vpack.c.b16 %v5031, %v5029
      %v5106 = vpack.c.b16 %v5032, %v5030
      %v5107 = vpack.c.b16 %v5035, %v5033
      %v5108 = vpack.c.b16 %v5036, %v5034
      %v5109 = vpack.c.b16 %v5039, %v5037
      %v5110 = vpack.c.b16 %v5040, %v5038
      %v5111 = vpack.c.b16 %v5043, %v5041
      %v5112 = vpack.c.b16 %v5044, %v5042
      %v5113 = vpack.c.b16 %v5047, %v5045
      %v5114 = vpack.c.b16 %v5048, %v5046
      %v5115 = vpack.c.b16 %v5051, %v5049
      %v5116 = vpack.c.b16 %v5052, %v5050
      %v5117 = vpack.c.b16 %v5055, %v5053
      %v5118 = vpack.c.b16 %v5056, %v5054
      %v5119 = vpack.c.b16 %v5059, %v5057
      %v5120 = vpack.c.b16 %v5060, %v5058
      %v5121 = vpack.c.b16 %v5063, %v5061
      %v5122 = vpack.c.b16 %v5064, %v5062
      %v5123 = vpack.c.b16 %v5067, %v5065
      %v5124 = vpack.c.b16 %v5068, %v5066
      %v5125 = vpack.c.b16 %v5071, %v5069
      %v5126 = vpack.c.b16 %v5072, %v5070
      %v5127 = vpack.c.b16 %v5075, %v5073
      %v5128 = vpack.c.b16 %v5076, %v5074
      %v5129 = vpack.c.b16 %v5079, %v5077
      %v5130 = vpack.c.b16 %v5080, %v5078
      %v5131 = vpack.c.b16 %v5083, %v5081
      %v5132 = vpack.c.b16 %v5084, %v5082
      %5181 = vmatprep.subr.bf16.mxu0 %v5086
      %5182 = vmatpush1.bf16.msra.mxu0 %v5085
      %5183 = vmatprep.subr.bf16.mxu0 %v5088
      %5184 = vmatpush1.bf16.msra.mxu0 %v5087
      %5185 = vmatprep.subr.bf16.mxu0 %v5090
      %5186 = vmatpush1.bf16.msra.mxu0 %v5089
      %5187 = vmatprep.subr.bf16.mxu0 %v5092
      %5188 = vmatpush1.bf16.msra.mxu0 %v5091
      %5189 = vmatprep.subr.bf16.mxu0 %v5094
      %5190 = vmatpush1.bf16.msra.mxu0 %v5093
      %5191 = vmatprep.subr.bf16.mxu0 %v5096
      %5192 = vmatpush1.bf16.msra.mxu0 %v5095
      %5193 = vmatprep.subr.bf16.mxu0 %v5098
      %5194 = vmatpush1.bf16.msra.mxu0 %v5097
      %5195 = vmatprep.subr.bf16.mxu0 %v5100
      %5196 = vmatpush1.bf16.msra.mxu0 %v5099
      %5197 = vmatprep.subr.bf16.mxu0 %v5102
      %5198 = vmatpush1.bf16.msra.mxu0 %v5101
      %5199 = vmatprep.subr.bf16.mxu0 %v5104
      %5200 = vmatpush1.bf16.msra.mxu0 %v5103
      %5201 = vmatprep.subr.bf16.mxu0 %v5106
      %5202 = vmatpush1.bf16.msra.mxu0 %v5105
      %5203 = vmatprep.subr.bf16.mxu0 %v5108
      %5204 = vmatpush1.bf16.msra.mxu0 %v5107
      %5205 = vmatprep.subr.bf16.mxu0 %v5110
      %5206 = vmatpush1.bf16.msra.mxu0 %v5109
      %5207 = vmatprep.subr.bf16.mxu0 %v5112
      %5208 = vmatpush1.bf16.msra.mxu0 %v5111
      %5209 = vmatprep.subr.bf16.mxu0 %v5114
      %5210 = vmatpush1.bf16.msra.mxu0 %v5113
      %5211 = vmatprep.subr.bf16.mxu0 %v5116
      %5212 = vmatpush1.bf16.msra.mxu0 %v5115
      %5213 = vmatprep.mubr.bf16.mxu0 %v4356
      %5214 = vmatmul.mubr.bf16.gmra.mrb[0].mxu0 %v4338
      %v5215 = vpop.f32.mrb[0].mxu0
      %v5216 = vadd.f32 %v4883, %v5215
      %v5217 = vpop.f32.mrb[0].mxu0
      %v5218 = vadd.f32 %v4885, %v5217
      %v5219 = vpop.f32.mrb[0].mxu0
      %v5220 = vadd.f32 %v4887, %v5219
      %v5221 = vpop.f32.mrb[0].mxu0
      %v5222 = vadd.f32 %v4889, %v5221
      %5223 = vmatprep.mubr.bf16.mxu0 %v4357
      %5224 = vmatmul.mubr.bf16.gmra.mrb[0].mxu0 %v4339
      %v5225 = vpop.f32.mrb[0].mxu0
      %v5226 = vadd.f32 %v4893, %v5225
      %v5227 = vpop.f32.mrb[0].mxu0
      %v5228 = vadd.f32 %v4895, %v5227
      %v5229 = vpop.f32.mrb[0].mxu0
      %v5230 = vadd.f32 %v4897, %v5229
      %v5231 = vpop.f32.mrb[0].mxu0
      %v5232 = vadd.f32 %v4899, %v5231
      %5233 = vmatprep.mubr.bf16.mxu0 %v4358
      %5234 = vmatmul.mubr.bf16.gmra.mrb[0].mxu0 %v4340
      %v5235 = vpop.f32.mrb[0].mxu0
      %v5236 = vadd.f32 %v4903, %v5235
      %v5237 = vpop.f32.mrb[0].mxu0
      %v5238 = vadd.f32 %v4905, %v5237
      %v5239 = vpop.f32.mrb[0].mxu0
      %v5240 = vadd.f32 %v4907, %v5239
      %v5241 = vpop.f32.mrb[0].mxu0
      %v5242 = vadd.f32 %v4909, %v5241
      %5243 = vmatprep.mubr.bf16.mxu0 %v4359
      %5244 = vmatmul.mubr.bf16.gmra.mrb[0].mxu0 %v4341
      %v5245 = vpop.f32.mrb[0].mxu0
      %v5246 = vadd.f32 %v4913, %v5245
      %v5247 = vpop.f32.mrb[0].mxu0
      %v5248 = vadd.f32 %v4915, %v5247
      %v5249 = vpop.f32.mrb[0].mxu0
      %v5250 = vadd.f32 %v4917, %v5249
      %v5251 = vpop.f32.mrb[0].mxu0
      %v5252 = vadd.f32 %v4919, %v5251
      %5253 = vmatprep.mubr.bf16.mxu0 %v4360
      %5254 = vmatmul.mubr.bf16.gmra.mrb[0].mxu0 %v4342
      %v5255 = vpop.f32.mrb[0].mxu0
      %v5256 = vadd.f32 %v4923, %v5255
      %v5257 = vpop.f32.mrb[0].mxu0
      %v5258 = vadd.f32 %v4925, %v5257
      %v5259 = vpop.f32.mrb[0].mxu0
      %v5260 = vadd.f32 %v4927, %v5259
      %v5261 = vpop.f32.mrb[0].mxu0
      %v5262 = vadd.f32 %v4929, %v5261
      %5263 = vmatprep.mubr.bf16.mxu0 %v4361
      %5264 = vmatmul.mubr.bf16.gmra.mrb[0].mxu0 %v4343
      %v5265 = vpop.f32.mrb[0].mxu0
      %v5266 = vadd.f32 %v4933, %v5265
      %v5267 = vpop.f32.mrb[0].mxu0
      %v5268 = vadd.f32 %v4935, %v5267
      %v5269 = vpop.f32.mrb[0].mxu0
      %v5270 = vadd.f32 %v4937, %v5269
      %v5271 = vpop.f32.mrb[0].mxu0
      %v5272 = vadd.f32 %v4939, %v5271
      %5273 = vdwg.mxu0
      %5274 = vmatprep.subr.bf16.mxu0 %v5118
      %5275 = vmatpush1.bf16.msra.mxu0 %v5117
      %5276 = vmatprep.subr.bf16.mxu0 %v5120
      %5277 = vmatpush1.bf16.msra.mxu0 %v5119
      %5278 = vmatprep.subr.bf16.mxu0 %v5122
      %5279 = vmatpush1.bf16.msra.mxu0 %v5121
      %5280 = vmatprep.subr.bf16.mxu0 %v5124
      %5281 = vmatpush1.bf16.msra.mxu0 %v5123
      %5282 = vmatprep.subr.bf16.mxu0 %v5126
      %5283 = vmatpush1.bf16.msra.mxu0 %v5125
      %5284 = vmatprep.subr.bf16.mxu0 %v5128
      %5285 = vmatpush1.bf16.msra.mxu0 %v5127
      %5286 = vmatprep.subr.bf16.mxu0 %v5130
      %5287 = vmatpush1.bf16.msra.mxu0 %v5129
      %5288 = vmatprep.subr.bf16.mxu0 %v5132
      %5289 = vmatpush1.bf16.msra.mxu0 %v5131
      %5290 = vmatprep.subr.bf16.mxu0 0
      %5291 = vmatpush1.bf16.msra.mxu0 0
      %5292 = vmatprep.subr.bf16.mxu0 0
      %5293 = vmatpush1.bf16.msra.mxu0 0
      %5294 = vmatprep.subr.bf16.mxu0 0
      %5295 = vmatpush1.bf16.msra.mxu0 0
      %5296 = vmatprep.subr.bf16.mxu0 0
      %5297 = vmatpush1.bf16.msra.mxu0 0
      %5298 = vmatprep.subr.bf16.mxu0 0
      %5299 = vmatpush1.bf16.msra.mxu0 0
      %5300 = vmatprep.subr.bf16.mxu0 0
      %5301 = vmatpush1.bf16.msra.mxu0 0
      %5302 = vmatprep.subr.bf16.mxu0 0
      %5303 = vmatpush1.bf16.msra.mxu0 0
      %5304 = vmatprep.subr.bf16.mxu0 0
      %5305 = vmatpush1.bf16.msra.mxu0 0
      %5306 = vmatprep.mubr.bf16.mxu0 0
      %5307 = vmatmul.mubr.bf16.gmra.mrb[0].mxu0 %v4374
      %v5308 = vpop.f32.mrb[0].mxu0
      %v5309 = vadd.f32 %v5216, %v5308
      %v5310 = vpop.f32.mrb[0].mxu0
      %v5311 = vadd.f32 %v5218, %v5310
      %v5312 = vpop.f32.mrb[0].mxu0
      %v5313 = vadd.f32 %v5220, %v5312
      %v5314 = vpop.f32.mrb[0].mxu0
      %v5315 = vadd.f32 %v5222, %v5314
      %5316 = vmatprep.mubr.bf16.mxu0 0
      %5317 = vmatmul.mubr.bf16.gmra.mrb[0].mxu0 %v4375
      %v5318 = vpop.f32.mrb[0].mxu0
      %v5319 = vadd.f32 %v5226, %v5318
      %v5320 = vpop.f32.mrb[0].mxu0
      %v5321 = vadd.f32 %v5228, %v5320
      %v5322 = vpop.f32.mrb[0].mxu0
      %v5323 = vadd.f32 %v5230, %v5322
      %v5324 = vpop.f32.mrb[0].mxu0
      %v5325 = vadd.f32 %v5232, %v5324
      %5326 = vmatprep.mubr.bf16.mxu0 0
      %5327 = vmatmul.mubr.bf16.gmra.mrb[0].mxu0 %v4376
      %v5328 = vpop.f32.mrb[0].mxu0
      %v5329 = vadd.f32 %v5236, %v5328
      %v5330 = vpop.f32.mrb[0].mxu0
      %v5331 = vadd.f32 %v5238, %v5330
      %v5332 = vpop.f32.mrb[0].mxu0
      %v5333 = vadd.f32 %v5240, %v5332
      %v5334 = vpop.f32.mrb[0].mxu0
      %v5335 = vadd.f32 %v5242, %v5334
      %5336 = vmatprep.mubr.bf16.mxu0 0
      %5337 = vmatmul.mubr.bf16.gmra.mrb[0].mxu0 %v4377
      %v5338 = vpop.f32.mrb[0].mxu0
      %v5339 = vadd.f32 %v5246, %v5338
      %v5340 = vpop.f32.mrb[0].mxu0
      %v5341 = vadd.f32 %v5248, %v5340
      %v5342 = vpop.f32.mrb[0].mxu0
      %v5343 = vadd.f32 %v5250, %v5342
      %v5344 = vpop.f32.mrb[0].mxu0
      %v5345 = vadd.f32 %v5252, %v5344
      %5346 = vmatprep.mubr.bf16.mxu0 0
      %5347 = vmatmul.mubr.bf16.gmra.mrb[0].mxu0 %v4378
      %v5348 = vpop.f32.mrb[0].mxu0
      %v5349 = vadd.f32 %v5256, %v5348
      %v5350 = vpop.f32.mrb[0].mxu0
      %v5351 = vadd.f32 %v5258, %v5350
      %v5352 = vpop.f32.mrb[0].mxu0
      %v5353 = vadd.f32 %v5260, %v5352
      %v5354 = vpop.f32.mrb[0].mxu0
      %v5355 = vadd.f32 %v5262, %v5354
      %5356 = vmatprep.mubr.bf16.mxu0 0
      %5357 = vmatmul.mubr.bf16.gmra.mrb[0].mxu0 %v4379
      %v5358 = vpop.f32.mrb[0].mxu0
      %v5359 = vadd.f32 %v5266, %v5358
      %v5360 = vpop.f32.mrb[0].mxu0
      %v5361 = vadd.f32 %v5268, %v5360
      %v5362 = vpop.f32.mrb[0].mxu0
      %v5363 = vadd.f32 %v5270, %v5362
      %v5364 = vpop.f32.mrb[0].mxu0
      %v5365 = vadd.f32 %v5272, %v5364
      %5366 = vdwg.mxu0
      %v5367 = vld [vmem:[%s221 + $0xe4] sm:$0xff]
      %v5368 = vld [vmem:[%s221 + $0xec] sm:$0xff]
      %v5369 = vld [vmem:[%s221 + $0xf4] sm:$0xff]
      %v5370 = vld [vmem:[%s221 + $0xfc] sm:$0xff]
      %v5371 = vld [vmem:[%s221 + $0x104] sm:$0xff]
      %v5372 = vld [vmem:[%s221 + $0x10c] sm:$0xff]
      %v5373 = vld [vmem:[%s221 + $0x114] sm:$0xff]
      %v5374 = vld [vmem:[%s221 + $0x11c] sm:$0xff]
      %v5375 = vld [vmem:[%s221 + $0x124] sm:$0xff]
      %v5376 = vld [vmem:[%s221 + $0x12c] sm:$0xff]
      %v5377 = vld [vmem:[%s221 + $0x134] sm:$0xff]
      %v5378 = vld [vmem:[%s221 + $0x13c] sm:$0xff]
      %v5379 = vpack.c.bf16 %v5368, %v5367
      %v5380 = vpack.c.bf16 %v5370, %v5369
      %v5381 = vpack.c.bf16 %v5372, %v5371
      %v5382 = vpack.c.bf16 %v5374, %v5373
      %v5383 = vpack.c.bf16 %v5376, %v5375
      %v5384 = vpack.c.bf16 %v5378, %v5377
      %v5385 = vld [vmem:[%s221 + $0xe5] sm:$0xff]
      %v5386 = vld [vmem:[%s221 + $0xed] sm:$0xff]
      %v5387 = vld [vmem:[%s221 + $0xf5] sm:$0xff]
      %v5388 = vld [vmem:[%s221 + $0xfd] sm:$0xff]
      %v5389 = vld [vmem:[%s221 + $0x105] sm:$0xff]
      %v5390 = vld [vmem:[%s221 + $0x10d] sm:$0xff]
      %v5391 = vld [vmem:[%s221 + $0x115] sm:$0xff]
      %v5392 = vld [vmem:[%s221 + $0x11d] sm:$0xff]
      %v5393 = vld [vmem:[%s221 + $0x125] sm:$0xff]
      %v5394 = vld [vmem:[%s221 + $0x12d] sm:$0xff]
      %v5395 = vld [vmem:[%s221 + $0x135] sm:$0xff]
      %v5396 = vld [vmem:[%s221 + $0x13d] sm:$0xff]
      %v5397 = vpack.c.bf16 %v5386, %v5385
      %v5398 = vpack.c.bf16 %v5388, %v5387
      %v5399 = vpack.c.bf16 %v5390, %v5389
      %v5400 = vpack.c.bf16 %v5392, %v5391
      %v5401 = vpack.c.bf16 %v5394, %v5393
      %v5402 = vpack.c.bf16 %v5396, %v5395
      %v5403 = vld [vmem:[%s221 + $0xe6] sm:$0xff]
      %v5404 = vld [vmem:[%s221 + $0xee] sm:$0xff]
      %v5405 = vld [vmem:[%s221 + $0xf6] sm:$0xff]
      %v5406 = vld [vmem:[%s221 + $0xfe] sm:$0xff]
      %v5407 = vld [vmem:[%s221 + $0x106] sm:$0xff]
      %v5408 = vld [vmem:[%s221 + $0x10e] sm:$0xff]
      %v5409 = vld [vmem:[%s221 + $0x116] sm:$0xff]
      %v5410 = vld [vmem:[%s221 + $0x11e] sm:$0xff]
      %v5411 = vld [vmem:[%s221 + $0x126] sm:$0xff]
      %v5412 = vld [vmem:[%s221 + $0x12e] sm:$0xff]
      %v5413 = vld [vmem:[%s221 + $0x136] sm:$0xff]
      %v5414 = vld [vmem:[%s221 + $0x13e] sm:$0xff]
      %v5415 = vpack.c.bf16 %v5404, %v5403
      %v5416 = vpack.c.bf16 %v5406, %v5405
      %v5417 = vpack.c.bf16 %v5408, %v5407
      %v5418 = vpack.c.bf16 %v5410, %v5409
      %v5419 = vpack.c.bf16 %v5412, %v5411
      %v5420 = vpack.c.bf16 %v5414, %v5413
      %v5421 = vld [vmem:[%s1340] sm:$0xff]
      %v5422 = vld [vmem:[%s1340 + $0x8] sm:$0xff]
      %v5423 = vld [vmem:[%s1340 + $0x10] sm:$0xff]
      %v5424 = vld [vmem:[%s1340 + $0x18] sm:$0xff]
      %v5425 = vld [vmem:[%s1340 + $0x20] sm:$0xff]
      %v5426 = vld [vmem:[%s1340 + $0x28] sm:$0xff]
      %v5427 = vld [vmem:[%s1340 + $0x30] sm:$0xff]
      %v5428 = vld [vmem:[%s1340 + $0x38] sm:$0xff]
      %v5429 = vld [vmem:[%s1340 + $0x40] sm:$0xff]
      %v5430 = vld [vmem:[%s1340 + $0x48] sm:$0xff]
      %v5431 = vld [vmem:[%s1340 + $0x50] sm:$0xff]
      %v5432 = vld [vmem:[%s1340 + $0x58] sm:$0xff]
      %v5433 = vld [vmem:[%s1340 + $0x60] sm:$0xff]
      %v5434 = vld [vmem:[%s1340 + $0x68] sm:$0xff]
      %v5435 = vld [vmem:[%s1340 + $0x70] sm:$0xff]
      %v5436 = vld [vmem:[%s1340 + $0x78] sm:$0xff]
      %v5437 = vld [vmem:[%s1340 + $0x80] sm:$0xff]
      %v5438 = vld [vmem:[%s1340 + $0x88] sm:$0xff]
      %v5439 = vld [vmem:[%s1340 + $0x90] sm:$0xff]
      %v5440 = vld [vmem:[%s1340 + $0x98] sm:$0xff]
      %v5441 = vld [vmem:[%s1340 + $0xa0] sm:$0xff]
      %v5442 = vld [vmem:[%s1340 + $0xa8] sm:$0xff]
      %v5443 = vld [vmem:[%s1340 + $0xb0] sm:$0xff]
      %v5444 = vld [vmem:[%s1340 + $0xb8] sm:$0xff]
      %v5445 = vld [vmem:[%s1340 + $0xc0] sm:$0xff]
      %v5446 = vld [vmem:[%s1340 + $0xc8] sm:$0xff]
      %v5447 = vld [vmem:[%s1340 + $0xd0] sm:$0xff]
      %v5448 = vld [vmem:[%s1340 + $0xd8] sm:$0xff]
      %v5449 = vld [vmem:[%s1340 + $0xe0] sm:$0xff]
      %v5450 = vld [vmem:[%s1340 + $0xe8] sm:$0xff]
      %v5451 = vld [vmem:[%s1340 + $0xf0] sm:$0xff]
      %v5452 = vld [vmem:[%s1340 + $0xf8] sm:$0xff]
      %v5453 = vld [vmem:[%s1340 + $0x100] sm:$0xff]
      %v5454 = vld [vmem:[%s1340 + $0x108] sm:$0xff]
      %v5455 = vld [vmem:[%s1340 + $0x110] sm:$0xff]
      %v5456 = vld [vmem:[%s1340 + $0x118] sm:$0xff]
      %v5457 = vld [vmem:[%s1340 + $0x120] sm:$0xff]
      %v5458 = vld [vmem:[%s1340 + $0x128] sm:$0xff]
      %v5459 = vld [vmem:[%s1340 + $0x130] sm:$0xff]
      %v5460 = vld [vmem:[%s1340 + $0x138] sm:$0xff]
      %v5461 = vld [vmem:[%s1340 + $0x140] sm:$0xff]
      %v5462 = vld [vmem:[%s1340 + $0x148] sm:$0xff]
      %v5463 = vld [vmem:[%s1340 + $0x150] sm:$0xff]
      %v5464 = vld [vmem:[%s1340 + $0x158] sm:$0xff]
      %v5465 = vld [vmem:[%s1340 + $0x160] sm:$0xff]
      %v5466 = vld [vmem:[%s1340 + $0x168] sm:$0xff]
      %v5467 = vld [vmem:[%s1340 + $0x170] sm:$0xff]
      %v5468 = vld [vmem:[%s1340 + $0x178] sm:$0xff]
      %v5517 = vunpack.c.l.b16 %v5421
      %v5518 = vunpack.c.h.b16 %v5421
      %v5519 = vunpack.c.l.b16 %v5422
      %v5520 = vunpack.c.h.b16 %v5422
      %v5521 = vunpack.c.l.b16 %v5423
      %v5522 = vunpack.c.h.b16 %v5423
      %v5523 = vunpack.c.l.b16 %v5424
      %v5524 = vunpack.c.h.b16 %v5424
      %v5525 = vunpack.c.l.b16 %v5425
      %v5526 = vunpack.c.h.b16 %v5425
      %v5527 = vunpack.c.l.b16 %v5426
      %v5528 = vunpack.c.h.b16 %v5426
      %v5529 = vunpack.c.l.b16 %v5427
      %v5530 = vunpack.c.h.b16 %v5427
      %v5531 = vunpack.c.l.b16 %v5428
      %v5532 = vunpack.c.h.b16 %v5428
      %v5533 = vunpack.c.l.b16 %v5429
      %v5534 = vunpack.c.h.b16 %v5429
      %v5535 = vunpack.c.l.b16 %v5430
      %v5536 = vunpack.c.h.b16 %v5430
      %v5537 = vunpack.c.l.b16 %v5431
      %v5538 = vunpack.c.h.b16 %v5431
      %v5539 = vunpack.c.l.b16 %v5432
      %v5540 = vunpack.c.h.b16 %v5432
      %v5541 = vunpack.c.l.b16 %v5433
      %v5542 = vunpack.c.h.b16 %v5433
      %v5543 = vunpack.c.l.b16 %v5434
      %v5544 = vunpack.c.h.b16 %v5434
      %v5545 = vunpack.c.l.b16 %v5435
      %v5546 = vunpack.c.h.b16 %v5435
      %v5547 = vunpack.c.l.b16 %v5436
      %v5548 = vunpack.c.h.b16 %v5436
      %v5549 = vunpack.c.l.b16 %v5437
      %v5550 = vunpack.c.h.b16 %v5437
      %v5551 = vunpack.c.l.b16 %v5438
      %v5552 = vunpack.c.h.b16 %v5438
      %v5553 = vunpack.c.l.b16 %v5439
      %v5554 = vunpack.c.h.b16 %v5439
      %v5555 = vunpack.c.l.b16 %v5440
      %v5556 = vunpack.c.h.b16 %v5440
      %v5557 = vunpack.c.l.b16 %v5441
      %v5558 = vunpack.c.h.b16 %v5441
      %v5559 = vunpack.c.l.b16 %v5442
      %v5560 = vunpack.c.h.b16 %v5442
      %v5561 = vunpack.c.l.b16 %v5443
      %v5562 = vunpack.c.h.b16 %v5443
      %v5563 = vunpack.c.l.b16 %v5444
      %v5564 = vunpack.c.h.b16 %v5444
      %v5565 = vunpack.c.l.b16 %v5445
      %v5566 = vunpack.c.h.b16 %v5445
      %v5567 = vunpack.c.l.b16 %v5446
      %v5568 = vunpack.c.h.b16 %v5446
      %v5569 = vunpack.c.l.b16 %v5447
      %v5570 = vunpack.c.h.b16 %v5447
      %v5571 = vunpack.c.l.b16 %v5448
      %v5572 = vunpack.c.h.b16 %v5448
      %v5573 = vunpack.c.l.b16 %v5449
      %v5574 = vunpack.c.h.b16 %v5449
      %v5575 = vunpack.c.l.b16 %v5450
      %v5576 = vunpack.c.h.b16 %v5450
      %v5577 = vunpack.c.l.b16 %v5451
      %v5578 = vunpack.c.h.b16 %v5451
      %v5579 = vunpack.c.l.b16 %v5452
      %v5580 = vunpack.c.h.b16 %v5452
      %v5581 = vunpack.c.l.b16 %v5453
      %v5582 = vunpack.c.h.b16 %v5453
      %v5583 = vunpack.c.l.b16 %v5454
      %v5584 = vunpack.c.h.b16 %v5454
      %v5585 = vunpack.c.l.b16 %v5455
      %v5586 = vunpack.c.h.b16 %v5455
      %v5587 = vunpack.c.l.b16 %v5456
      %v5588 = vunpack.c.h.b16 %v5456
      %v5589 = vunpack.c.l.b16 %v5457
      %v5590 = vunpack.c.h.b16 %v5457
      %v5591 = vunpack.c.l.b16 %v5458
      %v5592 = vunpack.c.h.b16 %v5458
      %v5593 = vunpack.c.l.b16 %v5459
      %v5594 = vunpack.c.h.b16 %v5459
      %v5595 = vunpack.c.l.b16 %v5460
      %v5596 = vunpack.c.h.b16 %v5460
      %v5597 = vunpack.c.l.b16 %v5461
      %v5598 = vunpack.c.h.b16 %v5461
      %v5599 = vunpack.c.l.b16 %v5462
      %v5600 = vunpack.c.h.b16 %v5462
      %v5601 = vunpack.c.l.b16 %v5463
      %v5602 = vunpack.c.h.b16 %v5463
      %v5603 = vunpack.c.l.b16 %v5464
      %v5604 = vunpack.c.h.b16 %v5464
      %v5605 = vunpack.c.l.b16 %v5465
      %v5606 = vunpack.c.h.b16 %v5465
      %v5607 = vunpack.c.l.b16 %v5466
      %v5608 = vunpack.c.h.b16 %v5466
      %v5609 = vunpack.c.l.b16 %v5467
      %v5610 = vunpack.c.h.b16 %v5467
      %v5611 = vunpack.c.l.b16 %v5468
      %v5612 = vunpack.c.h.b16 %v5468
      %v5613 = vpack.c.b16 %v5519, %v5517
      %v5614 = vpack.c.b16 %v5520, %v5518
      %v5615 = vpack.c.b16 %v5523, %v5521
      %v5616 = vpack.c.b16 %v5524, %v5522
      %v5617 = vpack.c.b16 %v5527, %v5525
      %v5618 = vpack.c.b16 %v5528, %v5526
      %v5619 = vpack.c.b16 %v5531, %v5529
      %v5620 = vpack.c.b16 %v5532, %v5530
      %v5621 = vpack.c.b16 %v5535, %v5533
      %v5622 = vpack.c.b16 %v5536, %v5534
      %v5623 = vpack.c.b16 %v5539, %v5537
      %v5624 = vpack.c.b16 %v5540, %v5538
      %v5625 = vpack.c.b16 %v5543, %v5541
      %v5626 = vpack.c.b16 %v5544, %v5542
      %v5627 = vpack.c.b16 %v5547, %v5545
      %v5628 = vpack.c.b16 %v5548, %v5546
      %v5629 = vpack.c.b16 %v5551, %v5549
      %v5630 = vpack.c.b16 %v5552, %v5550
      %v5631 = vpack.c.b16 %v5555, %v5553
      %v5632 = vpack.c.b16 %v5556, %v5554
      %v5633 = vpack.c.b16 %v5559, %v5557
      %v5634 = vpack.c.b16 %v5560, %v5558
      %v5635 = vpack.c.b16 %v5563, %v5561
      %v5636 = vpack.c.b16 %v5564, %v5562
      %v5637 = vpack.c.b16 %v5567, %v5565
      %v5638 = vpack.c.b16 %v5568, %v5566
      %v5639 = vpack.c.b16 %v5571, %v5569
      %v5640 = vpack.c.b16 %v5572, %v5570
      %v5641 = vpack.c.b16 %v5575, %v5573
      %v5642 = vpack.c.b16 %v5576, %v5574
      %v5643 = vpack.c.b16 %v5579, %v5577
      %v5644 = vpack.c.b16 %v5580, %v5578
      %v5645 = vpack.c.b16 %v5583, %v5581
      %v5646 = vpack.c.b16 %v5584, %v5582
      %v5647 = vpack.c.b16 %v5587, %v5585
      %v5648 = vpack.c.b16 %v5588, %v5586
      %v5649 = vpack.c.b16 %v5591, %v5589
      %v5650 = vpack.c.b16 %v5592, %v5590
      %v5651 = vpack.c.b16 %v5595, %v5593
      %v5652 = vpack.c.b16 %v5596, %v5594
      %v5653 = vpack.c.b16 %v5599, %v5597
      %v5654 = vpack.c.b16 %v5600, %v5598
      %v5655 = vpack.c.b16 %v5603, %v5601
      %v5656 = vpack.c.b16 %v5604, %v5602
      %v5657 = vpack.c.b16 %v5607, %v5605
      %v5658 = vpack.c.b16 %v5608, %v5606
      %v5659 = vpack.c.b16 %v5611, %v5609
      %v5660 = vpack.c.b16 %v5612, %v5610
      %5709 = vmatprep.subr.bf16.mxu0 %v5614
      %5710 = vmatpush1.bf16.msra.mxu0 %v5613
      %5711 = vmatprep.subr.bf16.mxu0 %v5616
      %5712 = vmatpush1.bf16.msra.mxu0 %v5615
      %5713 = vmatprep.subr.bf16.mxu0 %v5618
      %5714 = vmatpush1.bf16.msra.mxu0 %v5617
      %5715 = vmatprep.subr.bf16.mxu0 %v5620
      %5716 = vmatpush1.bf16.msra.mxu0 %v5619
      %5717 = vmatprep.subr.bf16.mxu0 %v5622
      %5718 = vmatpush1.bf16.msra.mxu0 %v5621
      %5719 = vmatprep.subr.bf16.mxu0 %v5624
      %5720 = vmatpush1.bf16.msra.mxu0 %v5623
      %5721 = vmatprep.subr.bf16.mxu0 %v5626
      %5722 = vmatpush1.bf16.msra.mxu0 %v5625
      %5723 = vmatprep.subr.bf16.mxu0 %v5628
      %5724 = vmatpush1.bf16.msra.mxu0 %v5627
      %5725 = vmatprep.subr.bf16.mxu0 %v5630
      %5726 = vmatpush1.bf16.msra.mxu0 %v5629
      %5727 = vmatprep.subr.bf16.mxu0 %v5632
      %5728 = vmatpush1.bf16.msra.mxu0 %v5631
      %5729 = vmatprep.subr.bf16.mxu0 %v5634
      %5730 = vmatpush1.bf16.msra.mxu0 %v5633
      %5731 = vmatprep.subr.bf16.mxu0 %v5636
      %5732 = vmatpush1.bf16.msra.mxu0 %v5635
      %5733 = vmatprep.subr.bf16.mxu0 %v5638
      %5734 = vmatpush1.bf16.msra.mxu0 %v5637
      %5735 = vmatprep.subr.bf16.mxu0 %v5640
      %5736 = vmatpush1.bf16.msra.mxu0 %v5639
      %5737 = vmatprep.subr.bf16.mxu0 %v5642
      %5738 = vmatpush1.bf16.msra.mxu0 %v5641
      %5739 = vmatprep.subr.bf16.mxu0 %v5644
      %5740 = vmatpush1.bf16.msra.mxu0 %v5643
      %5741 = vmatprep.mubr.bf16.mxu0 %v5397
      %5742 = vmatmul.mubr.bf16.gmra.mrb[0].mxu0 %v5379
      %v5743 = vpop.f32.mrb[0].mxu0
      %v5744 = vadd.f32 0.0, %v5743
      %v5745 = vpop.f32.mrb[0].mxu0
      %v5746 = vadd.f32 0.0, %v5745
      %v5747 = vpop.f32.mrb[0].mxu0
      %v5748 = vadd.f32 0.0, %v5747
      %v5749 = vpop.f32.mrb[0].mxu0
      %v5750 = vadd.f32 0.0, %v5749
      %5751 = vmatprep.mubr.bf16.mxu0 %v5398
      %5752 = vmatmul.mubr.bf16.gmra.mrb[0].mxu0 %v5380
      %v5753 = vpop.f32.mrb[0].mxu0
      %v5754 = vadd.f32 0.0, %v5753
      %v5755 = vpop.f32.mrb[0].mxu0
      %v5756 = vadd.f32 0.0, %v5755
      %v5757 = vpop.f32.mrb[0].mxu0
      %v5758 = vadd.f32 0.0, %v5757
      %v5759 = vpop.f32.mrb[0].mxu0
      %v5760 = vadd.f32 0.0, %v5759
      %5761 = vmatprep.mubr.bf16.mxu0 %v5399
      %5762 = vmatmul.mubr.bf16.gmra.mrb[0].mxu0 %v5381
      %v5763 = vpop.f32.mrb[0].mxu0
      %v5764 = vadd.f32 0.0, %v5763
      %v5765 = vpop.f32.mrb[0].mxu0
      %v5766 = vadd.f32 0.0, %v5765
      %v5767 = vpop.f32.mrb[0].mxu0
      %v5768 = vadd.f32 0.0, %v5767
      %v5769 = vpop.f32.mrb[0].mxu0
      %v5770 = vadd.f32 0.0, %v5769
      %5771 = vmatprep.mubr.bf16.mxu0 %v5400
      %5772 = vmatmul.mubr.bf16.gmra.mrb[0].mxu0 %v5382
      %v5773 = vpop.f32.mrb[0].mxu0
      %v5774 = vadd.f32 0.0, %v5773
      %v5775 = vpop.f32.mrb[0].mxu0
      %v5776 = vadd.f32 0.0, %v5775
      %v5777 = vpop.f32.mrb[0].mxu0
      %v5778 = vadd.f32 0.0, %v5777
      %v5779 = vpop.f32.mrb[0].mxu0
      %v5780 = vadd.f32 0.0, %v5779
      %5781 = vmatprep.mubr.bf16.mxu0 %v5401
      %5782 = vmatmul.mubr.bf16.gmra.mrb[0].mxu0 %v5383
      %v5783 = vpop.f32.mrb[0].mxu0
      %v5784 = vadd.f32 0.0, %v5783
      %v5785 = vpop.f32.mrb[0].mxu0
      %v5786 = vadd.f32 0.0, %v5785
      %v5787 = vpop.f32.mrb[0].mxu0
      %v5788 = vadd.f32 0.0, %v5787
      %v5789 = vpop.f32.mrb[0].mxu0
      %v5790 = vadd.f32 0.0, %v5789
      %5791 = vmatprep.mubr.bf16.mxu0 %v5402
      %5792 = vmatmul.mubr.bf16.gmra.mrb[0].mxu0 %v5384
      %v5793 = vpop.f32.mrb[0].mxu0
      %v5794 = vadd.f32 0.0, %v5793
      %v5795 = vpop.f32.mrb[0].mxu0
      %v5796 = vadd.f32 0.0, %v5795
      %v5797 = vpop.f32.mrb[0].mxu0
      %v5798 = vadd.f32 0.0, %v5797
      %v5799 = vpop.f32.mrb[0].mxu0
      %v5800 = vadd.f32 0.0, %v5799
      %5801 = vdwg.mxu0
      %5802 = vmatprep.subr.bf16.mxu0 %v5646
      %5803 = vmatpush1.bf16.msra.mxu0 %v5645
      %5804 = vmatprep.subr.bf16.mxu0 %v5648
      %5805 = vmatpush1.bf16.msra.mxu0 %v5647
      %5806 = vmatprep.subr.bf16.mxu0 %v5650
      %5807 = vmatpush1.bf16.msra.mxu0 %v5649
      %5808 = vmatprep.subr.bf16.mxu0 %v5652
      %5809 = vmatpush1.bf16.msra.mxu0 %v5651
      %5810 = vmatprep.subr.bf16.mxu0 %v5654
      %5811 = vmatpush1.bf16.msra.mxu0 %v5653
      %5812 = vmatprep.subr.bf16.mxu0 %v5656
      %5813 = vmatpush1.bf16.msra.mxu0 %v5655
      %5814 = vmatprep.subr.bf16.mxu0 %v5658
      %5815 = vmatpush1.bf16.msra.mxu0 %v5657
      %5816 = vmatprep.subr.bf16.mxu0 %v5660
      %5817 = vmatpush1.bf16.msra.mxu0 %v5659
      %5818 = vmatprep.subr.bf16.mxu0 0
      %5819 = vmatpush1.bf16.msra.mxu0 0
      %5820 = vmatprep.subr.bf16.mxu0 0
      %5821 = vmatpush1.bf16.msra.mxu0 0
      %5822 = vmatprep.subr.bf16.mxu0 0
      %5823 = vmatpush1.bf16.msra.mxu0 0
      %5824 = vmatprep.subr.bf16.mxu0 0
      %5825 = vmatpush1.bf16.msra.mxu0 0
      %5826 = vmatprep.subr.bf16.mxu0 0
      %5827 = vmatpush1.bf16.msra.mxu0 0
      %5828 = vmatprep.subr.bf16.mxu0 0
      %5829 = vmatpush1.bf16.msra.mxu0 0
      %5830 = vmatprep.subr.bf16.mxu0 0
      %5831 = vmatpush1.bf16.msra.mxu0 0
      %5832 = vmatprep.subr.bf16.mxu0 0
      %5833 = vmatpush1.bf16.msra.mxu0 0
      %5834 = vmatprep.mubr.bf16.mxu0 0
      %5835 = vmatmul.mubr.bf16.gmra.mrb[0].mxu0 %v5415
      %v5836 = vpop.f32.mrb[0].mxu0
      %v5837 = vadd.f32 %v5744, %v5836
      %v5838 = vpop.f32.mrb[0].mxu0
      %v5839 = vadd.f32 %v5746, %v5838
      %v5840 = vpop.f32.mrb[0].mxu0
      %v5841 = vadd.f32 %v5748, %v5840
      %v5842 = vpop.f32.mrb[0].mxu0
      %v5843 = vadd.f32 %v5750, %v5842
      %5844 = vmatprep.mubr.bf16.mxu0 0
      %5845 = vmatmul.mubr.bf16.gmra.mrb[0].mxu0 %v5416
      %v5846 = vpop.f32.mrb[0].mxu0
      %v5847 = vadd.f32 %v5754, %v5846
      %v5848 = vpop.f32.mrb[0].mxu0
      %v5849 = vadd.f32 %v5756, %v5848
      %v5850 = vpop.f32.mrb[0].mxu0
      %v5851 = vadd.f32 %v5758, %v5850
      %v5852 = vpop.f32.mrb[0].mxu0
      %v5853 = vadd.f32 %v5760, %v5852
      %5854 = vmatprep.mubr.bf16.mxu0 0
      %5855 = vmatmul.mubr.bf16.gmra.mrb[0].mxu0 %v5417
      %v5856 = vpop.f32.mrb[0].mxu0
      %v5857 = vadd.f32 %v5764, %v5856
      %v5858 = vpop.f32.mrb[0].mxu0
      %v5859 = vadd.f32 %v5766, %v5858
      %v5860 = vpop.f32.mrb[0].mxu0
      %v5861 = vadd.f32 %v5768, %v5860
      %v5862 = vpop.f32.mrb[0].mxu0
      %v5863 = vadd.f32 %v5770, %v5862
      %5864 = vmatprep.mubr.bf16.mxu0 0
      %5865 = vmatmul.mubr.bf16.gmra.mrb[0].mxu0 %v5418
      %v5866 = vpop.f32.mrb[0].mxu0
      %v5867 = vadd.f32 %v5774, %v5866
      %v5868 = vpop.f32.mrb[0].mxu0
      %v5869 = vadd.f32 %v5776, %v5868
      %v5870 = vpop.f32.mrb[0].mxu0
      %v5871 = vadd.f32 %v5778, %v5870
      %v5872 = vpop.f32.mrb[0].mxu0
      %v5873 = vadd.f32 %v5780, %v5872
      %5874 = vmatprep.mubr.bf16.mxu0 0
      %5875 = vmatmul.mubr.bf16.gmra.mrb[0].mxu0 %v5419
      %v5876 = vpop.f32.mrb[0].mxu0
      %v5877 = vadd.f32 %v5784, %v5876
      %v5878 = vpop.f32.mrb[0].mxu0
      %v5879 = vadd.f32 %v5786, %v5878
      %v5880 = vpop.f32.mrb[0].mxu0
      %v5881 = vadd.f32 %v5788, %v5880
      %v5882 = vpop.f32.mrb[0].mxu0
      %v5883 = vadd.f32 %v5790, %v5882
      %5884 = vmatprep.mubr.bf16.mxu0 0
      %5885 = vmatmul.mubr.bf16.gmra.mrb[0].mxu0 %v5420
      %v5886 = vpop.f32.mrb[0].mxu0
      %v5887 = vadd.f32 %v5794, %v5886
      %v5888 = vpop.f32.mrb[0].mxu0
      %v5889 = vadd.f32 %v5796, %v5888
      %v5890 = vpop.f32.mrb[0].mxu0
      %v5891 = vadd.f32 %v5798, %v5890
      %v5892 = vpop.f32.mrb[0].mxu0
      %v5893 = vadd.f32 %v5800, %v5892
      %5894 = vdwg.mxu0
      %v5895 = vadd.f32 %v5309, %v5837
      %v5896 = vadd.f32 %v5311, %v5839
      %v5897 = vadd.f32 %v5313, %v5841
      %v5898 = vadd.f32 %v5315, %v5843
      %v5899 = vadd.f32 %v5319, %v5847
      %v5900 = vadd.f32 %v5321, %v5849
      %v5901 = vadd.f32 %v5323, %v5851
      %v5902 = vadd.f32 %v5325, %v5853
      %v5903 = vadd.f32 %v5329, %v5857
      %v5904 = vadd.f32 %v5331, %v5859
      %v5905 = vadd.f32 %v5333, %v5861
      %v5906 = vadd.f32 %v5335, %v5863
      %v5907 = vadd.f32 %v5339, %v5867
      %v5908 = vadd.f32 %v5341, %v5869
      %v5909 = vadd.f32 %v5343, %v5871
      %v5910 = vadd.f32 %v5345, %v5873
      %v5911 = vadd.f32 %v5349, %v5877
      %v5912 = vadd.f32 %v5351, %v5879
      %v5913 = vadd.f32 %v5353, %v5881
      %v5914 = vadd.f32 %v5355, %v5883
      %v5915 = vadd.f32 %v5359, %v5887
      %v5916 = vadd.f32 %v5361, %v5889
      %v5917 = vadd.f32 %v5363, %v5891
      %v5918 = vadd.f32 %v5365, %v5893
      %v5919 = vld [vmem:[%s2] sm:$0x3]
      %v5921 = vlaneseq
      %v5922 = vshrl.u32 %v5921, 7
      %v5923 = vsub.s32 0, %v5922
      %v5924 = vrot.slane %v5919, %v5923
      %v5925 = vlaneseq
      %v5926 = vshrl.u32 %v5925, 7
      %v5927 = vsub.s32 1, %v5926
      %v5928 = vrot.slane %v5919, %v5927
      %v5931 = vadd.f32 %v5895, %v5924
      %v5932 = vadd.f32 %v5896, %v5928
      %v5933 = vadd.f32 %v5897, %v5924
      %v5934 = vadd.f32 %v5898, %v5928
      %v5935 = vadd.f32 %v5899, %v5924
      %v5936 = vadd.f32 %v5900, %v5928
      %v5937 = vadd.f32 %v5901, %v5924
      %v5938 = vadd.f32 %v5902, %v5928
      %v5939 = vadd.f32 %v5903, %v5924
      %v5940 = vadd.f32 %v5904, %v5928
      %v5941 = vadd.f32 %v5905, %v5924
      %v5942 = vadd.f32 %v5906, %v5928
      %v5943 = vadd.f32 %v5907, %v5924
      %v5944 = vadd.f32 %v5908, %v5928
      %v5945 = vadd.f32 %v5909, %v5924
      %v5946 = vadd.f32 %v5910, %v5928
      %v5947 = vadd.f32 %v5911, %v5924
      %v5948 = vadd.f32 %v5912, %v5928
      %v5949 = vadd.f32 %v5913, %v5924
      %v5950 = vadd.f32 %v5914, %v5928
      %v5951 = vadd.f32 %v5915, %v5924
      %v5952 = vadd.f32 %v5916, %v5928
      %v5953 = vadd.f32 %v5917, %v5924
      %v5954 = vadd.f32 %v5918, %v5928
      %v5955 = vmax.f32 %v5931, 0.0
      %v5956 = vmax.f32 %v5932, 0.0
      %v5957 = vmax.f32 %v5933, 0.0
      %v5958 = vmax.f32 %v5934, 0.0
      %v5959 = vmax.f32 %v5935, 0.0
      %v5960 = vmax.f32 %v5936, 0.0
      %v5961 = vmax.f32 %v5937, 0.0
      %v5962 = vmax.f32 %v5938, 0.0
      %v5963 = vmax.f32 %v5939, 0.0
      %v5964 = vmax.f32 %v5940, 0.0
      %v5965 = vmax.f32 %v5941, 0.0
      %v5966 = vmax.f32 %v5942, 0.0
      %v5967 = vmax.f32 %v5943, 0.0
      %v5968 = vmax.f32 %v5944, 0.0
      %v5969 = vmax.f32 %v5945, 0.0
      %v5970 = vmax.f32 %v5946, 0.0
      %v5971 = vmax.f32 %v5947, 0.0
      %v5972 = vmax.f32 %v5948, 0.0
      %v5973 = vmax.f32 %v5949, 0.0
      %v5974 = vmax.f32 %v5950, 0.0
      %v5975 = vmax.f32 %v5951, 0.0
      %v5976 = vmax.f32 %v5952, 0.0
      %v5977 = vmax.f32 %v5953, 0.0
      %v5978 = vmax.f32 %v5954, 0.0
      %v5979 = vadd.s32 %v1900, 192
      %v5980 = vadd.s32 %v1901, 192
      %v5981 = vadd.s32 %v1902, 192
      %v5982 = vadd.s32 %v1903, 192
      %v5983 = vadd.s32 %v1904, 192
      %v5984 = vadd.s32 %v1905, 192
      %v5985 = vadd.s32 %v1906, 192
      %v5986 = vadd.s32 %v1907, 192
      %v5987 = vadd.s32 %v1908, 192
      %v5988 = vadd.s32 %v1909, 192
      %v5989 = vadd.s32 %v1910, 192
      %v5990 = vadd.s32 %v1911, 192
      %vm5991 = vcmp.lt.s32.totalorder %v5979, 0
      %v5992 = vsub.s32 0, %v5979
      %v5993 = vsel %vm5991, %v5992, %v5979
      %v5994 = vmul.u32.u64.compose %v5993, 3817748708
      %v5995 = vextract.low.u32 %v5994
      %v5996 = vextract.high.u32 %v5994
      %v5997 = vshrl.u32 %v5996, 4
      %v5998 = vmul.u32 %v5997, 18
      %v5999 = vsub.s32 %v5993, %v5998
      %v6000 = vsub.s32 0, %v5999
      %v6001 = vsel %vm5991, %v6000, %v5999
      %vm6002 = vcmp.lt.s32.totalorder %v5980, 0
      %v6003 = vsub.s32 0, %v5980
      %v6004 = vsel %vm6002, %v6003, %v5980
      %v6005 = vmul.u32.u64.compose %v6004, 3817748708
      %v6006 = vextract.low.u32 %v6005
      %v6007 = vextract.high.u32 %v6005
      %v6008 = vshrl.u32 %v6007, 4
      %v6009 = vmul.u32 %v6008, 18
      %v6010 = vsub.s32 %v6004, %v6009
      %v6011 = vsub.s32 0, %v6010
      %v6012 = vsel %vm6002, %v6011, %v6010
      %vm6013 = vcmp.lt.s32.totalorder %v5981, 0
      %v6014 = vsub.s32 0, %v5981
      %v6015 = vsel %vm6013, %v6014, %v5981
      %v6016 = vmul.u32.u64.compose %v6015, 3817748708
      %v6017 = vextract.low.u32 %v6016
      %v6018 = vextract.high.u32 %v6016
      %v6019 = vshrl.u32 %v6018, 4
      %v6020 = vmul.u32 %v6019, 18
      %v6021 = vsub.s32 %v6015, %v6020
      %v6022 = vsub.s32 0, %v6021
      %v6023 = vsel %vm6013, %v6022, %v6021
      %vm6024 = vcmp.lt.s32.totalorder %v5982, 0
      %v6025 = vsub.s32 0, %v5982
      %v6026 = vsel %vm6024, %v6025, %v5982
      %v6027 = vmul.u32.u64.compose %v6026, 3817748708
      %v6028 = vextract.low.u32 %v6027
      %v6029 = vextract.high.u32 %v6027
      %v6030 = vshrl.u32 %v6029, 4
      %v6031 = vmul.u32 %v6030, 18
      %v6032 = vsub.s32 %v6026, %v6031
      %v6033 = vsub.s32 0, %v6032
      %v6034 = vsel %vm6024, %v6033, %v6032
      %vm6035 = vcmp.lt.s32.totalorder %v5983, 0
      %v6036 = vsub.s32 0, %v5983
      %v6037 = vsel %vm6035, %v6036, %v5983
      %v6038 = vmul.u32.u64.compose %v6037, 3817748708
      %v6039 = vextract.low.u32 %v6038
      %v6040 = vextract.high.u32 %v6038
      %v6041 = vshrl.u32 %v6040, 4
      %v6042 = vmul.u32 %v6041, 18
      %v6043 = vsub.s32 %v6037, %v6042
      %v6044 = vsub.s32 0, %v6043
      %v6045 = vsel %vm6035, %v6044, %v6043
      %vm6046 = vcmp.lt.s32.totalorder %v5984, 0
      %v6047 = vsub.s32 0, %v5984
      %v6048 = vsel %vm6046, %v6047, %v5984
      %v6049 = vmul.u32.u64.compose %v6048, 3817748708
      %v6050 = vextract.low.u32 %v6049
      %v6051 = vextract.high.u32 %v6049
      %v6052 = vshrl.u32 %v6051, 4
      %v6053 = vmul.u32 %v6052, 18
      %v6054 = vsub.s32 %v6048, %v6053
      %v6055 = vsub.s32 0, %v6054
      %v6056 = vsel %vm6046, %v6055, %v6054
      %vm6057 = vcmp.lt.s32.totalorder %v5985, 0
      %v6058 = vsub.s32 0, %v5985
      %v6059 = vsel %vm6057, %v6058, %v5985
      %v6060 = vmul.u32.u64.compose %v6059, 3817748708
      %v6061 = vextract.low.u32 %v6060
      %v6062 = vextract.high.u32 %v6060
      %v6063 = vshrl.u32 %v6062, 4
      %v6064 = vmul.u32 %v6063, 18
      %v6065 = vsub.s32 %v6059, %v6064
      %v6066 = vsub.s32 0, %v6065
      %v6067 = vsel %vm6057, %v6066, %v6065
      %vm6068 = vcmp.lt.s32.totalorder %v5986, 0
      %v6069 = vsub.s32 0, %v5986
      %v6070 = vsel %vm6068, %v6069, %v5986
      %v6071 = vmul.u32.u64.compose %v6070, 3817748708
      %v6072 = vextract.low.u32 %v6071
      %v6073 = vextract.high.u32 %v6071
      %v6074 = vshrl.u32 %v6073, 4
      %v6075 = vmul.u32 %v6074, 18
      %v6076 = vsub.s32 %v6070, %v6075
      %v6077 = vsub.s32 0, %v6076
      %v6078 = vsel %vm6068, %v6077, %v6076
      %vm6079 = vcmp.lt.s32.totalorder %v5987, 0
      %v6080 = vsub.s32 0, %v5987
      %v6081 = vsel %vm6079, %v6080, %v5987
      %v6082 = vmul.u32.u64.compose %v6081, 3817748708
      %v6083 = vextract.low.u32 %v6082
      %v6084 = vextract.high.u32 %v6082
      %v6085 = vshrl.u32 %v6084, 4
      %v6086 = vmul.u32 %v6085, 18
      %v6087 = vsub.s32 %v6081, %v6086
      %v6088 = vsub.s32 0, %v6087
      %v6089 = vsel %vm6079, %v6088, %v6087
      %vm6090 = vcmp.lt.s32.totalorder %v5988, 0
      %v6091 = vsub.s32 0, %v5988
      %v6092 = vsel %vm6090, %v6091, %v5988
      %v6093 = vmul.u32.u64.compose %v6092, 3817748708
      %v6094 = vextract.low.u32 %v6093
      %v6095 = vextract.high.u32 %v6093
      %v6096 = vshrl.u32 %v6095, 4
      %v6097 = vmul.u32 %v6096, 18
      %v6098 = vsub.s32 %v6092, %v6097
      %v6099 = vsub.s32 0, %v6098
      %v6100 = vsel %vm6090, %v6099, %v6098
      %vm6101 = vcmp.lt.s32.totalorder %v5989, 0
      %v6102 = vsub.s32 0, %v5989
      %v6103 = vsel %vm6101, %v6102, %v5989
      %v6104 = vmul.u32.u64.compose %v6103, 3817748708
      %v6105 = vextract.low.u32 %v6104
      %v6106 = vextract.high.u32 %v6104
      %v6107 = vshrl.u32 %v6106, 4
      %v6108 = vmul.u32 %v6107, 18
      %v6109 = vsub.s32 %v6103, %v6108
      %v6110 = vsub.s32 0, %v6109
      %v6111 = vsel %vm6101, %v6110, %v6109
      %vm6112 = vcmp.lt.s32.totalorder %v5990, 0
      %v6113 = vsub.s32 0, %v5990
      %v6114 = vsel %vm6112, %v6113, %v5990
      %v6115 = vmul.u32.u64.compose %v6114, 3817748708
      %v6116 = vextract.low.u32 %v6115
      %v6117 = vextract.high.u32 %v6115
      %v6118 = vshrl.u32 %v6117, 4
      %v6119 = vmul.u32 %v6118, 18
      %v6120 = vsub.s32 %v6114, %v6119
      %v6121 = vsub.s32 0, %v6120
      %v6122 = vsel %vm6112, %v6121, %v6120
      %vm6123 = vcmp.ne.s32.totalorder %v6001, 0
      %vm6124 = vcmp.ne.s32.totalorder %v6012, 0
      %vm6125 = vcmp.ne.s32.totalorder %v6023, 0
      %vm6126 = vcmp.ne.s32.totalorder %v6034, 0
      %vm6127 = vcmp.ne.s32.totalorder %v6045, 0
      %vm6128 = vcmp.ne.s32.totalorder %v6056, 0
      %vm6129 = vcmp.ne.s32.totalorder %v6067, 0
      %vm6130 = vcmp.ne.s32.totalorder %v6078, 0
      %vm6131 = vcmp.ne.s32.totalorder %v6089, 0
      %vm6132 = vcmp.ne.s32.totalorder %v6100, 0
      %vm6133 = vcmp.ne.s32.totalorder %v6111, 0
      %vm6134 = vcmp.ne.s32.totalorder %v6122, 0
      %vm6135 = vcmp.lt.s32.totalorder %v6001, 0
      %vm6136 = vcmp.lt.s32.totalorder %v6012, 0
      %vm6137 = vcmp.lt.s32.totalorder %v6023, 0
      %vm6138 = vcmp.lt.s32.totalorder %v6034, 0
      %vm6139 = vcmp.lt.s32.totalorder %v6045, 0
      %vm6140 = vcmp.lt.s32.totalorder %v6056, 0
      %vm6141 = vcmp.lt.s32.totalorder %v6067, 0
      %vm6142 = vcmp.lt.s32.totalorder %v6078, 0
      %vm6143 = vcmp.lt.s32.totalorder %v6089, 0
      %vm6144 = vcmp.lt.s32.totalorder %v6100, 0
      %vm6145 = vcmp.lt.s32.totalorder %v6111, 0
      %vm6146 = vcmp.lt.s32.totalorder %v6122, 0
      %vm6147 = vmand %vm6135, %vm6123
      %vm6148 = vmand %vm6136, %vm6124
      %vm6149 = vmand %vm6137, %vm6125
      %vm6150 = vmand %vm6138, %vm6126
      %vm6151 = vmand %vm6139, %vm6127
      %vm6152 = vmand %vm6140, %vm6128
      %vm6153 = vmand %vm6141, %vm6129
      %vm6154 = vmand %vm6142, %vm6130
      %vm6155 = vmand %vm6143, %vm6131
      %vm6156 = vmand %vm6144, %vm6132
      %vm6157 = vmand %vm6145, %vm6133
      %vm6158 = vmand %vm6146, %vm6134
      %v6159 = vadd.s32 %v6001, 18
      %v6160 = vadd.s32 %v6012, 18
      %v6161 = vadd.s32 %v6023, 18
      %v6162 = vadd.s32 %v6034, 18
      %v6163 = vadd.s32 %v6045, 18
      %v6164 = vadd.s32 %v6056, 18
      %v6165 = vadd.s32 %v6067, 18
      %v6166 = vadd.s32 %v6078, 18
      %v6167 = vadd.s32 %v6089, 18
      %v6168 = vadd.s32 %v6100, 18
      %v6169 = vadd.s32 %v6111, 18
      %v6170 = vadd.s32 %v6122, 18
      %v6171 = vsel %vm6147, %v6159, %v6001
      %v6172 = vsel %vm6148, %v6160, %v6012
      %v6173 = vsel %vm6149, %v6161, %v6023
      %v6174 = vsel %vm6150, %v6162, %v6034
      %v6175 = vsel %vm6151, %v6163, %v6045
      %v6176 = vsel %vm6152, %v6164, %v6056
      %v6177 = vsel %vm6153, %v6165, %v6067
      %v6178 = vsel %vm6154, %v6166, %v6078
      %v6179 = vsel %vm6155, %v6167, %v6089
      %v6180 = vsel %vm6156, %v6168, %v6100
      %v6181 = vsel %vm6157, %v6169, %v6111
      %v6182 = vsel %vm6158, %v6170, %v6122
      %vm6183 = vcmp.lt.s32.totalorder %v6171, 16
      %vm6184 = vcmp.lt.s32.totalorder %v6172, 16
      %vm6185 = vcmp.lt.s32.totalorder %v6173, 16
      %vm6186 = vcmp.lt.s32.totalorder %v6174, 16
      %vm6187 = vcmp.lt.s32.totalorder %v6175, 16
      %vm6188 = vcmp.lt.s32.totalorder %v6176, 16
      %vm6189 = vcmp.lt.s32.totalorder %v6177, 16
      %vm6190 = vcmp.lt.s32.totalorder %v6178, 16
      %vm6191 = vcmp.lt.s32.totalorder %v6179, 16
      %vm6192 = vcmp.lt.s32.totalorder %v6180, 16
      %vm6193 = vcmp.lt.s32.totalorder %v6181, 16
      %vm6194 = vcmp.lt.s32.totalorder %v6182, 16
      %v6195 = vsel %vm6183, 1, 0
      %v6196 = vsel %vm6184, 1, 0
      %v6197 = vsel %vm6185, 1, 0
      %v6198 = vsel %vm6186, 1, 0
      %v6199 = vsel %vm6187, 1, 0
      %v6200 = vsel %vm6188, 1, 0
      %v6201 = vsel %vm6189, 1, 0
      %v6202 = vsel %vm6190, 1, 0
      %v6203 = vsel %vm6191, 1, 0
      %v6204 = vsel %vm6192, 1, 0
      %v6205 = vsel %vm6193, 1, 0
      %v6206 = vsel %vm6194, 1, 0
      %vm6207 = vcmp.eq.s32.totalorder %v6195, 1
      %vm6208 = vcmp.eq.s32.totalorder %v6196, 1
      %vm6209 = vcmp.eq.s32.totalorder %v6197, 1
      %vm6210 = vcmp.eq.s32.totalorder %v6198, 1
      %vm6211 = vcmp.eq.s32.totalorder %v6199, 1
      %vm6212 = vcmp.eq.s32.totalorder %v6200, 1
      %vm6213 = vcmp.eq.s32.totalorder %v6201, 1
      %vm6214 = vcmp.eq.s32.totalorder %v6202, 1
      %vm6215 = vcmp.eq.s32.totalorder %v6203, 1
      %vm6216 = vcmp.eq.s32.totalorder %v6204, 1
      %vm6217 = vcmp.eq.s32.totalorder %v6205, 1
      %vm6218 = vcmp.eq.s32.totalorder %v6206, 1
      %v6219 = vsel %vm6207, %v5955, 0.0
      %v6220 = vsel %vm6207, %v5956, 0.0
      %v6221 = vsel %vm6208, %v5957, 0.0
      %v6222 = vsel %vm6208, %v5958, 0.0
      %v6223 = vsel %vm6209, %v5959, 0.0
      %v6224 = vsel %vm6209, %v5960, 0.0
      %v6225 = vsel %vm6210, %v5961, 0.0
      %v6226 = vsel %vm6210, %v5962, 0.0
      %v6227 = vsel %vm6211, %v5963, 0.0
      %v6228 = vsel %vm6211, %v5964, 0.0
      %v6229 = vsel %vm6212, %v5965, 0.0
      %v6230 = vsel %vm6212, %v5966, 0.0
      %v6231 = vsel %vm6213, %v5967, 0.0
      %v6232 = vsel %vm6213, %v5968, 0.0
      %v6233 = vsel %vm6214, %v5969, 0.0
      %v6234 = vsel %vm6214, %v5970, 0.0
      %v6235 = vsel %vm6215, %v5971, 0.0
      %v6236 = vsel %vm6215, %v5972, 0.0
      %v6237 = vsel %vm6216, %v5973, 0.0
      %v6238 = vsel %vm6216, %v5974, 0.0
      %v6239 = vsel %vm6217, %v5975, 0.0
      %v6240 = vsel %vm6217, %v5976, 0.0
      %v6241 = vsel %vm6218, %v5977, 0.0
      %v6242 = vsel %vm6218, %v5978, 0.0
      %v6267 = vrot.slane %v6219, 5
      %v6268 = vrot.slane %v6220, 5
      %v6269 = vrot.slane %v6221, 5
      %v6270 = vsel %vm2188, %v6267, %v6269
      %v6271 = vrot.slane %v6222, 5
      %v6272 = vsel %vm2188, %v6268, %v6271
      %v6273 = vrot.slane %v6223, 5
      %v6274 = vsel %vm2188, %v6269, %v6273
      %v6275 = vrot.slane %v6224, 5
      %v6276 = vsel %vm2188, %v6271, %v6275
      %v6277 = vrot.slane %v6225, 5
      %v6278 = vsel %vm2188, %v6273, %v6277
      %v6279 = vrot.slane %v6226, 5
      %v6280 = vsel %vm2188, %v6275, %v6279
      %v6281 = vrot.slane %v6227, 5
      %v6282 = vsel %vm2188, %v6277, %v6281
      %v6283 = vrot.slane %v6228, 5
      %v6284 = vsel %vm2188, %v6279, %v6283
      %v6285 = vrot.slane %v6229, 5
      %v6286 = vsel %vm2188, %v6281, %v6285
      %v6287 = vrot.slane %v6230, 5
      %v6288 = vsel %vm2188, %v6283, %v6287
      %v6289 = vrot.slane %v6231, 5
      %v6290 = vsel %vm2188, %v6285, %v6289
      %v6291 = vrot.slane %v6232, 5
      %v6292 = vsel %vm2188, %v6287, %v6291
      %v6293 = vrot.slane %v6233, 5
      %v6294 = vsel %vm2188, %v6289, %v6293
      %v6295 = vrot.slane %v6234, 5
      %v6296 = vsel %vm2188, %v6291, %v6295
      %v6297 = vrot.slane %v6235, 5
      %v6298 = vsel %vm2188, %v6293, %v6297
      %v6299 = vrot.slane %v6236, 5
      %v6300 = vsel %vm2188, %v6295, %v6299
      %v6301 = vrot.slane %v6237, 5
      %v6302 = vsel %vm2188, %v6297, %v6301
      %v6303 = vrot.slane %v6238, 5
      %v6304 = vsel %vm2188, %v6299, %v6303
      %v6305 = vrot.slane %v6239, 5
      %v6306 = vsel %vm2188, %v6301, %v6305
      %v6307 = vrot.slane %v6240, 5
      %v6308 = vsel %vm2188, %v6303, %v6307
      %v6309 = vrot.slane %v6241, 5
      %v6310 = vsel %vm2188, %v6305, %v6309
      %v6311 = vrot.slane %v6242, 5
      %v6312 = vsel %vm2188, %v6307, %v6311
      %6339 = vst [vmem:[#allocation2 + $0x1a0] sm:$0xf8] %v6267
      %6340 = vst [vmem:[#allocation2 + $0x1a8] sm:$0xf8] %v6268
      %6341 = vst [vmem:[#allocation2 + $0x1b0] sm:$0xff] %v6270
      %6342 = vst [vmem:[#allocation2 + $0x1b8] sm:$0xff] %v6272
      %6343 = vst [vmem:[#allocation2 + $0x1c0] sm:$0xff] %v6274
      %6344 = vst [vmem:[#allocation2 + $0x1c8] sm:$0xff] %v6276
      %6345 = vst [vmem:[#allocation2 + $0x1d0] sm:$0xff] %v6278
      %6346 = vst [vmem:[#allocation2 + $0x1d8] sm:$0xff] %v6280
      %6347 = vst [vmem:[#allocation2 + $0x1e0] sm:$0xff] %v6282
      %6348 = vst [vmem:[#allocation2 + $0x1e8] sm:$0xff] %v6284
      %6349 = vst [vmem:[#allocation2 + $0x1f0] sm:$0xff] %v6286
      %6350 = vst [vmem:[#allocation2 + $0x1f8] sm:$0xff] %v6288
      %6351 = vst [vmem:[#allocation2 + $0x200] sm:$0xff] %v6290
      %6352 = vst [vmem:[#allocation2 + $0x208] sm:$0xff] %v6292
      %6353 = vst [vmem:[#allocation2 + $0x210] sm:$0xff] %v6294
      %6354 = vst [vmem:[#allocation2 + $0x218] sm:$0xff] %v6296
      %6355 = vst [vmem:[#allocation2 + $0x220] sm:$0xff] %v6298
      %6356 = vst [vmem:[#allocation2 + $0x228] sm:$0xff] %v6300
      %6357 = vst [vmem:[#allocation2 + $0x230] sm:$0xff] %v6302
      %6358 = vst [vmem:[#allocation2 + $0x238] sm:$0xff] %v6304
      %6359 = vst [vmem:[#allocation2 + $0x240] sm:$0xff] %v6306
      %6360 = vst [vmem:[#allocation2 + $0x248] sm:$0xff] %v6308
      %6361 = vst [vmem:[#allocation2 + $0x250] sm:$0xff] %v6310
      %6362 = vst [vmem:[#allocation2 + $0x258] sm:$0xff] %v6312
      %6363 = vst [vmem:[#allocation2 + $0x260] sm:$0x7] %v6309
      %6364 = vst [vmem:[#allocation2 + $0x268] sm:$0x7] %v6311
      %v6365 = vld [vmem:[#allocation2] sm:$0xff]
      %v6366 = vld [vmem:[#allocation2 + $0x8] sm:$0xff]
      %v6367 = vld [vmem:[#allocation2 + $0x10] sm:$0xff]
      %v6368 = vld [vmem:[#allocation2 + $0x18] sm:$0xff]
      %v6369 = vld [vmem:[#allocation2 + $0x20] sm:$0xff]
      %v6370 = vld [vmem:[#allocation2 + $0x28] sm:$0xff]
      %v6371 = vld [vmem:[#allocation2 + $0x30] sm:$0xff]
      %v6372 = vld [vmem:[#allocation2 + $0x38] sm:$0xff]
      %v6373 = vld [vmem:[#allocation2 + $0x40] sm:$0xff]
      %v6374 = vld [vmem:[#allocation2 + $0x48] sm:$0xff]
      %v6375 = vld [vmem:[#allocation2 + $0x50] sm:$0xff]
      %v6376 = vld [vmem:[#allocation2 + $0x58] sm:$0xff]
      %v6377 = vld [vmem:[#allocation2 + $0x60] sm:$0xff]
      %v6378 = vld [vmem:[#allocation2 + $0x68] sm:$0xff]
      %v6379 = vld [vmem:[#allocation2 + $0x70] sm:$0xff]
      %v6380 = vld [vmem:[#allocation2 + $0x78] sm:$0xff]
      %v6381 = vld [vmem:[#allocation2 + $0x80] sm:$0xff]
      %v6382 = vld [vmem:[#allocation2 + $0x88] sm:$0xff]
      %v6383 = vld [vmem:[#allocation2 + $0x90] sm:$0xff]
      %v6384 = vld [vmem:[#allocation2 + $0x98] sm:$0xff]
      %v6385 = vld [vmem:[#allocation2 + $0xa0] sm:$0xff]
      %v6386 = vld [vmem:[#allocation2 + $0xa8] sm:$0xff]
      %v6387 = vld [vmem:[#allocation2 + $0xb0] sm:$0xff]
      %v6388 = vld [vmem:[#allocation2 + $0xb8] sm:$0xff]
      %v6389 = vld [vmem:[%s3] ss:$8 sm:$0x3]
      %v6391 = vlaneseq
      %v6392 = vshrl.u32 %v6391, 7
      %v6393 = vsub.s32 0, %v6392
      %v6394 = vrot.slane %v6389, %v6393
      %v6395 = vlaneseq
      %v6396 = vshrl.u32 %v6395, 7
      %v6397 = vsub.s32 1, %v6396
      %v6398 = vrot.slane %v6389, %v6397
      %v6401 = vmul.f32 %v6365, %v6394
      %v6402 = vmul.f32 %v6366, %v6398
      %v6403 = vmul.f32 %v6367, %v6394
      %v6404 = vmul.f32 %v6368, %v6398
      %v6405 = vmul.f32 %v6369, %v6394
      %v6406 = vmul.f32 %v6370, %v6398
      %v6407 = vmul.f32 %v6371, %v6394
      %v6408 = vmul.f32 %v6372, %v6398
      %v6409 = vmul.f32 %v6373, %v6394
      %v6410 = vmul.f32 %v6374, %v6398
      %v6411 = vmul.f32 %v6375, %v6394
      %v6412 = vmul.f32 %v6376, %v6398
      %v6413 = vmul.f32 %v6377, %v6394
      %v6414 = vmul.f32 %v6378, %v6398
      %v6415 = vmul.f32 %v6379, %v6394
      %v6416 = vmul.f32 %v6380, %v6398
      %v6417 = vmul.f32 %v6381, %v6394
      %v6418 = vmul.f32 %v6382, %v6398
      %v6419 = vmul.f32 %v6383, %v6394
      %v6420 = vmul.f32 %v6384, %v6398
      %v6421 = vmul.f32 %v6385, %v6394
      %v6422 = vmul.f32 %v6386, %v6398
      %v6423 = vmul.f32 %v6387, %v6394
      %v6424 = vmul.f32 %v6388, %v6398
      %v6425 = vadd.f32 %v6401, 0.0
      %v6426 = vadd.f32 %v6402, 0.0
      %v6427 = vadd.f32 %v6403, 0.0
      %v6428 = vadd.f32 %v6404, 0.0
      %v6429 = vadd.f32 %v6405, 0.0
      %v6430 = vadd.f32 %v6406, 0.0
      %v6431 = vadd.f32 %v6407, 0.0
      %v6432 = vadd.f32 %v6408, 0.0
      %v6433 = vadd.f32 %v6409, 0.0
      %v6434 = vadd.f32 %v6410, 0.0
      %v6435 = vadd.f32 %v6411, 0.0
      %v6436 = vadd.f32 %v6412, 0.0
      %v6437 = vadd.f32 %v6413, 0.0
      %v6438 = vadd.f32 %v6414, 0.0
      %v6439 = vadd.f32 %v6415, 0.0
      %v6440 = vadd.f32 %v6416, 0.0
      %v6441 = vadd.f32 %v6417, 0.0
      %v6442 = vadd.f32 %v6418, 0.0
      %v6443 = vadd.f32 %v6419, 0.0
      %v6444 = vadd.f32 %v6420, 0.0
      %v6445 = vadd.f32 %v6421, 0.0
      %v6446 = vadd.f32 %v6422, 0.0
      %v6447 = vadd.f32 %v6423, 0.0
      %v6448 = vadd.f32 %v6424, 0.0
      %v6449 = vld [vmem:[#allocation2] sm:$0xfe]
      %v6450 = vld [vmem:[#allocation2 + $0x8] sm:$0xfe]
      %v6451 = vld [vmem:[#allocation2 + $0xc0] sm:$0x1]
      %v6452 = vld [vmem:[#allocation2 + $0xc8] sm:$0x1]
      %s6453 = scalar_lea.vmem %s3, 1
      %v6454 = vld [vmem:[%s6453] ss:$8 sm:$0x3]
      %v6456 = vlaneseq
      %v6457 = vshrl.u32 %v6456, 7
      %v6458 = vsub.s32 0, %v6457
      %v6459 = vrot.slane %v6454, %v6458
      %v6460 = vlaneseq
      %v6461 = vshrl.u32 %v6460, 7
      %v6462 = vsub.s32 1, %v6461
      %v6463 = vrot.slane %v6454, %v6462
      %v6466 = vmul.f32 %v6449, %v6459
      %v6467 = vmul.f32 %v6450, %v6463
      %v6468 = vmul.f32 %v6367, %v6459
      %v6469 = vmul.f32 %v6368, %v6463
      %v6470 = vmul.f32 %v6369, %v6459
      %v6471 = vmul.f32 %v6370, %v6463
      %v6472 = vmul.f32 %v6371, %v6459
      %v6473 = vmul.f32 %v6372, %v6463
      %v6474 = vmul.f32 %v6373, %v6459
      %v6475 = vmul.f32 %v6374, %v6463
      %v6476 = vmul.f32 %v6375, %v6459
      %v6477 = vmul.f32 %v6376, %v6463
      %v6478 = vmul.f32 %v6377, %v6459
      %v6479 = vmul.f32 %v6378, %v6463
      %v6480 = vmul.f32 %v6379, %v6459
      %v6481 = vmul.f32 %v6380, %v6463
      %v6482 = vmul.f32 %v6381, %v6459
      %v6483 = vmul.f32 %v6382, %v6463
      %v6484 = vmul.f32 %v6383, %v6459
      %v6485 = vmul.f32 %v6384, %v6463
      %v6486 = vmul.f32 %v6385, %v6459
      %v6487 = vmul.f32 %v6386, %v6463
      %v6488 = vmul.f32 %v6387, %v6459
      %v6489 = vmul.f32 %v6388, %v6463
      %v6490 = vmul.f32 %v6451, %v6459
      %v6491 = vmul.f32 %v6452, %v6463
      %vm6518 = vcmask 1046528
      %v6519 = vrot.slane %v6466, 1
      %v6520 = vrot.slane %v6468, 1
      %v6521 = vsel %vm6518, %v6519, %v6520
      %v6522 = vrot.slane %v6467, 1
      %v6523 = vrot.slane %v6469, 1
      %v6524 = vsel %vm6518, %v6522, %v6523
      %v6525 = vrot.slane %v6470, 1
      %v6526 = vsel %vm6518, %v6520, %v6525
      %v6527 = vrot.slane %v6471, 1
      %v6528 = vsel %vm6518, %v6523, %v6527
      %v6529 = vrot.slane %v6472, 1
      %v6530 = vsel %vm6518, %v6525, %v6529
      %v6531 = vrot.slane %v6473, 1
      %v6532 = vsel %vm6518, %v6527, %v6531
      %v6533 = vrot.slane %v6474, 1
      %v6534 = vsel %vm6518, %v6529, %v6533
      %v6535 = vrot.slane %v6475, 1
      %v6536 = vsel %vm6518, %v6531, %v6535
      %v6537 = vrot.slane %v6476, 1
      %v6538 = vsel %vm6518, %v6533, %v6537
      %v6539 = vrot.slane %v6477, 1
      %v6540 = vsel %vm6518, %v6535, %v6539
      %v6541 = vrot.slane %v6478, 1
      %v6542 = vsel %vm6518, %v6537, %v6541
      %v6543 = vrot.slane %v6479, 1
      %v6544 = vsel %vm6518, %v6539, %v6543
      %v6545 = vrot.slane %v6480, 1
      %v6546 = vsel %vm6518, %v6541, %v6545
      %v6547 = vrot.slane %v6481, 1
      %v6548 = vsel %vm6518, %v6543, %v6547
      %v6549 = vrot.slane %v6482, 1
      %v6550 = vsel %vm6518, %v6545, %v6549
      %v6551 = vrot.slane %v6483, 1
      %v6552 = vsel %vm6518, %v6547, %v6551
      %v6553 = vrot.slane %v6484, 1
      %v6554 = vsel %vm6518, %v6549, %v6553
      %v6555 = vrot.slane %v6485, 1
      %v6556 = vsel %vm6518, %v6551, %v6555
      %v6557 = vrot.slane %v6486, 1
      %v6558 = vsel %vm6518, %v6553, %v6557
      %v6559 = vrot.slane %v6487, 1
      %v6560 = vsel %vm6518, %v6555, %v6559
      %v6561 = vrot.slane %v6488, 1
      %v6562 = vsel %vm6518, %v6557, %v6561
      %v6563 = vrot.slane %v6489, 1
      %v6564 = vsel %vm6518, %v6559, %v6563
      %v6565 = vrot.slane %v6490, 1
      %v6566 = vsel %vm6518, %v6561, %v6565
      %v6567 = vrot.slane %v6491, 1
      %v6568 = vsel %vm6518, %v6563, %v6567
      %v6593 = vadd.f32 %v6425, %v6521
      %v6594 = vadd.f32 %v6426, %v6524
      %v6595 = vadd.f32 %v6427, %v6526
      %v6596 = vadd.f32 %v6428, %v6528
      %v6597 = vadd.f32 %v6429, %v6530
      %v6598 = vadd.f32 %v6430, %v6532
      %v6599 = vadd.f32 %v6431, %v6534
      %v6600 = vadd.f32 %v6432, %v6536
      %v6601 = vadd.f32 %v6433, %v6538
      %v6602 = vadd.f32 %v6434, %v6540
      %v6603 = vadd.f32 %v6435, %v6542
      %v6604 = vadd.f32 %v6436, %v6544
      %v6605 = vadd.f32 %v6437, %v6546
      %v6606 = vadd.f32 %v6438, %v6548
      %v6607 = vadd.f32 %v6439, %v6550
      %v6608 = vadd.f32 %v6440, %v6552
      %v6609 = vadd.f32 %v6441, %v6554
      %v6610 = vadd.f32 %v6442, %v6556
      %v6611 = vadd.f32 %v6443, %v6558
      %v6612 = vadd.f32 %v6444, %v6560
      %v6613 = vadd.f32 %v6445, %v6562
      %v6614 = vadd.f32 %v6446, %v6564
      %v6615 = vadd.f32 %v6447, %v6566
      %v6616 = vadd.f32 %v6448, %v6568
      %v6617 = vld [vmem:[#allocation2] sm:$0xfc]
      %v6618 = vld [vmem:[#allocation2 + $0x8] sm:$0xfc]
      %v6619 = vld [vmem:[#allocation2 + $0xc0] sm:$0x3]
      %v6620 = vld [vmem:[#allocation2 + $0xc8] sm:$0x3]
      %s6621 = scalar_lea.vmem %s3, 2
      %v6622 = vld [vmem:[%s6621] ss:$8 sm:$0x3]
      %v6624 = vlaneseq
      %v6625 = vshrl.u32 %v6624, 7
      %v6626 = vsub.s32 0, %v6625
      %v6627 = vrot.slane %v6622, %v6626
      %v6628 = vlaneseq
      %v6629 = vshrl.u32 %v6628, 7
      %v6630 = vsub.s32 1, %v6629
      %v6631 = vrot.slane %v6622, %v6630
      %v6634 = vmul.f32 %v6617, %v6627
      %v6635 = vmul.f32 %v6618, %v6631
      %v6636 = vmul.f32 %v6367, %v6627
      %v6637 = vmul.f32 %v6368, %v6631
      %v6638 = vmul.f32 %v6369, %v6627
      %v6639 = vmul.f32 %v6370, %v6631
      %v6640 = vmul.f32 %v6371, %v6627
      %v6641 = vmul.f32 %v6372, %v6631
      %v6642 = vmul.f32 %v6373, %v6627
      %v6643 = vmul.f32 %v6374, %v6631
      %v6644 = vmul.f32 %v6375, %v6627
      %v6645 = vmul.f32 %v6376, %v6631
      %v6646 = vmul.f32 %v6377, %v6627
      %v6647 = vmul.f32 %v6378, %v6631
      %v6648 = vmul.f32 %v6379, %v6627
      %v6649 = vmul.f32 %v6380, %v6631
      %v6650 = vmul.f32 %v6381, %v6627
      %v6651 = vmul.f32 %v6382, %v6631
      %v6652 = vmul.f32 %v6383, %v6627
      %v6653 = vmul.f32 %v6384, %v6631
      %v6654 = vmul.f32 %v6385, %v6627
      %v6655 = vmul.f32 %v6386, %v6631
      %v6656 = vmul.f32 %v6387, %v6627
      %v6657 = vmul.f32 %v6388, %v6631
      %v6658 = vmul.f32 %v6619, %v6627
      %v6659 = vmul.f32 %v6620, %v6631
      %vm6686 = vcmask 1045504
      %v6687 = vrot.slane %v6634, 2
      %v6688 = vrot.slane %v6636, 2
      %v6689 = vsel %vm6686, %v6687, %v6688
      %v6690 = vrot.slane %v6635, 2
      %v6691 = vrot.slane %v6637, 2
      %v6692 = vsel %vm6686, %v6690, %v6691
      %v6693 = vrot.slane %v6638, 2
      %v6694 = vsel %vm6686, %v6688, %v6693
      %v6695 = vrot.slane %v6639, 2
      %v6696 = vsel %vm6686, %v6691, %v6695
      %v6697 = vrot.slane %v6640, 2
      %v6698 = vsel %vm6686, %v6693, %v6697
      %v6699 = vrot.slane %v6641, 2
      %v6700 = vsel %vm6686, %v6695, %v6699
      %v6701 = vrot.slane %v6642, 2
      %v6702 = vsel %vm6686, %v6697, %v6701
      %v6703 = vrot.slane %v6643, 2
      %v6704 = vsel %vm6686, %v6699, %v6703
      %v6705 = vrot.slane %v6644, 2
      %v6706 = vsel %vm6686, %v6701, %v6705
      %v6707 = vrot.slane %v6645, 2
      %v6708 = vsel %vm6686, %v6703, %v6707
      %v6709 = vrot.slane %v6646, 2
      %v6710 = vsel %vm6686, %v6705, %v6709
      %v6711 = vrot.slane %v6647, 2
      %v6712 = vsel %vm6686, %v6707, %v6711
      %v6713 = vrot.slane %v6648, 2
      %v6714 = vsel %vm6686, %v6709, %v6713
      %v6715 = vrot.slane %v6649, 2
      %v6716 = vsel %vm6686, %v6711, %v6715
      %v6717 = vrot.slane %v6650, 2
      %v6718 = vsel %vm6686, %v6713, %v6717
      %v6719 = vrot.slane %v6651, 2
      %v6720 = vsel %vm6686, %v6715, %v6719
      %v6721 = vrot.slane %v6652, 2
      %v6722 = vsel %vm6686, %v6717, %v6721
      %v6723 = vrot.slane %v6653, 2
      %v6724 = vsel %vm6686, %v6719, %v6723
      %v6725 = vrot.slane %v6654, 2
      %v6726 = vsel %vm6686, %v6721, %v6725
      %v6727 = vrot.slane %v6655, 2
      %v6728 = vsel %vm6686, %v6723, %v6727
      %v6729 = vrot.slane %v6656, 2
      %v6730 = vsel %vm6686, %v6725, %v6729
      %v6731 = vrot.slane %v6657, 2
      %v6732 = vsel %vm6686, %v6727, %v6731
      %v6733 = vrot.slane %v6658, 2
      %v6734 = vsel %vm6686, %v6729, %v6733
      %v6735 = vrot.slane %v6659, 2
      %v6736 = vsel %vm6686, %v6731, %v6735
      %v6761 = vadd.f32 %v6593, %v6689
      %v6762 = vadd.f32 %v6594, %v6692
      %v6763 = vadd.f32 %v6595, %v6694
      %v6764 = vadd.f32 %v6596, %v6696
      %v6765 = vadd.f32 %v6597, %v6698
      %v6766 = vadd.f32 %v6598, %v6700
      %v6767 = vadd.f32 %v6599, %v6702
      %v6768 = vadd.f32 %v6600, %v6704
      %v6769 = vadd.f32 %v6601, %v6706
      %v6770 = vadd.f32 %v6602, %v6708
      %v6771 = vadd.f32 %v6603, %v6710
      %v6772 = vadd.f32 %v6604, %v6712
      %v6773 = vadd.f32 %v6605, %v6714
      %v6774 = vadd.f32 %v6606, %v6716
      %v6775 = vadd.f32 %v6607, %v6718
      %v6776 = vadd.f32 %v6608, %v6720
      %v6777 = vadd.f32 %v6609, %v6722
      %v6778 = vadd.f32 %v6610, %v6724
      %v6779 = vadd.f32 %v6611, %v6726
      %v6780 = vadd.f32 %v6612, %v6728
      %v6781 = vadd.f32 %v6613, %v6730
      %v6782 = vadd.f32 %v6614, %v6732
      %v6783 = vadd.f32 %v6615, %v6734
      %v6784 = vadd.f32 %v6616, %v6736
      %v6785 = vld [vmem:[#allocation2 + $0x20] sm:$0xfc]
      %v6786 = vld [vmem:[#allocation2 + $0x28] sm:$0xfc]
      %v6787 = vld [vmem:[#allocation2 + $0xc0] sm:$0xff]
      %v6788 = vld [vmem:[#allocation2 + $0xc8] sm:$0xff]
      %v6789 = vld [vmem:[#allocation2 + $0xd0] sm:$0xff]
      %v6790 = vld [vmem:[#allocation2 + $0xd8] sm:$0xff]
      %v6791 = vld [vmem:[#allocation2 + $0xe0] sm:$0x3]
      %v6792 = vld [vmem:[#allocation2 + $0xe8] sm:$0x3]
      %s6793 = scalar_lea.vmem %s3, 3
      %v6794 = vld [vmem:[%s6793] ss:$8 sm:$0x3]
      %v6796 = vlaneseq
      %v6797 = vshrl.u32 %v6796, 7
      %v6798 = vsub.s32 0, %v6797
      %v6799 = vrot.slane %v6794, %v6798
      %v6800 = vlaneseq
      %v6801 = vshrl.u32 %v6800, 7
      %v6802 = vsub.s32 1, %v6801
      %v6803 = vrot.slane %v6794, %v6802
      %v6806 = vmul.f32 %v6785, %v6799
      %v6807 = vmul.f32 %v6786, %v6803
      %v6808 = vmul.f32 %v6371, %v6799
      %v6809 = vmul.f32 %v6372, %v6803
      %v6810 = vmul.f32 %v6373, %v6799
      %v6811 = vmul.f32 %v6374, %v6803
      %v6812 = vmul.f32 %v6375, %v6799
      %v6813 = vmul.f32 %v6376, %v6803
      %v6814 = vmul.f32 %v6377, %v6799
      %v6815 = vmul.f32 %v6378, %v6803
      %v6816 = vmul.f32 %v6379, %v6799
      %v6817 = vmul.f32 %v6380, %v6803
      %v6818 = vmul.f32 %v6381, %v6799
      %v6819 = vmul.f32 %v6382, %v6803
      %v6820 = vmul.f32 %v6383, %v6799
      %v6821 = vmul.f32 %v6384, %v6803
      %v6822 = vmul.f32 %v6385, %v6799
      %v6823 = vmul.f32 %v6386, %v6803
      %v6824 = vmul.f32 %v6387, %v6799
      %v6825 = vmul.f32 %v6388, %v6803
      %v6826 = vmul.f32 %v6787, %v6799
      %v6827 = vmul.f32 %v6788, %v6803
      %v6828 = vmul.f32 %v6789, %v6799
      %v6829 = vmul.f32 %v6790, %v6803
      %v6830 = vmul.f32 %v6791, %v6799
      %v6831 = vmul.f32 %v6792, %v6803
      %v6858 = vrot.slane %v6806, 2
      %v6859 = vrot.slane %v6808, 2
      %v6860 = vsel %vm6686, %v6858, %v6859
      %v6861 = vrot.slane %v6807, 2
      %v6862 = vrot.slane %v6809, 2
      %v6863 = vsel %vm6686, %v6861, %v6862
      %v6864 = vrot.slane %v6810, 2
      %v6865 = vsel %vm6686, %v6859, %v6864
      %v6866 = vrot.slane %v6811, 2
      %v6867 = vsel %vm6686, %v6862, %v6866
      %v6868 = vrot.slane %v6812, 2
      %v6869 = vsel %vm6686, %v6864, %v6868
      %v6870 = vrot.slane %v6813, 2
      %v6871 = vsel %vm6686, %v6866, %v6870
      %v6872 = vrot.slane %v6814, 2
      %v6873 = vsel %vm6686, %v6868, %v6872
      %v6874 = vrot.slane %v6815, 2
      %v6875 = vsel %vm6686, %v6870, %v6874
      %v6876 = vrot.slane %v6816, 2
      %v6877 = vsel %vm6686, %v6872, %v6876
      %v6878 = vrot.slane %v6817, 2
      %v6879 = vsel %vm6686, %v6874, %v6878
      %v6880 = vrot.slane %v6818, 2
      %v6881 = vsel %vm6686, %v6876, %v6880
      %v6882 = vrot.slane %v6819, 2
      %v6883 = vsel %vm6686, %v6878, %v6882
      %v6884 = vrot.slane %v6820, 2
      %v6885 = vsel %vm6686, %v6880, %v6884
      %v6886 = vrot.slane %v6821, 2
      %v6887 = vsel %vm6686, %v6882, %v6886
      %v6888 = vrot.slane %v6822, 2
      %v6889 = vsel %vm6686, %v6884, %v6888
      %v6890 = vrot.slane %v6823, 2
      %v6891 = vsel %vm6686, %v6886, %v6890
      %v6892 = vrot.slane %v6824, 2
      %v6893 = vsel %vm6686, %v6888, %v6892
      %v6894 = vrot.slane %v6825, 2
      %v6895 = vsel %vm6686, %v6890, %v6894
      %v6896 = vrot.slane %v6826, 2
      %v6897 = vsel %vm6686, %v6892, %v6896
      %v6898 = vrot.slane %v6827, 2
      %v6899 = vsel %vm6686, %v6894, %v6898
      %v6900 = vrot.slane %v6828, 2
      %v6901 = vsel %vm6686, %v6896, %v6900
      %v6902 = vrot.slane %v6829, 2
      %v6903 = vsel %vm6686, %v6898, %v6902
      %v6904 = vrot.slane %v6830, 2
      %v6905 = vsel %vm6686, %v6900, %v6904
      %v6906 = vrot.slane %v6831, 2
      %v6907 = vsel %vm6686, %v6902, %v6906
      %v6932 = vadd.f32 %v6761, %v6860
      %v6933 = vadd.f32 %v6762, %v6863
      %v6934 = vadd.f32 %v6763, %v6865
      %v6935 = vadd.f32 %v6764, %v6867
      %v6936 = vadd.f32 %v6765, %v6869
      %v6937 = vadd.f32 %v6766, %v6871
      %v6938 = vadd.f32 %v6767, %v6873
      %v6939 = vadd.f32 %v6768, %v6875
      %v6940 = vadd.f32 %v6769, %v6877
      %v6941 = vadd.f32 %v6770, %v6879
      %v6942 = vadd.f32 %v6771, %v6881
      %v6943 = vadd.f32 %v6772, %v6883
      %v6944 = vadd.f32 %v6773, %v6885
      %v6945 = vadd.f32 %v6774, %v6887
      %v6946 = vadd.f32 %v6775, %v6889
      %v6947 = vadd.f32 %v6776, %v6891
      %v6948 = vadd.f32 %v6777, %v6893
      %v6949 = vadd.f32 %v6778, %v6895
      %v6950 = vadd.f32 %v6779, %v6897
      %v6951 = vadd.f32 %v6780, %v6899
      %v6952 = vadd.f32 %v6781, %v6901
      %v6953 = vadd.f32 %v6782, %v6903
      %v6954 = vadd.f32 %v6783, %v6905
      %v6955 = vadd.f32 %v6784, %v6907
      %v6956 = vld [vmem:[#allocation2 + $0x20] sm:$0xf8]
      %v6957 = vld [vmem:[#allocation2 + $0x28] sm:$0xf8]
      %v6958 = vld [vmem:[#allocation2 + $0xe0] sm:$0x7]
      %v6959 = vld [vmem:[#allocation2 + $0xe8] sm:$0x7]
      %s6960 = scalar_lea.vmem %s3, 4
      %v6961 = vld [vmem:[%s6960] ss:$8 sm:$0x3]
      %v6963 = vlaneseq
      %v6964 = vshrl.u32 %v6963, 7
      %v6965 = vsub.s32 0, %v6964
      %v6966 = vrot.slane %v6961, %v6965
      %v6967 = vlaneseq
      %v6968 = vshrl.u32 %v6967, 7
      %v6969 = vsub.s32 1, %v6968
      %v6970 = vrot.slane %v6961, %v6969
      %v6973 = vmul.f32 %v6956, %v6966
      %v6974 = vmul.f32 %v6957, %v6970
      %v6975 = vmul.f32 %v6371, %v6966
      %v6976 = vmul.f32 %v6372, %v6970
      %v6977 = vmul.f32 %v6373, %v6966
      %v6978 = vmul.f32 %v6374, %v6970
      %v6979 = vmul.f32 %v6375, %v6966
      %v6980 = vmul.f32 %v6376, %v6970
      %v6981 = vmul.f32 %v6377, %v6966
      %v6982 = vmul.f32 %v6378, %v6970
      %v6983 = vmul.f32 %v6379, %v6966
      %v6984 = vmul.f32 %v6380, %v6970
      %v6985 = vmul.f32 %v6381, %v6966
      %v6986 = vmul.f32 %v6382, %v6970
      %v6987 = vmul.f32 %v6383, %v6966
      %v6988 = vmul.f32 %v6384, %v6970
      %v6989 = vmul.f32 %v6385, %v6966
      %v6990 = vmul.f32 %v6386, %v6970
      %v6991 = vmul.f32 %v6387, %v6966
      %v6992 = vmul.f32 %v6388, %v6970
      %v6993 = vmul.f32 %v6787, %v6966
      %v6994 = vmul.f32 %v6788, %v6970
      %v6995 = vmul.f32 %v6789, %v6966
      %v6996 = vmul.f32 %v6790, %v6970
      %v6997 = vmul.f32 %v6958, %v6966
      %v6998 = vmul.f32 %v6959, %v6970
      %vm7025 = vcmask 1044480
      %v7026 = vrot.slane %v6973, 3
      %v7027 = vrot.slane %v6975, 3
      %v7028 = vsel %vm7025, %v7026, %v7027
      %v7029 = vrot.slane %v6974, 3
      %v7030 = vrot.slane %v6976, 3
      %v7031 = vsel %vm7025, %v7029, %v7030
      %v7032 = vrot.slane %v6977, 3
      %v7033 = vsel %vm7025, %v7027, %v7032
      %v7034 = vrot.slane %v6978, 3
      %v7035 = vsel %vm7025, %v7030, %v7034
      %v7036 = vrot.slane %v6979, 3
      %v7037 = vsel %vm7025, %v7032, %v7036
      %v7038 = vrot.slane %v6980, 3
      %v7039 = vsel %vm7025, %v7034, %v7038
      %v7040 = vrot.slane %v6981, 3
      %v7041 = vsel %vm7025, %v7036, %v7040
      %v7042 = vrot.slane %v6982, 3
      %v7043 = vsel %vm7025, %v7038, %v7042
      %v7044 = vrot.slane %v6983, 3
      %v7045 = vsel %vm7025, %v7040, %v7044
      %v7046 = vrot.slane %v6984, 3
      %v7047 = vsel %vm7025, %v7042, %v7046
      %v7048 = vrot.slane %v6985, 3
      %v7049 = vsel %vm7025, %v7044, %v7048
      %v7050 = vrot.slane %v6986, 3
      %v7051 = vsel %vm7025, %v7046, %v7050
      %v7052 = vrot.slane %v6987, 3
      %v7053 = vsel %vm7025, %v7048, %v7052
      %v7054 = vrot.slane %v6988, 3
      %v7055 = vsel %vm7025, %v7050, %v7054
      %v7056 = vrot.slane %v6989, 3
      %v7057 = vsel %vm7025, %v7052, %v7056
      %v7058 = vrot.slane %v6990, 3
      %v7059 = vsel %vm7025, %v7054, %v7058
      %v7060 = vrot.slane %v6991, 3
      %v7061 = vsel %vm7025, %v7056, %v7060
      %v7062 = vrot.slane %v6992, 3
      %v7063 = vsel %vm7025, %v7058, %v7062
      %v7064 = vrot.slane %v6993, 3
      %v7065 = vsel %vm7025, %v7060, %v7064
      %v7066 = vrot.slane %v6994, 3
      %v7067 = vsel %vm7025, %v7062, %v7066
      %v7068 = vrot.slane %v6995, 3
      %v7069 = vsel %vm7025, %v7064, %v7068
      %v7070 = vrot.slane %v6996, 3
      %v7071 = vsel %vm7025, %v7066, %v7070
      %v7072 = vrot.slane %v6997, 3
      %v7073 = vsel %vm7025, %v7068, %v7072
      %v7074 = vrot.slane %v6998, 3
      %v7075 = vsel %vm7025, %v7070, %v7074
      %v7100 = vadd.f32 %v6932, %v7028
      %v7101 = vadd.f32 %v6933, %v7031
      %v7102 = vadd.f32 %v6934, %v7033
      %v7103 = vadd.f32 %v6935, %v7035
      %v7104 = vadd.f32 %v6936, %v7037
      %v7105 = vadd.f32 %v6937, %v7039
      %v7106 = vadd.f32 %v6938, %v7041
      %v7107 = vadd.f32 %v6939, %v7043
      %v7108 = vadd.f32 %v6940, %v7045
      %v7109 = vadd.f32 %v6941, %v7047
      %v7110 = vadd.f32 %v6942, %v7049
      %v7111 = vadd.f32 %v6943, %v7051
      %v7112 = vadd.f32 %v6944, %v7053
      %v7113 = vadd.f32 %v6945, %v7055
      %v7114 = vadd.f32 %v6946, %v7057
      %v7115 = vadd.f32 %v6947, %v7059
      %v7116 = vadd.f32 %v6948, %v7061
      %v7117 = vadd.f32 %v6949, %v7063
      %v7118 = vadd.f32 %v6950, %v7065
      %v7119 = vadd.f32 %v6951, %v7067
      %v7120 = vadd.f32 %v6952, %v7069
      %v7121 = vadd.f32 %v6953, %v7071
      %v7122 = vadd.f32 %v6954, %v7073
      %v7123 = vadd.f32 %v6955, %v7075
      %v7124 = vld [vmem:[#allocation2 + $0x20] sm:$0xf0]
      %v7125 = vld [vmem:[#allocation2 + $0x28] sm:$0xf0]
      %v7126 = vld [vmem:[#allocation2 + $0xe0] sm:$0xf]
      %v7127 = vld [vmem:[#allocation2 + $0xe8] sm:$0xf]
      %s7128 = scalar_lea.vmem %s3, 5
      %v7129 = vld [vmem:[%s7128] ss:$8 sm:$0x3]
      %v7131 = vlaneseq
      %v7132 = vshrl.u32 %v7131, 7
      %v7133 = vsub.s32 0, %v7132
      %v7134 = vrot.slane %v7129, %v7133
      %v7135 = vlaneseq
      %v7136 = vshrl.u32 %v7135, 7
      %v7137 = vsub.s32 1, %v7136
      %v7138 = vrot.slane %v7129, %v7137
      %v7141 = vmul.f32 %v7124, %v7134
      %v7142 = vmul.f32 %v7125, %v7138
      %v7143 = vmul.f32 %v6371, %v7134
      %v7144 = vmul.f32 %v6372, %v7138
      %v7145 = vmul.f32 %v6373, %v7134
      %v7146 = vmul.f32 %v6374, %v7138
      %v7147 = vmul.f32 %v6375, %v7134
      %v7148 = vmul.f32 %v6376, %v7138
      %v7149 = vmul.f32 %v6377, %v7134
      %v7150 = vmul.f32 %v6378, %v7138
      %v7151 = vmul.f32 %v6379, %v7134
      %v7152 = vmul.f32 %v6380, %v7138
      %v7153 = vmul.f32 %v6381, %v7134
      %v7154 = vmul.f32 %v6382, %v7138
      %v7155 = vmul.f32 %v6383, %v7134
      %v7156 = vmul.f32 %v6384, %v7138
      %v7157 = vmul.f32 %v6385, %v7134
      %v7158 = vmul.f32 %v6386, %v7138
      %v7159 = vmul.f32 %v6387, %v7134
      %v7160 = vmul.f32 %v6388, %v7138
      %v7161 = vmul.f32 %v6787, %v7134
      %v7162 = vmul.f32 %v6788, %v7138
      %v7163 = vmul.f32 %v6789, %v7134
      %v7164 = vmul.f32 %v6790, %v7138
      %v7165 = vmul.f32 %v7126, %v7134
      %v7166 = vmul.f32 %v7127, %v7138
      %vm7193 = vcmask 1043456
      %v7194 = vrot.slane %v7141, 4
      %v7195 = vrot.slane %v7143, 4
      %v7196 = vsel %vm7193, %v7194, %v7195
      %v7197 = vrot.slane %v7142, 4
      %v7198 = vrot.slane %v7144, 4
      %v7199 = vsel %vm7193, %v7197, %v7198
      %v7200 = vrot.slane %v7145, 4
      %v7201 = vsel %vm7193, %v7195, %v7200
      %v7202 = vrot.slane %v7146, 4
      %v7203 = vsel %vm7193, %v7198, %v7202
      %v7204 = vrot.slane %v7147, 4
      %v7205 = vsel %vm7193, %v7200, %v7204
      %v7206 = vrot.slane %v7148, 4
      %v7207 = vsel %vm7193, %v7202, %v7206
      %v7208 = vrot.slane %v7149, 4
      %v7209 = vsel %vm7193, %v7204, %v7208
      %v7210 = vrot.slane %v7150, 4
      %v7211 = vsel %vm7193, %v7206, %v7210
      %v7212 = vrot.slane %v7151, 4
      %v7213 = vsel %vm7193, %v7208, %v7212
      %v7214 = vrot.slane %v7152, 4
      %v7215 = vsel %vm7193, %v7210, %v7214
      %v7216 = vrot.slane %v7153, 4
      %v7217 = vsel %vm7193, %v7212, %v7216
      %v7218 = vrot.slane %v7154, 4
      %v7219 = vsel %vm7193, %v7214, %v7218
      %v7220 = vrot.slane %v7155, 4
      %v7221 = vsel %vm7193, %v7216, %v7220
      %v7222 = vrot.slane %v7156, 4
      %v7223 = vsel %vm7193, %v7218, %v7222
      %v7224 = vrot.slane %v7157, 4
      %v7225 = vsel %vm7193, %v7220, %v7224
      %v7226 = vrot.slane %v7158, 4
      %v7227 = vsel %vm7193, %v7222, %v7226
      %v7228 = vrot.slane %v7159, 4
      %v7229 = vsel %vm7193, %v7224, %v7228
      %v7230 = vrot.slane %v7160, 4
      %v7231 = vsel %vm7193, %v7226, %v7230
      %v7232 = vrot.slane %v7161, 4
      %v7233 = vsel %vm7193, %v7228, %v7232
      %v7234 = vrot.slane %v7162, 4
      %v7235 = vsel %vm7193, %v7230, %v7234
      %v7236 = vrot.slane %v7163, 4
      %v7237 = vsel %vm7193, %v7232, %v7236
      %v7238 = vrot.slane %v7164, 4
      %v7239 = vsel %vm7193, %v7234, %v7238
      %v7240 = vrot.slane %v7165, 4
      %v7241 = vsel %vm7193, %v7236, %v7240
      %v7242 = vrot.slane %v7166, 4
      %v7243 = vsel %vm7193, %v7238, %v7242
      %v7268 = vadd.f32 %v7100, %v7196
      %v7269 = vadd.f32 %v7101, %v7199
      %v7270 = vadd.f32 %v7102, %v7201
      %v7271 = vadd.f32 %v7103, %v7203
      %v7272 = vadd.f32 %v7104, %v7205
      %v7273 = vadd.f32 %v7105, %v7207
      %v7274 = vadd.f32 %v7106, %v7209
      %v7275 = vadd.f32 %v7107, %v7211
      %v7276 = vadd.f32 %v7108, %v7213
      %v7277 = vadd.f32 %v7109, %v7215
      %v7278 = vadd.f32 %v7110, %v7217
      %v7279 = vadd.f32 %v7111, %v7219
      %v7280 = vadd.f32 %v7112, %v7221
      %v7281 = vadd.f32 %v7113, %v7223
      %v7282 = vadd.f32 %v7114, %v7225
      %v7283 = vadd.f32 %v7115, %v7227
      %v7284 = vadd.f32 %v7116, %v7229
      %v7285 = vadd.f32 %v7117, %v7231
      %v7286 = vadd.f32 %v7118, %v7233
      %v7287 = vadd.f32 %v7119, %v7235
      %v7288 = vadd.f32 %v7120, %v7237
      %v7289 = vadd.f32 %v7121, %v7239
      %v7290 = vadd.f32 %v7122, %v7241
      %v7291 = vadd.f32 %v7123, %v7243
      %v7292 = vld [vmem:[#allocation2 + $0x40] sm:$0xf0]
      %v7293 = vld [vmem:[#allocation2 + $0x48] sm:$0xf0]
      %v7294 = vld [vmem:[#allocation2 + $0xe0] sm:$0xff]
      %v7295 = vld [vmem:[#allocation2 + $0xe8] sm:$0xff]
      %v7296 = vld [vmem:[#allocation2 + $0xf0] sm:$0xff]
      %v7297 = vld [vmem:[#allocation2 + $0xf8] sm:$0xff]
      %v7298 = vld [vmem:[#allocation2 + $0x100] sm:$0xf]
      %v7299 = vld [vmem:[#allocation2 + $0x108] sm:$0xf]
      %s7300 = scalar_lea.vmem %s3, 6
      %v7301 = vld [vmem:[%s7300] ss:$8 sm:$0x3]
      %v7303 = vlaneseq
      %v7304 = vshrl.u32 %v7303, 7
      %v7305 = vsub.s32 0, %v7304
      %v7306 = vrot.slane %v7301, %v7305
      %v7307 = vlaneseq
      %v7308 = vshrl.u32 %v7307, 7
      %v7309 = vsub.s32 1, %v7308
      %v7310 = vrot.slane %v7301, %v7309
      %v7313 = vmul.f32 %v7292, %v7306
      %v7314 = vmul.f32 %v7293, %v7310
      %v7315 = vmul.f32 %v6375, %v7306
      %v7316 = vmul.f32 %v6376, %v7310
      %v7317 = vmul.f32 %v6377, %v7306
      %v7318 = vmul.f32 %v6378, %v7310
      %v7319 = vmul.f32 %v6379, %v7306
      %v7320 = vmul.f32 %v6380, %v7310
      %v7321 = vmul.f32 %v6381, %v7306
      %v7322 = vmul.f32 %v6382, %v7310
      %v7323 = vmul.f32 %v6383, %v7306
      %v7324 = vmul.f32 %v6384, %v7310
      %v7325 = vmul.f32 %v6385, %v7306
      %v7326 = vmul.f32 %v6386, %v7310
      %v7327 = vmul.f32 %v6387, %v7306
      %v7328 = vmul.f32 %v6388, %v7310
      %v7329 = vmul.f32 %v6787, %v7306
      %v7330 = vmul.f32 %v6788, %v7310
      %v7331 = vmul.f32 %v6789, %v7306
      %v7332 = vmul.f32 %v6790, %v7310
      %v7333 = vmul.f32 %v7294, %v7306
      %v7334 = vmul.f32 %v7295, %v7310
      %v7335 = vmul.f32 %v7296, %v7306
      %v7336 = vmul.f32 %v7297, %v7310
      %v7337 = vmul.f32 %v7298, %v7306
      %v7338 = vmul.f32 %v7299, %v7310
      %v7365 = vrot.slane %v7313, 4
      %v7366 = vrot.slane %v7315, 4
      %v7367 = vsel %vm7193, %v7365, %v7366
      %v7368 = vrot.slane %v7314, 4
      %v7369 = vrot.slane %v7316, 4
      %v7370 = vsel %vm7193, %v7368, %v7369
      %v7371 = vrot.slane %v7317, 4
      %v7372 = vsel %vm7193, %v7366, %v7371
      %v7373 = vrot.slane %v7318, 4
      %v7374 = vsel %vm7193, %v7369, %v7373
      %v7375 = vrot.slane %v7319, 4
      %v7376 = vsel %vm7193, %v7371, %v7375
      %v7377 = vrot.slane %v7320, 4
      %v7378 = vsel %vm7193, %v7373, %v7377
      %v7379 = vrot.slane %v7321, 4
      %v7380 = vsel %vm7193, %v7375, %v7379
      %v7381 = vrot.slane %v7322, 4
      %v7382 = vsel %vm7193, %v7377, %v7381
      %v7383 = vrot.slane %v7323, 4
      %v7384 = vsel %vm7193, %v7379, %v7383
      %v7385 = vrot.slane %v7324, 4
      %v7386 = vsel %vm7193, %v7381, %v7385
      %v7387 = vrot.slane %v7325, 4
      %v7388 = vsel %vm7193, %v7383, %v7387
      %v7389 = vrot.slane %v7326, 4
      %v7390 = vsel %vm7193, %v7385, %v7389
      %v7391 = vrot.slane %v7327, 4
      %v7392 = vsel %vm7193, %v7387, %v7391
      %v7393 = vrot.slane %v7328, 4
      %v7394 = vsel %vm7193, %v7389, %v7393
      %v7395 = vrot.slane %v7329, 4
      %v7396 = vsel %vm7193, %v7391, %v7395
      %v7397 = vrot.slane %v7330, 4
      %v7398 = vsel %vm7193, %v7393, %v7397
      %v7399 = vrot.slane %v7331, 4
      %v7400 = vsel %vm7193, %v7395, %v7399
      %v7401 = vrot.slane %v7332, 4
      %v7402 = vsel %vm7193, %v7397, %v7401
      %v7403 = vrot.slane %v7333, 4
      %v7404 = vsel %vm7193, %v7399, %v7403
      %v7405 = vrot.slane %v7334, 4
      %v7406 = vsel %vm7193, %v7401, %v7405
      %v7407 = vrot.slane %v7335, 4
      %v7408 = vsel %vm7193, %v7403, %v7407
      %v7409 = vrot.slane %v7336, 4
      %v7410 = vsel %vm7193, %v7405, %v7409
      %v7411 = vrot.slane %v7337, 4
      %v7412 = vsel %vm7193, %v7407, %v7411
      %v7413 = vrot.slane %v7338, 4
      %v7414 = vsel %vm7193, %v7409, %v7413
      %v7439 = vadd.f32 %v7268, %v7367
      %v7440 = vadd.f32 %v7269, %v7370
      %v7441 = vadd.f32 %v7270, %v7372
      %v7442 = vadd.f32 %v7271, %v7374
      %v7443 = vadd.f32 %v7272, %v7376
      %v7444 = vadd.f32 %v7273, %v7378
      %v7445 = vadd.f32 %v7274, %v7380
      %v7446 = vadd.f32 %v7275, %v7382
      %v7447 = vadd.f32 %v7276, %v7384
      %v7448 = vadd.f32 %v7277, %v7386
      %v7449 = vadd.f32 %v7278, %v7388
      %v7450 = vadd.f32 %v7279, %v7390
      %v7451 = vadd.f32 %v7280, %v7392
      %v7452 = vadd.f32 %v7281, %v7394
      %v7453 = vadd.f32 %v7282, %v7396
      %v7454 = vadd.f32 %v7283, %v7398
      %v7455 = vadd.f32 %v7284, %v7400
      %v7456 = vadd.f32 %v7285, %v7402
      %v7457 = vadd.f32 %v7286, %v7404
      %v7458 = vadd.f32 %v7287, %v7406
      %v7459 = vadd.f32 %v7288, %v7408
      %v7460 = vadd.f32 %v7289, %v7410
      %v7461 = vadd.f32 %v7290, %v7412
      %v7462 = vadd.f32 %v7291, %v7414
      %v7463 = vld [vmem:[#allocation2 + $0x40] sm:$0xe0]
      %v7464 = vld [vmem:[#allocation2 + $0x48] sm:$0xe0]
      %v7465 = vld [vmem:[#allocation2 + $0x100] sm:$0x1f]
      %v7466 = vld [vmem:[#allocation2 + $0x108] sm:$0x1f]
      %s7467 = scalar_lea.vmem %s3, 7
      %v7468 = vld [vmem:[%s7467] ss:$8 sm:$0x3]
      %v7470 = vlaneseq
      %v7471 = vshrl.u32 %v7470, 7
      %v7472 = vsub.s32 0, %v7471
      %v7473 = vrot.slane %v7468, %v7472
      %v7474 = vlaneseq
      %v7475 = vshrl.u32 %v7474, 7
      %v7476 = vsub.s32 1, %v7475
      %v7477 = vrot.slane %v7468, %v7476
      %v7480 = vmul.f32 %v7463, %v7473
      %v7481 = vmul.f32 %v7464, %v7477
      %v7482 = vmul.f32 %v6375, %v7473
      %v7483 = vmul.f32 %v6376, %v7477
      %v7484 = vmul.f32 %v6377, %v7473
      %v7485 = vmul.f32 %v6378, %v7477
      %v7486 = vmul.f32 %v6379, %v7473
      %v7487 = vmul.f32 %v6380, %v7477
      %v7488 = vmul.f32 %v6381, %v7473
      %v7489 = vmul.f32 %v6382, %v7477
      %v7490 = vmul.f32 %v6383, %v7473
      %v7491 = vmul.f32 %v6384, %v7477
      %v7492 = vmul.f32 %v6385, %v7473
      %v7493 = vmul.f32 %v6386, %v7477
      %v7494 = vmul.f32 %v6387, %v7473
      %v7495 = vmul.f32 %v6388, %v7477
      %v7496 = vmul.f32 %v6787, %v7473
      %v7497 = vmul.f32 %v6788, %v7477
      %v7498 = vmul.f32 %v6789, %v7473
      %v7499 = vmul.f32 %v6790, %v7477
      %v7500 = vmul.f32 %v7294, %v7473
      %v7501 = vmul.f32 %v7295, %v7477
      %v7502 = vmul.f32 %v7296, %v7473
      %v7503 = vmul.f32 %v7297, %v7477
      %v7504 = vmul.f32 %v7465, %v7473
      %v7505 = vmul.f32 %v7466, %v7477
      %v7532 = vrot.slane %v7480, 5
      %v7533 = vrot.slane %v7482, 5
      %v7534 = vsel %vm2188, %v7532, %v7533
      %v7535 = vrot.slane %v7481, 5
      %v7536 = vrot.slane %v7483, 5
      %v7537 = vsel %vm2188, %v7535, %v7536
      %v7538 = vrot.slane %v7484, 5
      %v7539 = vsel %vm2188, %v7533, %v7538
      %v7540 = vrot.slane %v7485, 5
      %v7541 = vsel %vm2188, %v7536, %v7540
      %v7542 = vrot.slane %v7486, 5
      %v7543 = vsel %vm2188, %v7538, %v7542
      %v7544 = vrot.slane %v7487, 5
      %v7545 = vsel %vm2188, %v7540, %v7544
      %v7546 = vrot.slane %v7488, 5
      %v7547 = vsel %vm2188, %v7542, %v7546
      %v7548 = vrot.slane %v7489, 5
      %v7549 = vsel %vm2188, %v7544, %v7548
      %v7550 = vrot.slane %v7490, 5
      %v7551 = vsel %vm2188, %v7546, %v7550
      %v7552 = vrot.slane %v7491, 5
      %v7553 = vsel %vm2188, %v7548, %v7552
      %v7554 = vrot.slane %v7492, 5
      %v7555 = vsel %vm2188, %v7550, %v7554
      %v7556 = vrot.slane %v7493, 5
      %v7557 = vsel %vm2188, %v7552, %v7556
      %v7558 = vrot.slane %v7494, 5
      %v7559 = vsel %vm2188, %v7554, %v7558
      %v7560 = vrot.slane %v7495, 5
      %v7561 = vsel %vm2188, %v7556, %v7560
      %v7562 = vrot.slane %v7496, 5
      %v7563 = vsel %vm2188, %v7558, %v7562
      %v7564 = vrot.slane %v7497, 5
      %v7565 = vsel %vm2188, %v7560, %v7564
      %v7566 = vrot.slane %v7498, 5
      %v7567 = vsel %vm2188, %v7562, %v7566
      %v7568 = vrot.slane %v7499, 5
      %v7569 = vsel %vm2188, %v7564, %v7568
      %v7570 = vrot.slane %v7500, 5
      %v7571 = vsel %vm2188, %v7566, %v7570
      %v7572 = vrot.slane %v7501, 5
      %v7573 = vsel %vm2188, %v7568, %v7572
      %v7574 = vrot.slane %v7502, 5
      %v7575 = vsel %vm2188, %v7570, %v7574
      %v7576 = vrot.slane %v7503, 5
      %v7577 = vsel %vm2188, %v7572, %v7576
      %v7578 = vrot.slane %v7504, 5
      %v7579 = vsel %vm2188, %v7574, %v7578
      %v7580 = vrot.slane %v7505, 5
      %v7581 = vsel %vm2188, %v7576, %v7580
      %v7606 = vadd.f32 %v7439, %v7534
      %v7607 = vadd.f32 %v7440, %v7537
      %v7608 = vadd.f32 %v7441, %v7539
      %v7609 = vadd.f32 %v7442, %v7541
      %v7610 = vadd.f32 %v7443, %v7543
      %v7611 = vadd.f32 %v7444, %v7545
      %v7612 = vadd.f32 %v7445, %v7547
      %v7613 = vadd.f32 %v7446, %v7549
      %v7614 = vadd.f32 %v7447, %v7551
      %v7615 = vadd.f32 %v7448, %v7553
      %v7616 = vadd.f32 %v7449, %v7555
      %v7617 = vadd.f32 %v7450, %v7557
      %v7618 = vadd.f32 %v7451, %v7559
      %v7619 = vadd.f32 %v7452, %v7561
      %v7620 = vadd.f32 %v7453, %v7563
      %v7621 = vadd.f32 %v7454, %v7565
      %v7622 = vadd.f32 %v7455, %v7567
      %v7623 = vadd.f32 %v7456, %v7569
      %v7624 = vadd.f32 %v7457, %v7571
      %v7625 = vadd.f32 %v7458, %v7573
      %v7626 = vadd.f32 %v7459, %v7575
      %v7627 = vadd.f32 %v7460, %v7577
      %v7628 = vadd.f32 %v7461, %v7579
      %v7629 = vadd.f32 %v7462, %v7581
      %v7630 = vld [vmem:[#allocation2 + $0x40] sm:$0xc0]
      %v7631 = vld [vmem:[#allocation2 + $0x48] sm:$0xc0]
      %v7632 = vld [vmem:[#allocation2 + $0x100] sm:$0x3f]
      %v7633 = vld [vmem:[#allocation2 + $0x108] sm:$0x3f]
      %s7634 = scalar_lea.vmem %s3, 16
      %v7635 = vld [vmem:[%s7634] ss:$8 sm:$0x3]
      %v7637 = vlaneseq
      %v7638 = vshrl.u32 %v7637, 7
      %v7639 = vsub.s32 0, %v7638
      %v7640 = vrot.slane %v7635, %v7639
      %v7641 = vlaneseq
      %v7642 = vshrl.u32 %v7641, 7
      %v7643 = vsub.s32 1, %v7642
      %v7644 = vrot.slane %v7635, %v7643
      %v7647 = vmul.f32 %v7630, %v7640
      %v7648 = vmul.f32 %v7631, %v7644
      %v7649 = vmul.f32 %v6375, %v7640
      %v7650 = vmul.f32 %v6376, %v7644
      %v7651 = vmul.f32 %v6377, %v7640
      %v7652 = vmul.f32 %v6378, %v7644
      %v7653 = vmul.f32 %v6379, %v7640
      %v7654 = vmul.f32 %v6380, %v7644
      %v7655 = vmul.f32 %v6381, %v7640
      %v7656 = vmul.f32 %v6382, %v7644
      %v7657 = vmul.f32 %v6383, %v7640
      %v7658 = vmul.f32 %v6384, %v7644
      %v7659 = vmul.f32 %v6385, %v7640
      %v7660 = vmul.f32 %v6386, %v7644
      %v7661 = vmul.f32 %v6387, %v7640
      %v7662 = vmul.f32 %v6388, %v7644
      %v7663 = vmul.f32 %v6787, %v7640
      %v7664 = vmul.f32 %v6788, %v7644
      %v7665 = vmul.f32 %v6789, %v7640
      %v7666 = vmul.f32 %v6790, %v7644
      %v7667 = vmul.f32 %v7294, %v7640
      %v7668 = vmul.f32 %v7295, %v7644
      %v7669 = vmul.f32 %v7296, %v7640
      %v7670 = vmul.f32 %v7297, %v7644
      %v7671 = vmul.f32 %v7632, %v7640
      %v7672 = vmul.f32 %v7633, %v7644
      %vm7699 = vcmask 1041408
      %v7700 = vrot.slane %v7647, 6
      %v7701 = vrot.slane %v7649, 6
      %v7702 = vsel %vm7699, %v7700, %v7701
      %v7703 = vrot.slane %v7648, 6
      %v7704 = vrot.slane %v7650, 6
      %v7705 = vsel %vm7699, %v7703, %v7704
      %v7706 = vrot.slane %v7651, 6
      %v7707 = vsel %vm7699, %v7701, %v7706
      %v7708 = vrot.slane %v7652, 6
      %v7709 = vsel %vm7699, %v7704, %v7708
      %v7710 = vrot.slane %v7653, 6
      %v7711 = vsel %vm7699, %v7706, %v7710
      %v7712 = vrot.slane %v7654, 6
      %v7713 = vsel %vm7699, %v7708, %v7712
      %v7714 = vrot.slane %v7655, 6
      %v7715 = vsel %vm7699, %v7710, %v7714
      %v7716 = vrot.slane %v7656, 6
      %v7717 = vsel %vm7699, %v7712, %v7716
      %v7718 = vrot.slane %v7657, 6
      %v7719 = vsel %vm7699, %v7714, %v7718
      %v7720 = vrot.slane %v7658, 6
      %v7721 = vsel %vm7699, %v7716, %v7720
      %v7722 = vrot.slane %v7659, 6
      %v7723 = vsel %vm7699, %v7718, %v7722
      %v7724 = vrot.slane %v7660, 6
      %v7725 = vsel %vm7699, %v7720, %v7724
      %v7726 = vrot.slane %v7661, 6
      %v7727 = vsel %vm7699, %v7722, %v7726
      %v7728 = vrot.slane %v7662, 6
      %v7729 = vsel %vm7699, %v7724, %v7728
      %v7730 = vrot.slane %v7663, 6
      %v7731 = vsel %vm7699, %v7726, %v7730
      %v7732 = vrot.slane %v7664, 6
      %v7733 = vsel %vm7699, %v7728, %v7732
      %v7734 = vrot.slane %v7665, 6
      %v7735 = vsel %vm7699, %v7730, %v7734
      %v7736 = vrot.slane %v7666, 6
      %v7737 = vsel %vm7699, %v7732, %v7736
      %v7738 = vrot.slane %v7667, 6
      %v7739 = vsel %vm7699, %v7734, %v7738
      %v7740 = vrot.slane %v7668, 6
      %v7741 = vsel %vm7699, %v7736, %v7740
      %v7742 = vrot.slane %v7669, 6
      %v7743 = vsel %vm7699, %v7738, %v7742
      %v7744 = vrot.slane %v7670, 6
      %v7745 = vsel %vm7699, %v7740, %v7744
      %v7746 = vrot.slane %v7671, 6
      %v7747 = vsel %vm7699, %v7742, %v7746
      %v7748 = vrot.slane %v7672, 6
      %v7749 = vsel %vm7699, %v7744, %v7748
      %v7774 = vadd.f32 %v7606, %v7702
      %v7775 = vadd.f32 %v7607, %v7705
      %v7776 = vadd.f32 %v7608, %v7707
      %v7777 = vadd.f32 %v7609, %v7709
      %v7778 = vadd.f32 %v7610, %v7711
      %v7779 = vadd.f32 %v7611, %v7713
      %v7780 = vadd.f32 %v7612, %v7715
      %v7781 = vadd.f32 %v7613, %v7717
      %v7782 = vadd.f32 %v7614, %v7719
      %v7783 = vadd.f32 %v7615, %v7721
      %v7784 = vadd.f32 %v7616, %v7723
      %v7785 = vadd.f32 %v7617, %v7725
      %v7786 = vadd.f32 %v7618, %v7727
      %v7787 = vadd.f32 %v7619, %v7729
      %v7788 = vadd.f32 %v7620, %v7731
      %v7789 = vadd.f32 %v7621, %v7733
      %v7790 = vadd.f32 %v7622, %v7735
      %v7791 = vadd.f32 %v7623, %v7737
      %v7792 = vadd.f32 %v7624, %v7739
      %v7793 = vadd.f32 %v7625, %v7741
      %v7794 = vadd.f32 %v7626, %v7743
      %v7795 = vadd.f32 %v7627, %v7745
      %v7796 = vadd.f32 %v7628, %v7747
      %v7797 = vadd.f32 %v7629, %v7749
      %v7798 = vadd.f32 %v7774, %v7775
      %7799 = vadd.xlane.f32.xlu0 %v7798
      %v7800 = vpop.xlane.xlu0 %7799
      %v7801 = vadd.f32 %v7776, %v7777
      %7802 = vadd.xlane.f32.xlu0 %v7801
      %v7803 = vpop.xlane.xlu0 %7802
      %v7804 = vadd.f32 %v7778, %v7779
      %7805 = vadd.xlane.f32.xlu0 %v7804
      %v7806 = vpop.xlane.xlu0 %7805
      %v7807 = vadd.f32 %v7780, %v7781
      %7808 = vadd.xlane.f32.xlu0 %v7807
      %v7809 = vpop.xlane.xlu0 %7808
      %v7810 = vadd.f32 %v7782, %v7783
      %7811 = vadd.xlane.f32.xlu0 %v7810
      %v7812 = vpop.xlane.xlu0 %7811
      %v7813 = vadd.f32 %v7784, %v7785
      %7814 = vadd.xlane.f32.xlu0 %v7813
      %v7815 = vpop.xlane.xlu0 %7814
      %v7816 = vadd.f32 %v7786, %v7787
      %7817 = vadd.xlane.f32.xlu0 %v7816
      %v7818 = vpop.xlane.xlu0 %7817
      %v7819 = vadd.f32 %v7788, %v7789
      %7820 = vadd.xlane.f32.xlu0 %v7819
      %v7821 = vpop.xlane.xlu0 %7820
      %v7822 = vadd.f32 %v7790, %v7791
      %7823 = vadd.xlane.f32.xlu0 %v7822
      %v7824 = vpop.xlane.xlu0 %7823
      %v7825 = vadd.f32 %v7792, %v7793
      %7826 = vadd.xlane.f32.xlu0 %v7825
      %v7827 = vpop.xlane.xlu0 %7826
      %v7828 = vadd.f32 %v7794, %v7795
      %7829 = vadd.xlane.f32.xlu0 %v7828
      %v7830 = vpop.xlane.xlu0 %7829
      %v7831 = vadd.f32 %v7796, %v7797
      %7832 = vadd.xlane.f32.xlu0 %v7831
      %v7833 = vpop.xlane.xlu0 %7832
      %v7834 = vld [vmem:[#allocation3] sm:$0x1]
      %v7836 = vlaneseq
      %v7837 = vshrl.u32 %v7836, 7
      %v7838 = vsub.s32 0, %v7837
      %v7839 = vrot.slane %v7834, %v7838
      %v7841 = vadd.f32 %v7800, %v7839
      %v7842 = vadd.f32 %v7803, %v7839
      %v7843 = vadd.f32 %v7806, %v7839
      %v7844 = vadd.f32 %v7809, %v7839
      %v7845 = vadd.f32 %v7812, %v7839
      %v7846 = vadd.f32 %v7815, %v7839
      %v7847 = vadd.f32 %v7818, %v7839
      %v7848 = vadd.f32 %v7821, %v7839
      %v7849 = vadd.f32 %v7824, %v7839
      %v7850 = vadd.f32 %v7827, %v7839
      %v7851 = vadd.f32 %v7830, %v7839
      %v7852 = vadd.f32 %v7833, %v7839
      %v7853 = vtanh.pop %v7841
      %v7854 = vtanh.pop %v7842
      %v7855 = vtanh.pop %v7843
      %v7856 = vtanh.pop %v7844
      %v7857 = vtanh.pop %v7845
      %v7858 = vtanh.pop %v7846
      %v7859 = vtanh.pop %v7847
      %v7860 = vtanh.pop %v7848
      %v7861 = vtanh.pop %v7849
      %v7862 = vtanh.pop %v7850
      %v7863 = vtanh.pop %v7851
      %v7864 = vtanh.pop %v7852
      %vm7865 = vcmask 7168
      %7866 = vst.msk [vmem:[%s226] sm:$0xff] %vm7865, %v7853
      %7867 = vst.msk [vmem:[%s226 + $0x8] sm:$0xff] %vm7865, %v7854
      %7868 = vst.msk [vmem:[%s226 + $0x10] sm:$0xff] %vm7865, %v7855
      %7869 = vst.msk [vmem:[%s226 + $0x18] sm:$0xff] %vm7865, %v7856
      %7870 = vst.msk [vmem:[%s226 + $0x20] sm:$0xff] %vm7865, %v7857
      %7871 = vst.msk [vmem:[%s226 + $0x28] sm:$0xff] %vm7865, %v7858
      %7872 = vst.msk [vmem:[%s226 + $0x30] sm:$0xff] %vm7865, %v7859
      %7873 = vst.msk [vmem:[%s226 + $0x38] sm:$0xff] %vm7865, %v7860
      %7874 = vst.msk [vmem:[%s226 + $0x40] sm:$0xff] %vm7865, %v7861
      %7875 = vst.msk [vmem:[%s226 + $0x48] sm:$0xff] %vm7865, %v7862
      %7876 = vst.msk [vmem:[%s226 + $0x50] sm:$0xff] %vm7865, %v7863
      %7877 = vst.msk [vmem:[%s226 + $0x58] sm:$0xff] %vm7865, %v7864
      %v7878 = vld [vmem:[#allocation2 + $0xc0] sm:$0xff]
      %v7879 = vld [vmem:[#allocation2 + $0xc8] sm:$0xff]
      %v7880 = vld [vmem:[#allocation2 + $0xd0] sm:$0xff]
      %v7881 = vld [vmem:[#allocation2 + $0xd8] sm:$0xff]
      %v7882 = vld [vmem:[#allocation2 + $0xe0] sm:$0xff]
      %v7883 = vld [vmem:[#allocation2 + $0xe8] sm:$0xff]
      %v7884 = vld [vmem:[#allocation2 + $0xf0] sm:$0xff]
      %v7885 = vld [vmem:[#allocation2 + $0xf8] sm:$0xff]
      %v7886 = vld [vmem:[#allocation2 + $0x100] sm:$0xff]
      %v7887 = vld [vmem:[#allocation2 + $0x108] sm:$0xff]
      %v7888 = vld [vmem:[#allocation2 + $0x110] sm:$0xff]
      %v7889 = vld [vmem:[#allocation2 + $0x118] sm:$0xff]
      %v7890 = vld [vmem:[#allocation2 + $0x120] sm:$0xff]
      %v7891 = vld [vmem:[#allocation2 + $0x128] sm:$0xff]
      %v7892 = vld [vmem:[#allocation2 + $0x130] sm:$0xff]
      %v7893 = vld [vmem:[#allocation2 + $0x138] sm:$0xff]
      %v7894 = vld [vmem:[#allocation2 + $0x140] sm:$0xff]
      %v7895 = vld [vmem:[#allocation2 + $0x148] sm:$0xff]
      %v7896 = vld [vmem:[#allocation2 + $0x150] sm:$0xff]
      %v7897 = vld [vmem:[#allocation2 + $0x158] sm:$0xff]
      %v7898 = vld [vmem:[#allocation2 + $0x160] sm:$0xff]
      %v7899 = vld [vmem:[#allocation2 + $0x168] sm:$0xff]
      %v7900 = vld [vmem:[#allocation2 + $0x170] sm:$0xff]
      %v7901 = vld [vmem:[#allocation2 + $0x178] sm:$0xff]
      %v7902 = vld [vmem:[%s3] ss:$8 sm:$0x3]
      %v7904 = vlaneseq
      %v7905 = vshrl.u32 %v7904, 7
      %v7906 = vsub.s32 0, %v7905
      %v7907 = vrot.slane %v7902, %v7906
      %v7908 = vlaneseq
      %v7909 = vshrl.u32 %v7908, 7
      %v7910 = vsub.s32 1, %v7909
      %v7911 = vrot.slane %v7902, %v7910
      %v7914 = vmul.f32 %v7878, %v7907
      %v7915 = vmul.f32 %v7879, %v7911
      %v7916 = vmul.f32 %v7880, %v7907
      %v7917 = vmul.f32 %v7881, %v7911
      %v7918 = vmul.f32 %v7882, %v7907
      %v7919 = vmul.f32 %v7883, %v7911
      %v7920 = vmul.f32 %v7884, %v7907
      %v7921 = vmul.f32 %v7885, %v7911
      %v7922 = vmul.f32 %v7886, %v7907
      %v7923 = vmul.f32 %v7887, %v7911
      %v7924 = vmul.f32 %v7888, %v7907
      %v7925 = vmul.f32 %v7889, %v7911
      %v7926 = vmul.f32 %v7890, %v7907
      %v7927 = vmul.f32 %v7891, %v7911
      %v7928 = vmul.f32 %v7892, %v7907
      %v7929 = vmul.f32 %v7893, %v7911
      %v7930 = vmul.f32 %v7894, %v7907
      %v7931 = vmul.f32 %v7895, %v7911
      %v7932 = vmul.f32 %v7896, %v7907
      %v7933 = vmul.f32 %v7897, %v7911
      %v7934 = vmul.f32 %v7898, %v7907
      %v7935 = vmul.f32 %v7899, %v7911
      %v7936 = vmul.f32 %v7900, %v7907
      %v7937 = vmul.f32 %v7901, %v7911
      %v7938 = vadd.f32 %v7914, 0.0
      %v7939 = vadd.f32 %v7915, 0.0
      %v7940 = vadd.f32 %v7916, 0.0
      %v7941 = vadd.f32 %v7917, 0.0
      %v7942 = vadd.f32 %v7918, 0.0
      %v7943 = vadd.f32 %v7919, 0.0
      %v7944 = vadd.f32 %v7920, 0.0
      %v7945 = vadd.f32 %v7921, 0.0
      %v7946 = vadd.f32 %v7922, 0.0
      %v7947 = vadd.f32 %v7923, 0.0
      %v7948 = vadd.f32 %v7924, 0.0
      %v7949 = vadd.f32 %v7925, 0.0
      %v7950 = vadd.f32 %v7926, 0.0
      %v7951 = vadd.f32 %v7927, 0.0
      %v7952 = vadd.f32 %v7928, 0.0
      %v7953 = vadd.f32 %v7929, 0.0
      %v7954 = vadd.f32 %v7930, 0.0
      %v7955 = vadd.f32 %v7931, 0.0
      %v7956 = vadd.f32 %v7932, 0.0
      %v7957 = vadd.f32 %v7933, 0.0
      %v7958 = vadd.f32 %v7934, 0.0
      %v7959 = vadd.f32 %v7935, 0.0
      %v7960 = vadd.f32 %v7936, 0.0
      %v7961 = vadd.f32 %v7937, 0.0
      %v7962 = vld [vmem:[#allocation2 + $0xc0] sm:$0xfe]
      %v7963 = vld [vmem:[#allocation2 + $0xc8] sm:$0xfe]
      %v7964 = vld [vmem:[#allocation2 + $0x180] sm:$0x1]
      %v7965 = vld [vmem:[#allocation2 + $0x188] sm:$0x1]
      %v7966 = vld [vmem:[%s6453] ss:$8 sm:$0x3]
      %v7968 = vlaneseq
      %v7969 = vshrl.u32 %v7968, 7
      %v7970 = vsub.s32 0, %v7969
      %v7971 = vrot.slane %v7966, %v7970
      %v7972 = vlaneseq
      %v7973 = vshrl.u32 %v7972, 7
      %v7974 = vsub.s32 1, %v7973
      %v7975 = vrot.slane %v7966, %v7974
      %v7978 = vmul.f32 %v7962, %v7971
      %v7979 = vmul.f32 %v7963, %v7975
      %v7980 = vmul.f32 %v7880, %v7971
      %v7981 = vmul.f32 %v7881, %v7975
      %v7982 = vmul.f32 %v7882, %v7971
      %v7983 = vmul.f32 %v7883, %v7975
      %v7984 = vmul.f32 %v7884, %v7971
      %v7985 = vmul.f32 %v7885, %v7975
      %v7986 = vmul.f32 %v7886, %v7971
      %v7987 = vmul.f32 %v7887, %v7975
      %v7988 = vmul.f32 %v7888, %v7971
      %v7989 = vmul.f32 %v7889, %v7975
      %v7990 = vmul.f32 %v7890, %v7971
      %v7991 = vmul.f32 %v7891, %v7975
      %v7992 = vmul.f32 %v7892, %v7971
      %v7993 = vmul.f32 %v7893, %v7975
      %v7994 = vmul.f32 %v7894, %v7971
      %v7995 = vmul.f32 %v7895, %v7975
      %v7996 = vmul.f32 %v7896, %v7971
      %v7997 = vmul.f32 %v7897, %v7975
      %v7998 = vmul.f32 %v7898, %v7971
      %v7999 = vmul.f32 %v7899, %v7975
      %v8000 = vmul.f32 %v7900, %v7971
      %v8001 = vmul.f32 %v7901, %v7975
      %v8002 = vmul.f32 %v7964, %v7971
      %v8003 = vmul.f32 %v7965, %v7975
      %v8030 = vrot.slane %v7978, 1
      %v8031 = vrot.slane %v7980, 1
      %v8032 = vsel %vm6518, %v8030, %v8031
      %v8033 = vrot.slane %v7979, 1
      %v8034 = vrot.slane %v7981, 1
      %v8035 = vsel %vm6518, %v8033, %v8034
      %v8036 = vrot.slane %v7982, 1
      %v8037 = vsel %vm6518, %v8031, %v8036
      %v8038 = vrot.slane %v7983, 1
      %v8039 = vsel %vm6518, %v8034, %v8038
      %v8040 = vrot.slane %v7984, 1
      %v8041 = vsel %vm6518, %v8036, %v8040
      %v8042 = vrot.slane %v7985, 1
      %v8043 = vsel %vm6518, %v8038, %v8042
      %v8044 = vrot.slane %v7986, 1
      %v8045 = vsel %vm6518, %v8040, %v8044
      %v8046 = vrot.slane %v7987, 1
      %v8047 = vsel %vm6518, %v8042, %v8046
      %v8048 = vrot.slane %v7988, 1
      %v8049 = vsel %vm6518, %v8044, %v8048
      %v8050 = vrot.slane %v7989, 1
      %v8051 = vsel %vm6518, %v8046, %v8050
      %v8052 = vrot.slane %v7990, 1
      %v8053 = vsel %vm6518, %v8048, %v8052
      %v8054 = vrot.slane %v7991, 1
      %v8055 = vsel %vm6518, %v8050, %v8054
      %v8056 = vrot.slane %v7992, 1
      %v8057 = vsel %vm6518, %v8052, %v8056
      %v8058 = vrot.slane %v7993, 1
      %v8059 = vsel %vm6518, %v8054, %v8058
      %v8060 = vrot.slane %v7994, 1
      %v8061 = vsel %vm6518, %v8056, %v8060
      %v8062 = vrot.slane %v7995, 1
      %v8063 = vsel %vm6518, %v8058, %v8062
      %v8064 = vrot.slane %v7996, 1
      %v8065 = vsel %vm6518, %v8060, %v8064
      %v8066 = vrot.slane %v7997, 1
      %v8067 = vsel %vm6518, %v8062, %v8066
      %v8068 = vrot.slane %v7998, 1
      %v8069 = vsel %vm6518, %v8064, %v8068
      %v8070 = vrot.slane %v7999, 1
      %v8071 = vsel %vm6518, %v8066, %v8070
      %v8072 = vrot.slane %v8000, 1
      %v8073 = vsel %vm6518, %v8068, %v8072
      %v8074 = vrot.slane %v8001, 1
      %v8075 = vsel %vm6518, %v8070, %v8074
      %v8076 = vrot.slane %v8002, 1
      %v8077 = vsel %vm6518, %v8072, %v8076
      %v8078 = vrot.slane %v8003, 1
      %v8079 = vsel %vm6518, %v8074, %v8078
      %v8104 = vadd.f32 %v7938, %v8032
      %v8105 = vadd.f32 %v7939, %v8035
      %v8106 = vadd.f32 %v7940, %v8037
      %v8107 = vadd.f32 %v7941, %v8039
      %v8108 = vadd.f32 %v7942, %v8041
      %v8109 = vadd.f32 %v7943, %v8043
      %v8110 = vadd.f32 %v7944, %v8045
      %v8111 = vadd.f32 %v7945, %v8047
      %v8112 = vadd.f32 %v7946, %v8049
      %v8113 = vadd.f32 %v7947, %v8051
      %v8114 = vadd.f32 %v7948, %v8053
      %v8115 = vadd.f32 %v7949, %v8055
      %v8116 = vadd.f32 %v7950, %v8057
      %v8117 = vadd.f32 %v7951, %v8059
      %v8118 = vadd.f32 %v7952, %v8061
      %v8119 = vadd.f32 %v7953, %v8063
      %v8120 = vadd.f32 %v7954, %v8065
      %v8121 = vadd.f32 %v7955, %v8067
      %v8122 = vadd.f32 %v7956, %v8069
      %v8123 = vadd.f32 %v7957, %v8071
      %v8124 = vadd.f32 %v7958, %v8073
      %v8125 = vadd.f32 %v7959, %v8075
      %v8126 = vadd.f32 %v7960, %v8077
      %v8127 = vadd.f32 %v7961, %v8079
      %v8128 = vld [vmem:[#allocation2 + $0xc0] sm:$0xfc]
      %v8129 = vld [vmem:[#allocation2 + $0xc8] sm:$0xfc]
      %v8130 = vld [vmem:[#allocation2 + $0x180] sm:$0x3]
      %v8131 = vld [vmem:[#allocation2 + $0x188] sm:$0x3]
      %v8132 = vld [vmem:[%s6621] ss:$8 sm:$0x3]
      %v8134 = vlaneseq
      %v8135 = vshrl.u32 %v8134, 7
      %v8136 = vsub.s32 0, %v8135
      %v8137 = vrot.slane %v8132, %v8136
      %v8138 = vlaneseq
      %v8139 = vshrl.u32 %v8138, 7
      %v8140 = vsub.s32 1, %v8139
      %v8141 = vrot.slane %v8132, %v8140
      %v8144 = vmul.f32 %v8128, %v8137
      %v8145 = vmul.f32 %v8129, %v8141
      %v8146 = vmul.f32 %v7880, %v8137
      %v8147 = vmul.f32 %v7881, %v8141
      %v8148 = vmul.f32 %v7882, %v8137
      %v8149 = vmul.f32 %v7883, %v8141
      %v8150 = vmul.f32 %v7884, %v8137
      %v8151 = vmul.f32 %v7885, %v8141
      %v8152 = vmul.f32 %v7886, %v8137
      %v8153 = vmul.f32 %v7887, %v8141
      %v8154 = vmul.f32 %v7888, %v8137
      %v8155 = vmul.f32 %v7889, %v8141
      %v8156 = vmul.f32 %v7890, %v8137
      %v8157 = vmul.f32 %v7891, %v8141
      %v8158 = vmul.f32 %v7892, %v8137
      %v8159 = vmul.f32 %v7893, %v8141
      %v8160 = vmul.f32 %v7894, %v8137
      %v8161 = vmul.f32 %v7895, %v8141
      %v8162 = vmul.f32 %v7896, %v8137
      %v8163 = vmul.f32 %v7897, %v8141
      %v8164 = vmul.f32 %v7898, %v8137
      %v8165 = vmul.f32 %v7899, %v8141
      %v8166 = vmul.f32 %v7900, %v8137
      %v8167 = vmul.f32 %v7901, %v8141
      %v8168 = vmul.f32 %v8130, %v8137
      %v8169 = vmul.f32 %v8131, %v8141
      %v8196 = vrot.slane %v8144, 2
      %v8197 = vrot.slane %v8146, 2
      %v8198 = vsel %vm6686, %v8196, %v8197
      %v8199 = vrot.slane %v8145, 2
      %v8200 = vrot.slane %v8147, 2
      %v8201 = vsel %vm6686, %v8199, %v8200
      %v8202 = vrot.slane %v8148, 2
      %v8203 = vsel %vm6686, %v8197, %v8202
      %v8204 = vrot.slane %v8149, 2
      %v8205 = vsel %vm6686, %v8200, %v8204
      %v8206 = vrot.slane %v8150, 2
      %v8207 = vsel %vm6686, %v8202, %v8206
      %v8208 = vrot.slane %v8151, 2
      %v8209 = vsel %vm6686, %v8204, %v8208
      %v8210 = vrot.slane %v8152, 2
      %v8211 = vsel %vm6686, %v8206, %v8210
      %v8212 = vrot.slane %v8153, 2
      %v8213 = vsel %vm6686, %v8208, %v8212
      %v8214 = vrot.slane %v8154, 2
      %v8215 = vsel %vm6686, %v8210, %v8214
      %v8216 = vrot.slane %v8155, 2
      %v8217 = vsel %vm6686, %v8212, %v8216
      %v8218 = vrot.slane %v8156, 2
      %v8219 = vsel %vm6686, %v8214, %v8218
      %v8220 = vrot.slane %v8157, 2
      %v8221 = vsel %vm6686, %v8216, %v8220
      %v8222 = vrot.slane %v8158, 2
      %v8223 = vsel %vm6686, %v8218, %v8222
      %v8224 = vrot.slane %v8159, 2
      %v8225 = vsel %vm6686, %v8220, %v8224
      %v8226 = vrot.slane %v8160, 2
      %v8227 = vsel %vm6686, %v8222, %v8226
      %v8228 = vrot.slane %v8161, 2
      %v8229 = vsel %vm6686, %v8224, %v8228
      %v8230 = vrot.slane %v8162, 2
      %v8231 = vsel %vm6686, %v8226, %v8230
      %v8232 = vrot.slane %v8163, 2
      %v8233 = vsel %vm6686, %v8228, %v8232
      %v8234 = vrot.slane %v8164, 2
      %v8235 = vsel %vm6686, %v8230, %v8234
      %v8236 = vrot.slane %v8165, 2
      %v8237 = vsel %vm6686, %v8232, %v8236
      %v8238 = vrot.slane %v8166, 2
      %v8239 = vsel %vm6686, %v8234, %v8238
      %v8240 = vrot.slane %v8167, 2
      %v8241 = vsel %vm6686, %v8236, %v8240
      %v8242 = vrot.slane %v8168, 2
      %v8243 = vsel %vm6686, %v8238, %v8242
      %v8244 = vrot.slane %v8169, 2
      %v8245 = vsel %vm6686, %v8240, %v8244
      %v8270 = vadd.f32 %v8104, %v8198
      %v8271 = vadd.f32 %v8105, %v8201
      %v8272 = vadd.f32 %v8106, %v8203
      %v8273 = vadd.f32 %v8107, %v8205
      %v8274 = vadd.f32 %v8108, %v8207
      %v8275 = vadd.f32 %v8109, %v8209
      %v8276 = vadd.f32 %v8110, %v8211
      %v8277 = vadd.f32 %v8111, %v8213
      %v8278 = vadd.f32 %v8112, %v8215
      %v8279 = vadd.f32 %v8113, %v8217
      %v8280 = vadd.f32 %v8114, %v8219
      %v8281 = vadd.f32 %v8115, %v8221
      %v8282 = vadd.f32 %v8116, %v8223
      %v8283 = vadd.f32 %v8117, %v8225
      %v8284 = vadd.f32 %v8118, %v8227
      %v8285 = vadd.f32 %v8119, %v8229
      %v8286 = vadd.f32 %v8120, %v8231
      %v8287 = vadd.f32 %v8121, %v8233
      %v8288 = vadd.f32 %v8122, %v8235
      %v8289 = vadd.f32 %v8123, %v8237
      %v8290 = vadd.f32 %v8124, %v8239
      %v8291 = vadd.f32 %v8125, %v8241
      %v8292 = vadd.f32 %v8126, %v8243
      %v8293 = vadd.f32 %v8127, %v8245
      %v8294 = vld [vmem:[#allocation2 + $0xe0] sm:$0xfc]
      %v8295 = vld [vmem:[#allocation2 + $0xe8] sm:$0xfc]
      %v8296 = vld [vmem:[#allocation2 + $0x180] sm:$0xff]
      %v8297 = vld [vmem:[#allocation2 + $0x188] sm:$0xff]
      %v8298 = vld [vmem:[#allocation2 + $0x190] sm:$0xff]
      %v8299 = vld [vmem:[#allocation2 + $0x198] sm:$0xff]
      %v8300 = vld [vmem:[#allocation2 + $0x1a0] sm:$0x3]
      %v8301 = vld [vmem:[#allocation2 + $0x1a8] sm:$0x3]
      %v8302 = vld [vmem:[%s6793] ss:$8 sm:$0x3]
      %v8304 = vlaneseq
      %v8305 = vshrl.u32 %v8304, 7
      %v8306 = vsub.s32 0, %v8305
      %v8307 = vrot.slane %v8302, %v8306
      %v8308 = vlaneseq
      %v8309 = vshrl.u32 %v8308, 7
      %v8310 = vsub.s32 1, %v8309
      %v8311 = vrot.slane %v8302, %v8310
      %v8314 = vmul.f32 %v8294, %v8307
      %v8315 = vmul.f32 %v8295, %v8311
      %v8316 = vmul.f32 %v7884, %v8307
      %v8317 = vmul.f32 %v7885, %v8311
      %v8318 = vmul.f32 %v7886, %v8307
      %v8319 = vmul.f32 %v7887, %v8311
      %v8320 = vmul.f32 %v7888, %v8307
      %v8321 = vmul.f32 %v7889, %v8311
      %v8322 = vmul.f32 %v7890, %v8307
      %v8323 = vmul.f32 %v7891, %v8311
      %v8324 = vmul.f32 %v7892, %v8307
      %v8325 = vmul.f32 %v7893, %v8311
      %v8326 = vmul.f32 %v7894, %v8307
      %v8327 = vmul.f32 %v7895, %v8311
      %v8328 = vmul.f32 %v7896, %v8307
      %v8329 = vmul.f32 %v7897, %v8311
      %v8330 = vmul.f32 %v7898, %v8307
      %v8331 = vmul.f32 %v7899, %v8311
      %v8332 = vmul.f32 %v7900, %v8307
      %v8333 = vmul.f32 %v7901, %v8311
      %v8334 = vmul.f32 %v8296, %v8307
      %v8335 = vmul.f32 %v8297, %v8311
      %v8336 = vmul.f32 %v8298, %v8307
      %v8337 = vmul.f32 %v8299, %v8311
      %v8338 = vmul.f32 %v8300, %v8307
      %v8339 = vmul.f32 %v8301, %v8311
      %v8366 = vrot.slane %v8314, 2
      %v8367 = vrot.slane %v8316, 2
      %v8368 = vsel %vm6686, %v8366, %v8367
      %v8369 = vrot.slane %v8315, 2
      %v8370 = vrot.slane %v8317, 2
      %v8371 = vsel %vm6686, %v8369, %v8370
      %v8372 = vrot.slane %v8318, 2
      %v8373 = vsel %vm6686, %v8367, %v8372
      %v8374 = vrot.slane %v8319, 2
      %v8375 = vsel %vm6686, %v8370, %v8374
      %v8376 = vrot.slane %v8320, 2
      %v8377 = vsel %vm6686, %v8372, %v8376
      %v8378 = vrot.slane %v8321, 2
      %v8379 = vsel %vm6686, %v8374, %v8378
      %v8380 = vrot.slane %v8322, 2
      %v8381 = vsel %vm6686, %v8376, %v8380
      %v8382 = vrot.slane %v8323, 2
      %v8383 = vsel %vm6686, %v8378, %v8382
      %v8384 = vrot.slane %v8324, 2
      %v8385 = vsel %vm6686, %v8380, %v8384
      %v8386 = vrot.slane %v8325, 2
      %v8387 = vsel %vm6686, %v8382, %v8386
      %v8388 = vrot.slane %v8326, 2
      %v8389 = vsel %vm6686, %v8384, %v8388
      %v8390 = vrot.slane %v8327, 2
      %v8391 = vsel %vm6686, %v8386, %v8390
      %v8392 = vrot.slane %v8328, 2
      %v8393 = vsel %vm6686, %v8388, %v8392
      %v8394 = vrot.slane %v8329, 2
      %v8395 = vsel %vm6686, %v8390, %v8394
      %v8396 = vrot.slane %v8330, 2
      %v8397 = vsel %vm6686, %v8392, %v8396
      %v8398 = vrot.slane %v8331, 2
      %v8399 = vsel %vm6686, %v8394, %v8398
      %v8400 = vrot.slane %v8332, 2
      %v8401 = vsel %vm6686, %v8396, %v8400
      %v8402 = vrot.slane %v8333, 2
      %v8403 = vsel %vm6686, %v8398, %v8402
      %v8404 = vrot.slane %v8334, 2
      %v8405 = vsel %vm6686, %v8400, %v8404
      %v8406 = vrot.slane %v8335, 2
      %v8407 = vsel %vm6686, %v8402, %v8406
      %v8408 = vrot.slane %v8336, 2
      %v8409 = vsel %vm6686, %v8404, %v8408
      %v8410 = vrot.slane %v8337, 2
      %v8411 = vsel %vm6686, %v8406, %v8410
      %v8412 = vrot.slane %v8338, 2
      %v8413 = vsel %vm6686, %v8408, %v8412
      %v8414 = vrot.slane %v8339, 2
      %v8415 = vsel %vm6686, %v8410, %v8414
      %v8440 = vadd.f32 %v8270, %v8368
      %v8441 = vadd.f32 %v8271, %v8371
      %v8442 = vadd.f32 %v8272, %v8373
      %v8443 = vadd.f32 %v8273, %v8375
      %v8444 = vadd.f32 %v8274, %v8377
      %v8445 = vadd.f32 %v8275, %v8379
      %v8446 = vadd.f32 %v8276, %v8381
      %v8447 = vadd.f32 %v8277, %v8383
      %v8448 = vadd.f32 %v8278, %v8385
      %v8449 = vadd.f32 %v8279, %v8387
      %v8450 = vadd.f32 %v8280, %v8389
      %v8451 = vadd.f32 %v8281, %v8391
      %v8452 = vadd.f32 %v8282, %v8393
      %v8453 = vadd.f32 %v8283, %v8395
      %v8454 = vadd.f32 %v8284, %v8397
      %v8455 = vadd.f32 %v8285, %v8399
      %v8456 = vadd.f32 %v8286, %v8401
      %v8457 = vadd.f32 %v8287, %v8403
      %v8458 = vadd.f32 %v8288, %v8405
      %v8459 = vadd.f32 %v8289, %v8407
      %v8460 = vadd.f32 %v8290, %v8409
      %v8461 = vadd.f32 %v8291, %v8411
      %v8462 = vadd.f32 %v8292, %v8413
      %v8463 = vadd.f32 %v8293, %v8415
      %v8464 = vld [vmem:[#allocation2 + $0xe0] sm:$0xf8]
      %v8465 = vld [vmem:[#allocation2 + $0xe8] sm:$0xf8]
      %v8466 = vld [vmem:[#allocation2 + $0x1a0] sm:$0x7]
      %v8467 = vld [vmem:[#allocation2 + $0x1a8] sm:$0x7]
      %v8468 = vld [vmem:[%s6960] ss:$8 sm:$0x3]
      %v8470 = vlaneseq
      %v8471 = vshrl.u32 %v8470, 7
      %v8472 = vsub.s32 0, %v8471
      %v8473 = vrot.slane %v8468, %v8472
      %v8474 = vlaneseq
      %v8475 = vshrl.u32 %v8474, 7
      %v8476 = vsub.s32 1, %v8475
      %v8477 = vrot.slane %v8468, %v8476
      %v8480 = vmul.f32 %v8464, %v8473
      %v8481 = vmul.f32 %v8465, %v8477
      %v8482 = vmul.f32 %v7884, %v8473
      %v8483 = vmul.f32 %v7885, %v8477
      %v8484 = vmul.f32 %v7886, %v8473
      %v8485 = vmul.f32 %v7887, %v8477
      %v8486 = vmul.f32 %v7888, %v8473
      %v8487 = vmul.f32 %v7889, %v8477
      %v8488 = vmul.f32 %v7890, %v8473
      %v8489 = vmul.f32 %v7891, %v8477
      %v8490 = vmul.f32 %v7892, %v8473
      %v8491 = vmul.f32 %v7893, %v8477
      %v8492 = vmul.f32 %v7894, %v8473
      %v8493 = vmul.f32 %v7895, %v8477
      %v8494 = vmul.f32 %v7896, %v8473
      %v8495 = vmul.f32 %v7897, %v8477
      %v8496 = vmul.f32 %v7898, %v8473
      %v8497 = vmul.f32 %v7899, %v8477
      %v8498 = vmul.f32 %v7900, %v8473
      %v8499 = vmul.f32 %v7901, %v8477
      %v8500 = vmul.f32 %v8296, %v8473
      %v8501 = vmul.f32 %v8297, %v8477
      %v8502 = vmul.f32 %v8298, %v8473
      %v8503 = vmul.f32 %v8299, %v8477
      %v8504 = vmul.f32 %v8466, %v8473
      %v8505 = vmul.f32 %v8467, %v8477
      %v8532 = vrot.slane %v8480, 3
      %v8533 = vrot.slane %v8482, 3
      %v8534 = vsel %vm7025, %v8532, %v8533
      %v8535 = vrot.slane %v8481, 3
      %v8536 = vrot.slane %v8483, 3
      %v8537 = vsel %vm7025, %v8535, %v8536
      %v8538 = vrot.slane %v8484, 3
      %v8539 = vsel %vm7025, %v8533, %v8538
      %v8540 = vrot.slane %v8485, 3
      %v8541 = vsel %vm7025, %v8536, %v8540
      %v8542 = vrot.slane %v8486, 3
      %v8543 = vsel %vm7025, %v8538, %v8542
      %v8544 = vrot.slane %v8487, 3
      %v8545 = vsel %vm7025, %v8540, %v8544
      %v8546 = vrot.slane %v8488, 3
      %v8547 = vsel %vm7025, %v8542, %v8546
      %v8548 = vrot.slane %v8489, 3
      %v8549 = vsel %vm7025, %v8544, %v8548
      %v8550 = vrot.slane %v8490, 3
      %v8551 = vsel %vm7025, %v8546, %v8550
      %v8552 = vrot.slane %v8491, 3
      %v8553 = vsel %vm7025, %v8548, %v8552
      %v8554 = vrot.slane %v8492, 3
      %v8555 = vsel %vm7025, %v8550, %v8554
      %v8556 = vrot.slane %v8493, 3
      %v8557 = vsel %vm7025, %v8552, %v8556
      %v8558 = vrot.slane %v8494, 3
      %v8559 = vsel %vm7025, %v8554, %v8558
      %v8560 = vrot.slane %v8495, 3
      %v8561 = vsel %vm7025, %v8556, %v8560
      %v8562 = vrot.slane %v8496, 3
      %v8563 = vsel %vm7025, %v8558, %v8562
      %v8564 = vrot.slane %v8497, 3
      %v8565 = vsel %vm7025, %v8560, %v8564
      %v8566 = vrot.slane %v8498, 3
      %v8567 = vsel %vm7025, %v8562, %v8566
      %v8568 = vrot.slane %v8499, 3
      %v8569 = vsel %vm7025, %v8564, %v8568
      %v8570 = vrot.slane %v8500, 3
      %v8571 = vsel %vm7025, %v8566, %v8570
      %v8572 = vrot.slane %v8501, 3
      %v8573 = vsel %vm7025, %v8568, %v8572
      %v8574 = vrot.slane %v8502, 3
      %v8575 = vsel %vm7025, %v8570, %v8574
      %v8576 = vrot.slane %v8503, 3
      %v8577 = vsel %vm7025, %v8572, %v8576
      %v8578 = vrot.slane %v8504, 3
      %v8579 = vsel %vm7025, %v8574, %v8578
      %v8580 = vrot.slane %v8505, 3
      %v8581 = vsel %vm7025, %v8576, %v8580
      %v8606 = vadd.f32 %v8440, %v8534
      %v8607 = vadd.f32 %v8441, %v8537
      %v8608 = vadd.f32 %v8442, %v8539
      %v8609 = vadd.f32 %v8443, %v8541
      %v8610 = vadd.f32 %v8444, %v8543
      %v8611 = vadd.f32 %v8445, %v8545
      %v8612 = vadd.f32 %v8446, %v8547
      %v8613 = vadd.f32 %v8447, %v8549
      %v8614 = vadd.f32 %v8448, %v8551
      %v8615 = vadd.f32 %v8449, %v8553
      %v8616 = vadd.f32 %v8450, %v8555
      %v8617 = vadd.f32 %v8451, %v8557
      %v8618 = vadd.f32 %v8452, %v8559
      %v8619 = vadd.f32 %v8453, %v8561
      %v8620 = vadd.f32 %v8454, %v8563
      %v8621 = vadd.f32 %v8455, %v8565
      %v8622 = vadd.f32 %v8456, %v8567
      %v8623 = vadd.f32 %v8457, %v8569
      %v8624 = vadd.f32 %v8458, %v8571
      %v8625 = vadd.f32 %v8459, %v8573
      %v8626 = vadd.f32 %v8460, %v8575
      %v8627 = vadd.f32 %v8461, %v8577
      %v8628 = vadd.f32 %v8462, %v8579
      %v8629 = vadd.f32 %v8463, %v8581
      %v8630 = vld [vmem:[#allocation2 + $0xe0] sm:$0xf0]
      %v8631 = vld [vmem:[#allocation2 + $0xe8] sm:$0xf0]
      %v8632 = vld [vmem:[#allocation2 + $0x1a0] sm:$0xf]
      %v8633 = vld [vmem:[#allocation2 + $0x1a8] sm:$0xf]
      %v8634 = vld [vmem:[%s7128] ss:$8 sm:$0x3]
      %v8636 = vlaneseq
      %v8637 = vshrl.u32 %v8636, 7
      %v8638 = vsub.s32 0, %v8637
      %v8639 = vrot.slane %v8634, %v8638
      %v8640 = vlaneseq
      %v8641 = vshrl.u32 %v8640, 7
      %v8642 = vsub.s32 1, %v8641
      %v8643 = vrot.slane %v8634, %v8642
      %v8646 = vmul.f32 %v8630, %v8639
      %v8647 = vmul.f32 %v8631, %v8643
      %v8648 = vmul.f32 %v7884, %v8639
      %v8649 = vmul.f32 %v7885, %v8643
      %v8650 = vmul.f32 %v7886, %v8639
      %v8651 = vmul.f32 %v7887, %v8643
      %v8652 = vmul.f32 %v7888, %v8639
      %v8653 = vmul.f32 %v7889, %v8643
      %v8654 = vmul.f32 %v7890, %v8639
      %v8655 = vmul.f32 %v7891, %v8643
      %v8656 = vmul.f32 %v7892, %v8639
      %v8657 = vmul.f32 %v7893, %v8643
      %v8658 = vmul.f32 %v7894, %v8639
      %v8659 = vmul.f32 %v7895, %v8643
      %v8660 = vmul.f32 %v7896, %v8639
      %v8661 = vmul.f32 %v7897, %v8643
      %v8662 = vmul.f32 %v7898, %v8639
      %v8663 = vmul.f32 %v7899, %v8643
      %v8664 = vmul.f32 %v7900, %v8639
      %v8665 = vmul.f32 %v7901, %v8643
      %v8666 = vmul.f32 %v8296, %v8639
      %v8667 = vmul.f32 %v8297, %v8643
      %v8668 = vmul.f32 %v8298, %v8639
      %v8669 = vmul.f32 %v8299, %v8643
      %v8670 = vmul.f32 %v8632, %v8639
      %v8671 = vmul.f32 %v8633, %v8643
      %v8698 = vrot.slane %v8646, 4
      %v8699 = vrot.slane %v8648, 4
      %v8700 = vsel %vm7193, %v8698, %v8699
      %v8701 = vrot.slane %v8647, 4
      %v8702 = vrot.slane %v8649, 4
      %v8703 = vsel %vm7193, %v8701, %v8702
      %v8704 = vrot.slane %v8650, 4
      %v8705 = vsel %vm7193, %v8699, %v8704
      %v8706 = vrot.slane %v8651, 4
      %v8707 = vsel %vm7193, %v8702, %v8706
      %v8708 = vrot.slane %v8652, 4
      %v8709 = vsel %vm7193, %v8704, %v8708
      %v8710 = vrot.slane %v8653, 4
      %v8711 = vsel %vm7193, %v8706, %v8710
      %v8712 = vrot.slane %v8654, 4
      %v8713 = vsel %vm7193, %v8708, %v8712
      %v8714 = vrot.slane %v8655, 4
      %v8715 = vsel %vm7193, %v8710, %v8714
      %v8716 = vrot.slane %v8656, 4
      %v8717 = vsel %vm7193, %v8712, %v8716
      %v8718 = vrot.slane %v8657, 4
      %v8719 = vsel %vm7193, %v8714, %v8718
      %v8720 = vrot.slane %v8658, 4
      %v8721 = vsel %vm7193, %v8716, %v8720
      %v8722 = vrot.slane %v8659, 4
      %v8723 = vsel %vm7193, %v8718, %v8722
      %v8724 = vrot.slane %v8660, 4
      %v8725 = vsel %vm7193, %v8720, %v8724
      %v8726 = vrot.slane %v8661, 4
      %v8727 = vsel %vm7193, %v8722, %v8726
      %v8728 = vrot.slane %v8662, 4
      %v8729 = vsel %vm7193, %v8724, %v8728
      %v8730 = vrot.slane %v8663, 4
      %v8731 = vsel %vm7193, %v8726, %v8730
      %v8732 = vrot.slane %v8664, 4
      %v8733 = vsel %vm7193, %v8728, %v8732
      %v8734 = vrot.slane %v8665, 4
      %v8735 = vsel %vm7193, %v8730, %v8734
      %v8736 = vrot.slane %v8666, 4
      %v8737 = vsel %vm7193, %v8732, %v8736
      %v8738 = vrot.slane %v8667, 4
      %v8739 = vsel %vm7193, %v8734, %v8738
      %v8740 = vrot.slane %v8668, 4
      %v8741 = vsel %vm7193, %v8736, %v8740
      %v8742 = vrot.slane %v8669, 4
      %v8743 = vsel %vm7193, %v8738, %v8742
      %v8744 = vrot.slane %v8670, 4
      %v8745 = vsel %vm7193, %v8740, %v8744
      %v8746 = vrot.slane %v8671, 4
      %v8747 = vsel %vm7193, %v8742, %v8746
      %v8772 = vadd.f32 %v8606, %v8700
      %v8773 = vadd.f32 %v8607, %v8703
      %v8774 = vadd.f32 %v8608, %v8705
      %v8775 = vadd.f32 %v8609, %v8707
      %v8776 = vadd.f32 %v8610, %v8709
      %v8777 = vadd.f32 %v8611, %v8711
      %v8778 = vadd.f32 %v8612, %v8713
      %v8779 = vadd.f32 %v8613, %v8715
      %v8780 = vadd.f32 %v8614, %v8717
      %v8781 = vadd.f32 %v8615, %v8719
      %v8782 = vadd.f32 %v8616, %v8721
      %v8783 = vadd.f32 %v8617, %v8723
      %v8784 = vadd.f32 %v8618, %v8725
      %v8785 = vadd.f32 %v8619, %v8727
      %v8786 = vadd.f32 %v8620, %v8729
      %v8787 = vadd.f32 %v8621, %v8731
      %v8788 = vadd.f32 %v8622, %v8733
      %v8789 = vadd.f32 %v8623, %v8735
      %v8790 = vadd.f32 %v8624, %v8737
      %v8791 = vadd.f32 %v8625, %v8739
      %v8792 = vadd.f32 %v8626, %v8741
      %v8793 = vadd.f32 %v8627, %v8743
      %v8794 = vadd.f32 %v8628, %v8745
      %v8795 = vadd.f32 %v8629, %v8747
      %v8796 = vld [vmem:[#allocation2 + $0x100] sm:$0xf0]
      %v8797 = vld [vmem:[#allocation2 + $0x108] sm:$0xf0]
      %v8798 = vld [vmem:[#allocation2 + $0x1a0] sm:$0xff]
      %v8799 = vld [vmem:[#allocation2 + $0x1a8] sm:$0xff]
      %v8800 = vld [vmem:[#allocation2 + $0x1b0] sm:$0xff]
      %v8801 = vld [vmem:[#allocation2 + $0x1b8] sm:$0xff]
      %v8802 = vld [vmem:[#allocation2 + $0x1c0] sm:$0xf]
      %v8803 = vld [vmem:[#allocation2 + $0x1c8] sm:$0xf]
      %v8804 = vld [vmem:[%s7300] ss:$8 sm:$0x3]
      %v8806 = vlaneseq
      %v8807 = vshrl.u32 %v8806, 7
      %v8808 = vsub.s32 0, %v8807
      %v8809 = vrot.slane %v8804, %v8808
      %v8810 = vlaneseq
      %v8811 = vshrl.u32 %v8810, 7
      %v8812 = vsub.s32 1, %v8811
      %v8813 = vrot.slane %v8804, %v8812
      %v8816 = vmul.f32 %v8796, %v8809
      %v8817 = vmul.f32 %v8797, %v8813
      %v8818 = vmul.f32 %v7888, %v8809
      %v8819 = vmul.f32 %v7889, %v8813
      %v8820 = vmul.f32 %v7890, %v8809
      %v8821 = vmul.f32 %v7891, %v8813
      %v8822 = vmul.f32 %v7892, %v8809
      %v8823 = vmul.f32 %v7893, %v8813
      %v8824 = vmul.f32 %v7894, %v8809
      %v8825 = vmul.f32 %v7895, %v8813
      %v8826 = vmul.f32 %v7896, %v8809
      %v8827 = vmul.f32 %v7897, %v8813
      %v8828 = vmul.f32 %v7898, %v8809
      %v8829 = vmul.f32 %v7899, %v8813
      %v8830 = vmul.f32 %v7900, %v8809
      %v8831 = vmul.f32 %v7901, %v8813
      %v8832 = vmul.f32 %v8296, %v8809
      %v8833 = vmul.f32 %v8297, %v8813
      %v8834 = vmul.f32 %v8298, %v8809
      %v8835 = vmul.f32 %v8299, %v8813
      %v8836 = vmul.f32 %v8798, %v8809
      %v8837 = vmul.f32 %v8799, %v8813
      %v8838 = vmul.f32 %v8800, %v8809
      %v8839 = vmul.f32 %v8801, %v8813
      %v8840 = vmul.f32 %v8802, %v8809
      %v8841 = vmul.f32 %v8803, %v8813
      %v8868 = vrot.slane %v8816, 4
      %v8869 = vrot.slane %v8818, 4
      %v8870 = vsel %vm7193, %v8868, %v8869
      %v8871 = vrot.slane %v8817, 4
      %v8872 = vrot.slane %v8819, 4
      %v8873 = vsel %vm7193, %v8871, %v8872
      %v8874 = vrot.slane %v8820, 4
      %v8875 = vsel %vm7193, %v8869, %v8874
      %v8876 = vrot.slane %v8821, 4
      %v8877 = vsel %vm7193, %v8872, %v8876
      %v8878 = vrot.slane %v8822, 4
      %v8879 = vsel %vm7193, %v8874, %v8878
      %v8880 = vrot.slane %v8823, 4
      %v8881 = vsel %vm7193, %v8876, %v8880
      %v8882 = vrot.slane %v8824, 4
      %v8883 = vsel %vm7193, %v8878, %v8882
      %v8884 = vrot.slane %v8825, 4
      %v8885 = vsel %vm7193, %v8880, %v8884
      %v8886 = vrot.slane %v8826, 4
      %v8887 = vsel %vm7193, %v8882, %v8886
      %v8888 = vrot.slane %v8827, 4
      %v8889 = vsel %vm7193, %v8884, %v8888
      %v8890 = vrot.slane %v8828, 4
      %v8891 = vsel %vm7193, %v8886, %v8890
      %v8892 = vrot.slane %v8829, 4
      %v8893 = vsel %vm7193, %v8888, %v8892
      %v8894 = vrot.slane %v8830, 4
      %v8895 = vsel %vm7193, %v8890, %v8894
      %v8896 = vrot.slane %v8831, 4
      %v8897 = vsel %vm7193, %v8892, %v8896
      %v8898 = vrot.slane %v8832, 4
      %v8899 = vsel %vm7193, %v8894, %v8898
      %v8900 = vrot.slane %v8833, 4
      %v8901 = vsel %vm7193, %v8896, %v8900
      %v8902 = vrot.slane %v8834, 4
      %v8903 = vsel %vm7193, %v8898, %v8902
      %v8904 = vrot.slane %v8835, 4
      %v8905 = vsel %vm7193, %v8900, %v8904
      %v8906 = vrot.slane %v8836, 4
      %v8907 = vsel %vm7193, %v8902, %v8906
      %v8908 = vrot.slane %v8837, 4
      %v8909 = vsel %vm7193, %v8904, %v8908
      %v8910 = vrot.slane %v8838, 4
      %v8911 = vsel %vm7193, %v8906, %v8910
      %v8912 = vrot.slane %v8839, 4
      %v8913 = vsel %vm7193, %v8908, %v8912
      %v8914 = vrot.slane %v8840, 4
      %v8915 = vsel %vm7193, %v8910, %v8914
      %v8916 = vrot.slane %v8841, 4
      %v8917 = vsel %vm7193, %v8912, %v8916
      %v8942 = vadd.f32 %v8772, %v8870
      %v8943 = vadd.f32 %v8773, %v8873
      %v8944 = vadd.f32 %v8774, %v8875
      %v8945 = vadd.f32 %v8775, %v8877
      %v8946 = vadd.f32 %v8776, %v8879
      %v8947 = vadd.f32 %v8777, %v8881
      %v8948 = vadd.f32 %v8778, %v8883
      %v8949 = vadd.f32 %v8779, %v8885
      %v8950 = vadd.f32 %v8780, %v8887
      %v8951 = vadd.f32 %v8781, %v8889
      %v8952 = vadd.f32 %v8782, %v8891
      %v8953 = vadd.f32 %v8783, %v8893
      %v8954 = vadd.f32 %v8784, %v8895
      %v8955 = vadd.f32 %v8785, %v8897
      %v8956 = vadd.f32 %v8786, %v8899
      %v8957 = vadd.f32 %v8787, %v8901
      %v8958 = vadd.f32 %v8788, %v8903
      %v8959 = vadd.f32 %v8789, %v8905
      %v8960 = vadd.f32 %v8790, %v8907
      %v8961 = vadd.f32 %v8791, %v8909
      %v8962 = vadd.f32 %v8792, %v8911
      %v8963 = vadd.f32 %v8793, %v8913
      %v8964 = vadd.f32 %v8794, %v8915
      %v8965 = vadd.f32 %v8795, %v8917
      %v8966 = vld [vmem:[#allocation2 + $0x100] sm:$0xe0]
      %v8967 = vld [vmem:[#allocation2 + $0x108] sm:$0xe0]
      %v8968 = vld [vmem:[#allocation2 + $0x1c0] sm:$0x1f]
      %v8969 = vld [vmem:[#allocation2 + $0x1c8] sm:$0x1f]
      %v8970 = vld [vmem:[%s7467] ss:$8 sm:$0x3]
      %v8972 = vlaneseq
      %v8973 = vshrl.u32 %v8972, 7
      %v8974 = vsub.s32 0, %v8973
      %v8975 = vrot.slane %v8970, %v8974
      %v8976 = vlaneseq
      %v8977 = vshrl.u32 %v8976, 7
      %v8978 = vsub.s32 1, %v8977
      %v8979 = vrot.slane %v8970, %v8978
      %v8982 = vmul.f32 %v8966, %v8975
      %v8983 = vmul.f32 %v8967, %v8979
      %v8984 = vmul.f32 %v7888, %v8975
      %v8985 = vmul.f32 %v7889, %v8979
      %v8986 = vmul.f32 %v7890, %v8975
      %v8987 = vmul.f32 %v7891, %v8979
      %v8988 = vmul.f32 %v7892, %v8975
      %v8989 = vmul.f32 %v7893, %v8979
      %v8990 = vmul.f32 %v7894, %v8975
      %v8991 = vmul.f32 %v7895, %v8979
      %v8992 = vmul.f32 %v7896, %v8975
      %v8993 = vmul.f32 %v7897, %v8979
      %v8994 = vmul.f32 %v7898, %v8975
      %v8995 = vmul.f32 %v7899, %v8979
      %v8996 = vmul.f32 %v7900, %v8975
      %v8997 = vmul.f32 %v7901, %v8979
      %v8998 = vmul.f32 %v8296, %v8975
      %v8999 = vmul.f32 %v8297, %v8979
      %v9000 = vmul.f32 %v8298, %v8975
      %v9001 = vmul.f32 %v8299, %v8979
      %v9002 = vmul.f32 %v8798, %v8975
      %v9003 = vmul.f32 %v8799, %v8979
      %v9004 = vmul.f32 %v8800, %v8975
      %v9005 = vmul.f32 %v8801, %v8979
      %v9006 = vmul.f32 %v8968, %v8975
      %v9007 = vmul.f32 %v8969, %v8979
      %v9034 = vrot.slane %v8982, 5
      %v9035 = vrot.slane %v8984, 5
      %v9036 = vsel %vm2188, %v9034, %v9035
      %v9037 = vrot.slane %v8983, 5
      %v9038 = vrot.slane %v8985, 5
      %v9039 = vsel %vm2188, %v9037, %v9038
      %v9040 = vrot.slane %v8986, 5
      %v9041 = vsel %vm2188, %v9035, %v9040
      %v9042 = vrot.slane %v8987, 5
      %v9043 = vsel %vm2188, %v9038, %v9042
      %v9044 = vrot.slane %v8988, 5
      %v9045 = vsel %vm2188, %v9040, %v9044
      %v9046 = vrot.slane %v8989, 5
      %v9047 = vsel %vm2188, %v9042, %v9046
      %v9048 = vrot.slane %v8990, 5
      %v9049 = vsel %vm2188, %v9044, %v9048
      %v9050 = vrot.slane %v8991, 5
      %v9051 = vsel %vm2188, %v9046, %v9050
      %v9052 = vrot.slane %v8992, 5
      %v9053 = vsel %vm2188, %v9048, %v9052
      %v9054 = vrot.slane %v8993, 5
      %v9055 = vsel %vm2188, %v9050, %v9054
      %v9056 = vrot.slane %v8994, 5
      %v9057 = vsel %vm2188, %v9052, %v9056
      %v9058 = vrot.slane %v8995, 5
      %v9059 = vsel %vm2188, %v9054, %v9058
      %v9060 = vrot.slane %v8996, 5
      %v9061 = vsel %vm2188, %v9056, %v9060
      %v9062 = vrot.slane %v8997, 5
      %v9063 = vsel %vm2188, %v9058, %v9062
      %v9064 = vrot.slane %v8998, 5
      %v9065 = vsel %vm2188, %v9060, %v9064
      %v9066 = vrot.slane %v8999, 5
      %v9067 = vsel %vm2188, %v9062, %v9066
      %v9068 = vrot.slane %v9000, 5
      %v9069 = vsel %vm2188, %v9064, %v9068
      %v9070 = vrot.slane %v9001, 5
      %v9071 = vsel %vm2188, %v9066, %v9070
      %v9072 = vrot.slane %v9002, 5
      %v9073 = vsel %vm2188, %v9068, %v9072
      %v9074 = vrot.slane %v9003, 5
      %v9075 = vsel %vm2188, %v9070, %v9074
      %v9076 = vrot.slane %v9004, 5
      %v9077 = vsel %vm2188, %v9072, %v9076
      %v9078 = vrot.slane %v9005, 5
      %v9079 = vsel %vm2188, %v9074, %v9078
      %v9080 = vrot.slane %v9006, 5
      %v9081 = vsel %vm2188, %v9076, %v9080
      %v9082 = vrot.slane %v9007, 5
      %v9083 = vsel %vm2188, %v9078, %v9082
      %v9108 = vadd.f32 %v8942, %v9036
      %v9109 = vadd.f32 %v8943, %v9039
      %v9110 = vadd.f32 %v8944, %v9041
      %v9111 = vadd.f32 %v8945, %v9043
      %v9112 = vadd.f32 %v8946, %v9045
      %v9113 = vadd.f32 %v8947, %v9047
      %v9114 = vadd.f32 %v8948, %v9049
      %v9115 = vadd.f32 %v8949, %v9051
      %v9116 = vadd.f32 %v8950, %v9053
      %v9117 = vadd.f32 %v8951, %v9055
      %v9118 = vadd.f32 %v8952, %v9057
      %v9119 = vadd.f32 %v8953, %v9059
      %v9120 = vadd.f32 %v8954, %v9061
      %v9121 = vadd.f32 %v8955, %v9063
      %v9122 = vadd.f32 %v8956, %v9065
      %v9123 = vadd.f32 %v8957, %v9067
      %v9124 = vadd.f32 %v8958, %v9069
      %v9125 = vadd.f32 %v8959, %v9071
      %v9126 = vadd.f32 %v8960, %v9073
      %v9127 = vadd.f32 %v8961, %v9075
      %v9128 = vadd.f32 %v8962, %v9077
      %v9129 = vadd.f32 %v8963, %v9079
      %v9130 = vadd.f32 %v8964, %v9081
      %v9131 = vadd.f32 %v8965, %v9083
      %v9132 = vld [vmem:[#allocation2 + $0x100] sm:$0xc0]
      %v9133 = vld [vmem:[#allocation2 + $0x108] sm:$0xc0]
      %v9134 = vld [vmem:[#allocation2 + $0x1c0] sm:$0x3f]
      %v9135 = vld [vmem:[#allocation2 + $0x1c8] sm:$0x3f]
      %v9136 = vld [vmem:[%s7634] ss:$8 sm:$0x3]
      %v9138 = vlaneseq
      %v9139 = vshrl.u32 %v9138, 7
      %v9140 = vsub.s32 0, %v9139
      %v9141 = vrot.slane %v9136, %v9140
      %v9142 = vlaneseq
      %v9143 = vshrl.u32 %v9142, 7
      %v9144 = vsub.s32 1, %v9143
      %v9145 = vrot.slane %v9136, %v9144
      %v9148 = vmul.f32 %v9132, %v9141
      %v9149 = vmul.f32 %v9133, %v9145
      %v9150 = vmul.f32 %v7888, %v9141
      %v9151 = vmul.f32 %v7889, %v9145
      %v9152 = vmul.f32 %v7890, %v9141
      %v9153 = vmul.f32 %v7891, %v9145
      %v9154 = vmul.f32 %v7892, %v9141
      %v9155 = vmul.f32 %v7893, %v9145
      %v9156 = vmul.f32 %v7894, %v9141
      %v9157 = vmul.f32 %v7895, %v9145
      %v9158 = vmul.f32 %v7896, %v9141
      %v9159 = vmul.f32 %v7897, %v9145
      %v9160 = vmul.f32 %v7898, %v9141
      %v9161 = vmul.f32 %v7899, %v9145
      %v9162 = vmul.f32 %v7900, %v9141
      %v9163 = vmul.f32 %v7901, %v9145
      %v9164 = vmul.f32 %v8296, %v9141
      %v9165 = vmul.f32 %v8297, %v9145
      %v9166 = vmul.f32 %v8298, %v9141
      %v9167 = vmul.f32 %v8299, %v9145
      %v9168 = vmul.f32 %v8798, %v9141
      %v9169 = vmul.f32 %v8799, %v9145
      %v9170 = vmul.f32 %v8800, %v9141
      %v9171 = vmul.f32 %v8801, %v9145
      %v9172 = vmul.f32 %v9134, %v9141
      %v9173 = vmul.f32 %v9135, %v9145
      %v9200 = vrot.slane %v9148, 6
      %v9201 = vrot.slane %v9150, 6
      %v9202 = vsel %vm7699, %v9200, %v9201
      %v9203 = vrot.slane %v9149, 6
      %v9204 = vrot.slane %v9151, 6
      %v9205 = vsel %vm7699, %v9203, %v9204
      %v9206 = vrot.slane %v9152, 6
      %v9207 = vsel %vm7699, %v9201, %v9206
      %v9208 = vrot.slane %v9153, 6
      %v9209 = vsel %vm7699, %v9204, %v9208
      %v9210 = vrot.slane %v9154, 6
      %v9211 = vsel %vm7699, %v9206, %v9210
      %v9212 = vrot.slane %v9155, 6
      %v9213 = vsel %vm7699, %v9208, %v9212
      %v9214 = vrot.slane %v9156, 6
      %v9215 = vsel %vm7699, %v9210, %v9214
      %v9216 = vrot.slane %v9157, 6
      %v9217 = vsel %vm7699, %v9212, %v9216
      %v9218 = vrot.slane %v9158, 6
      %v9219 = vsel %vm7699, %v9214, %v9218
      %v9220 = vrot.slane %v9159, 6
      %v9221 = vsel %vm7699, %v9216, %v9220
      %v9222 = vrot.slane %v9160, 6
      %v9223 = vsel %vm7699, %v9218, %v9222
      %v9224 = vrot.slane %v9161, 6
      %v9225 = vsel %vm7699, %v9220, %v9224
      %v9226 = vrot.slane %v9162, 6
      %v9227 = vsel %vm7699, %v9222, %v9226
      %v9228 = vrot.slane %v9163, 6
      %v9229 = vsel %vm7699, %v9224, %v9228
      %v9230 = vrot.slane %v9164, 6
      %v9231 = vsel %vm7699, %v9226, %v9230
      %v9232 = vrot.slane %v9165, 6
      %v9233 = vsel %vm7699, %v9228, %v9232
      %v9234 = vrot.slane %v9166, 6
      %v9235 = vsel %vm7699, %v9230, %v9234
      %v9236 = vrot.slane %v9167, 6
      %v9237 = vsel %vm7699, %v9232, %v9236
      %v9238 = vrot.slane %v9168, 6
      %v9239 = vsel %vm7699, %v9234, %v9238
      %v9240 = vrot.slane %v9169, 6
      %v9241 = vsel %vm7699, %v9236, %v9240
      %v9242 = vrot.slane %v9170, 6
      %v9243 = vsel %vm7699, %v9238, %v9242
      %v9244 = vrot.slane %v9171, 6
      %v9245 = vsel %vm7699, %v9240, %v9244
      %v9246 = vrot.slane %v9172, 6
      %v9247 = vsel %vm7699, %v9242, %v9246
      %v9248 = vrot.slane %v9173, 6
      %v9249 = vsel %vm7699, %v9244, %v9248
      %v9274 = vadd.f32 %v9108, %v9202
      %v9275 = vadd.f32 %v9109, %v9205
      %v9276 = vadd.f32 %v9110, %v9207
      %v9277 = vadd.f32 %v9111, %v9209
      %v9278 = vadd.f32 %v9112, %v9211
      %v9279 = vadd.f32 %v9113, %v9213
      %v9280 = vadd.f32 %v9114, %v9215
      %v9281 = vadd.f32 %v9115, %v9217
      %v9282 = vadd.f32 %v9116, %v9219
      %v9283 = vadd.f32 %v9117, %v9221
      %v9284 = vadd.f32 %v9118, %v9223
      %v9285 = vadd.f32 %v9119, %v9225
      %v9286 = vadd.f32 %v9120, %v9227
      %v9287 = vadd.f32 %v9121, %v9229
      %v9288 = vadd.f32 %v9122, %v9231
      %v9289 = vadd.f32 %v9123, %v9233
      %v9290 = vadd.f32 %v9124, %v9235
      %v9291 = vadd.f32 %v9125, %v9237
      %v9292 = vadd.f32 %v9126, %v9239
      %v9293 = vadd.f32 %v9127, %v9241
      %v9294 = vadd.f32 %v9128, %v9243
      %v9295 = vadd.f32 %v9129, %v9245
      %v9296 = vadd.f32 %v9130, %v9247
      %v9297 = vadd.f32 %v9131, %v9249
      %v9298 = vadd.f32 %v9274, %v9275
      %9299 = vadd.xlane.f32.xlu0 %v9298
      %v9300 = vpop.xlane.xlu0 %9299
      %v9301 = vadd.f32 %v9276, %v9277
      %9302 = vadd.xlane.f32.xlu0 %v9301
      %v9303 = vpop.xlane.xlu0 %9302
      %v9304 = vadd.f32 %v9278, %v9279
      %9305 = vadd.xlane.f32.xlu0 %v9304
      %v9306 = vpop.xlane.xlu0 %9305
      %v9307 = vadd.f32 %v9280, %v9281
      %9308 = vadd.xlane.f32.xlu0 %v9307
      %v9309 = vpop.xlane.xlu0 %9308
      %v9310 = vadd.f32 %v9282, %v9283
      %9311 = vadd.xlane.f32.xlu0 %v9310
      %v9312 = vpop.xlane.xlu0 %9311
      %v9313 = vadd.f32 %v9284, %v9285
      %9314 = vadd.xlane.f32.xlu0 %v9313
      %v9315 = vpop.xlane.xlu0 %9314
      %v9316 = vadd.f32 %v9286, %v9287
      %9317 = vadd.xlane.f32.xlu0 %v9316
      %v9318 = vpop.xlane.xlu0 %9317
      %v9319 = vadd.f32 %v9288, %v9289
      %9320 = vadd.xlane.f32.xlu0 %v9319
      %v9321 = vpop.xlane.xlu0 %9320
      %v9322 = vadd.f32 %v9290, %v9291
      %9323 = vadd.xlane.f32.xlu0 %v9322
      %v9324 = vpop.xlane.xlu0 %9323
      %v9325 = vadd.f32 %v9292, %v9293
      %9326 = vadd.xlane.f32.xlu0 %v9325
      %v9327 = vpop.xlane.xlu0 %9326
      %v9328 = vadd.f32 %v9294, %v9295
      %9329 = vadd.xlane.f32.xlu0 %v9328
      %v9330 = vpop.xlane.xlu0 %9329
      %v9331 = vadd.f32 %v9296, %v9297
      %9332 = vadd.xlane.f32.xlu0 %v9331
      %v9333 = vpop.xlane.xlu0 %9332
      %v9334 = vld [vmem:[#allocation3] sm:$0x1]
      %v9336 = vlaneseq
      %v9337 = vshrl.u32 %v9336, 7
      %v9338 = vsub.s32 0, %v9337
      %v9339 = vrot.slane %v9334, %v9338
      %v9341 = vadd.f32 %v9300, %v9339
      %v9342 = vadd.f32 %v9303, %v9339
      %v9343 = vadd.f32 %v9306, %v9339
      %v9344 = vadd.f32 %v9309, %v9339
      %v9345 = vadd.f32 %v9312, %v9339
      %v9346 = vadd.f32 %v9315, %v9339
      %v9347 = vadd.f32 %v9318, %v9339
      %v9348 = vadd.f32 %v9321, %v9339
      %v9349 = vadd.f32 %v9324, %v9339
      %v9350 = vadd.f32 %v9327, %v9339
      %v9351 = vadd.f32 %v9330, %v9339
      %v9352 = vadd.f32 %v9333, %v9339
      %v9353 = vtanh.pop %v9341
      %v9354 = vtanh.pop %v9342
      %v9355 = vtanh.pop %v9343
      %v9356 = vtanh.pop %v9344
      %v9357 = vtanh.pop %v9345
      %v9358 = vtanh.pop %v9346
      %v9359 = vtanh.pop %v9347
      %v9360 = vtanh.pop %v9348
      %v9361 = vtanh.pop %v9349
      %v9362 = vtanh.pop %v9350
      %v9363 = vtanh.pop %v9351
      %v9364 = vtanh.pop %v9352
      %9365 = vst.msk [vmem:[%s226 + $0x60] sm:$0xff] %vm7865, %v9353
      %9366 = vst.msk [vmem:[%s226 + $0x68] sm:$0xff] %vm7865, %v9354
      %9367 = vst.msk [vmem:[%s226 + $0x70] sm:$0xff] %vm7865, %v9355
      %9368 = vst.msk [vmem:[%s226 + $0x78] sm:$0xff] %vm7865, %v9356
      %9369 = vst.msk [vmem:[%s226 + $0x80] sm:$0xff] %vm7865, %v9357
      %9370 = vst.msk [vmem:[%s226 + $0x88] sm:$0xff] %vm7865, %v9358
      %9371 = vst.msk [vmem:[%s226 + $0x90] sm:$0xff] %vm7865, %v9359
      %9372 = vst.msk [vmem:[%s226 + $0x98] sm:$0xff] %vm7865, %v9360
      %9373 = vst.msk [vmem:[%s226 + $0xa0] sm:$0xff] %vm7865, %v9361
      %9374 = vst.msk [vmem:[%s226 + $0xa8] sm:$0xff] %vm7865, %v9362
      %9375 = vst.msk [vmem:[%s226 + $0xb0] sm:$0xff] %vm7865, %v9363
      %9376 = vst.msk [vmem:[%s226 + $0xb8] sm:$0xff] %vm7865, %v9364
      %v9377 = vld [vmem:[#allocation2 + $0x180] sm:$0xff]
      %v9378 = vld [vmem:[#allocation2 + $0x188] sm:$0xff]
      %v9379 = vld [vmem:[#allocation2 + $0x190] sm:$0xff]
      %v9380 = vld [vmem:[#allocation2 + $0x198] sm:$0xff]
      %v9381 = vld [vmem:[#allocation2 + $0x1a0] sm:$0xff]
      %v9382 = vld [vmem:[#allocation2 + $0x1a8] sm:$0xff]
      %v9383 = vld [vmem:[#allocation2 + $0x1b0] sm:$0xff]
      %v9384 = vld [vmem:[#allocation2 + $0x1b8] sm:$0xff]
      %v9385 = vld [vmem:[#allocation2 + $0x1c0] sm:$0xff]
      %v9386 = vld [vmem:[#allocation2 + $0x1c8] sm:$0xff]
      %v9387 = vld [vmem:[#allocation2 + $0x1d0] sm:$0xff]
      %v9388 = vld [vmem:[#allocation2 + $0x1d8] sm:$0xff]
      %v9389 = vld [vmem:[#allocation2 + $0x1e0] sm:$0xff]
      %v9390 = vld [vmem:[#allocation2 + $0x1e8] sm:$0xff]
      %v9391 = vld [vmem:[#allocation2 + $0x1f0] sm:$0xff]
      %v9392 = vld [vmem:[#allocation2 + $0x1f8] sm:$0xff]
      %v9393 = vld [vmem:[#allocation2 + $0x200] sm:$0xff]
      %v9394 = vld [vmem:[#allocation2 + $0x208] sm:$0xff]
      %v9395 = vld [vmem:[#allocation2 + $0x210] sm:$0xff]
      %v9396 = vld [vmem:[#allocation2 + $0x218] sm:$0xff]
      %v9397 = vld [vmem:[#allocation2 + $0x220] sm:$0xff]
      %v9398 = vld [vmem:[#allocation2 + $0x228] sm:$0xff]
      %v9399 = vld [vmem:[#allocation2 + $0x230] sm:$0xff]
      %v9400 = vld [vmem:[#allocation2 + $0x238] sm:$0xff]
      %v9401 = vld [vmem:[%s3] ss:$8 sm:$0x3]
      %v9403 = vlaneseq
      %v9404 = vshrl.u32 %v9403, 7
      %v9405 = vsub.s32 0, %v9404
      %v9406 = vrot.slane %v9401, %v9405
      %v9407 = vlaneseq
      %v9408 = vshrl.u32 %v9407, 7
      %v9409 = vsub.s32 1, %v9408
      %v9410 = vrot.slane %v9401, %v9409
      %v9413 = vmul.f32 %v9377, %v9406
      %v9414 = vmul.f32 %v9378, %v9410
      %v9415 = vmul.f32 %v9379, %v9406
      %v9416 = vmul.f32 %v9380, %v9410
      %v9417 = vmul.f32 %v9381, %v9406
      %v9418 = vmul.f32 %v9382, %v9410
      %v9419 = vmul.f32 %v9383, %v9406
      %v9420 = vmul.f32 %v9384, %v9410
      %v9421 = vmul.f32 %v9385, %v9406
      %v9422 = vmul.f32 %v9386, %v9410
      %v9423 = vmul.f32 %v9387, %v9406
      %v9424 = vmul.f32 %v9388, %v9410
      %v9425 = vmul.f32 %v9389, %v9406
      %v9426 = vmul.f32 %v9390, %v9410
      %v9427 = vmul.f32 %v9391, %v9406
      %v9428 = vmul.f32 %v9392, %v9410
      %v9429 = vmul.f32 %v9393, %v9406
      %v9430 = vmul.f32 %v9394, %v9410
      %v9431 = vmul.f32 %v9395, %v9406
      %v9432 = vmul.f32 %v9396, %v9410
      %v9433 = vmul.f32 %v9397, %v9406
      %v9434 = vmul.f32 %v9398, %v9410
      %v9435 = vmul.f32 %v9399, %v9406
      %v9436 = vmul.f32 %v9400, %v9410
      %v9437 = vadd.f32 %v9413, 0.0
      %v9438 = vadd.f32 %v9414, 0.0
      %v9439 = vadd.f32 %v9415, 0.0
      %v9440 = vadd.f32 %v9416, 0.0
      %v9441 = vadd.f32 %v9417, 0.0
      %v9442 = vadd.f32 %v9418, 0.0
      %v9443 = vadd.f32 %v9419, 0.0
      %v9444 = vadd.f32 %v9420, 0.0
      %v9445 = vadd.f32 %v9421, 0.0
      %v9446 = vadd.f32 %v9422, 0.0
      %v9447 = vadd.f32 %v9423, 0.0
      %v9448 = vadd.f32 %v9424, 0.0
      %v9449 = vadd.f32 %v9425, 0.0
      %v9450 = vadd.f32 %v9426, 0.0
      %v9451 = vadd.f32 %v9427, 0.0
      %v9452 = vadd.f32 %v9428, 0.0
      %v9453 = vadd.f32 %v9429, 0.0
      %v9454 = vadd.f32 %v9430, 0.0
      %v9455 = vadd.f32 %v9431, 0.0
      %v9456 = vadd.f32 %v9432, 0.0
      %v9457 = vadd.f32 %v9433, 0.0
      %v9458 = vadd.f32 %v9434, 0.0
      %v9459 = vadd.f32 %v9435, 0.0
      %v9460 = vadd.f32 %v9436, 0.0
      %v9461 = vld [vmem:[#allocation2 + $0x180] sm:$0xfe]
      %v9462 = vld [vmem:[#allocation2 + $0x188] sm:$0xfe]
      %v9463 = vld [vmem:[#allocation2 + $0x240] sm:$0x1]
      %v9464 = vld [vmem:[#allocation2 + $0x248] sm:$0x1]
      %v9465 = vld [vmem:[%s6453] ss:$8 sm:$0x3]
      %v9467 = vlaneseq
      %v9468 = vshrl.u32 %v9467, 7
      %v9469 = vsub.s32 0, %v9468
      %v9470 = vrot.slane %v9465, %v9469
      %v9471 = vlaneseq
      %v9472 = vshrl.u32 %v9471, 7
      %v9473 = vsub.s32 1, %v9472
      %v9474 = vrot.slane %v9465, %v9473
      %v9477 = vmul.f32 %v9461, %v9470
      %v9478 = vmul.f32 %v9462, %v9474
      %v9479 = vmul.f32 %v9379, %v9470
      %v9480 = vmul.f32 %v9380, %v9474
      %v9481 = vmul.f32 %v9381, %v9470
      %v9482 = vmul.f32 %v9382, %v9474
      %v9483 = vmul.f32 %v9383, %v9470
      %v9484 = vmul.f32 %v9384, %v9474
      %v9485 = vmul.f32 %v9385, %v9470
      %v9486 = vmul.f32 %v9386, %v9474
      %v9487 = vmul.f32 %v9387, %v9470
      %v9488 = vmul.f32 %v9388, %v9474
      %v9489 = vmul.f32 %v9389, %v9470
      %v9490 = vmul.f32 %v9390, %v9474
      %v9491 = vmul.f32 %v9391, %v9470
      %v9492 = vmul.f32 %v9392, %v9474
      %v9493 = vmul.f32 %v9393, %v9470
      %v9494 = vmul.f32 %v9394, %v9474
      %v9495 = vmul.f32 %v9395, %v9470
      %v9496 = vmul.f32 %v9396, %v9474
      %v9497 = vmul.f32 %v9397, %v9470
      %v9498 = vmul.f32 %v9398, %v9474
      %v9499 = vmul.f32 %v9399, %v9470
      %v9500 = vmul.f32 %v9400, %v9474
      %v9501 = vmul.f32 %v9463, %v9470
      %v9502 = vmul.f32 %v9464, %v9474
      %v9529 = vrot.slane %v9477, 1
      %v9530 = vrot.slane %v9479, 1
      %v9531 = vsel %vm6518, %v9529, %v9530
      %v9532 = vrot.slane %v9478, 1
      %v9533 = vrot.slane %v9480, 1
      %v9534 = vsel %vm6518, %v9532, %v9533
      %v9535 = vrot.slane %v9481, 1
      %v9536 = vsel %vm6518, %v9530, %v9535
      %v9537 = vrot.slane %v9482, 1
      %v9538 = vsel %vm6518, %v9533, %v9537
      %v9539 = vrot.slane %v9483, 1
      %v9540 = vsel %vm6518, %v9535, %v9539
      %v9541 = vrot.slane %v9484, 1
      %v9542 = vsel %vm6518, %v9537, %v9541
      %v9543 = vrot.slane %v9485, 1
      %v9544 = vsel %vm6518, %v9539, %v9543
      %v9545 = vrot.slane %v9486, 1
      %v9546 = vsel %vm6518, %v9541, %v9545
      %v9547 = vrot.slane %v9487, 1
      %v9548 = vsel %vm6518, %v9543, %v9547
      %v9549 = vrot.slane %v9488, 1
      %v9550 = vsel %vm6518, %v9545, %v9549
      %v9551 = vrot.slane %v9489, 1
      %v9552 = vsel %vm6518, %v9547, %v9551
      %v9553 = vrot.slane %v9490, 1
      %v9554 = vsel %vm6518, %v9549, %v9553
      %v9555 = vrot.slane %v9491, 1
      %v9556 = vsel %vm6518, %v9551, %v9555
      %v9557 = vrot.slane %v9492, 1
      %v9558 = vsel %vm6518, %v9553, %v9557
      %v9559 = vrot.slane %v9493, 1
      %v9560 = vsel %vm6518, %v9555, %v9559
      %v9561 = vrot.slane %v9494, 1
      %v9562 = vsel %vm6518, %v9557, %v9561
      %v9563 = vrot.slane %v9495, 1
      %v9564 = vsel %vm6518, %v9559, %v9563
      %v9565 = vrot.slane %v9496, 1
      %v9566 = vsel %vm6518, %v9561, %v9565
      %v9567 = vrot.slane %v9497, 1
      %v9568 = vsel %vm6518, %v9563, %v9567
      %v9569 = vrot.slane %v9498, 1
      %v9570 = vsel %vm6518, %v9565, %v9569
      %v9571 = vrot.slane %v9499, 1
      %v9572 = vsel %vm6518, %v9567, %v9571
      %v9573 = vrot.slane %v9500, 1
      %v9574 = vsel %vm6518, %v9569, %v9573
      %v9575 = vrot.slane %v9501, 1
      %v9576 = vsel %vm6518, %v9571, %v9575
      %v9577 = vrot.slane %v9502, 1
      %v9578 = vsel %vm6518, %v9573, %v9577
      %v9603 = vadd.f32 %v9437, %v9531
      %v9604 = vadd.f32 %v9438, %v9534
      %v9605 = vadd.f32 %v9439, %v9536
      %v9606 = vadd.f32 %v9440, %v9538
      %v9607 = vadd.f32 %v9441, %v9540
      %v9608 = vadd.f32 %v9442, %v9542
      %v9609 = vadd.f32 %v9443, %v9544
      %v9610 = vadd.f32 %v9444, %v9546
      %v9611 = vadd.f32 %v9445, %v9548
      %v9612 = vadd.f32 %v9446, %v9550
      %v9613 = vadd.f32 %v9447, %v9552
      %v9614 = vadd.f32 %v9448, %v9554
      %v9615 = vadd.f32 %v9449, %v9556
      %v9616 = vadd.f32 %v9450, %v9558
      %v9617 = vadd.f32 %v9451, %v9560
      %v9618 = vadd.f32 %v9452, %v9562
      %v9619 = vadd.f32 %v9453, %v9564
      %v9620 = vadd.f32 %v9454, %v9566
      %v9621 = vadd.f32 %v9455, %v9568
      %v9622 = vadd.f32 %v9456, %v9570
      %v9623 = vadd.f32 %v9457, %v9572
      %v9624 = vadd.f32 %v9458, %v9574
      %v9625 = vadd.f32 %v9459, %v9576
      %v9626 = vadd.f32 %v9460, %v9578
      %v9627 = vld [vmem:[#allocation2 + $0x180] sm:$0xfc]
      %v9628 = vld [vmem:[#allocation2 + $0x188] sm:$0xfc]
      %v9629 = vld [vmem:[#allocation2 + $0x240] sm:$0x3]
      %v9630 = vld [vmem:[#allocation2 + $0x248] sm:$0x3]
      %v9631 = vld [vmem:[%s6621] ss:$8 sm:$0x3]
      %v9633 = vlaneseq
      %v9634 = vshrl.u32 %v9633, 7
      %v9635 = vsub.s32 0, %v9634
      %v9636 = vrot.slane %v9631, %v9635
      %v9637 = vlaneseq
      %v9638 = vshrl.u32 %v9637, 7
      %v9639 = vsub.s32 1, %v9638
      %v9640 = vrot.slane %v9631, %v9639
      %v9643 = vmul.f32 %v9627, %v9636
      %v9644 = vmul.f32 %v9628, %v9640
      %v9645 = vmul.f32 %v9379, %v9636
      %v9646 = vmul.f32 %v9380, %v9640
      %v9647 = vmul.f32 %v9381, %v9636
      %v9648 = vmul.f32 %v9382, %v9640
      %v9649 = vmul.f32 %v9383, %v9636
      %v9650 = vmul.f32 %v9384, %v9640
      %v9651 = vmul.f32 %v9385, %v9636
      %v9652 = vmul.f32 %v9386, %v9640
      %v9653 = vmul.f32 %v9387, %v9636
      %v9654 = vmul.f32 %v9388, %v9640
      %v9655 = vmul.f32 %v9389, %v9636
      %v9656 = vmul.f32 %v9390, %v9640
      %v9657 = vmul.f32 %v9391, %v9636
      %v9658 = vmul.f32 %v9392, %v9640
      %v9659 = vmul.f32 %v9393, %v9636
      %v9660 = vmul.f32 %v9394, %v9640
      %v9661 = vmul.f32 %v9395, %v9636
      %v9662 = vmul.f32 %v9396, %v9640
      %v9663 = vmul.f32 %v9397, %v9636
      %v9664 = vmul.f32 %v9398, %v9640
      %v9665 = vmul.f32 %v9399, %v9636
      %v9666 = vmul.f32 %v9400, %v9640
      %v9667 = vmul.f32 %v9629, %v9636
      %v9668 = vmul.f32 %v9630, %v9640
      %v9695 = vrot.slane %v9643, 2
      %v9696 = vrot.slane %v9645, 2
      %v9697 = vsel %vm6686, %v9695, %v9696
      %v9698 = vrot.slane %v9644, 2
      %v9699 = vrot.slane %v9646, 2
      %v9700 = vsel %vm6686, %v9698, %v9699
      %v9701 = vrot.slane %v9647, 2
      %v9702 = vsel %vm6686, %v9696, %v9701
      %v9703 = vrot.slane %v9648, 2
      %v9704 = vsel %vm6686, %v9699, %v9703
      %v9705 = vrot.slane %v9649, 2
      %v9706 = vsel %vm6686, %v9701, %v9705
      %v9707 = vrot.slane %v9650, 2
      %v9708 = vsel %vm6686, %v9703, %v9707
      %v9709 = vrot.slane %v9651, 2
      %v9710 = vsel %vm6686, %v9705, %v9709
      %v9711 = vrot.slane %v9652, 2
      %v9712 = vsel %vm6686, %v9707, %v9711
      %v9713 = vrot.slane %v9653, 2
      %v9714 = vsel %vm6686, %v9709, %v9713
      %v9715 = vrot.slane %v9654, 2
      %v9716 = vsel %vm6686, %v9711, %v9715
      %v9717 = vrot.slane %v9655, 2
      %v9718 = vsel %vm6686, %v9713, %v9717
      %v9719 = vrot.slane %v9656, 2
      %v9720 = vsel %vm6686, %v9715, %v9719
      %v9721 = vrot.slane %v9657, 2
      %v9722 = vsel %vm6686, %v9717, %v9721
      %v9723 = vrot.slane %v9658, 2
      %v9724 = vsel %vm6686, %v9719, %v9723
      %v9725 = vrot.slane %v9659, 2
      %v9726 = vsel %vm6686, %v9721, %v9725
      %v9727 = vrot.slane %v9660, 2
      %v9728 = vsel %vm6686, %v9723, %v9727
      %v9729 = vrot.slane %v9661, 2
      %v9730 = vsel %vm6686, %v9725, %v9729
      %v9731 = vrot.slane %v9662, 2
      %v9732 = vsel %vm6686, %v9727, %v9731
      %v9733 = vrot.slane %v9663, 2
      %v9734 = vsel %vm6686, %v9729, %v9733
      %v9735 = vrot.slane %v9664, 2
      %v9736 = vsel %vm6686, %v9731, %v9735
      %v9737 = vrot.slane %v9665, 2
      %v9738 = vsel %vm6686, %v9733, %v9737
      %v9739 = vrot.slane %v9666, 2
      %v9740 = vsel %vm6686, %v9735, %v9739
      %v9741 = vrot.slane %v9667, 2
      %v9742 = vsel %vm6686, %v9737, %v9741
      %v9743 = vrot.slane %v9668, 2
      %v9744 = vsel %vm6686, %v9739, %v9743
      %v9769 = vadd.f32 %v9603, %v9697
      %v9770 = vadd.f32 %v9604, %v9700
      %v9771 = vadd.f32 %v9605, %v9702
      %v9772 = vadd.f32 %v9606, %v9704
      %v9773 = vadd.f32 %v9607, %v9706
      %v9774 = vadd.f32 %v9608, %v9708
      %v9775 = vadd.f32 %v9609, %v9710
      %v9776 = vadd.f32 %v9610, %v9712
      %v9777 = vadd.f32 %v9611, %v9714
      %v9778 = vadd.f32 %v9612, %v9716
      %v9779 = vadd.f32 %v9613, %v9718
      %v9780 = vadd.f32 %v9614, %v9720
      %v9781 = vadd.f32 %v9615, %v9722
      %v9782 = vadd.f32 %v9616, %v9724
      %v9783 = vadd.f32 %v9617, %v9726
      %v9784 = vadd.f32 %v9618, %v9728
      %v9785 = vadd.f32 %v9619, %v9730
      %v9786 = vadd.f32 %v9620, %v9732
      %v9787 = vadd.f32 %v9621, %v9734
      %v9788 = vadd.f32 %v9622, %v9736
      %v9789 = vadd.f32 %v9623, %v9738
      %v9790 = vadd.f32 %v9624, %v9740
      %v9791 = vadd.f32 %v9625, %v9742
      %v9792 = vadd.f32 %v9626, %v9744
      %v9793 = vld [vmem:[#allocation2 + $0x1a0] sm:$0xfc]
      %v9794 = vld [vmem:[#allocation2 + $0x1a8] sm:$0xfc]
      %v9795 = vld [vmem:[#allocation2 + $0x240] sm:$0xff]
      %v9796 = vld [vmem:[#allocation2 + $0x248] sm:$0xff]
      %v9797 = vld [vmem:[#allocation2 + $0x250] sm:$0xff]
      %v9798 = vld [vmem:[#allocation2 + $0x258] sm:$0xff]
      %v9799 = vld [vmem:[#allocation2 + $0x260] sm:$0x3]
      %v9800 = vld [vmem:[#allocation2 + $0x268] sm:$0x3]
      %v9801 = vld [vmem:[%s6793] ss:$8 sm:$0x3]
      %v9803 = vlaneseq
      %v9804 = vshrl.u32 %v9803, 7
      %v9805 = vsub.s32 0, %v9804
      %v9806 = vrot.slane %v9801, %v9805
      %v9807 = vlaneseq
      %v9808 = vshrl.u32 %v9807, 7
      %v9809 = vsub.s32 1, %v9808
      %v9810 = vrot.slane %v9801, %v9809
      %v9813 = vmul.f32 %v9793, %v9806
      %v9814 = vmul.f32 %v9794, %v9810
      %v9815 = vmul.f32 %v9383, %v9806
      %v9816 = vmul.f32 %v9384, %v9810
      %v9817 = vmul.f32 %v9385, %v9806
      %v9818 = vmul.f32 %v9386, %v9810
      %v9819 = vmul.f32 %v9387, %v9806
      %v9820 = vmul.f32 %v9388, %v9810
      %v9821 = vmul.f32 %v9389, %v9806
      %v9822 = vmul.f32 %v9390, %v9810
      %v9823 = vmul.f32 %v9391, %v9806
      %v9824 = vmul.f32 %v9392, %v9810
      %v9825 = vmul.f32 %v9393, %v9806
      %v9826 = vmul.f32 %v9394, %v9810
      %v9827 = vmul.f32 %v9395, %v9806
      %v9828 = vmul.f32 %v9396, %v9810
      %v9829 = vmul.f32 %v9397, %v9806
      %v9830 = vmul.f32 %v9398, %v9810
      %v9831 = vmul.f32 %v9399, %v9806
      %v9832 = vmul.f32 %v9400, %v9810
      %v9833 = vmul.f32 %v9795, %v9806
      %v9834 = vmul.f32 %v9796, %v9810
      %v9835 = vmul.f32 %v9797, %v9806
      %v9836 = vmul.f32 %v9798, %v9810
      %v9837 = vmul.f32 %v9799, %v9806
      %v9838 = vmul.f32 %v9800, %v9810
      %v9865 = vrot.slane %v9813, 2
      %v9866 = vrot.slane %v9815, 2
      %v9867 = vsel %vm6686, %v9865, %v9866
      %v9868 = vrot.slane %v9814, 2
      %v9869 = vrot.slane %v9816, 2
      %v9870 = vsel %vm6686, %v9868, %v9869
      %v9871 = vrot.slane %v9817, 2
      %v9872 = vsel %vm6686, %v9866, %v9871
      %v9873 = vrot.slane %v9818, 2
      %v9874 = vsel %vm6686, %v9869, %v9873
      %v9875 = vrot.slane %v9819, 2
      %v9876 = vsel %vm6686, %v9871, %v9875
      %v9877 = vrot.slane %v9820, 2
      %v9878 = vsel %vm6686, %v9873, %v9877
      %v9879 = vrot.slane %v9821, 2
      %v9880 = vsel %vm6686, %v9875, %v9879
      %v9881 = vrot.slane %v9822, 2
      %v9882 = vsel %vm6686, %v9877, %v9881
      %v9883 = vrot.slane %v9823, 2
      %v9884 = vsel %vm6686, %v9879, %v9883
      %v9885 = vrot.slane %v9824, 2
      %v9886 = vsel %vm6686, %v9881, %v9885
      %v9887 = vrot.slane %v9825, 2
      %v9888 = vsel %vm6686, %v9883, %v9887
      %v9889 = vrot.slane %v9826, 2
      %v9890 = vsel %vm6686, %v9885, %v9889
      %v9891 = vrot.slane %v9827, 2
      %v9892 = vsel %vm6686, %v9887, %v9891
      %v9893 = vrot.slane %v9828, 2
      %v9894 = vsel %vm6686, %v9889, %v9893
      %v9895 = vrot.slane %v9829, 2
      %v9896 = vsel %vm6686, %v9891, %v9895
      %v9897 = vrot.slane %v9830, 2
      %v9898 = vsel %vm6686, %v9893, %v9897
      %v9899 = vrot.slane %v9831, 2
      %v9900 = vsel %vm6686, %v9895, %v9899
      %v9901 = vrot.slane %v9832, 2
      %v9902 = vsel %vm6686, %v9897, %v9901
      %v9903 = vrot.slane %v9833, 2
      %v9904 = vsel %vm6686, %v9899, %v9903
      %v9905 = vrot.slane %v9834, 2
      %v9906 = vsel %vm6686, %v9901, %v9905
      %v9907 = vrot.slane %v9835, 2
      %v9908 = vsel %vm6686, %v9903, %v9907
      %v9909 = vrot.slane %v9836, 2
      %v9910 = vsel %vm6686, %v9905, %v9909
      %v9911 = vrot.slane %v9837, 2
      %v9912 = vsel %vm6686, %v9907, %v9911
      %v9913 = vrot.slane %v9838, 2
      %v9914 = vsel %vm6686, %v9909, %v9913
      %v9939 = vadd.f32 %v9769, %v9867
      %v9940 = vadd.f32 %v9770, %v9870
      %v9941 = vadd.f32 %v9771, %v9872
      %v9942 = vadd.f32 %v9772, %v9874
      %v9943 = vadd.f32 %v9773, %v9876
      %v9944 = vadd.f32 %v9774, %v9878
      %v9945 = vadd.f32 %v9775, %v9880
      %v9946 = vadd.f32 %v9776, %v9882
      %v9947 = vadd.f32 %v9777, %v9884
      %v9948 = vadd.f32 %v9778, %v9886
      %v9949 = vadd.f32 %v9779, %v9888
      %v9950 = vadd.f32 %v9780, %v9890
      %v9951 = vadd.f32 %v9781, %v9892
      %v9952 = vadd.f32 %v9782, %v9894
      %v9953 = vadd.f32 %v9783, %v9896
      %v9954 = vadd.f32 %v9784, %v9898
      %v9955 = vadd.f32 %v9785, %v9900
      %v9956 = vadd.f32 %v9786, %v9902
      %v9957 = vadd.f32 %v9787, %v9904
      %v9958 = vadd.f32 %v9788, %v9906
      %v9959 = vadd.f32 %v9789, %v9908
      %v9960 = vadd.f32 %v9790, %v9910
      %v9961 = vadd.f32 %v9791, %v9912
      %v9962 = vadd.f32 %v9792, %v9914
      %v9963 = vld [vmem:[#allocation2 + $0x1a0] sm:$0xf8]
      %v9964 = vld [vmem:[#allocation2 + $0x1a8] sm:$0xf8]
      %v9965 = vld [vmem:[#allocation2 + $0x260] sm:$0x7]
      %v9966 = vld [vmem:[#allocation2 + $0x268] sm:$0x7]
      %v9967 = vld [vmem:[%s6960] ss:$8 sm:$0x3]
      %v9969 = vlaneseq
      %v9970 = vshrl.u32 %v9969, 7
      %v9971 = vsub.s32 0, %v9970
      %v9972 = vrot.slane %v9967, %v9971
      %v9973 = vlaneseq
      %v9974 = vshrl.u32 %v9973, 7
      %v9975 = vsub.s32 1, %v9974
      %v9976 = vrot.slane %v9967, %v9975
      %v9979 = vmul.f32 %v9963, %v9972
      %v9980 = vmul.f32 %v9964, %v9976
      %v9981 = vmul.f32 %v9383, %v9972
      %v9982 = vmul.f32 %v9384, %v9976
      %v9983 = vmul.f32 %v9385, %v9972
      %v9984 = vmul.f32 %v9386, %v9976
      %v9985 = vmul.f32 %v9387, %v9972
      %v9986 = vmul.f32 %v9388, %v9976
      %v9987 = vmul.f32 %v9389, %v9972
      %v9988 = vmul.f32 %v9390, %v9976
      %v9989 = vmul.f32 %v9391, %v9972
      %v9990 = vmul.f32 %v9392, %v9976
      %v9991 = vmul.f32 %v9393, %v9972
      %v9992 = vmul.f32 %v9394, %v9976
      %v9993 = vmul.f32 %v9395, %v9972
      %v9994 = vmul.f32 %v9396, %v9976
      %v9995 = vmul.f32 %v9397, %v9972
      %v9996 = vmul.f32 %v9398, %v9976
      %v9997 = vmul.f32 %v9399, %v9972
      %v9998 = vmul.f32 %v9400, %v9976
      %v9999 = vmul.f32 %v9795, %v9972
      %v10000 = vmul.f32 %v9796, %v9976
      %v10001 = vmul.f32 %v9797, %v9972
      %v10002 = vmul.f32 %v9798, %v9976
      %v10003 = vmul.f32 %v9965, %v9972
      %v10004 = vmul.f32 %v9966, %v9976
      %v10031 = vrot.slane %v9979, 3
      %v10032 = vrot.slane %v9981, 3
      %v10033 = vsel %vm7025, %v10031, %v10032
      %v10034 = vrot.slane %v9980, 3
      %v10035 = vrot.slane %v9982, 3
      %v10036 = vsel %vm7025, %v10034, %v10035
      %v10037 = vrot.slane %v9983, 3
      %v10038 = vsel %vm7025, %v10032, %v10037
      %v10039 = vrot.slane %v9984, 3
      %v10040 = vsel %vm7025, %v10035, %v10039
      %v10041 = vrot.slane %v9985, 3
      %v10042 = vsel %vm7025, %v10037, %v10041
      %v10043 = vrot.slane %v9986, 3
      %v10044 = vsel %vm7025, %v10039, %v10043
      %v10045 = vrot.slane %v9987, 3
      %v10046 = vsel %vm7025, %v10041, %v10045
      %v10047 = vrot.slane %v9988, 3
      %v10048 = vsel %vm7025, %v10043, %v10047
      %v10049 = vrot.slane %v9989, 3
      %v10050 = vsel %vm7025, %v10045, %v10049
      %v10051 = vrot.slane %v9990, 3
      %v10052 = vsel %vm7025, %v10047, %v10051
      %v10053 = vrot.slane %v9991, 3
      %v10054 = vsel %vm7025, %v10049, %v10053
      %v10055 = vrot.slane %v9992, 3
      %v10056 = vsel %vm7025, %v10051, %v10055
      %v10057 = vrot.slane %v9993, 3
      %v10058 = vsel %vm7025, %v10053, %v10057
      %v10059 = vrot.slane %v9994, 3
      %v10060 = vsel %vm7025, %v10055, %v10059
      %v10061 = vrot.slane %v9995, 3
      %v10062 = vsel %vm7025, %v10057, %v10061
      %v10063 = vrot.slane %v9996, 3
      %v10064 = vsel %vm7025, %v10059, %v10063
      %v10065 = vrot.slane %v9997, 3
      %v10066 = vsel %vm7025, %v10061, %v10065
      %v10067 = vrot.slane %v9998, 3
      %v10068 = vsel %vm7025, %v10063, %v10067
      %v10069 = vrot.slane %v9999, 3
      %v10070 = vsel %vm7025, %v10065, %v10069
      %v10071 = vrot.slane %v10000, 3
      %v10072 = vsel %vm7025, %v10067, %v10071
      %v10073 = vrot.slane %v10001, 3
      %v10074 = vsel %vm7025, %v10069, %v10073
      %v10075 = vrot.slane %v10002, 3
      %v10076 = vsel %vm7025, %v10071, %v10075
      %v10077 = vrot.slane %v10003, 3
      %v10078 = vsel %vm7025, %v10073, %v10077
      %v10079 = vrot.slane %v10004, 3
      %v10080 = vsel %vm7025, %v10075, %v10079
      %v10105 = vadd.f32 %v9939, %v10033
      %v10106 = vadd.f32 %v9940, %v10036
      %v10107 = vadd.f32 %v9941, %v10038
      %v10108 = vadd.f32 %v9942, %v10040
      %v10109 = vadd.f32 %v9943, %v10042
      %v10110 = vadd.f32 %v9944, %v10044
      %v10111 = vadd.f32 %v9945, %v10046
      %v10112 = vadd.f32 %v9946, %v10048
      %v10113 = vadd.f32 %v9947, %v10050
      %v10114 = vadd.f32 %v9948, %v10052
      %v10115 = vadd.f32 %v9949, %v10054
      %v10116 = vadd.f32 %v9950, %v10056
      %v10117 = vadd.f32 %v9951, %v10058
      %v10118 = vadd.f32 %v9952, %v10060
      %v10119 = vadd.f32 %v9953, %v10062
      %v10120 = vadd.f32 %v9954, %v10064
      %v10121 = vadd.f32 %v9955, %v10066
      %v10122 = vadd.f32 %v9956, %v10068
      %v10123 = vadd.f32 %v9957, %v10070
      %v10124 = vadd.f32 %v9958, %v10072
      %v10125 = vadd.f32 %v9959, %v10074
      %v10126 = vadd.f32 %v9960, %v10076
      %v10127 = vadd.f32 %v9961, %v10078
      %v10128 = vadd.f32 %v9962, %v10080
      %v10129 = vld [vmem:[#allocation2 + $0x1a0] sm:$0xf0]
      %v10130 = vld [vmem:[#allocation2 + $0x1a8] sm:$0xf0]
      %v10131 = vld [vmem:[#allocation2 + $0x260] sm:$0xf]
      %v10132 = vld [vmem:[#allocation2 + $0x268] sm:$0xf]
      %v10133 = vld [vmem:[%s7128] ss:$8 sm:$0x3]
      %v10135 = vlaneseq
      %v10136 = vshrl.u32 %v10135, 7
      %v10137 = vsub.s32 0, %v10136
      %v10138 = vrot.slane %v10133, %v10137
      %v10139 = vlaneseq
      %v10140 = vshrl.u32 %v10139, 7
      %v10141 = vsub.s32 1, %v10140
      %v10142 = vrot.slane %v10133, %v10141
      %v10145 = vmul.f32 %v10129, %v10138
      %v10146 = vmul.f32 %v10130, %v10142
      %v10147 = vmul.f32 %v9383, %v10138
      %v10148 = vmul.f32 %v9384, %v10142
      %v10149 = vmul.f32 %v9385, %v10138
      %v10150 = vmul.f32 %v9386, %v10142
      %v10151 = vmul.f32 %v9387, %v10138
      %v10152 = vmul.f32 %v9388, %v10142
      %v10153 = vmul.f32 %v9389, %v10138
      %v10154 = vmul.f32 %v9390, %v10142
      %v10155 = vmul.f32 %v9391, %v10138
      %v10156 = vmul.f32 %v9392, %v10142
      %v10157 = vmul.f32 %v9393, %v10138
      %v10158 = vmul.f32 %v9394, %v10142
      %v10159 = vmul.f32 %v9395, %v10138
      %v10160 = vmul.f32 %v9396, %v10142
      %v10161 = vmul.f32 %v9397, %v10138
      %v10162 = vmul.f32 %v9398, %v10142
      %v10163 = vmul.f32 %v9399, %v10138
      %v10164 = vmul.f32 %v9400, %v10142
      %v10165 = vmul.f32 %v9795, %v10138
      %v10166 = vmul.f32 %v9796, %v10142
      %v10167 = vmul.f32 %v9797, %v10138
      %v10168 = vmul.f32 %v9798, %v10142
      %v10169 = vmul.f32 %v10131, %v10138
      %v10170 = vmul.f32 %v10132, %v10142
      %v10197 = vrot.slane %v10145, 4
      %v10198 = vrot.slane %v10147, 4
      %v10199 = vsel %vm7193, %v10197, %v10198
      %v10200 = vrot.slane %v10146, 4
      %v10201 = vrot.slane %v10148, 4
      %v10202 = vsel %vm7193, %v10200, %v10201
      %v10203 = vrot.slane %v10149, 4
      %v10204 = vsel %vm7193, %v10198, %v10203
      %v10205 = vrot.slane %v10150, 4
      %v10206 = vsel %vm7193, %v10201, %v10205
      %v10207 = vrot.slane %v10151, 4
      %v10208 = vsel %vm7193, %v10203, %v10207
      %v10209 = vrot.slane %v10152, 4
      %v10210 = vsel %vm7193, %v10205, %v10209
      %v10211 = vrot.slane %v10153, 4
      %v10212 = vsel %vm7193, %v10207, %v10211
      %v10213 = vrot.slane %v10154, 4
      %v10214 = vsel %vm7193, %v10209, %v10213
      %v10215 = vrot.slane %v10155, 4
      %v10216 = vsel %vm7193, %v10211, %v10215
      %v10217 = vrot.slane %v10156, 4
      %v10218 = vsel %vm7193, %v10213, %v10217
      %v10219 = vrot.slane %v10157, 4
      %v10220 = vsel %vm7193, %v10215, %v10219
      %v10221 = vrot.slane %v10158, 4
      %v10222 = vsel %vm7193, %v10217, %v10221
      %v10223 = vrot.slane %v10159, 4
      %v10224 = vsel %vm7193, %v10219, %v10223
      %v10225 = vrot.slane %v10160, 4
      %v10226 = vsel %vm7193, %v10221, %v10225
      %v10227 = vrot.slane %v10161, 4
      %v10228 = vsel %vm7193, %v10223, %v10227
      %v10229 = vrot.slane %v10162, 4
      %v10230 = vsel %vm7193, %v10225, %v10229
      %v10231 = vrot.slane %v10163, 4
      %v10232 = vsel %vm7193, %v10227, %v10231
      %v10233 = vrot.slane %v10164, 4
      %v10234 = vsel %vm7193, %v10229, %v10233
      %v10235 = vrot.slane %v10165, 4
      %v10236 = vsel %vm7193, %v10231, %v10235
      %v10237 = vrot.slane %v10166, 4
      %v10238 = vsel %vm7193, %v10233, %v10237
      %v10239 = vrot.slane %v10167, 4
      %v10240 = vsel %vm7193, %v10235, %v10239
      %v10241 = vrot.slane %v10168, 4
      %v10242 = vsel %vm7193, %v10237, %v10241
      %v10243 = vrot.slane %v10169, 4
      %v10244 = vsel %vm7193, %v10239, %v10243
      %v10245 = vrot.slane %v10170, 4
      %v10246 = vsel %vm7193, %v10241, %v10245
      %v10271 = vadd.f32 %v10105, %v10199
      %v10272 = vadd.f32 %v10106, %v10202
      %v10273 = vadd.f32 %v10107, %v10204
      %v10274 = vadd.f32 %v10108, %v10206
      %v10275 = vadd.f32 %v10109, %v10208
      %v10276 = vadd.f32 %v10110, %v10210
      %v10277 = vadd.f32 %v10111, %v10212
      %v10278 = vadd.f32 %v10112, %v10214
      %v10279 = vadd.f32 %v10113, %v10216
      %v10280 = vadd.f32 %v10114, %v10218
      %v10281 = vadd.f32 %v10115, %v10220
      %v10282 = vadd.f32 %v10116, %v10222
      %v10283 = vadd.f32 %v10117, %v10224
      %v10284 = vadd.f32 %v10118, %v10226
      %v10285 = vadd.f32 %v10119, %v10228
      %v10286 = vadd.f32 %v10120, %v10230
      %v10287 = vadd.f32 %v10121, %v10232
      %v10288 = vadd.f32 %v10122, %v10234
      %v10289 = vadd.f32 %v10123, %v10236
      %v10290 = vadd.f32 %v10124, %v10238
      %v10291 = vadd.f32 %v10125, %v10240
      %v10292 = vadd.f32 %v10126, %v10242
      %v10293 = vadd.f32 %v10127, %v10244
      %v10294 = vadd.f32 %v10128, %v10246
      %v10295 = vld [vmem:[#allocation2 + $0x1c0] sm:$0xf0]
      %v10296 = vld [vmem:[#allocation2 + $0x1c8] sm:$0xf0]
      %v10297 = vld [vmem:[#allocation2 + $0x260] sm:$0xff]
      %v10298 = vld [vmem:[#allocation2 + $0x268] sm:$0xff]
      %v10299 = vld [vmem:[#allocation2 + $0x270] sm:$0xff]
      %v10300 = vld [vmem:[#allocation2 + $0x278] sm:$0xff]
      %v10301 = vld [vmem:[#allocation2 + $0x280] sm:$0xf]
      %v10302 = vld [vmem:[#allocation2 + $0x288] sm:$0xf]
      %v10303 = vld [vmem:[%s7300] ss:$8 sm:$0x3]
      %v10305 = vlaneseq
      %v10306 = vshrl.u32 %v10305, 7
      %v10307 = vsub.s32 0, %v10306
      %v10308 = vrot.slane %v10303, %v10307
      %v10309 = vlaneseq
      %v10310 = vshrl.u32 %v10309, 7
      %v10311 = vsub.s32 1, %v10310
      %v10312 = vrot.slane %v10303, %v10311
      %v10315 = vmul.f32 %v10295, %v10308
      %v10316 = vmul.f32 %v10296, %v10312
      %v10317 = vmul.f32 %v9387, %v10308
      %v10318 = vmul.f32 %v9388, %v10312
      %v10319 = vmul.f32 %v9389, %v10308
      %v10320 = vmul.f32 %v9390, %v10312
      %v10321 = vmul.f32 %v9391, %v10308
      %v10322 = vmul.f32 %v9392, %v10312
      %v10323 = vmul.f32 %v9393, %v10308
      %v10324 = vmul.f32 %v9394, %v10312
      %v10325 = vmul.f32 %v9395, %v10308
      %v10326 = vmul.f32 %v9396, %v10312
      %v10327 = vmul.f32 %v9397, %v10308
      %v10328 = vmul.f32 %v9398, %v10312
      %v10329 = vmul.f32 %v9399, %v10308
      %v10330 = vmul.f32 %v9400, %v10312
      %v10331 = vmul.f32 %v9795, %v10308
      %v10332 = vmul.f32 %v9796, %v10312
      %v10333 = vmul.f32 %v9797, %v10308
      %v10334 = vmul.f32 %v9798, %v10312
      %v10335 = vmul.f32 %v10297, %v10308
      %v10336 = vmul.f32 %v10298, %v10312
      %v10337 = vmul.f32 %v10299, %v10308
      %v10338 = vmul.f32 %v10300, %v10312
      %v10339 = vmul.f32 %v10301, %v10308
      %v10340 = vmul.f32 %v10302, %v10312
      %v10367 = vrot.slane %v10315, 4
      %v10368 = vrot.slane %v10317, 4
      %v10369 = vsel %vm7193, %v10367, %v10368
      %v10370 = vrot.slane %v10316, 4
      %v10371 = vrot.slane %v10318, 4
      %v10372 = vsel %vm7193, %v10370, %v10371
      %v10373 = vrot.slane %v10319, 4
      %v10374 = vsel %vm7193, %v10368, %v10373
      %v10375 = vrot.slane %v10320, 4
      %v10376 = vsel %vm7193, %v10371, %v10375
      %v10377 = vrot.slane %v10321, 4
      %v10378 = vsel %vm7193, %v10373, %v10377
      %v10379 = vrot.slane %v10322, 4
      %v10380 = vsel %vm7193, %v10375, %v10379
      %v10381 = vrot.slane %v10323, 4
      %v10382 = vsel %vm7193, %v10377, %v10381
      %v10383 = vrot.slane %v10324, 4
      %v10384 = vsel %vm7193, %v10379, %v10383
      %v10385 = vrot.slane %v10325, 4
      %v10386 = vsel %vm7193, %v10381, %v10385
      %v10387 = vrot.slane %v10326, 4
      %v10388 = vsel %vm7193, %v10383, %v10387
      %v10389 = vrot.slane %v10327, 4
      %v10390 = vsel %vm7193, %v10385, %v10389
      %v10391 = vrot.slane %v10328, 4
      %v10392 = vsel %vm7193, %v10387, %v10391
      %v10393 = vrot.slane %v10329, 4
      %v10394 = vsel %vm7193, %v10389, %v10393
      %v10395 = vrot.slane %v10330, 4
      %v10396 = vsel %vm7193, %v10391, %v10395
      %v10397 = vrot.slane %v10331, 4
      %v10398 = vsel %vm7193, %v10393, %v10397
      %v10399 = vrot.slane %v10332, 4
      %v10400 = vsel %vm7193, %v10395, %v10399
      %v10401 = vrot.slane %v10333, 4
      %v10402 = vsel %vm7193, %v10397, %v10401
      %v10403 = vrot.slane %v10334, 4
      %v10404 = vsel %vm7193, %v10399, %v10403
      %v10405 = vrot.slane %v10335, 4
      %v10406 = vsel %vm7193, %v10401, %v10405
      %v10407 = vrot.slane %v10336, 4
      %v10408 = vsel %vm7193, %v10403, %v10407
      %v10409 = vrot.slane %v10337, 4
      %v10410 = vsel %vm7193, %v10405, %v10409
      %v10411 = vrot.slane %v10338, 4
      %v10412 = vsel %vm7193, %v10407, %v10411
      %v10413 = vrot.slane %v10339, 4
      %v10414 = vsel %vm7193, %v10409, %v10413
      %v10415 = vrot.slane %v10340, 4
      %v10416 = vsel %vm7193, %v10411, %v10415
      %v10441 = vadd.f32 %v10271, %v10369
      %v10442 = vadd.f32 %v10272, %v10372
      %v10443 = vadd.f32 %v10273, %v10374
      %v10444 = vadd.f32 %v10274, %v10376
      %v10445 = vadd.f32 %v10275, %v10378
      %v10446 = vadd.f32 %v10276, %v10380
      %v10447 = vadd.f32 %v10277, %v10382
      %v10448 = vadd.f32 %v10278, %v10384
      %v10449 = vadd.f32 %v10279, %v10386
      %v10450 = vadd.f32 %v10280, %v10388
      %v10451 = vadd.f32 %v10281, %v10390
      %v10452 = vadd.f32 %v10282, %v10392
      %v10453 = vadd.f32 %v10283, %v10394
      %v10454 = vadd.f32 %v10284, %v10396
      %v10455 = vadd.f32 %v10285, %v10398
      %v10456 = vadd.f32 %v10286, %v10400
      %v10457 = vadd.f32 %v10287, %v10402
      %v10458 = vadd.f32 %v10288, %v10404
      %v10459 = vadd.f32 %v10289, %v10406
      %v10460 = vadd.f32 %v10290, %v10408
      %v10461 = vadd.f32 %v10291, %v10410
      %v10462 = vadd.f32 %v10292, %v10412
      %v10463 = vadd.f32 %v10293, %v10414
      %v10464 = vadd.f32 %v10294, %v10416
      %v10465 = vld [vmem:[#allocation2 + $0x1c0] sm:$0xe0]
      %v10466 = vld [vmem:[#allocation2 + $0x1c8] sm:$0xe0]
      %v10467 = vld [vmem:[#allocation2 + $0x280] sm:$0x1f]
      %v10468 = vld [vmem:[#allocation2 + $0x288] sm:$0x1f]
      %v10469 = vld [vmem:[%s7467] ss:$8 sm:$0x3]
      %v10471 = vlaneseq
      %v10472 = vshrl.u32 %v10471, 7
      %v10473 = vsub.s32 0, %v10472
      %v10474 = vrot.slane %v10469, %v10473
      %v10475 = vlaneseq
      %v10476 = vshrl.u32 %v10475, 7
      %v10477 = vsub.s32 1, %v10476
      %v10478 = vrot.slane %v10469, %v10477
      %v10481 = vmul.f32 %v10465, %v10474
      %v10482 = vmul.f32 %v10466, %v10478
      %v10483 = vmul.f32 %v9387, %v10474
      %v10484 = vmul.f32 %v9388, %v10478
      %v10485 = vmul.f32 %v9389, %v10474
      %v10486 = vmul.f32 %v9390, %v10478
      %v10487 = vmul.f32 %v9391, %v10474
      %v10488 = vmul.f32 %v9392, %v10478
      %v10489 = vmul.f32 %v9393, %v10474
      %v10490 = vmul.f32 %v9394, %v10478
      %v10491 = vmul.f32 %v9395, %v10474
      %v10492 = vmul.f32 %v9396, %v10478
      %v10493 = vmul.f32 %v9397, %v10474
      %v10494 = vmul.f32 %v9398, %v10478
      %v10495 = vmul.f32 %v9399, %v10474
      %v10496 = vmul.f32 %v9400, %v10478
      %v10497 = vmul.f32 %v9795, %v10474
      %v10498 = vmul.f32 %v9796, %v10478
      %v10499 = vmul.f32 %v9797, %v10474
      %v10500 = vmul.f32 %v9798, %v10478
      %v10501 = vmul.f32 %v10297, %v10474
      %v10502 = vmul.f32 %v10298, %v10478
      %v10503 = vmul.f32 %v10299, %v10474
      %v10504 = vmul.f32 %v10300, %v10478
      %v10505 = vmul.f32 %v10467, %v10474
      %v10506 = vmul.f32 %v10468, %v10478
      %v10533 = vrot.slane %v10481, 5
      %v10534 = vrot.slane %v10483, 5
      %v10535 = vsel %vm2188, %v10533, %v10534
      %v10536 = vrot.slane %v10482, 5
      %v10537 = vrot.slane %v10484, 5
      %v10538 = vsel %vm2188, %v10536, %v10537
      %v10539 = vrot.slane %v10485, 5
      %v10540 = vsel %vm2188, %v10534, %v10539
      %v10541 = vrot.slane %v10486, 5
      %v10542 = vsel %vm2188, %v10537, %v10541
      %v10543 = vrot.slane %v10487, 5
      %v10544 = vsel %vm2188, %v10539, %v10543
      %v10545 = vrot.slane %v10488, 5
      %v10546 = vsel %vm2188, %v10541, %v10545
      %v10547 = vrot.slane %v10489, 5
      %v10548 = vsel %vm2188, %v10543, %v10547
      %v10549 = vrot.slane %v10490, 5
      %v10550 = vsel %vm2188, %v10545, %v10549
      %v10551 = vrot.slane %v10491, 5
      %v10552 = vsel %vm2188, %v10547, %v10551
      %v10553 = vrot.slane %v10492, 5
      %v10554 = vsel %vm2188, %v10549, %v10553
      %v10555 = vrot.slane %v10493, 5
      %v10556 = vsel %vm2188, %v10551, %v10555
      %v10557 = vrot.slane %v10494, 5
      %v10558 = vsel %vm2188, %v10553, %v10557
      %v10559 = vrot.slane %v10495, 5
      %v10560 = vsel %vm2188, %v10555, %v10559
      %v10561 = vrot.slane %v10496, 5
      %v10562 = vsel %vm2188, %v10557, %v10561
      %v10563 = vrot.slane %v10497, 5
      %v10564 = vsel %vm2188, %v10559, %v10563
      %v10565 = vrot.slane %v10498, 5
      %v10566 = vsel %vm2188, %v10561, %v10565
      %v10567 = vrot.slane %v10499, 5
      %v10568 = vsel %vm2188, %v10563, %v10567
      %v10569 = vrot.slane %v10500, 5
      %v10570 = vsel %vm2188, %v10565, %v10569
      %v10571 = vrot.slane %v10501, 5
      %v10572 = vsel %vm2188, %v10567, %v10571
      %v10573 = vrot.slane %v10502, 5
      %v10574 = vsel %vm2188, %v10569, %v10573
      %v10575 = vrot.slane %v10503, 5
      %v10576 = vsel %vm2188, %v10571, %v10575
      %v10577 = vrot.slane %v10504, 5
      %v10578 = vsel %vm2188, %v10573, %v10577
      %v10579 = vrot.slane %v10505, 5
      %v10580 = vsel %vm2188, %v10575, %v10579
      %v10581 = vrot.slane %v10506, 5
      %v10582 = vsel %vm2188, %v10577, %v10581
      %v10607 = vadd.f32 %v10441, %v10535
      %v10608 = vadd.f32 %v10442, %v10538
      %v10609 = vadd.f32 %v10443, %v10540
      %v10610 = vadd.f32 %v10444, %v10542
      %v10611 = vadd.f32 %v10445, %v10544
      %v10612 = vadd.f32 %v10446, %v10546
      %v10613 = vadd.f32 %v10447, %v10548
      %v10614 = vadd.f32 %v10448, %v10550
      %v10615 = vadd.f32 %v10449, %v10552
      %v10616 = vadd.f32 %v10450, %v10554
      %v10617 = vadd.f32 %v10451, %v10556
      %v10618 = vadd.f32 %v10452, %v10558
      %v10619 = vadd.f32 %v10453, %v10560
      %v10620 = vadd.f32 %v10454, %v10562
      %v10621 = vadd.f32 %v10455, %v10564
      %v10622 = vadd.f32 %v10456, %v10566
      %v10623 = vadd.f32 %v10457, %v10568
      %v10624 = vadd.f32 %v10458, %v10570
      %v10625 = vadd.f32 %v10459, %v10572
      %v10626 = vadd.f32 %v10460, %v10574
      %v10627 = vadd.f32 %v10461, %v10576
      %v10628 = vadd.f32 %v10462, %v10578
      %v10629 = vadd.f32 %v10463, %v10580
      %v10630 = vadd.f32 %v10464, %v10582
      %v10631 = vld [vmem:[#allocation2 + $0x1c0] sm:$0xc0]
      %v10632 = vld [vmem:[#allocation2 + $0x1c8] sm:$0xc0]
      %v10633 = vld [vmem:[#allocation2 + $0x280] sm:$0x3f]
      %v10634 = vld [vmem:[#allocation2 + $0x288] sm:$0x3f]
      %v10635 = vld [vmem:[%s7634] ss:$8 sm:$0x3]
      %v10637 = vlaneseq
      %v10638 = vshrl.u32 %v10637, 7
      %v10639 = vsub.s32 0, %v10638
      %v10640 = vrot.slane %v10635, %v10639
      %v10641 = vlaneseq
      %v10642 = vshrl.u32 %v10641, 7
      %v10643 = vsub.s32 1, %v10642
      %v10644 = vrot.slane %v10635, %v10643
      %v10647 = vmul.f32 %v10631, %v10640
      %v10648 = vmul.f32 %v10632, %v10644
      %v10649 = vmul.f32 %v9387, %v10640
      %v10650 = vmul.f32 %v9388, %v10644
      %v10651 = vmul.f32 %v9389, %v10640
      %v10652 = vmul.f32 %v9390, %v10644
      %v10653 = vmul.f32 %v9391, %v10640
      %v10654 = vmul.f32 %v9392, %v10644
      %v10655 = vmul.f32 %v9393, %v10640
      %v10656 = vmul.f32 %v9394, %v10644
      %v10657 = vmul.f32 %v9395, %v10640
      %v10658 = vmul.f32 %v9396, %v10644
      %v10659 = vmul.f32 %v9397, %v10640
      %v10660 = vmul.f32 %v9398, %v10644
      %v10661 = vmul.f32 %v9399, %v10640
      %v10662 = vmul.f32 %v9400, %v10644
      %v10663 = vmul.f32 %v9795, %v10640
      %v10664 = vmul.f32 %v9796, %v10644
      %v10665 = vmul.f32 %v9797, %v10640
      %v10666 = vmul.f32 %v9798, %v10644
      %v10667 = vmul.f32 %v10297, %v10640
      %v10668 = vmul.f32 %v10298, %v10644
      %v10669 = vmul.f32 %v10299, %v10640
      %v10670 = vmul.f32 %v10300, %v10644
      %v10671 = vmul.f32 %v10633, %v10640
      %v10672 = vmul.f32 %v10634, %v10644
      %v10699 = vrot.slane %v10647, 6
      %v10700 = vrot.slane %v10649, 6
      %v10701 = vsel %vm7699, %v10699, %v10700
      %v10702 = vrot.slane %v10648, 6
      %v10703 = vrot.slane %v10650, 6
      %v10704 = vsel %vm7699, %v10702, %v10703
      %v10705 = vrot.slane %v10651, 6
      %v10706 = vsel %vm7699, %v10700, %v10705
      %v10707 = vrot.slane %v10652, 6
      %v10708 = vsel %vm7699, %v10703, %v10707
      %v10709 = vrot.slane %v10653, 6
      %v10710 = vsel %vm7699, %v10705, %v10709
      %v10711 = vrot.slane %v10654, 6
      %v10712 = vsel %vm7699, %v10707, %v10711
      %v10713 = vrot.slane %v10655, 6
      %v10714 = vsel %vm7699, %v10709, %v10713
      %v10715 = vrot.slane %v10656, 6
      %v10716 = vsel %vm7699, %v10711, %v10715
      %v10717 = vrot.slane %v10657, 6
      %v10718 = vsel %vm7699, %v10713, %v10717
      %v10719 = vrot.slane %v10658, 6
      %v10720 = vsel %vm7699, %v10715, %v10719
      %v10721 = vrot.slane %v10659, 6
      %v10722 = vsel %vm7699, %v10717, %v10721
      %v10723 = vrot.slane %v10660, 6
      %v10724 = vsel %vm7699, %v10719, %v10723
      %v10725 = vrot.slane %v10661, 6
      %v10726 = vsel %vm7699, %v10721, %v10725
      %v10727 = vrot.slane %v10662, 6
      %v10728 = vsel %vm7699, %v10723, %v10727
      %v10729 = vrot.slane %v10663, 6
      %v10730 = vsel %vm7699, %v10725, %v10729
      %v10731 = vrot.slane %v10664, 6
      %v10732 = vsel %vm7699, %v10727, %v10731
      %v10733 = vrot.slane %v10665, 6
      %v10734 = vsel %vm7699, %v10729, %v10733
      %v10735 = vrot.slane %v10666, 6
      %v10736 = vsel %vm7699, %v10731, %v10735
      %v10737 = vrot.slane %v10667, 6
      %v10738 = vsel %vm7699, %v10733, %v10737
      %v10739 = vrot.slane %v10668, 6
      %v10740 = vsel %vm7699, %v10735, %v10739
      %v10741 = vrot.slane %v10669, 6
      %v10742 = vsel %vm7699, %v10737, %v10741
      %v10743 = vrot.slane %v10670, 6
      %v10744 = vsel %vm7699, %v10739, %v10743
      %v10745 = vrot.slane %v10671, 6
      %v10746 = vsel %vm7699, %v10741, %v10745
      %v10747 = vrot.slane %v10672, 6
      %v10748 = vsel %vm7699, %v10743, %v10747
      %v10773 = vadd.f32 %v10607, %v10701
      %v10774 = vadd.f32 %v10608, %v10704
      %v10775 = vadd.f32 %v10609, %v10706
      %v10776 = vadd.f32 %v10610, %v10708
      %v10777 = vadd.f32 %v10611, %v10710
      %v10778 = vadd.f32 %v10612, %v10712
      %v10779 = vadd.f32 %v10613, %v10714
      %v10780 = vadd.f32 %v10614, %v10716
      %v10781 = vadd.f32 %v10615, %v10718
      %v10782 = vadd.f32 %v10616, %v10720
      %v10783 = vadd.f32 %v10617, %v10722
      %v10784 = vadd.f32 %v10618, %v10724
      %v10785 = vadd.f32 %v10619, %v10726
      %v10786 = vadd.f32 %v10620, %v10728
      %v10787 = vadd.f32 %v10621, %v10730
      %v10788 = vadd.f32 %v10622, %v10732
      %v10789 = vadd.f32 %v10623, %v10734
      %v10790 = vadd.f32 %v10624, %v10736
      %v10791 = vadd.f32 %v10625, %v10738
      %v10792 = vadd.f32 %v10626, %v10740
      %v10793 = vadd.f32 %v10627, %v10742
      %v10794 = vadd.f32 %v10628, %v10744
      %v10795 = vadd.f32 %v10629, %v10746
      %v10796 = vadd.f32 %v10630, %v10748
      %v10797 = vadd.f32 %v10773, %v10774
      %10798 = vadd.xlane.f32.xlu0 %v10797
      %v10799 = vpop.xlane.xlu0 %10798
      %v10800 = vadd.f32 %v10775, %v10776
      %10801 = vadd.xlane.f32.xlu0 %v10800
      %v10802 = vpop.xlane.xlu0 %10801
      %v10803 = vadd.f32 %v10777, %v10778
      %10804 = vadd.xlane.f32.xlu0 %v10803
      %v10805 = vpop.xlane.xlu0 %10804
      %v10806 = vadd.f32 %v10779, %v10780
      %10807 = vadd.xlane.f32.xlu0 %v10806
      %v10808 = vpop.xlane.xlu0 %10807
      %v10809 = vadd.f32 %v10781, %v10782
      %10810 = vadd.xlane.f32.xlu0 %v10809
      %v10811 = vpop.xlane.xlu0 %10810
      %v10812 = vadd.f32 %v10783, %v10784
      %10813 = vadd.xlane.f32.xlu0 %v10812
      %v10814 = vpop.xlane.xlu0 %10813
      %v10815 = vadd.f32 %v10785, %v10786
      %10816 = vadd.xlane.f32.xlu0 %v10815
      %v10817 = vpop.xlane.xlu0 %10816
      %v10818 = vadd.f32 %v10787, %v10788
      %10819 = vadd.xlane.f32.xlu0 %v10818
      %v10820 = vpop.xlane.xlu0 %10819
      %v10821 = vadd.f32 %v10789, %v10790
      %10822 = vadd.xlane.f32.xlu0 %v10821
      %v10823 = vpop.xlane.xlu0 %10822
      %v10824 = vadd.f32 %v10791, %v10792
      %10825 = vadd.xlane.f32.xlu0 %v10824
      %v10826 = vpop.xlane.xlu0 %10825
      %v10827 = vadd.f32 %v10793, %v10794
      %10828 = vadd.xlane.f32.xlu0 %v10827
      %v10829 = vpop.xlane.xlu0 %10828
      %v10830 = vadd.f32 %v10795, %v10796
      %10831 = vadd.xlane.f32.xlu0 %v10830
      %v10832 = vpop.xlane.xlu0 %10831
      %v10833 = vld [vmem:[#allocation3] sm:$0x1]
      %v10835 = vlaneseq
      %v10836 = vshrl.u32 %v10835, 7
      %v10837 = vsub.s32 0, %v10836
      %v10838 = vrot.slane %v10833, %v10837
      %v10840 = vadd.f32 %v10799, %v10838
      %v10841 = vadd.f32 %v10802, %v10838
      %v10842 = vadd.f32 %v10805, %v10838
      %v10843 = vadd.f32 %v10808, %v10838
      %v10844 = vadd.f32 %v10811, %v10838
      %v10845 = vadd.f32 %v10814, %v10838
      %v10846 = vadd.f32 %v10817, %v10838
      %v10847 = vadd.f32 %v10820, %v10838
      %v10848 = vadd.f32 %v10823, %v10838
      %v10849 = vadd.f32 %v10826, %v10838
      %v10850 = vadd.f32 %v10829, %v10838
      %v10851 = vadd.f32 %v10832, %v10838
      %v10852 = vtanh.pop %v10840
      %v10853 = vtanh.pop %v10841
      %v10854 = vtanh.pop %v10842
      %v10855 = vtanh.pop %v10843
      %v10856 = vtanh.pop %v10844
      %v10857 = vtanh.pop %v10845
      %v10858 = vtanh.pop %v10846
      %v10859 = vtanh.pop %v10847
      %v10860 = vtanh.pop %v10848
      %v10861 = vtanh.pop %v10849
      %v10862 = vtanh.pop %v10850
      %v10863 = vtanh.pop %v10851
      %10864 = vst.msk [vmem:[%s226 + $0xc0] sm:$0xff] %vm7865, %v10852
      %10865 = vst.msk [vmem:[%s226 + $0xc8] sm:$0xff] %vm7865, %v10853
      %10866 = vst.msk [vmem:[%s226 + $0xd0] sm:$0xff] %vm7865, %v10854
      %10867 = vst.msk [vmem:[%s226 + $0xd8] sm:$0xff] %vm7865, %v10855
      %10868 = vst.msk [vmem:[%s226 + $0xe0] sm:$0xff] %vm7865, %v10856
      %10869 = vst.msk [vmem:[%s226 + $0xe8] sm:$0xff] %vm7865, %v10857
      %10870 = vst.msk [vmem:[%s226 + $0xf0] sm:$0xff] %vm7865, %v10858
      %10871 = vst.msk [vmem:[%s226 + $0xf8] sm:$0xff] %vm7865, %v10859
      %10872 = vst.msk [vmem:[%s226 + $0x100] sm:$0xff] %vm7865, %v10860
      %10873 = vst.msk [vmem:[%s226 + $0x108] sm:$0xff] %vm7865, %v10861
      %10874 = vst.msk [vmem:[%s226 + $0x110] sm:$0xff] %vm7865, %v10862
      %10875 = vst.msk [vmem:[%s226 + $0x118] sm:$0xff] %vm7865, %v10863
      %p10876 = scmp.lt.s32.totalorder %s18, 1
      %s10877 = scalar_select %p10876, %s18, 1
      %s10878 = smul.addr %s10877, 36
      %s10879 = smul.addr %s10878, 8
      %s10880 = scalar_lea.vmem %s5, %s10879
      // Predicated region
      $region41: #{offset_head_forward.1} parent=39 // pred_check
        %p10881 = pneg %p146
      $region42: #{offset_head_forward.1} parent=39 // pred_check_branch
        %10883 = sbr.rel (%p10881) target = $region44
      $region43: #{offset_head_forward.1} parent=39 // pred_region
        _
      $region44: #{offset_head_forward.1} parent=39 // pred_fallthru
        _
    $region40: #{offset_head_forward.1} parent=5 // pred_fallthru
      _
    %p10884 = scmp.le.s32.totalorder 2, %s13
    // Predicated region
    $region45: #{offset_head_forward.1} parent=5 // pred_check
      %p10885 = pneg %p10884
    $region46: #{offset_head_forward.1} parent=5 // pred_check_branch
      %10887 = sbr.rel (%p10885) target = $region48
    $region47: #{offset_head_forward.1} parent=5 // pred_region
      %s10888 = ssub.s32 %s13, 2
      // Predicated region
      $region49: #{offset_head_forward.1} parent=47 // pred_check
        %p10889 = pneg %p152
      $region50: #{offset_head_forward.1} parent=47 // pred_check_branch
        %10891 = sbr.rel (%p10889) target = $region52
      $region51: #{offset_head_forward.1} parent=47 // pred_region
        %p10892 = scmp.lt.s32.totalorder %s19, 1
        %s10893 = scalar_select %p10892, %s19, 1
        %s10894 = smul.addr %s10893, 36
        %s10895 = smul.addr %s10894, 8
        %s10896 = scalar_lea.vmem %s5, %s10895
      $region52: #{offset_head_forward.1} parent=47 // pred_fallthru
        _
    $region48: #{offset_head_forward.1} parent=5 // pred_fallthru
      _
  $region6: #{offset_head_forward.1} parent=0 // loop_footer
    %s17 = sadd.s32 1, %s13
  $region7: #{offset_head_forward.1} parent=0 // loop_footer_branch
    %12 = sbr.rel target = $region3
  $region8: #{offset_head_forward.1} parent=0 // loop_exit
    _

</llo_original>
